<compile_context>
chip_gen: v7x
topology: tpu7x:2x2x1
jax: 0.10.0
libtpu: 0.0.40
codegen_flags: <defaults>
</compile_context>

<pallas_src>
import functools

import jax
import jax.numpy as jnp
from jax.experimental import pallas as pl
from jax.experimental.pallas import tpu as pltpu

K = 4          # Gen.DECONV_CFG kernel_size
STRIDE = 2     # stride
PAD = 1        # padding (output_padding = 0)
CHANNELS = [512, 256, 128, 64]
BLOCKS = len(CHANNELS)
BN_EPS = 1e-5


def _vmem_spec():
    return pl.BlockSpec(memory_space=pltpu.MemorySpace.VMEM)


# ------------------------------------------------------------------ helpers --
def _phase_weights(w):
    """torch ConvTranspose2d weight (IC, OC, 4, 4) -> per-phase (4, 4*IC, OC).

    Output phase p = 2*py + px of the stride-2 transposed conv is a dense 2x2
    correlation over the 1-padded input; window offset (dy, dx) uses original
    tap (3 - py - 2*dy, 3 - px - 2*dx).
    """
    ic, oc = w.shape[0], w.shape[1]
    phases = []
    for py in range(2):
        for px in range(2):
            taps = [w[:, :, 3 - py - 2 * dy, 3 - px - 2 * dx]
                    for dy in range(2) for dx in range(2)]            # 4 x (IC, OC)
            phases.append(jnp.stack(taps, axis=0).reshape(4 * ic, oc))
    return jnp.stack(phases, axis=0)                                  # (4, 4*IC, OC)


def _build_phase_slabs(x_nhwc):
    """NHWC input (B,H,W,IC) -> per-phase im2col slabs (4, B*H*W, 4*IC)."""
    B, H, W, IC = x_nhwc.shape
    xp = jnp.pad(x_nhwc, ((0, 0), (1, 1), (1, 1), (0, 0)))
    slabs = []
    for py in range(2):
        for px in range(2):
            taps = [xp[:, py + dy:py + dy + H, px + dx:px + dx + W, :]
                    for dy in range(2) for dx in range(2)]            # 4 x (B,H,W,IC)
            slabs.append(jnp.stack(taps, axis=3).reshape(B * H * W, 4 * IC))
    return jnp.stack(slabs, axis=0)                                   # (4, BHW, 4*IC)


def _unphase(y, B, H, W, channels_last):
    """Phase-major kernel output -> NHWC (B, 2H, 2W, OC)."""
    if channels_last:                       # y: (4, B*H*W, OC), p = 2*py + px
        OC = y.shape[-1]
        y = y.reshape(2, 2, B, H, W, OC)
        y = jnp.transpose(y, (2, 3, 0, 4, 1, 5))   # (B, H, py, W, px, OC)
    else:                                   # y: (4, OC, B*H*W)
        OC = y.shape[1]
        y = y.reshape(2, 2, OC, B, H, W)
        y = jnp.transpose(y, (3, 4, 0, 5, 1, 2))   # (B, H, py, W, px, OC)
    return y.reshape(B, STRIDE * H, STRIDE * W, OC)


# --------------------------------------------- fused deconv + BN + act block --
def _deconv_bn_act_kernel(slab_ref, w_ref, g_ref, b_ref, o_ref, *,
                          act, channels_last):
    # channels_last: slab (4, M, 4*IC) bf16, w (4, 4*IC, OCt) bf16, out (4, M, OCt)
    # lane-dense M : slab (4, 4*IC, M) bf16, w (4, OC, 4*IC) bf16, out (4, OC, M)
    phases = []
    for p in range(4):                      # static 4-phase loop, 1 MXU matmul each
        if channels_last:
            phases.append(jnp.dot(slab_ref[p], w_ref[p],
                                  preferred_element_type=jnp.float32))
        else:
            phases.append(jnp.dot(w_ref[p], slab_ref[p],
                                  preferred_element_type=jnp.float32))
    y = jnp.stack(phases, axis=0)

    # BatchNorm2d, training-mode batch statistics (biased variance, eps=1e-5).
    # Stats are per-channel -> exact under the OC-tile grid split.
    red = (0, 1) if channels_last else (0, 2)
    mean = jnp.mean(y, axis=red, keepdims=True)
    var = jnp.mean((y - mean) ** 2, axis=red, keepdims=True)
    y = (y - mean) * jax.lax.rsqrt(var + BN_EPS)
    if channels_last:
        y = y * g_ref[...].reshape(1, 1, -1) + b_ref[...].reshape(1, 1, -1)
    else:
        y = y * g_ref[...].reshape(1, -1, 1) + b_ref[...].reshape(1, -1, 1)

    o_ref[...] = jnp.maximum(y, 0.0) if act == "relu" else jnp.tanh(y)


def deconv_bn_act(x_nhwc, w_ph, gamma, beta, act):
    B, H, W, IC = x_nhwc.shape
    OC = w_ph.shape[-1]
    M, KC = B * H * W, 4 * IC
    slab = _build_phase_slabs(x_nhwc.astype(jnp.bfloat16))            # (4, M, KC) bf16

    channels_last = OC >= M
    if channels_last:
        oct_ = 128 if (OC > 128 and OC % 128 == 0) else OC
        out = pl.pallas_call(
            functools.partial(_deconv_bn_act_kernel, act=act, channels_last=True),
            grid=(OC // oct_,),
            out_shape=jax.ShapeDtypeStruct((4, M, OC), jnp.float32),
            in_specs=[
                pl.BlockSpec((4, M, KC), lambda j: (0, 0, 0)),
                pl.BlockSpec((4, KC, oct_), lambda j: (0, 0, j)),
                pl.BlockSpec((1, oct_), lambda j: (0, j)),
                pl.BlockSpec((1, oct_), lambda j: (0, j)),
            ],
            out_specs=pl.BlockSpec((4, M, oct_), lambda j: (0, 0, j)),
            compiler_params=pltpu.CompilerParams(
                dimension_semantics=("parallel",)),
        )(slab, w_ph, gamma, beta)
    else:
        # Small OC (final RGB block): transpose the matmul so the output lane
        # dim is B*H*W -> lane-dense stores instead of 3/128 masked stores.
        out = pl.pallas_call(
            functools.partial(_deconv_bn_act_kernel, act=act, channels_last=False),
            out_shape=jax.ShapeDtypeStruct((4, OC, M), jnp.float32),
            in_specs=[_vmem_spec()] * 4,
            out_specs=_vmem_spec(),
        )(jnp.transpose(slab, (0, 2, 1)), jnp.transpose(w_ph, (0, 2, 1)),
          gamma.reshape(OC, 1), beta.reshape(OC, 1))

    # TODO(synk): for large B*H*W, switch BN to a two-pass (sum / sum-of-squares
    # scratch + spatial grid axis) scheme instead of whole-tensor residency.
    return _unphase(out, B, H, W, channels_last)


# ------------------------------------------- fused Linear + block-0 (1x1 in) --
def _fused_lin_block0_kernel(z_ref, wl_ref, bl_ref, w0_ref, g_ref, b_ref, o_ref,
                             *, act):
    # z (B, L) f32, wl (L, fC) f32, bl (1, fC) f32, w0 (4, fC, OC) bf16
    h = jnp.dot(z_ref[...], wl_ref[...],
                preferred_element_type=jnp.float32) + bl_ref[...]
    hb = h.astype(jnp.bfloat16)
    phases = [jnp.dot(hb, w0_ref[p], preferred_element_type=jnp.float32)
              for p in range(4)]
    y = jnp.stack(phases, axis=0)                                     # (4, B, OC)
    mean = jnp.mean(y, axis=(0, 1), keepdims=True)
    var = jnp.mean((y - mean) ** 2, axis=(0, 1), keepdims=True)
    y = (y - mean) * jax.lax.rsqrt(var + BN_EPS)
    y = y * g_ref[...].reshape(1, 1, -1) + b_ref[...].reshape(1, 1, -1)
    o_ref[...] = jnp.maximum(y, 0.0) if act == "relu" else jnp.tanh(y)


def fused_linear_block0(z, lin_w_t, lin_b, w0_ph, gamma, beta, act):
    B, OC = z.shape[0], w0_ph.shape[-1]
    return pl.pallas_call(
        functools.partial(_fused_lin_block0_kernel, act=act),
        out_shape=jax.ShapeDtypeStruct((4, B, OC), jnp.float32),
        in_specs=[_vmem_spec()] * 6,
        out_specs=_vmem_spec(),
    )(z, lin_w_t, lin_b, w0_ph, gamma, beta)


# ----------------------------------------------- standalone linear (fallback) --
def _linear_kernel(z_ref, w_ref, b_ref, o_ref):
    o_ref[...] = (jnp.dot(z_ref[...], w_ref[...],
                          preferred_element_type=jnp.float32) + b_ref[...])


def linear(z, w_t, b):
    B, F = z.shape[0], w_t.shape[1]
    return pl.pallas_call(
        _linear_kernel,
        out_shape=jax.ShapeDtypeStruct((B, F), jnp.float32),
        in_specs=[_vmem_spec()] * 3,
        out_specs=_vmem_spec(),
    )(z, w_t, b)


# ------------------------------------------------------------------- params --
def set_in(size, blocks):
    # inverse of the deconv: each block exactly doubles H/W with this cfg
    for _ in range(blocks):
        assert size % STRIDE == 0, "output spatial must be divisible by 2**BLOCKS"
        size //= STRIDE
    return size


def init_params(key, dim_latent, out_shape):
    c, h, w = out_shape
    fC, fH, fW = CHANNELS[0], set_in(h, BLOCKS), set_in(w, BLOCKS)
    chans = CHANNELS + [c]
    keys = jax.random.split(key, 2 + 3 * BLOCKS)
    F = fC * fH * fW

    params = {
        "fC": fC, "fH": fH, "fW": fW,
        # nn.Linear weight is (F, L); kernel consumes W^T of shape (L, F)
        "lin_w_t": jax.random.uniform(keys[0], (dim_latent, F), jnp.float32, -0.1, 0.1),
        "lin_b": jax.random.uniform(keys[1], (1, F), jnp.float32, -0.1, 0.1),
        "blocks": [],
    }
    for i in range(BLOCKS):
        ic, oc = chans[i], chans[i + 1]
        kw, kg, kb = keys[2 + 3 * i: 5 + 3 * i]
        # torch ConvTranspose2d weight layout: (IC, OC, K, K).  The deconv bias
        # is omitted: it is exactly cancelled by BatchNorm's mean subtraction.
        wt = jax.random.uniform(kw, (ic, oc, K, K), jnp.float32, -0.05, 0.05)
        blk = {
            "w_ph": _phase_weights(wt).astype(jnp.bfloat16),          # (4, 4*IC, OC)
            "gamma": 1.0 + 0.1 * jax.random.normal(kg, (1, oc), jnp.float32),
            "beta": 0.1 * jax.random.normal(kb, (1, oc), jnp.float32),
        }
        if i == 0 and fH == 1 and fW == 1:
            # 1x1 input touches only the central 2x2 taps: phase p = 2*py + px
            # uses tap (1+py, 1+px).
            blk["w0_ph"] = jnp.stack(
                [wt[:, :, 1 + py, 1 + px] for py in range(2) for px in range(2)],
                axis=0).astype(jnp.bfloat16)                          # (4, IC, OC)
        params["blocks"].append(blk)
    return params


# ------------------------------------------------------------------ forward --
def gen_forward(z, params):
    B = z.shape[0]
    blocks = params["blocks"]
    acts = ["relu"] * (len(blocks) - 1) + ["tanh"]

    blk0 = blocks[0]
    if "w0_ph" in blk0:
        # Linear fused into block 0 (fH == fW == 1).
        y0 = fused_linear_block0(z, params["lin_w_t"], params["lin_b"],
                                 blk0["w0_ph"], blk0["gamma"], blk0["beta"], acts[0])
        x = _unphase(y0, B, 1, 1, channels_last=True)                 # (B, 2, 2, OC0)
    else:
        h = linear(z, params["lin_w_t"], params["lin_b"])             # (B, fC*fH*fW)
        x = jnp.transpose(h.reshape(B, params["fC"], params["fH"], params["fW"]),
                          (0, 2, 3, 1))                               # NHWC
        x = deconv_bn_act(x, blk0["w_ph"], blk0["gamma"], blk0["beta"], acts[0])

    for blk, act in zip(blocks[1:], acts[1:]):
        x = deconv_bn_act(x, blk["w_ph"], blk["gamma"], blk["beta"], act)
    return jnp.transpose(x, (0, 3, 1, 2))                             # NHWC -> NCHW


if __name__ == "__main__":
    dim_latent = 32
    out_shape = (3, 16, 16)   # (C, H, W); H, W must be divisible by 2**4
    batch = 2

    key = jax.random.PRNGKey(0)
    kp, kz = jax.random.split(key)
    params = init_params(kp, dim_latent, out_shape)
    z = jax.random.normal(kz, (batch, dim_latent), jnp.float32)

    fwd = jax.jit(lambda latent: gen_forward(latent, params))
    out = jax.block_until_ready(fwd(z))

    assert out.shape == (batch,) + out_shape, out.shape
    assert bool(jnp.all(jnp.isfinite(out)))
    # last activation is tanh -> bounded output
    assert float(jnp.max(jnp.abs(out))) <= 1.0 + 1e-5
    print("KERNEL_OK")
</pallas_src>

<mosaic_0001>
module attributes {stable_mosaic.version = 11 : i64} {
  func.func @_fused_lin_block0_kernel(%arg0: memref<2x32xf32, #tpu.memory_space<vmem>>, %arg1: memref<32x512xf32, #tpu.memory_space<vmem>>, %arg2: memref<1x512xf32, #tpu.memory_space<vmem>>, %arg3: memref<4x512x256xbf16, #tpu.memory_space<vmem>>, %arg4: memref<1x256xf32, #tpu.memory_space<vmem>>, %arg5: memref<1x256xf32, #tpu.memory_space<vmem>>, %arg6: memref<4x2x256xf32, #tpu.memory_space<vmem>>) attributes {dimension_semantics = [], scalar_prefetch = 0 : i64, scratch_operands = 0 : i64, tpu.core_type = #tpu.core_type<tc>} {
    %c0 = arith.constant 0 : index
    %c0_0 = arith.constant 0 : index
    %0 = vector.load %arg0[%c0, %c0_0] : memref<2x32xf32, #tpu.memory_space<vmem>>, vector<2x32xf32>
    %c0_1 = arith.constant 0 : index
    %c0_2 = arith.constant 0 : index
    %1 = vector.load %arg1[%c0_1, %c0_2] : memref<32x512xf32, #tpu.memory_space<vmem>>, vector<32x512xf32>
    %cst = arith.constant dense<0.000000e+00> : vector<2x512xf32>
    %2 = tpu.matmul %0, %1, %cst {dimension_numbers = #tpu.dot_dimension_numbers<[1], [0], [0], [1], [0, 0, 1, 1], [], []>} : vector<2x32xf32>, vector<32x512xf32>, vector<2x512xf32> -> vector<2x512xf32>
    %c0_3 = arith.constant 0 : index
    %c0_4 = arith.constant 0 : index
    %3 = vector.load %arg2[%c0_3, %c0_4] : memref<1x512xf32, #tpu.memory_space<vmem>>, vector<1x512xf32>
    %4 = vector.broadcast %3 : vector<1x512xf32> to vector<2x512xf32>
    %5 = arith.addf %2, %4 : vector<2x512xf32>
    %6 = arith.truncf %5 : vector<2x512xf32> to vector<2x512xbf16>
    %c0_5 = arith.constant 0 : index
    %c0_6 = arith.constant 0 : index
    %c0_7 = arith.constant 0 : index
    %7 = vector.load %arg3[%c0_5, %c0_6, %c0_7] : memref<4x512x256xbf16, #tpu.memory_space<vmem>>, vector<1x512x256xbf16>
    %8 = vector.shape_cast %7 : vector<1x512x256xbf16> to vector<512x256xbf16>
    %cst_8 = arith.constant dense<0.000000e+00> : vector<2x256xf32>
    %9 = tpu.matmul %6, %8, %cst_8 {dimension_numbers = #tpu.dot_dimension_numbers<[1], [0], [0], [1], [0, 0, 1, 1], [], []>} : vector<2x512xbf16>, vector<512x256xbf16>, vector<2x256xf32> -> vector<2x256xf32>
    %c1 = arith.constant 1 : index
    %c0_9 = arith.constant 0 : index
    %c0_10 = arith.constant 0 : index
    %10 = vector.load %arg3[%c1, %c0_9, %c0_10] : memref<4x512x256xbf16, #tpu.memory_space<vmem>>, vector<1x512x256xbf16>
    %11 = vector.shape_cast %10 : vector<1x512x256xbf16> to vector<512x256xbf16>
    %cst_11 = arith.constant dense<0.000000e+00> : vector<2x256xf32>
    %12 = tpu.matmul %6, %11, %cst_11 {dimension_numbers = #tpu.dot_dimension_numbers<[1], [0], [0], [1], [0, 0, 1, 1], [], []>} : vector<2x512xbf16>, vector<512x256xbf16>, vector<2x256xf32> -> vector<2x256xf32>
    %c2 = arith.constant 2 : index
    %c0_12 = arith.constant 0 : index
    %c0_13 = arith.constant 0 : index
    %13 = vector.load %arg3[%c2, %c0_12, %c0_13] : memref<4x512x256xbf16, #tpu.memory_space<vmem>>, vector<1x512x256xbf16>
    %14 = vector.shape_cast %13 : vector<1x512x256xbf16> to vector<512x256xbf16>
    %cst_14 = arith.constant dense<0.000000e+00> : vector<2x256xf32>
    %15 = tpu.matmul %6, %14, %cst_14 {dimension_numbers = #tpu.dot_dimension_numbers<[1], [0], [0], [1], [0, 0, 1, 1], [], []>} : vector<2x512xbf16>, vector<512x256xbf16>, vector<2x256xf32> -> vector<2x256xf32>
    %c3 = arith.constant 3 : index
    %c0_15 = arith.constant 0 : index
    %c0_16 = arith.constant 0 : index
    %16 = vector.load %arg3[%c3, %c0_15, %c0_16] : memref<4x512x256xbf16, #tpu.memory_space<vmem>>, vector<1x512x256xbf16>
    %17 = vector.shape_cast %16 : vector<1x512x256xbf16> to vector<512x256xbf16>
    %cst_17 = arith.constant dense<0.000000e+00> : vector<2x256xf32>
    %18 = tpu.matmul %6, %17, %cst_17 {dimension_numbers = #tpu.dot_dimension_numbers<[1], [0], [0], [1], [0, 0, 1, 1], [], []>} : vector<2x512xbf16>, vector<512x256xbf16>, vector<2x256xf32> -> vector<2x256xf32>
    %19 = vector.shape_cast %9 : vector<2x256xf32> to vector<1x2x256xf32>
    %20 = vector.shape_cast %12 : vector<2x256xf32> to vector<1x2x256xf32>
    %21 = vector.shape_cast %15 : vector<2x256xf32> to vector<1x2x256xf32>
    %22 = vector.shape_cast %18 : vector<2x256xf32> to vector<1x2x256xf32>
    %23 = tpu.concatenate %19, %20, %21, %22 in 0 : vector<1x2x256xf32>, vector<1x2x256xf32>, vector<1x2x256xf32>, vector<1x2x256xf32> -> vector<4x2x256xf32>
    %cst_18 = arith.constant dense<0.000000e+00> : vector<256xf32>
    %24 = vector.multi_reduction <add>, %23, %cst_18 [0, 1] : vector<4x2x256xf32> to vector<256xf32>
    %25 = vector.shape_cast %24 : vector<256xf32> to vector<1x1x256xf32>
    %cst_19 = arith.constant 8.000000e+00 : f32
    %26 = vector.broadcast %cst_19 : f32 to vector<1x1x256xf32>
    %27 = arith.divf %25, %26 : vector<1x1x256xf32>
    %28 = vector.broadcast %27 : vector<1x1x256xf32> to vector<4x2x256xf32>
    %29 = arith.subf %23, %28 : vector<4x2x256xf32>
    %30 = arith.mulf %29, %29 : vector<4x2x256xf32>
    %cst_20 = arith.constant dense<0.000000e+00> : vector<256xf32>
    %31 = vector.multi_reduction <add>, %30, %cst_20 [0, 1] : vector<4x2x256xf32> to vector<256xf32>
    %32 = vector.shape_cast %31 : vector<256xf32> to vector<1x1x256xf32>
    %cst_21 = arith.constant 8.000000e+00 : f32
    %33 = vector.broadcast %cst_21 : f32 to vector<1x1x256xf32>
    %34 = arith.divf %32, %33 : vector<1x1x256xf32>
    %35 = vector.broadcast %27 : vector<1x1x256xf32> to vector<4x2x256xf32>
    %36 = arith.subf %23, %35 : vector<4x2x256xf32>
    %cst_22 = arith.constant 9.99999974E-6 : f32
    %37 = vector.broadcast %cst_22 : f32 to vector<1x1x256xf32>
    %38 = arith.addf %34, %37 : vector<1x1x256xf32>
    %39 = math.rsqrt %38 : vector<1x1x256xf32>
    %40 = vector.broadcast %39 : vector<1x1x256xf32> to vector<4x2x256xf32>
    %41 = arith.mulf %36, %40 : vector<4x2x256xf32>
    %c0_23 = arith.constant 0 : index
    %c0_24 = arith.constant 0 : index
    %42 = vector.load %arg4[%c0_23, %c0_24] : memref<1x256xf32, #tpu.memory_space<vmem>>, vector<1x256xf32>
    %43 = vector.shape_cast %42 : vector<1x256xf32> to vector<1x1x256xf32>
    %44 = vector.broadcast %43 : vector<1x1x256xf32> to vector<4x2x256xf32>
    %45 = arith.mulf %41, %44 : vector<4x2x256xf32>
    %c0_25 = arith.constant 0 : index
    %c0_26 = arith.constant 0 : index
    %46 = vector.load %arg5[%c0_25, %c0_26] : memref<1x256xf32, #tpu.memory_space<vmem>>, vector<1x256xf32>
    %47 = vector.shape_cast %46 : vector<1x256xf32> to vector<1x1x256xf32>
    %48 = vector.broadcast %47 : vector<1x1x256xf32> to vector<4x2x256xf32>
    %49 = arith.addf %45, %48 : vector<4x2x256xf32>
    %cst_27 = arith.constant 0.000000e+00 : f32
    %50 = vector.broadcast %cst_27 : f32 to vector<4x2x256xf32>
    %51 = arith.maximumf %49, %50 : vector<4x2x256xf32>
    %c0_28 = arith.constant 0 : index
    %c0_29 = arith.constant 0 : index
    %c0_30 = arith.constant 0 : index
    %52 = vector.load %arg6[%c0_28, %c0_29, %c0_30] : memref<4x2x256xf32, #tpu.memory_space<vmem>>, vector<4x2x256xf32>
    tpu.vector_store %arg6[%c0_28, %c0_29, %c0_30], %51 {strides = array<i32>} : memref<4x2x256xf32, #tpu.memory_space<vmem>>, vector<4x2x256xf32>,
    return
  }
}

module attributes {stable_mosaic.version = 11 : i64} {
  func.func @_deconv_bn_act_kernel(%arg0: i32, %arg1: memref<4x8x1024xbf16, #tpu.memory_space<vmem>>, %arg2: memref<4x1024x128xbf16, #tpu.memory_space<vmem>>, %arg3: memref<1x128xf32, #tpu.memory_space<vmem>>, %arg4: memref<1x128xf32, #tpu.memory_space<vmem>>, %arg5: memref<4x8x128xf32, #tpu.memory_space<vmem>>) attributes {dimension_semantics = [#tpu.dimension_semantics<parallel>], iteration_bounds = array<i64: 1>, scalar_prefetch = 0 : i64, scratch_operands = 0 : i64, tpu.core_type = #tpu.core_type<tc>, window_params = [{pipeline_mode = #tpu.pipeline_mode<synchronous>, transform_indices = @transform_0, window_bounds = array<i64: 4, 8, 1024>}, {transform_indices = @transform_1, window_bounds = array<i64: 4, 1024, 128>}, {transform_indices = @transform_2, window_bounds = array<i64: 1, 128>}, {transform_indices = @transform_3, window_bounds = array<i64: 1, 128>}, {transform_indices = @transform_4, window_bounds = array<i64: 4, 8, 128>}]} {
    %c0 = arith.constant 0 : index
    %c0_0 = arith.constant 0 : index
    %c0_1 = arith.constant 0 : index
    %0 = vector.load %arg1[%c0, %c0_0, %c0_1] : memref<4x8x1024xbf16, #tpu.memory_space<vmem>>, vector<1x8x1024xbf16>
    %1 = vector.shape_cast %0 : vector<1x8x1024xbf16> to vector<8x1024xbf16>
    %c0_2 = arith.constant 0 : index
    %c0_3 = arith.constant 0 : index
    %c0_4 = arith.constant 0 : index
    %2 = vector.load %arg2[%c0_2, %c0_3, %c0_4] : memref<4x1024x128xbf16, #tpu.memory_space<vmem>>, vector<1x1024x128xbf16>
    %3 = vector.shape_cast %2 : vector<1x1024x128xbf16> to vector<1024x128xbf16>
    %cst = arith.constant dense<0.000000e+00> : vector<8x128xf32>
    %4 = tpu.matmul %1, %3, %cst {dimension_numbers = #tpu.dot_dimension_numbers<[1], [0], [0], [1], [0, 0, 1, 1], [], []>} : vector<8x1024xbf16>, vector<1024x128xbf16>, vector<8x128xf32> -> vector<8x128xf32>
    %c1 = arith.constant 1 : index
    %c0_5 = arith.constant 0 : index
    %c0_6 = arith.constant 0 : index
    %5 = vector.load %arg1[%c1, %c0_5, %c0_6] : memref<4x8x1024xbf16, #tpu.memory_space<vmem>>, vector<1x8x1024xbf16>
    %6 = vector.shape_cast %5 : vector<1x8x1024xbf16> to vector<8x1024xbf16>
    %c1_7 = arith.constant 1 : index
    %c0_8 = arith.constant 0 : index
    %c0_9 = arith.constant 0 : index
    %7 = vector.load %arg2[%c1_7, %c0_8, %c0_9] : memref<4x1024x128xbf16, #tpu.memory_space<vmem>>, vector<1x1024x128xbf16>
    %8 = vector.shape_cast %7 : vector<1x1024x128xbf16> to vector<1024x128xbf16>
    %cst_10 = arith.constant dense<0.000000e+00> : vector<8x128xf32>
    %9 = tpu.matmul %6, %8, %cst_10 {dimension_numbers = #tpu.dot_dimension_numbers<[1], [0], [0], [1], [0, 0, 1, 1], [], []>} : vector<8x1024xbf16>, vector<1024x128xbf16>, vector<8x128xf32> -> vector<8x128xf32>
    %c2 = arith.constant 2 : index
    %c0_11 = arith.constant 0 : index
    %c0_12 = arith.constant 0 : index
    %10 = vector.load %arg1[%c2, %c0_11, %c0_12] : memref<4x8x1024xbf16, #tpu.memory_space<vmem>>, vector<1x8x1024xbf16>
    %11 = vector.shape_cast %10 : vector<1x8x1024xbf16> to vector<8x1024xbf16>
    %c2_13 = arith.constant 2 : index
    %c0_14 = arith.constant 0 : index
    %c0_15 = arith.constant 0 : index
    %12 = vector.load %arg2[%c2_13, %c0_14, %c0_15] : memref<4x1024x128xbf16, #tpu.memory_space<vmem>>, vector<1x1024x128xbf16>
    %13 = vector.shape_cast %12 : vector<1x1024x128xbf16> to vector<1024x128xbf16>
    %cst_16 = arith.constant dense<0.000000e+00> : vector<8x128xf32>
    %14 = tpu.matmul %11, %13, %cst_16 {dimension_numbers = #tpu.dot_dimension_numbers<[1], [0], [0], [1], [0, 0, 1, 1], [], []>} : vector<8x1024xbf16>, vector<1024x128xbf16>, vector<8x128xf32> -> vector<8x128xf32>
    %c3 = arith.constant 3 : index
    %c0_17 = arith.constant 0 : index
    %c0_18 = arith.constant 0 : index
    %15 = vector.load %arg1[%c3, %c0_17, %c0_18] : memref<4x8x1024xbf16, #tpu.memory_space<vmem>>, vector<1x8x1024xbf16>
    %16 = vector.shape_cast %15 : vector<1x8x1024xbf16> to vector<8x1024xbf16>
    %c3_19 = arith.constant 3 : index
    %c0_20 = arith.constant 0 : index
    %c0_21 = arith.constant 0 : index
    %17 = vector.load %arg2[%c3_19, %c0_20, %c0_21] : memref<4x1024x128xbf16, #tpu.memory_space<vmem>>, vector<1x1024x128xbf16>
    %18 = vector.shape_cast %17 : vector<1x1024x128xbf16> to vector<1024x128xbf16>
    %cst_22 = arith.constant dense<0.000000e+00> : vector<8x128xf32>
    %19 = tpu.matmul %16, %18, %cst_22 {dimension_numbers = #tpu.dot_dimension_numbers<[1], [0], [0], [1], [0, 0, 1, 1], [], []>} : vector<8x1024xbf16>, vector<1024x128xbf16>, vector<8x128xf32> -> vector<8x128xf32>
    %20 = vector.shape_cast %4 : vector<8x128xf32> to vector<1x8x128xf32>
    %21 = vector.shape_cast %9 : vector<8x128xf32> to vector<1x8x128xf32>
    %22 = vector.shape_cast %14 : vector<8x128xf32> to vector<1x8x128xf32>
    %23 = vector.shape_cast %19 : vector<8x128xf32> to vector<1x8x128xf32>
    %24 = tpu.concatenate %20, %21, %22, %23 in 0 : vector<1x8x128xf32>, vector<1x8x128xf32>, vector<1x8x128xf32>, vector<1x8x128xf32> -> vector<4x8x128xf32>
    %cst_23 = arith.constant dense<0.000000e+00> : vector<128xf32>
    %25 = vector.multi_reduction <add>, %24, %cst_23 [0, 1] : vector<4x8x128xf32> to vector<128xf32>
    %26 = vector.shape_cast %25 : vector<128xf32> to vector<1x1x128xf32>
    %cst_24 = arith.constant 3.200000e+01 : f32
    %27 = vector.broadcast %cst_24 : f32 to vector<1x1x128xf32>
    %28 = arith.divf %26, %27 : vector<1x1x128xf32>
    %29 = vector.broadcast %28 : vector<1x1x128xf32> to vector<4x8x128xf32>
    %30 = arith.subf %24, %29 : vector<4x8x128xf32>
    %31 = arith.mulf %30, %30 : vector<4x8x128xf32>
    %cst_25 = arith.constant dense<0.000000e+00> : vector<128xf32>
    %32 = vector.multi_reduction <add>, %31, %cst_25 [0, 1] : vector<4x8x128xf32> to vector<128xf32>
    %33 = vector.shape_cast %32 : vector<128xf32> to vector<1x1x128xf32>
    %cst_26 = arith.constant 3.200000e+01 : f32
    %34 = vector.broadcast %cst_26 : f32 to vector<1x1x128xf32>
    %35 = arith.divf %33, %34 : vector<1x1x128xf32>
    %36 = vector.broadcast %28 : vector<1x1x128xf32> to vector<4x8x128xf32>
    %37 = arith.subf %24, %36 : vector<4x8x128xf32>
    %cst_27 = arith.constant 9.99999974E-6 : f32
    %38 = vector.broadcast %cst_27 : f32 to vector<1x1x128xf32>
    %39 = arith.addf %35, %38 : vector<1x1x128xf32>
    %40 = math.rsqrt %39 : vector<1x1x128xf32>
    %41 = vector.broadcast %40 : vector<1x1x128xf32> to vector<4x8x128xf32>
    %42 = arith.mulf %37, %41 : vector<4x8x128xf32>
    %c0_28 = arith.constant 0 : index
    %c0_29 = arith.constant 0 : index
    %43 = vector.load %arg3[%c0_28, %c0_29] : memref<1x128xf32, #tpu.memory_space<vmem>>, vector<1x128xf32>
    %44 = vector.shape_cast %43 : vector<1x128xf32> to vector<1x1x128xf32>
    %45 = vector.broadcast %44 : vector<1x1x128xf32> to vector<4x8x128xf32>
    %46 = arith.mulf %42, %45 : vector<4x8x128xf32>
    %c0_30 = arith.constant 0 : index
    %c0_31 = arith.constant 0 : index
    %47 = vector.load %arg4[%c0_30, %c0_31] : memref<1x128xf32, #tpu.memory_space<vmem>>, vector<1x128xf32>
    %48 = vector.shape_cast %47 : vector<1x128xf32> to vector<1x1x128xf32>
    %49 = vector.broadcast %48 : vector<1x1x128xf32> to vector<4x8x128xf32>
    %50 = arith.addf %46, %49 : vector<4x8x128xf32>
    %cst_32 = arith.constant 0.000000e+00 : f32
    %51 = vector.broadcast %cst_32 : f32 to vector<4x8x128xf32>
    %52 = arith.maximumf %50, %51 : vector<4x8x128xf32>
    %c0_33 = arith.constant 0 : index
    %c0_34 = arith.constant 0 : index
    %c0_35 = arith.constant 0 : index
    %53 = vector.load %arg5[%c0_33, %c0_34, %c0_35] : memref<4x8x128xf32, #tpu.memory_space<vmem>>, vector<4x8x128xf32>
    tpu.vector_store %arg5[%c0_33, %c0_34, %c0_35], %52 {strides = array<i32>} : memref<4x8x128xf32, #tpu.memory_space<vmem>>, vector<4x8x128xf32>,
    return
  }
  func.func @transform_0(%arg0: i32) -> (i32, i32, i32) {
    %c0_i32 = arith.constant 0 : i32
    %c0_i32_0 = arith.constant 0 : i32
    %c0_i32_1 = arith.constant 0 : i32
    %c0_i32_2 = arith.constant 0 : i32
    return %c0_i32, %c0_i32_0, %c0_i32_1 : i32, i32, i32
  }
  func.func @transform_1(%arg0: i32) -> (i32, i32, i32) {
    %c0_i32 = arith.constant 0 : i32
    %c0_i32_0 = arith.constant 0 : i32
    %c0_i32_1 = arith.constant 0 : i32
    return %c0_i32, %c0_i32_0, %arg0 : i32, i32, i32
  }
  func.func @transform_2(%arg0: i32) -> (i32, i32) {
    %c0_i32 = arith.constant 0 : i32
    %c0_i32_0 = arith.constant 0 : i32
    return %c0_i32, %arg0 : i32, i32
  }
  func.func @transform_3(%arg0: i32) -> (i32, i32) {
    %c0_i32 = arith.constant 0 : i32
    %c0_i32_0 = arith.constant 0 : i32
    return %c0_i32, %arg0 : i32, i32
  }
  func.func @transform_4(%arg0: i32) -> (i32, i32, i32) {
    %c0_i32 = arith.constant 0 : i32
    %c0_i32_0 = arith.constant 0 : i32
    %c0_i32_1 = arith.constant 0 : i32
    return %c0_i32, %c0_i32_0, %arg0 : i32, i32, i32
  }
}

module attributes {stable_mosaic.version = 11 : i64} {
  func.func @_deconv_bn_act_kernel(%arg0: i32, %arg1: memref<4x32x512xbf16, #tpu.memory_space<vmem>>, %arg2: memref<4x512x64xbf16, #tpu.memory_space<vmem>>, %arg3: memref<1x64xf32, #tpu.memory_space<vmem>>, %arg4: memref<1x64xf32, #tpu.memory_space<vmem>>, %arg5: memref<4x32x64xf32, #tpu.memory_space<vmem>>) attributes {dimension_semantics = [#tpu.dimension_semantics<parallel>], iteration_bounds = array<i64: 1>, scalar_prefetch = 0 : i64, scratch_operands = 0 : i64, tpu.core_type = #tpu.core_type<tc>, window_params = [{pipeline_mode = #tpu.pipeline_mode<synchronous>, transform_indices = @transform_0, window_bounds = array<i64: 4, 32, 512>}, {transform_indices = @transform_1, window_bounds = array<i64: 4, 512, 64>}, {transform_indices = @transform_2, window_bounds = array<i64: 1, 64>}, {transform_indices = @transform_3, window_bounds = array<i64: 1, 64>}, {transform_indices = @transform_4, window_bounds = array<i64: 4, 32, 64>}]} {
    %c0 = arith.constant 0 : index
    %c0_0 = arith.constant 0 : index
    %c0_1 = arith.constant 0 : index
    %0 = vector.load %arg1[%c0, %c0_0, %c0_1] : memref<4x32x512xbf16, #tpu.memory_space<vmem>>, vector<1x32x512xbf16>
    %1 = vector.shape_cast %0 : vector<1x32x512xbf16> to vector<32x512xbf16>
    %c0_2 = arith.constant 0 : index
    %c0_3 = arith.constant 0 : index
    %c0_4 = arith.constant 0 : index
    %2 = vector.load %arg2[%c0_2, %c0_3, %c0_4] : memref<4x512x64xbf16, #tpu.memory_space<vmem>>, vector<1x512x64xbf16>
    %3 = vector.shape_cast %2 : vector<1x512x64xbf16> to vector<512x64xbf16>
    %cst = arith.constant dense<0.000000e+00> : vector<32x64xf32>
    %4 = tpu.matmul %1, %3, %cst {dimension_numbers = #tpu.dot_dimension_numbers<[1], [0], [0], [1], [0, 0, 1, 1], [], []>} : vector<32x512xbf16>, vector<512x64xbf16>, vector<32x64xf32> -> vector<32x64xf32>
    %c1 = arith.constant 1 : index
    %c0_5 = arith.constant 0 : index
    %c0_6 = arith.constant 0 : index
    %5 = vector.load %arg1[%c1, %c0_5, %c0_6] : memref<4x32x512xbf16, #tpu.memory_space<vmem>>, vector<1x32x512xbf16>
    %6 = vector.shape_cast %5 : vector<1x32x512xbf16> to vector<32x512xbf16>
    %c1_7 = arith.constant 1 : index
    %c0_8 = arith.constant 0 : index
    %c0_9 = arith.constant 0 : index
    %7 = vector.load %arg2[%c1_7, %c0_8, %c0_9] : memref<4x512x64xbf16, #tpu.memory_space<vmem>>, vector<1x512x64xbf16>
    %8 = vector.shape_cast %7 : vector<1x512x64xbf16> to vector<512x64xbf16>
    %cst_10 = arith.constant dense<0.000000e+00> : vector<32x64xf32>
    %9 = tpu.matmul %6, %8, %cst_10 {dimension_numbers = #tpu.dot_dimension_numbers<[1], [0], [0], [1], [0, 0, 1, 1], [], []>} : vector<32x512xbf16>, vector<512x64xbf16>, vector<32x64xf32> -> vector<32x64xf32>
    %c2 = arith.constant 2 : index
    %c0_11 = arith.constant 0 : index
    %c0_12 = arith.constant 0 : index
    %10 = vector.load %arg1[%c2, %c0_11, %c0_12] : memref<4x32x512xbf16, #tpu.memory_space<vmem>>, vector<1x32x512xbf16>
    %11 = vector.shape_cast %10 : vector<1x32x512xbf16> to vector<32x512xbf16>
    %c2_13 = arith.constant 2 : index
    %c0_14 = arith.constant 0 : index
    %c0_15 = arith.constant 0 : index
    %12 = vector.load %arg2[%c2_13, %c0_14, %c0_15] : memref<4x512x64xbf16, #tpu.memory_space<vmem>>, vector<1x512x64xbf16>
    %13 = vector.shape_cast %12 : vector<1x512x64xbf16> to vector<512x64xbf16>
    %cst_16 = arith.constant dense<0.000000e+00> : vector<32x64xf32>
    %14 = tpu.matmul %11, %13, %cst_16 {dimension_numbers = #tpu.dot_dimension_numbers<[1], [0], [0], [1], [0, 0, 1, 1], [], []>} : vector<32x512xbf16>, vector<512x64xbf16>, vector<32x64xf32> -> vector<32x64xf32>
    %c3 = arith.constant 3 : index
    %c0_17 = arith.constant 0 : index
    %c0_18 = arith.constant 0 : index
    %15 = vector.load %arg1[%c3, %c0_17, %c0_18] : memref<4x32x512xbf16, #tpu.memory_space<vmem>>, vector<1x32x512xbf16>
    %16 = vector.shape_cast %15 : vector<1x32x512xbf16> to vector<32x512xbf16>
    %c3_19 = arith.constant 3 : index
    %c0_20 = arith.constant 0 : index
    %c0_21 = arith.constant 0 : index
    %17 = vector.load %arg2[%c3_19, %c0_20, %c0_21] : memref<4x512x64xbf16, #tpu.memory_space<vmem>>, vector<1x512x64xbf16>
    %18 = vector.shape_cast %17 : vector<1x512x64xbf16> to vector<512x64xbf16>
    %cst_22 = arith.constant dense<0.000000e+00> : vector<32x64xf32>
    %19 = tpu.matmul %16, %18, %cst_22 {dimension_numbers = #tpu.dot_dimension_numbers<[1], [0], [0], [1], [0, 0, 1, 1], [], []>} : vector<32x512xbf16>, vector<512x64xbf16>, vector<32x64xf32> -> vector<32x64xf32>
    %20 = vector.shape_cast %4 : vector<32x64xf32> to vector<1x32x64xf32>
    %21 = vector.shape_cast %9 : vector<32x64xf32> to vector<1x32x64xf32>
    %22 = vector.shape_cast %14 : vector<32x64xf32> to vector<1x32x64xf32>
    %23 = vector.shape_cast %19 : vector<32x64xf32> to vector<1x32x64xf32>
    %24 = tpu.concatenate %20, %21, %22, %23 in 0 : vector<1x32x64xf32>, vector<1x32x64xf32>, vector<1x32x64xf32>, vector<1x32x64xf32> -> vector<4x32x64xf32>
    %cst_23 = arith.constant dense<0.000000e+00> : vector<64xf32>
    %25 = vector.multi_reduction <add>, %24, %cst_23 [0, 1] : vector<4x32x64xf32> to vector<64xf32>
    %26 = vector.shape_cast %25 : vector<64xf32> to vector<1x1x64xf32>
    %cst_24 = arith.constant 1.280000e+02 : f32
    %27 = vector.broadcast %cst_24 : f32 to vector<1x1x64xf32>
    %28 = arith.divf %26, %27 : vector<1x1x64xf32>
    %29 = vector.broadcast %28 : vector<1x1x64xf32> to vector<4x32x64xf32>
    %30 = arith.subf %24, %29 : vector<4x32x64xf32>
    %31 = arith.mulf %30, %30 : vector<4x32x64xf32>
    %cst_25 = arith.constant dense<0.000000e+00> : vector<64xf32>
    %32 = vector.multi_reduction <add>, %31, %cst_25 [0, 1] : vector<4x32x64xf32> to vector<64xf32>
    %33 = vector.shape_cast %32 : vector<64xf32> to vector<1x1x64xf32>
    %cst_26 = arith.constant 1.280000e+02 : f32
    %34 = vector.broadcast %cst_26 : f32 to vector<1x1x64xf32>
    %35 = arith.divf %33, %34 : vector<1x1x64xf32>
    %36 = vector.broadcast %28 : vector<1x1x64xf32> to vector<4x32x64xf32>
    %37 = arith.subf %24, %36 : vector<4x32x64xf32>
    %cst_27 = arith.constant 9.99999974E-6 : f32
    %38 = vector.broadcast %cst_27 : f32 to vector<1x1x64xf32>
    %39 = arith.addf %35, %38 : vector<1x1x64xf32>
    %40 = math.rsqrt %39 : vector<1x1x64xf32>
    %41 = vector.broadcast %40 : vector<1x1x64xf32> to vector<4x32x64xf32>
    %42 = arith.mulf %37, %41 : vector<4x32x64xf32>
    %c0_28 = arith.constant 0 : index
    %c0_29 = arith.constant 0 : index
    %43 = vector.load %arg3[%c0_28, %c0_29] : memref<1x64xf32, #tpu.memory_space<vmem>>, vector<1x64xf32>
    %44 = vector.shape_cast %43 : vector<1x64xf32> to vector<1x1x64xf32>
    %45 = vector.broadcast %44 : vector<1x1x64xf32> to vector<4x32x64xf32>
    %46 = arith.mulf %42, %45 : vector<4x32x64xf32>
    %c0_30 = arith.constant 0 : index
    %c0_31 = arith.constant 0 : index
    %47 = vector.load %arg4[%c0_30, %c0_31] : memref<1x64xf32, #tpu.memory_space<vmem>>, vector<1x64xf32>
    %48 = vector.shape_cast %47 : vector<1x64xf32> to vector<1x1x64xf32>
    %49 = vector.broadcast %48 : vector<1x1x64xf32> to vector<4x32x64xf32>
    %50 = arith.addf %46, %49 : vector<4x32x64xf32>
    %cst_32 = arith.constant 0.000000e+00 : f32
    %51 = vector.broadcast %cst_32 : f32 to vector<4x32x64xf32>
    %52 = arith.maximumf %50, %51 : vector<4x32x64xf32>
    %c0_33 = arith.constant 0 : index
    %c0_34 = arith.constant 0 : index
    %c0_35 = arith.constant 0 : index
    %53 = vector.load %arg5[%c0_33, %c0_34, %c0_35] : memref<4x32x64xf32, #tpu.memory_space<vmem>>, vector<4x32x64xf32>
    tpu.vector_store %arg5[%c0_33, %c0_34, %c0_35], %52 {strides = array<i32>} : memref<4x32x64xf32, #tpu.memory_space<vmem>>, vector<4x32x64xf32>,
    return
  }
  func.func @transform_0(%arg0: i32) -> (i32, i32, i32) {
    %c0_i32 = arith.constant 0 : i32
    %c0_i32_0 = arith.constant 0 : i32
    %c0_i32_1 = arith.constant 0 : i32
    %c0_i32_2 = arith.constant 0 : i32
    return %c0_i32, %c0_i32_0, %c0_i32_1 : i32, i32, i32
  }
  func.func @transform_1(%arg0: i32) -> (i32, i32, i32) {
    %c0_i32 = arith.constant 0 : i32
    %c0_i32_0 = arith.constant 0 : i32
    %c0_i32_1 = arith.constant 0 : i32
    return %c0_i32, %c0_i32_0, %arg0 : i32, i32, i32
  }
  func.func @transform_2(%arg0: i32) -> (i32, i32) {
    %c0_i32 = arith.constant 0 : i32
    %c0_i32_0 = arith.constant 0 : i32
    return %c0_i32, %arg0 : i32, i32
  }
  func.func @transform_3(%arg0: i32) -> (i32, i32) {
    %c0_i32 = arith.constant 0 : i32
    %c0_i32_0 = arith.constant 0 : i32
    return %c0_i32, %arg0 : i32, i32
  }
  func.func @transform_4(%arg0: i32) -> (i32, i32, i32) {
    %c0_i32 = arith.constant 0 : i32
    %c0_i32_0 = arith.constant 0 : i32
    %c0_i32_1 = arith.constant 0 : i32
    return %c0_i32, %c0_i32_0, %arg0 : i32, i32, i32
  }
}

module attributes {stable_mosaic.version = 11 : i64} {
  func.func @_deconv_bn_act_kernel(%arg0: memref<4x256x128xbf16, #tpu.memory_space<vmem>>, %arg1: memref<4x3x256xbf16, #tpu.memory_space<vmem>>, %arg2: memref<3x1xf32, #tpu.memory_space<vmem>>, %arg3: memref<3x1xf32, #tpu.memory_space<vmem>>, %arg4: memref<4x3x128xf32, #tpu.memory_space<vmem>>) attributes {dimension_semantics = [], scalar_prefetch = 0 : i64, scratch_operands = 0 : i64, tpu.core_type = #tpu.core_type<tc>} {
    %c0 = arith.constant 0 : index
    %c0_0 = arith.constant 0 : index
    %c0_1 = arith.constant 0 : index
    %0 = vector.load %arg1[%c0, %c0_0, %c0_1] : memref<4x3x256xbf16, #tpu.memory_space<vmem>>, vector<1x3x256xbf16>
    %1 = vector.shape_cast %0 : vector<1x3x256xbf16> to vector<3x256xbf16>
    %c0_2 = arith.constant 0 : index
    %c0_3 = arith.constant 0 : index
    %c0_4 = arith.constant 0 : index
    %2 = vector.load %arg0[%c0_2, %c0_3, %c0_4] : memref<4x256x128xbf16, #tpu.memory_space<vmem>>, vector<1x256x128xbf16>
    %3 = vector.shape_cast %2 : vector<1x256x128xbf16> to vector<256x128xbf16>
    %cst = arith.constant dense<0.000000e+00> : vector<3x128xf32>
    %4 = tpu.matmul %1, %3, %cst {dimension_numbers = #tpu.dot_dimension_numbers<[1], [0], [0], [1], [0, 0, 1, 1], [], []>} : vector<3x256xbf16>, vector<256x128xbf16>, vector<3x128xf32> -> vector<3x128xf32>
    %c1 = arith.constant 1 : index
    %c0_5 = arith.constant 0 : index
    %c0_6 = arith.constant 0 : index
    %5 = vector.load %arg1[%c1, %c0_5, %c0_6] : memref<4x3x256xbf16, #tpu.memory_space<vmem>>, vector<1x3x256xbf16>
    %6 = vector.shape_cast %5 : vector<1x3x256xbf16> to vector<3x256xbf16>
    %c1_7 = arith.constant 1 : index
    %c0_8 = arith.constant 0 : index
    %c0_9 = arith.constant 0 : index
    %7 = vector.load %arg0[%c1_7, %c0_8, %c0_9] : memref<4x256x128xbf16, #tpu.memory_space<vmem>>, vector<1x256x128xbf16>
    %8 = vector.shape_cast %7 : vector<1x256x128xbf16> to vector<256x128xbf16>
    %cst_10 = arith.constant dense<0.000000e+00> : vector<3x128xf32>
    %9 = tpu.matmul %6, %8, %cst_10 {dimension_numbers = #tpu.dot_dimension_numbers<[1], [0], [0], [1], [0, 0, 1, 1], [], []>} : vector<3x256xbf16>, vector<256x128xbf16>, vector<3x128xf32> -> vector<3x128xf32>
    %c2 = arith.constant 2 : index
    %c0_11 = arith.constant 0 : index
    %c0_12 = arith.constant 0 : index
    %10 = vector.load %arg1[%c2, %c0_11, %c0_12] : memref<4x3x256xbf16, #tpu.memory_space<vmem>>, vector<1x3x256xbf16>
    %11 = vector.shape_cast %10 : vector<1x3x256xbf16> to vector<3x256xbf16>
    %c2_13 = arith.constant 2 : index
    %c0_14 = arith.constant 0 : index
    %c0_15 = arith.constant 0 : index
    %12 = vector.load %arg0[%c2_13, %c0_14, %c0_15] : memref<4x256x128xbf16, #tpu.memory_space<vmem>>, vector<1x256x128xbf16>
    %13 = vector.shape_cast %12 : vector<1x256x128xbf16> to vector<256x128xbf16>
    %cst_16 = arith.constant dense<0.000000e+00> : vector<3x128xf32>
    %14 = tpu.matmul %11, %13, %cst_16 {dimension_numbers = #tpu.dot_dimension_numbers<[1], [0], [0], [1], [0, 0, 1, 1], [], []>} : vector<3x256xbf16>, vector<256x128xbf16>, vector<3x128xf32> -> vector<3x128xf32>
    %c3 = arith.constant 3 : index
    %c0_17 = arith.constant 0 : index
    %c0_18 = arith.constant 0 : index
    %15 = vector.load %arg1[%c3, %c0_17, %c0_18] : memref<4x3x256xbf16, #tpu.memory_space<vmem>>, vector<1x3x256xbf16>
    %16 = vector.shape_cast %15 : vector<1x3x256xbf16> to vector<3x256xbf16>
    %c3_19 = arith.constant 3 : index
    %c0_20 = arith.constant 0 : index
    %c0_21 = arith.constant 0 : index
    %17 = vector.load %arg0[%c3_19, %c0_20, %c0_21] : memref<4x256x128xbf16, #tpu.memory_space<vmem>>, vector<1x256x128xbf16>
    %18 = vector.shape_cast %17 : vector<1x256x128xbf16> to vector<256x128xbf16>
    %cst_22 = arith.constant dense<0.000000e+00> : vector<3x128xf32>
    %19 = tpu.matmul %16, %18, %cst_22 {dimension_numbers = #tpu.dot_dimension_numbers<[1], [0], [0], [1], [0, 0, 1, 1], [], []>} : vector<3x256xbf16>, vector<256x128xbf16>, vector<3x128xf32> -> vector<3x128xf32>
    %20 = vector.shape_cast %4 : vector<3x128xf32> to vector<1x3x128xf32>
    %21 = vector.shape_cast %9 : vector<3x128xf32> to vector<1x3x128xf32>
    %22 = vector.shape_cast %14 : vector<3x128xf32> to vector<1x3x128xf32>
    %23 = vector.shape_cast %19 : vector<3x128xf32> to vector<1x3x128xf32>
    %24 = tpu.concatenate %20, %21, %22, %23 in 0 : vector<1x3x128xf32>, vector<1x3x128xf32>, vector<1x3x128xf32>, vector<1x3x128xf32> -> vector<4x3x128xf32>
    %cst_23 = arith.constant dense<0.000000e+00> : vector<3xf32>
    %25 = vector.multi_reduction <add>, %24, %cst_23 [0, 2] : vector<4x3x128xf32> to vector<3xf32>
    %26 = vector.shape_cast %25 : vector<3xf32> to vector<1x3x1xf32>
    %cst_24 = arith.constant 5.120000e+02 : f32
    %27 = vector.broadcast %cst_24 : f32 to vector<1x3x1xf32>
    %28 = arith.divf %26, %27 : vector<1x3x1xf32>
    %29 = vector.broadcast %28 : vector<1x3x1xf32> to vector<4x3x128xf32>
    %30 = arith.subf %24, %29 : vector<4x3x128xf32>
    %31 = arith.mulf %30, %30 : vector<4x3x128xf32>
    %cst_25 = arith.constant dense<0.000000e+00> : vector<3xf32>
    %32 = vector.multi_reduction <add>, %31, %cst_25 [0, 2] : vector<4x3x128xf32> to vector<3xf32>
    %33 = vector.shape_cast %32 : vector<3xf32> to vector<1x3x1xf32>
    %cst_26 = arith.constant 5.120000e+02 : f32
    %34 = vector.broadcast %cst_26 : f32 to vector<1x3x1xf32>
    %35 = arith.divf %33, %34 : vector<1x3x1xf32>
    %36 = vector.broadcast %28 : vector<1x3x1xf32> to vector<4x3x128xf32>
    %37 = arith.subf %24, %36 : vector<4x3x128xf32>
    %cst_27 = arith.constant 9.99999974E-6 : f32
    %38 = vector.broadcast %cst_27 : f32 to vector<1x3x1xf32>
    %39 = arith.addf %35, %38 : vector<1x3x1xf32>
    %40 = math.rsqrt %39 : vector<1x3x1xf32>
    %41 = vector.broadcast %40 : vector<1x3x1xf32> to vector<4x3x128xf32>
    %42 = arith.mulf %37, %41 : vector<4x3x128xf32>
    %c0_28 = arith.constant 0 : index
    %c0_29 = arith.constant 0 : index
    %43 = vector.load %arg2[%c0_28, %c0_29] : memref<3x1xf32, #tpu.memory_space<vmem>>, vector<3x1xf32>
    %44 = vector.shape_cast %43 : vector<3x1xf32> to vector<1x3x1xf32>
    %45 = vector.broadcast %44 : vector<1x3x1xf32> to vector<4x3x128xf32>
    %46 = arith.mulf %42, %45 : vector<4x3x128xf32>
    %c0_30 = arith.constant 0 : index
    %c0_31 = arith.constant 0 : index
    %47 = vector.load %arg3[%c0_30, %c0_31] : memref<3x1xf32, #tpu.memory_space<vmem>>, vector<3x1xf32>
    %48 = vector.shape_cast %47 : vector<3x1xf32> to vector<1x3x1xf32>
    %49 = vector.broadcast %48 : vector<1x3x1xf32> to vector<4x3x128xf32>
    %50 = arith.addf %46, %49 : vector<4x3x128xf32>
    %51 = math.tanh %50 : vector<4x3x128xf32>
    %c0_32 = arith.constant 0 : index
    %c0_33 = arith.constant 0 : index
    %c0_34 = arith.constant 0 : index
    %52 = vector.load %arg4[%c0_32, %c0_33, %c0_34] : memref<4x3x128xf32, #tpu.memory_space<vmem>>, vector<4x3x128xf32>
    tpu.vector_store %arg4[%c0_32, %c0_33, %c0_34], %51 {strides = array<i32>} : memref<4x3x128xf32, #tpu.memory_space<vmem>>, vector<4x3x128xf32>,
    return
  }
}

</mosaic_0001>

<llo_original>
// kernel: _lambda_.4
$region0: #{_lambda_.4}
  #allocation0 [shape = 'u32[]', space=smem, size = 0x4, offset = 0x4, fixed_abs, tag = 'smem constant byte address 0x4 - core index']
  #allocation1 [shape = 'u32[144,128]{1,0:T(1,128)}', space=vmem, size = 0x12000, scoped, tag = 'internal scratch']
  %s0 = inlined_call_operand.vmem [shape: f32[2,32], index: 0, kind: input, shape index: {}]
  %s1 = inlined_call_operand.vmem [shape: f32[32,512], index: 1, kind: input, shape index: {}]
  %s2 = inlined_call_operand.vmem [shape: f32[1,512], index: 2, kind: input, shape index: {}]
  %s3 = inlined_call_operand.vmem [shape: bf16[4,512,256], index: 3, kind: input, shape index: {}]
  %s4 = inlined_call_operand.vmem [shape: f32[1,256], index: 4, kind: input, shape index: {}]
  %s5 = inlined_call_operand.vmem [shape: f32[1,256], index: 5, kind: input, shape index: {}]
  %s6 = inlined_call_operand.vmem [shape: f32[4,2,256], index: 6, kind: output, shape index: {}]
  %s7 = sld [smem:[#allocation0]]
  $region34: #{_lambda_.4} parent=0
    _
  %s9 = ssub.s32 1, %s7
  %s10 = scalar_select 0, %s9, %s7
  // Predicated region
  $region2: #{_lambda_.4} parent=0 // pred_check
    _
  $region3: #{_lambda_.4} parent=0 // pred_check_branch
    %12 = sbr.rel (0) target = $region5
  $region4: #{_lambda_.4} parent=0 // pred_region
    _
  $region5: #{_lambda_.4} parent=0 // pred_fallthru
    _
  // Predicated region
  $region6: #{_lambda_.4} parent=0 // pred_check
    _
  $region7: #{_lambda_.4} parent=0 // pred_check_branch
    %14 = sbr.rel (0) target = $region9
  $region8: #{_lambda_.4} parent=0 // pred_region
    _
  $region9: #{_lambda_.4} parent=0 // pred_fallthru
    _
  // Predicated region
  $region10: #{_lambda_.4} parent=0 // pred_check
    _
  $region11: #{_lambda_.4} parent=0 // pred_check_branch
    %16 = sbr.rel (0) target = $region13
  $region12: #{_lambda_.4} parent=0 // pred_region
    _
  $region13: #{_lambda_.4} parent=0 // pred_fallthru
    _
  // Predicated region
  $region14: #{_lambda_.4} parent=0 // pred_check
    _
  $region15: #{_lambda_.4} parent=0 // pred_check_branch
    %18 = sbr.rel (0) target = $region17
  $region16: #{_lambda_.4} parent=0 // pred_region
    _
  $region17: #{_lambda_.4} parent=0 // pred_fallthru
    _
  // Predicated region
  $region18: #{_lambda_.4} parent=0 // pred_check
    _
  $region19: #{_lambda_.4} parent=0 // pred_check_branch
    %20 = sbr.rel (0) target = $region21
  $region20: #{_lambda_.4} parent=0 // pred_region
    _
  $region21: #{_lambda_.4} parent=0 // pred_fallthru
    _
  // Predicated region
  $region22: #{_lambda_.4} parent=0 // pred_check
    _
  $region23: #{_lambda_.4} parent=0 // pred_check_branch
    %22 = sbr.rel (0) target = $region25
  $region24: #{_lambda_.4} parent=0 // pred_region
    _
  $region25: #{_lambda_.4} parent=0 // pred_fallthru
    _
  %v23 = vld [vmem:[%s0] sm:$0x3]
  %v24 = vld [vmem:[%s1] sm:$0xff]
  %v25 = vld [vmem:[%s1 + $0x8] sm:$0xff]
  %v26 = vld [vmem:[%s1 + $0x10] sm:$0xff]
  %v27 = vld [vmem:[%s1 + $0x18] sm:$0xff]
  %v28 = vld [vmem:[%s1 + $0x20] sm:$0xff]
  %v29 = vld [vmem:[%s1 + $0x28] sm:$0xff]
  %v30 = vld [vmem:[%s1 + $0x30] sm:$0xff]
  %v31 = vld [vmem:[%s1 + $0x38] sm:$0xff]
  %v32 = vld [vmem:[%s1 + $0x40] sm:$0xff]
  %v33 = vld [vmem:[%s1 + $0x48] sm:$0xff]
  %v34 = vld [vmem:[%s1 + $0x50] sm:$0xff]
  %v35 = vld [vmem:[%s1 + $0x58] sm:$0xff]
  %v36 = vld [vmem:[%s1 + $0x60] sm:$0xff]
  %v37 = vld [vmem:[%s1 + $0x68] sm:$0xff]
  %v38 = vld [vmem:[%s1 + $0x70] sm:$0xff]
  %v39 = vld [vmem:[%s1 + $0x78] sm:$0xff]
  %v40 = vld [vmem:[%s2] sm:$0xf]
  %v42 = vlaneseq
  %v43 = vshrl.u32 %v42, 7
  %v44 = vsub.s32 0, %v43
  %v45 = vrot.slane %v40, %v44
  %v46 = vlaneseq
  %v47 = vshrl.u32 %v46, 7
  %v48 = vsub.s32 1, %v47
  %v49 = vrot.slane %v40, %v48
  %v50 = vlaneseq
  %v51 = vshrl.u32 %v50, 7
  %v52 = vsub.s32 2, %v51
  %v53 = vrot.slane %v40, %v52
  %v54 = vlaneseq
  %v55 = vshrl.u32 %v54, 7
  %v56 = vsub.s32 3, %v55
  %v57 = vrot.slane %v40, %v56
  %vm62 = vcmask 261120
  %v64 = vsel %vm62, %v23, 0
  %66 = vmatprep.subr.mxu0 %v25
  %67 = vmatpush1.msra.mxu0 %v24
  %68 = vmatprep.subr.mxu0 %v29
  %69 = vmatpush1.msra.mxu0 %v28
  %70 = vmatprep.subr.mxu0 %v33
  %71 = vmatpush1.msra.mxu0 %v32
  %72 = vmatprep.subr.mxu0 %v37
  %73 = vmatpush1.msra.mxu0 %v36
  %74 = vmatprep.subr.mxu0 0.0
  %75 = vmatpush1.msra.mxu0 0.0
  %76 = vmatprep.subr.mxu0 0.0
  %77 = vmatpush1.msra.mxu0 0.0
  %78 = vmatprep.subr.mxu0 0.0
  %79 = vmatpush1.msra.mxu0 0.0
  %80 = vmatprep.subr.mxu0 0.0
  %81 = vmatpush1.msra.mxu0 0.0
  %82 = vmatprep.subr.mxu0 0.0
  %83 = vmatpush1.msra.mxu0 0.0
  %84 = vmatprep.subr.mxu0 0.0
  %85 = vmatpush1.msra.mxu0 0.0
  %86 = vmatprep.subr.mxu0 0.0
  %87 = vmatpush1.msra.mxu0 0.0
  %88 = vmatprep.subr.mxu0 0.0
  %89 = vmatpush1.msra.mxu0 0.0
  %90 = vmatprep.subr.mxu0 0.0
  %91 = vmatpush1.msra.mxu0 0.0
  %92 = vmatprep.subr.mxu0 0.0
  %93 = vmatpush1.msra.mxu0 0.0
  %94 = vmatprep.subr.mxu0 0.0
  %95 = vmatpush1.msra.mxu0 0.0
  %96 = vmatprep.subr.mxu0 0.0
  %97 = vmatpush1.msra.mxu0 0.0
  %98 = vmatprep.subr.mxu0 0.0
  %99 = vmatpush1.msra.mxu0 0.0
  %100 = vmatprep.subr.mxu0 0.0
  %101 = vmatpush1.msra.mxu0 0.0
  %102 = vmatprep.subr.mxu0 0.0
  %103 = vmatpush1.msra.mxu0 0.0
  %104 = vmatprep.subr.mxu0 0.0
  %105 = vmatpush1.msra.mxu0 0.0
  %106 = vmatprep.subr.mxu0 0.0
  %107 = vmatpush1.msra.mxu0 0.0
  %108 = vmatprep.subr.mxu0 0.0
  %109 = vmatpush1.msra.mxu0 0.0
  %110 = vmatprep.subr.mxu0 0.0
  %111 = vmatpush1.msra.mxu0 0.0
  %112 = vmatprep.subr.mxu0 0.0
  %113 = vmatpush1.msra.mxu0 0.0
  %114 = vmatprep.subr.mxu0 0.0
  %115 = vmatpush1.msra.mxu0 0.0
  %116 = vmatprep.subr.mxu0 0.0
  %117 = vmatpush1.msra.mxu0 0.0
  %118 = vmatprep.subr.mxu0 0.0
  %119 = vmatpush1.msra.mxu0 0.0
  %120 = vmatprep.subr.mxu0 0.0
  %121 = vmatpush1.msra.mxu0 0.0
  %122 = vmatprep.subr.mxu0 0.0
  %123 = vmatpush1.msra.mxu0 0.0
  %124 = vmatprep.subr.mxu0 0.0
  %125 = vmatpush1.msra.mxu0 0.0
  %126 = vmatprep.subr.mxu0 0.0
  %127 = vmatpush1.msra.mxu0 0.0
  %128 = vmatprep.subr.mxu0 0.0
  %129 = vmatpush1.msra.mxu0 0.0
  %130 = vmatprep.mubr.f32.mxu0 0.0
  %131 = vmatmul.mubr.f32.gmra.mrb[0].mxu0 %v64
  %v132 = vpop.f32.mrb[0].mxu0
  %v133 = vadd.f32 %v45, %v132
  %v134 = vpop.f32.mrb[0].mxu0
  %v135 = vadd.f32 %v49, %v134
  %136 = vdwg.mxu0
  %137 = vmatprep.subr.mxu0 %v27
  %138 = vmatpush1.msra.mxu0 %v26
  %139 = vmatprep.subr.mxu0 %v31
  %140 = vmatpush1.msra.mxu0 %v30
  %141 = vmatprep.subr.mxu0 %v35
  %142 = vmatpush1.msra.mxu0 %v34
  %143 = vmatprep.subr.mxu0 %v39
  %144 = vmatpush1.msra.mxu0 %v38
  %145 = vmatprep.subr.mxu0 0.0
  %146 = vmatpush1.msra.mxu0 0.0
  %147 = vmatprep.subr.mxu0 0.0
  %148 = vmatpush1.msra.mxu0 0.0
  %149 = vmatprep.subr.mxu0 0.0
  %150 = vmatpush1.msra.mxu0 0.0
  %151 = vmatprep.subr.mxu0 0.0
  %152 = vmatpush1.msra.mxu0 0.0
  %153 = vmatprep.subr.mxu0 0.0
  %154 = vmatpush1.msra.mxu0 0.0
  %155 = vmatprep.subr.mxu0 0.0
  %156 = vmatpush1.msra.mxu0 0.0
  %157 = vmatprep.subr.mxu0 0.0
  %158 = vmatpush1.msra.mxu0 0.0
  %159 = vmatprep.subr.mxu0 0.0
  %160 = vmatpush1.msra.mxu0 0.0
  %161 = vmatprep.subr.mxu0 0.0
  %162 = vmatpush1.msra.mxu0 0.0
  %163 = vmatprep.subr.mxu0 0.0
  %164 = vmatpush1.msra.mxu0 0.0
  %165 = vmatprep.subr.mxu0 0.0
  %166 = vmatpush1.msra.mxu0 0.0
  %167 = vmatprep.subr.mxu0 0.0
  %168 = vmatpush1.msra.mxu0 0.0
  %169 = vmatprep.subr.mxu0 0.0
  %170 = vmatpush1.msra.mxu0 0.0
  %171 = vmatprep.subr.mxu0 0.0
  %172 = vmatpush1.msra.mxu0 0.0
  %173 = vmatprep.subr.mxu0 0.0
  %174 = vmatpush1.msra.mxu0 0.0
  %175 = vmatprep.subr.mxu0 0.0
  %176 = vmatpush1.msra.mxu0 0.0
  %177 = vmatprep.subr.mxu0 0.0
  %178 = vmatpush1.msra.mxu0 0.0
  %179 = vmatprep.subr.mxu0 0.0
  %180 = vmatpush1.msra.mxu0 0.0
  %181 = vmatprep.subr.mxu0 0.0
  %182 = vmatpush1.msra.mxu0 0.0
  %183 = vmatprep.subr.mxu0 0.0
  %184 = vmatpush1.msra.mxu0 0.0
  %185 = vmatprep.subr.mxu0 0.0
  %186 = vmatpush1.msra.mxu0 0.0
  %187 = vmatprep.subr.mxu0 0.0
  %188 = vmatpush1.msra.mxu0 0.0
  %189 = vmatprep.subr.mxu0 0.0
  %190 = vmatpush1.msra.mxu0 0.0
  %191 = vmatprep.subr.mxu0 0.0
  %192 = vmatpush1.msra.mxu0 0.0
  %193 = vmatprep.subr.mxu0 0.0
  %194 = vmatpush1.msra.mxu0 0.0
  %195 = vmatprep.subr.mxu0 0.0
  %196 = vmatpush1.msra.mxu0 0.0
  %197 = vmatprep.subr.mxu0 0.0
  %198 = vmatpush1.msra.mxu0 0.0
  %199 = vmatprep.subr.mxu0 0.0
  %200 = vmatpush1.msra.mxu0 0.0
  %201 = vmatprep.mubr.f32.mxu0 0.0
  %202 = vmatmul.mubr.f32.gmra.mrb[0].mxu0 %v64
  %v203 = vpop.f32.mrb[0].mxu0
  %v204 = vadd.f32 %v53, %v203
  %v205 = vpop.f32.mrb[0].mxu0
  %v206 = vadd.f32 %v57, %v205
  %207 = vdwg.mxu0
  %v208 = vpack.c.bf16 %v133, %v133
  %v209 = vpack.c.bf16 %v135, %v135
  %v210 = vpack.c.bf16 %v204, %v204
  %v211 = vpack.c.bf16 %v206, %v206
  %v212 = vld [vmem:[%s3] sm:$0xff]
  %v213 = vld [vmem:[%s3 + $0x8] sm:$0xff]
  %v214 = vld [vmem:[%s3 + $0x10] sm:$0xff]
  %v215 = vld [vmem:[%s3 + $0x18] sm:$0xff]
  %v216 = vld [vmem:[%s3 + $0x20] sm:$0xff]
  %v217 = vld [vmem:[%s3 + $0x28] sm:$0xff]
  %v218 = vld [vmem:[%s3 + $0x30] sm:$0xff]
  %v219 = vld [vmem:[%s3 + $0x38] sm:$0xff]
  %v220 = vld [vmem:[%s3 + $0x40] sm:$0xff]
  %v221 = vld [vmem:[%s3 + $0x48] sm:$0xff]
  %v222 = vld [vmem:[%s3 + $0x50] sm:$0xff]
  %v223 = vld [vmem:[%s3 + $0x58] sm:$0xff]
  %v224 = vld [vmem:[%s3 + $0x60] sm:$0xff]
  %v225 = vld [vmem:[%s3 + $0x68] sm:$0xff]
  %v226 = vld [vmem:[%s3 + $0x70] sm:$0xff]
  %v227 = vld [vmem:[%s3 + $0x78] sm:$0xff]
  %v228 = vld [vmem:[%s3 + $0x80] sm:$0xff]
  %v229 = vld [vmem:[%s3 + $0x88] sm:$0xff]
  %v230 = vld [vmem:[%s3 + $0x90] sm:$0xff]
  %v231 = vld [vmem:[%s3 + $0x98] sm:$0xff]
  %v232 = vld [vmem:[%s3 + $0xa0] sm:$0xff]
  %v233 = vld [vmem:[%s3 + $0xa8] sm:$0xff]
  %v234 = vld [vmem:[%s3 + $0xb0] sm:$0xff]
  %v235 = vld [vmem:[%s3 + $0xb8] sm:$0xff]
  %v236 = vld [vmem:[%s3 + $0xc0] sm:$0xff]
  %v237 = vld [vmem:[%s3 + $0xc8] sm:$0xff]
  %v238 = vld [vmem:[%s3 + $0xd0] sm:$0xff]
  %v239 = vld [vmem:[%s3 + $0xd8] sm:$0xff]
  %v240 = vld [vmem:[%s3 + $0xe0] sm:$0xff]
  %v241 = vld [vmem:[%s3 + $0xe8] sm:$0xff]
  %v242 = vld [vmem:[%s3 + $0xf0] sm:$0xff]
  %v243 = vld [vmem:[%s3 + $0xf8] sm:$0xff]
  %v244 = vld [vmem:[%s3 + $0x100] sm:$0xff]
  %v245 = vld [vmem:[%s3 + $0x108] sm:$0xff]
  %v246 = vld [vmem:[%s3 + $0x110] sm:$0xff]
  %v247 = vld [vmem:[%s3 + $0x118] sm:$0xff]
  %v248 = vld [vmem:[%s3 + $0x120] sm:$0xff]
  %v249 = vld [vmem:[%s3 + $0x128] sm:$0xff]
  %v250 = vld [vmem:[%s3 + $0x130] sm:$0xff]
  %v251 = vld [vmem:[%s3 + $0x138] sm:$0xff]
  %v252 = vld [vmem:[%s3 + $0x140] sm:$0xff]
  %v253 = vld [vmem:[%s3 + $0x148] sm:$0xff]
  %v254 = vld [vmem:[%s3 + $0x150] sm:$0xff]
  %v255 = vld [vmem:[%s3 + $0x158] sm:$0xff]
  %v256 = vld [vmem:[%s3 + $0x160] sm:$0xff]
  %v257 = vld [vmem:[%s3 + $0x168] sm:$0xff]
  %v258 = vld [vmem:[%s3 + $0x170] sm:$0xff]
  %v259 = vld [vmem:[%s3 + $0x178] sm:$0xff]
  %v260 = vld [vmem:[%s3 + $0x180] sm:$0xff]
  %v261 = vld [vmem:[%s3 + $0x188] sm:$0xff]
  %v262 = vld [vmem:[%s3 + $0x190] sm:$0xff]
  %v263 = vld [vmem:[%s3 + $0x198] sm:$0xff]
  %v264 = vld [vmem:[%s3 + $0x1a0] sm:$0xff]
  %v265 = vld [vmem:[%s3 + $0x1a8] sm:$0xff]
  %v266 = vld [vmem:[%s3 + $0x1b0] sm:$0xff]
  %v267 = vld [vmem:[%s3 + $0x1b8] sm:$0xff]
  %v268 = vld [vmem:[%s3 + $0x1c0] sm:$0xff]
  %v269 = vld [vmem:[%s3 + $0x1c8] sm:$0xff]
  %v270 = vld [vmem:[%s3 + $0x1d0] sm:$0xff]
  %v271 = vld [vmem:[%s3 + $0x1d8] sm:$0xff]
  %v272 = vld [vmem:[%s3 + $0x1e0] sm:$0xff]
  %v273 = vld [vmem:[%s3 + $0x1e8] sm:$0xff]
  %v274 = vld [vmem:[%s3 + $0x1f0] sm:$0xff]
  %v275 = vld [vmem:[%s3 + $0x1f8] sm:$0xff]
  %v340 = vunpack.c.l.b16 %v212
  %v341 = vunpack.c.h.b16 %v212
  %v342 = vunpack.c.l.b16 %v213
  %v343 = vunpack.c.h.b16 %v213
  %v344 = vunpack.c.l.b16 %v214
  %v345 = vunpack.c.h.b16 %v214
  %v346 = vunpack.c.l.b16 %v215
  %v347 = vunpack.c.h.b16 %v215
  %v348 = vunpack.c.l.b16 %v216
  %v349 = vunpack.c.h.b16 %v216
  %v350 = vunpack.c.l.b16 %v217
  %v351 = vunpack.c.h.b16 %v217
  %v352 = vunpack.c.l.b16 %v218
  %v353 = vunpack.c.h.b16 %v218
  %v354 = vunpack.c.l.b16 %v219
  %v355 = vunpack.c.h.b16 %v219
  %v356 = vunpack.c.l.b16 %v220
  %v357 = vunpack.c.h.b16 %v220
  %v358 = vunpack.c.l.b16 %v221
  %v359 = vunpack.c.h.b16 %v221
  %v360 = vunpack.c.l.b16 %v222
  %v361 = vunpack.c.h.b16 %v222
  %v362 = vunpack.c.l.b16 %v223
  %v363 = vunpack.c.h.b16 %v223
  %v364 = vunpack.c.l.b16 %v224
  %v365 = vunpack.c.h.b16 %v224
  %v366 = vunpack.c.l.b16 %v225
  %v367 = vunpack.c.h.b16 %v225
  %v368 = vunpack.c.l.b16 %v226
  %v369 = vunpack.c.h.b16 %v226
  %v370 = vunpack.c.l.b16 %v227
  %v371 = vunpack.c.h.b16 %v227
  %v372 = vunpack.c.l.b16 %v228
  %v373 = vunpack.c.h.b16 %v228
  %v374 = vunpack.c.l.b16 %v229
  %v375 = vunpack.c.h.b16 %v229
  %v376 = vunpack.c.l.b16 %v230
  %v377 = vunpack.c.h.b16 %v230
  %v378 = vunpack.c.l.b16 %v231
  %v379 = vunpack.c.h.b16 %v231
  %v380 = vunpack.c.l.b16 %v232
  %v381 = vunpack.c.h.b16 %v232
  %v382 = vunpack.c.l.b16 %v233
  %v383 = vunpack.c.h.b16 %v233
  %v384 = vunpack.c.l.b16 %v234
  %v385 = vunpack.c.h.b16 %v234
  %v386 = vunpack.c.l.b16 %v235
  %v387 = vunpack.c.h.b16 %v235
  %v388 = vunpack.c.l.b16 %v236
  %v389 = vunpack.c.h.b16 %v236
  %v390 = vunpack.c.l.b16 %v237
  %v391 = vunpack.c.h.b16 %v237
  %v392 = vunpack.c.l.b16 %v238
  %v393 = vunpack.c.h.b16 %v238
  %v394 = vunpack.c.l.b16 %v239
  %v395 = vunpack.c.h.b16 %v239
  %v396 = vunpack.c.l.b16 %v240
  %v397 = vunpack.c.h.b16 %v240
  %v398 = vunpack.c.l.b16 %v241
  %v399 = vunpack.c.h.b16 %v241
  %v400 = vunpack.c.l.b16 %v242
  %v401 = vunpack.c.h.b16 %v242
  %v402 = vunpack.c.l.b16 %v243
  %v403 = vunpack.c.h.b16 %v243
  %v404 = vunpack.c.l.b16 %v244
  %v405 = vunpack.c.h.b16 %v244
  %v406 = vunpack.c.l.b16 %v245
  %v407 = vunpack.c.h.b16 %v245
  %v408 = vunpack.c.l.b16 %v246
  %v409 = vunpack.c.h.b16 %v246
  %v410 = vunpack.c.l.b16 %v247
  %v411 = vunpack.c.h.b16 %v247
  %v412 = vunpack.c.l.b16 %v248
  %v413 = vunpack.c.h.b16 %v248
  %v414 = vunpack.c.l.b16 %v249
  %v415 = vunpack.c.h.b16 %v249
  %v416 = vunpack.c.l.b16 %v250
  %v417 = vunpack.c.h.b16 %v250
  %v418 = vunpack.c.l.b16 %v251
  %v419 = vunpack.c.h.b16 %v251
  %v420 = vunpack.c.l.b16 %v252
  %v421 = vunpack.c.h.b16 %v252
  %v422 = vunpack.c.l.b16 %v253
  %v423 = vunpack.c.h.b16 %v253
  %v424 = vunpack.c.l.b16 %v254
  %v425 = vunpack.c.h.b16 %v254
  %v426 = vunpack.c.l.b16 %v255
  %v427 = vunpack.c.h.b16 %v255
  %v428 = vunpack.c.l.b16 %v256
  %v429 = vunpack.c.h.b16 %v256
  %v430 = vunpack.c.l.b16 %v257
  %v431 = vunpack.c.h.b16 %v257
  %v432 = vunpack.c.l.b16 %v258
  %v433 = vunpack.c.h.b16 %v258
  %v434 = vunpack.c.l.b16 %v259
  %v435 = vunpack.c.h.b16 %v259
  %v436 = vunpack.c.l.b16 %v260
  %v437 = vunpack.c.h.b16 %v260
  %v438 = vunpack.c.l.b16 %v261
  %v439 = vunpack.c.h.b16 %v261
  %v440 = vunpack.c.l.b16 %v262
  %v441 = vunpack.c.h.b16 %v262
  %v442 = vunpack.c.l.b16 %v263
  %v443 = vunpack.c.h.b16 %v263
  %v444 = vunpack.c.l.b16 %v264
  %v445 = vunpack.c.h.b16 %v264
  %v446 = vunpack.c.l.b16 %v265
  %v447 = vunpack.c.h.b16 %v265
  %v448 = vunpack.c.l.b16 %v266
  %v449 = vunpack.c.h.b16 %v266
  %v450 = vunpack.c.l.b16 %v267
  %v451 = vunpack.c.h.b16 %v267
  %v452 = vunpack.c.l.b16 %v268
  %v453 = vunpack.c.h.b16 %v268
  %v454 = vunpack.c.l.b16 %v269
  %v455 = vunpack.c.h.b16 %v269
  %v456 = vunpack.c.l.b16 %v270
  %v457 = vunpack.c.h.b16 %v270
  %v458 = vunpack.c.l.b16 %v271
  %v459 = vunpack.c.h.b16 %v271
  %v460 = vunpack.c.l.b16 %v272
  %v461 = vunpack.c.h.b16 %v272
  %v462 = vunpack.c.l.b16 %v273
  %v463 = vunpack.c.h.b16 %v273
  %v464 = vunpack.c.l.b16 %v274
  %v465 = vunpack.c.h.b16 %v274
  %v466 = vunpack.c.l.b16 %v275
  %v467 = vunpack.c.h.b16 %v275
  %v468 = vpack.c.b16 %v342, %v340
  %v469 = vpack.c.b16 %v343, %v341
  %v470 = vpack.c.b16 %v346, %v344
  %v471 = vpack.c.b16 %v347, %v345
  %v472 = vpack.c.b16 %v350, %v348
  %v473 = vpack.c.b16 %v351, %v349
  %v474 = vpack.c.b16 %v354, %v352
  %v475 = vpack.c.b16 %v355, %v353
  %v476 = vpack.c.b16 %v358, %v356
  %v477 = vpack.c.b16 %v359, %v357
  %v478 = vpack.c.b16 %v362, %v360
  %v479 = vpack.c.b16 %v363, %v361
  %v480 = vpack.c.b16 %v366, %v364
  %v481 = vpack.c.b16 %v367, %v365
  %v482 = vpack.c.b16 %v370, %v368
  %v483 = vpack.c.b16 %v371, %v369
  %v484 = vpack.c.b16 %v374, %v372
  %v485 = vpack.c.b16 %v375, %v373
  %v486 = vpack.c.b16 %v378, %v376
  %v487 = vpack.c.b16 %v379, %v377
  %v488 = vpack.c.b16 %v382, %v380
  %v489 = vpack.c.b16 %v383, %v381
  %v490 = vpack.c.b16 %v386, %v384
  %v491 = vpack.c.b16 %v387, %v385
  %v492 = vpack.c.b16 %v390, %v388
  %v493 = vpack.c.b16 %v391, %v389
  %v494 = vpack.c.b16 %v394, %v392
  %v495 = vpack.c.b16 %v395, %v393
  %v496 = vpack.c.b16 %v398, %v396
  %v497 = vpack.c.b16 %v399, %v397
  %v498 = vpack.c.b16 %v402, %v400
  %v499 = vpack.c.b16 %v403, %v401
  %v500 = vpack.c.b16 %v406, %v404
  %v501 = vpack.c.b16 %v407, %v405
  %v502 = vpack.c.b16 %v410, %v408
  %v503 = vpack.c.b16 %v411, %v409
  %v504 = vpack.c.b16 %v414, %v412
  %v505 = vpack.c.b16 %v415, %v413
  %v506 = vpack.c.b16 %v418, %v416
  %v507 = vpack.c.b16 %v419, %v417
  %v508 = vpack.c.b16 %v422, %v420
  %v509 = vpack.c.b16 %v423, %v421
  %v510 = vpack.c.b16 %v426, %v424
  %v511 = vpack.c.b16 %v427, %v425
  %v512 = vpack.c.b16 %v430, %v428
  %v513 = vpack.c.b16 %v431, %v429
  %v514 = vpack.c.b16 %v434, %v432
  %v515 = vpack.c.b16 %v435, %v433
  %v516 = vpack.c.b16 %v438, %v436
  %v517 = vpack.c.b16 %v439, %v437
  %v518 = vpack.c.b16 %v442, %v440
  %v519 = vpack.c.b16 %v443, %v441
  %v520 = vpack.c.b16 %v446, %v444
  %v521 = vpack.c.b16 %v447, %v445
  %v522 = vpack.c.b16 %v450, %v448
  %v523 = vpack.c.b16 %v451, %v449
  %v524 = vpack.c.b16 %v454, %v452
  %v525 = vpack.c.b16 %v455, %v453
  %v526 = vpack.c.b16 %v458, %v456
  %v527 = vpack.c.b16 %v459, %v457
  %v528 = vpack.c.b16 %v462, %v460
  %v529 = vpack.c.b16 %v463, %v461
  %v530 = vpack.c.b16 %v466, %v464
  %v531 = vpack.c.b16 %v467, %v465
  %596 = vmatprep.subr.bf16.mxu0 %v469
  %597 = vmatpush1.bf16.msra.mxu0 %v468
  %598 = vmatprep.subr.bf16.mxu0 %v471
  %599 = vmatpush1.bf16.msra.mxu0 %v470
  %600 = vmatprep.subr.bf16.mxu0 %v473
  %601 = vmatpush1.bf16.msra.mxu0 %v472
  %602 = vmatprep.subr.bf16.mxu0 %v475
  %603 = vmatpush1.bf16.msra.mxu0 %v474
  %604 = vmatprep.subr.bf16.mxu0 %v477
  %605 = vmatpush1.bf16.msra.mxu0 %v476
  %606 = vmatprep.subr.bf16.mxu0 %v479
  %607 = vmatpush1.bf16.msra.mxu0 %v478
  %608 = vmatprep.subr.bf16.mxu0 %v481
  %609 = vmatpush1.bf16.msra.mxu0 %v480
  %610 = vmatprep.subr.bf16.mxu0 %v483
  %611 = vmatpush1.bf16.msra.mxu0 %v482
  %612 = vmatprep.subr.bf16.mxu0 %v485
  %613 = vmatpush1.bf16.msra.mxu0 %v484
  %614 = vmatprep.subr.bf16.mxu0 %v487
  %615 = vmatpush1.bf16.msra.mxu0 %v486
  %616 = vmatprep.subr.bf16.mxu0 %v489
  %617 = vmatpush1.bf16.msra.mxu0 %v488
  %618 = vmatprep.subr.bf16.mxu0 %v491
  %619 = vmatpush1.bf16.msra.mxu0 %v490
  %620 = vmatprep.subr.bf16.mxu0 %v493
  %621 = vmatpush1.bf16.msra.mxu0 %v492
  %622 = vmatprep.subr.bf16.mxu0 %v495
  %623 = vmatpush1.bf16.msra.mxu0 %v494
  %624 = vmatprep.subr.bf16.mxu0 %v497
  %625 = vmatpush1.bf16.msra.mxu0 %v496
  %626 = vmatprep.subr.bf16.mxu0 %v499
  %627 = vmatpush1.bf16.msra.mxu0 %v498
  %628 = vmatprep.mubr.bf16.mxu0 %v209
  %629 = vmatmul.mubr.bf16.gmra.mrb[0].mxu0 %v208
  %v630 = vpop.f32.mrb[0].mxu0
  %v631 = vadd.f32 0.0, %v630
  %v632 = vpop.f32.mrb[0].mxu0
  %v633 = vadd.f32 0.0, %v632
  %v634 = vpop.f32.mrb[0].mxu0
  %v635 = vpop.f32.mrb[0].mxu0
  %636 = vdwg.mxu0
  %637 = vmatprep.subr.bf16.mxu0 %v501
  %638 = vmatpush1.bf16.msra.mxu0 %v500
  %639 = vmatprep.subr.bf16.mxu0 %v503
  %640 = vmatpush1.bf16.msra.mxu0 %v502
  %641 = vmatprep.subr.bf16.mxu0 %v505
  %642 = vmatpush1.bf16.msra.mxu0 %v504
  %643 = vmatprep.subr.bf16.mxu0 %v507
  %644 = vmatpush1.bf16.msra.mxu0 %v506
  %645 = vmatprep.subr.bf16.mxu0 %v509
  %646 = vmatpush1.bf16.msra.mxu0 %v508
  %647 = vmatprep.subr.bf16.mxu0 %v511
  %648 = vmatpush1.bf16.msra.mxu0 %v510
  %649 = vmatprep.subr.bf16.mxu0 %v513
  %650 = vmatpush1.bf16.msra.mxu0 %v512
  %651 = vmatprep.subr.bf16.mxu0 %v515
  %652 = vmatpush1.bf16.msra.mxu0 %v514
  %653 = vmatprep.subr.bf16.mxu0 %v517
  %654 = vmatpush1.bf16.msra.mxu0 %v516
  %655 = vmatprep.subr.bf16.mxu0 %v519
  %656 = vmatpush1.bf16.msra.mxu0 %v518
  %657 = vmatprep.subr.bf16.mxu0 %v521
  %658 = vmatpush1.bf16.msra.mxu0 %v520
  %659 = vmatprep.subr.bf16.mxu0 %v523
  %660 = vmatpush1.bf16.msra.mxu0 %v522
  %661 = vmatprep.subr.bf16.mxu0 %v525
  %662 = vmatpush1.bf16.msra.mxu0 %v524
  %663 = vmatprep.subr.bf16.mxu0 %v527
  %664 = vmatpush1.bf16.msra.mxu0 %v526
  %665 = vmatprep.subr.bf16.mxu0 %v529
  %666 = vmatpush1.bf16.msra.mxu0 %v528
  %667 = vmatprep.subr.bf16.mxu0 %v531
  %668 = vmatpush1.bf16.msra.mxu0 %v530
  %669 = vmatprep.mubr.bf16.mxu0 %v211
  %670 = vmatmul.mubr.bf16.gmra.mrb[0].mxu0 %v210
  %v671 = vpop.f32.mrb[0].mxu0
  %v672 = vadd.f32 %v631, %v671
  %v673 = vpop.f32.mrb[0].mxu0
  %v674 = vadd.f32 %v633, %v673
  %v675 = vpop.f32.mrb[0].mxu0
  %v676 = vpop.f32.mrb[0].mxu0
  %677 = vdwg.mxu0
  %s678 = scalar_lea.vmem %s3, 512
  %v679 = vld [vmem:[%s678] sm:$0xff]
  %v680 = vld [vmem:[%s678 + $0x8] sm:$0xff]
  %v681 = vld [vmem:[%s678 + $0x10] sm:$0xff]
  %v682 = vld [vmem:[%s678 + $0x18] sm:$0xff]
  %v683 = vld [vmem:[%s678 + $0x20] sm:$0xff]
  %v684 = vld [vmem:[%s678 + $0x28] sm:$0xff]
  %v685 = vld [vmem:[%s678 + $0x30] sm:$0xff]
  %v686 = vld [vmem:[%s678 + $0x38] sm:$0xff]
  %v687 = vld [vmem:[%s678 + $0x40] sm:$0xff]
  %v688 = vld [vmem:[%s678 + $0x48] sm:$0xff]
  %v689 = vld [vmem:[%s678 + $0x50] sm:$0xff]
  %v690 = vld [vmem:[%s678 + $0x58] sm:$0xff]
  %v691 = vld [vmem:[%s678 + $0x60] sm:$0xff]
  %v692 = vld [vmem:[%s678 + $0x68] sm:$0xff]
  %v693 = vld [vmem:[%s678 + $0x70] sm:$0xff]
  %v694 = vld [vmem:[%s678 + $0x78] sm:$0xff]
  %v695 = vld [vmem:[%s678 + $0x80] sm:$0xff]
  %v696 = vld [vmem:[%s678 + $0x88] sm:$0xff]
  %v697 = vld [vmem:[%s678 + $0x90] sm:$0xff]
  %v698 = vld [vmem:[%s678 + $0x98] sm:$0xff]
  %v699 = vld [vmem:[%s678 + $0xa0] sm:$0xff]
  %v700 = vld [vmem:[%s678 + $0xa8] sm:$0xff]
  %v701 = vld [vmem:[%s678 + $0xb0] sm:$0xff]
  %v702 = vld [vmem:[%s678 + $0xb8] sm:$0xff]
  %v703 = vld [vmem:[%s678 + $0xc0] sm:$0xff]
  %v704 = vld [vmem:[%s678 + $0xc8] sm:$0xff]
  %v705 = vld [vmem:[%s678 + $0xd0] sm:$0xff]
  %v706 = vld [vmem:[%s678 + $0xd8] sm:$0xff]
  %v707 = vld [vmem:[%s678 + $0xe0] sm:$0xff]
  %v708 = vld [vmem:[%s678 + $0xe8] sm:$0xff]
  %v709 = vld [vmem:[%s678 + $0xf0] sm:$0xff]
  %v710 = vld [vmem:[%s678 + $0xf8] sm:$0xff]
  %v711 = vld [vmem:[%s678 + $0x100] sm:$0xff]
  %v712 = vld [vmem:[%s678 + $0x108] sm:$0xff]
  %v713 = vld [vmem:[%s678 + $0x110] sm:$0xff]
  %v714 = vld [vmem:[%s678 + $0x118] sm:$0xff]
  %v715 = vld [vmem:[%s678 + $0x120] sm:$0xff]
  %v716 = vld [vmem:[%s678 + $0x128] sm:$0xff]
  %v717 = vld [vmem:[%s678 + $0x130] sm:$0xff]
  %v718 = vld [vmem:[%s678 + $0x138] sm:$0xff]
  %v719 = vld [vmem:[%s678 + $0x140] sm:$0xff]
  %v720 = vld [vmem:[%s678 + $0x148] sm:$0xff]
  %v721 = vld [vmem:[%s678 + $0x150] sm:$0xff]
  %v722 = vld [vmem:[%s678 + $0x158] sm:$0xff]
  %v723 = vld [vmem:[%s678 + $0x160] sm:$0xff]
  %v724 = vld [vmem:[%s678 + $0x168] sm:$0xff]
  %v725 = vld [vmem:[%s678 + $0x170] sm:$0xff]
  %v726 = vld [vmem:[%s678 + $0x178] sm:$0xff]
  %v727 = vld [vmem:[%s678 + $0x180] sm:$0xff]
  %v728 = vld [vmem:[%s678 + $0x188] sm:$0xff]
  %v729 = vld [vmem:[%s678 + $0x190] sm:$0xff]
  %v730 = vld [vmem:[%s678 + $0x198] sm:$0xff]
  %v731 = vld [vmem:[%s678 + $0x1a0] sm:$0xff]
  %v732 = vld [vmem:[%s678 + $0x1a8] sm:$0xff]
  %v733 = vld [vmem:[%s678 + $0x1b0] sm:$0xff]
  %v734 = vld [vmem:[%s678 + $0x1b8] sm:$0xff]
  %v735 = vld [vmem:[%s678 + $0x1c0] sm:$0xff]
  %v736 = vld [vmem:[%s678 + $0x1c8] sm:$0xff]
  %v737 = vld [vmem:[%s678 + $0x1d0] sm:$0xff]
  %v738 = vld [vmem:[%s678 + $0x1d8] sm:$0xff]
  %v739 = vld [vmem:[%s678 + $0x1e0] sm:$0xff]
  %v740 = vld [vmem:[%s678 + $0x1e8] sm:$0xff]
  %v741 = vld [vmem:[%s678 + $0x1f0] sm:$0xff]
  %v742 = vld [vmem:[%s678 + $0x1f8] sm:$0xff]
  %v807 = vunpack.c.l.b16 %v679
  %v808 = vunpack.c.h.b16 %v679
  %v809 = vunpack.c.l.b16 %v680
  %v810 = vunpack.c.h.b16 %v680
  %v811 = vunpack.c.l.b16 %v681
  %v812 = vunpack.c.h.b16 %v681
  %v813 = vunpack.c.l.b16 %v682
  %v814 = vunpack.c.h.b16 %v682
  %v815 = vunpack.c.l.b16 %v683
  %v816 = vunpack.c.h.b16 %v683
  %v817 = vunpack.c.l.b16 %v684
  %v818 = vunpack.c.h.b16 %v684
  %v819 = vunpack.c.l.b16 %v685
  %v820 = vunpack.c.h.b16 %v685
  %v821 = vunpack.c.l.b16 %v686
  %v822 = vunpack.c.h.b16 %v686
  %v823 = vunpack.c.l.b16 %v687
  %v824 = vunpack.c.h.b16 %v687
  %v825 = vunpack.c.l.b16 %v688
  %v826 = vunpack.c.h.b16 %v688
  %v827 = vunpack.c.l.b16 %v689
  %v828 = vunpack.c.h.b16 %v689
  %v829 = vunpack.c.l.b16 %v690
  %v830 = vunpack.c.h.b16 %v690
  %v831 = vunpack.c.l.b16 %v691
  %v832 = vunpack.c.h.b16 %v691
  %v833 = vunpack.c.l.b16 %v692
  %v834 = vunpack.c.h.b16 %v692
  %v835 = vunpack.c.l.b16 %v693
  %v836 = vunpack.c.h.b16 %v693
  %v837 = vunpack.c.l.b16 %v694
  %v838 = vunpack.c.h.b16 %v694
  %v839 = vunpack.c.l.b16 %v695
  %v840 = vunpack.c.h.b16 %v695
  %v841 = vunpack.c.l.b16 %v696
  %v842 = vunpack.c.h.b16 %v696
  %v843 = vunpack.c.l.b16 %v697
  %v844 = vunpack.c.h.b16 %v697
  %v845 = vunpack.c.l.b16 %v698
  %v846 = vunpack.c.h.b16 %v698
  %v847 = vunpack.c.l.b16 %v699
  %v848 = vunpack.c.h.b16 %v699
  %v849 = vunpack.c.l.b16 %v700
  %v850 = vunpack.c.h.b16 %v700
  %v851 = vunpack.c.l.b16 %v701
  %v852 = vunpack.c.h.b16 %v701
  %v853 = vunpack.c.l.b16 %v702
  %v854 = vunpack.c.h.b16 %v702
  %v855 = vunpack.c.l.b16 %v703
  %v856 = vunpack.c.h.b16 %v703
  %v857 = vunpack.c.l.b16 %v704
  %v858 = vunpack.c.h.b16 %v704
  %v859 = vunpack.c.l.b16 %v705
  %v860 = vunpack.c.h.b16 %v705
  %v861 = vunpack.c.l.b16 %v706
  %v862 = vunpack.c.h.b16 %v706
  %v863 = vunpack.c.l.b16 %v707
  %v864 = vunpack.c.h.b16 %v707
  %v865 = vunpack.c.l.b16 %v708
  %v866 = vunpack.c.h.b16 %v708
  %v867 = vunpack.c.l.b16 %v709
  %v868 = vunpack.c.h.b16 %v709
  %v869 = vunpack.c.l.b16 %v710
  %v870 = vunpack.c.h.b16 %v710
  %v871 = vunpack.c.l.b16 %v711
  %v872 = vunpack.c.h.b16 %v711
  %v873 = vunpack.c.l.b16 %v712
  %v874 = vunpack.c.h.b16 %v712
  %v875 = vunpack.c.l.b16 %v713
  %v876 = vunpack.c.h.b16 %v713
  %v877 = vunpack.c.l.b16 %v714
  %v878 = vunpack.c.h.b16 %v714
  %v879 = vunpack.c.l.b16 %v715
  %v880 = vunpack.c.h.b16 %v715
  %v881 = vunpack.c.l.b16 %v716
  %v882 = vunpack.c.h.b16 %v716
  %v883 = vunpack.c.l.b16 %v717
  %v884 = vunpack.c.h.b16 %v717
  %v885 = vunpack.c.l.b16 %v718
  %v886 = vunpack.c.h.b16 %v718
  %v887 = vunpack.c.l.b16 %v719
  %v888 = vunpack.c.h.b16 %v719
  %v889 = vunpack.c.l.b16 %v720
  %v890 = vunpack.c.h.b16 %v720
  %v891 = vunpack.c.l.b16 %v721
  %v892 = vunpack.c.h.b16 %v721
  %v893 = vunpack.c.l.b16 %v722
  %v894 = vunpack.c.h.b16 %v722
  %v895 = vunpack.c.l.b16 %v723
  %v896 = vunpack.c.h.b16 %v723
  %v897 = vunpack.c.l.b16 %v724
  %v898 = vunpack.c.h.b16 %v724
  %v899 = vunpack.c.l.b16 %v725
  %v900 = vunpack.c.h.b16 %v725
  %v901 = vunpack.c.l.b16 %v726
  %v902 = vunpack.c.h.b16 %v726
  %v903 = vunpack.c.l.b16 %v727
  %v904 = vunpack.c.h.b16 %v727
  %v905 = vunpack.c.l.b16 %v728
  %v906 = vunpack.c.h.b16 %v728
  %v907 = vunpack.c.l.b16 %v729
  %v908 = vunpack.c.h.b16 %v729
  %v909 = vunpack.c.l.b16 %v730
  %v910 = vunpack.c.h.b16 %v730
  %v911 = vunpack.c.l.b16 %v731
  %v912 = vunpack.c.h.b16 %v731
  %v913 = vunpack.c.l.b16 %v732
  %v914 = vunpack.c.h.b16 %v732
  %v915 = vunpack.c.l.b16 %v733
  %v916 = vunpack.c.h.b16 %v733
  %v917 = vunpack.c.l.b16 %v734
  %v918 = vunpack.c.h.b16 %v734
  %v919 = vunpack.c.l.b16 %v735
  %v920 = vunpack.c.h.b16 %v735
  %v921 = vunpack.c.l.b16 %v736
  %v922 = vunpack.c.h.b16 %v736
  %v923 = vunpack.c.l.b16 %v737
  %v924 = vunpack.c.h.b16 %v737
  %v925 = vunpack.c.l.b16 %v738
  %v926 = vunpack.c.h.b16 %v738
  %v927 = vunpack.c.l.b16 %v739
  %v928 = vunpack.c.h.b16 %v739
  %v929 = vunpack.c.l.b16 %v740
  %v930 = vunpack.c.h.b16 %v740
  %v931 = vunpack.c.l.b16 %v741
  %v932 = vunpack.c.h.b16 %v741
  %v933 = vunpack.c.l.b16 %v742
  %v934 = vunpack.c.h.b16 %v742
  %v935 = vpack.c.b16 %v809, %v807
  %v936 = vpack.c.b16 %v810, %v808
  %v937 = vpack.c.b16 %v813, %v811
  %v938 = vpack.c.b16 %v814, %v812
  %v939 = vpack.c.b16 %v817, %v815
  %v940 = vpack.c.b16 %v818, %v816
  %v941 = vpack.c.b16 %v821, %v819
  %v942 = vpack.c.b16 %v822, %v820
  %v943 = vpack.c.b16 %v825, %v823
  %v944 = vpack.c.b16 %v826, %v824
  %v945 = vpack.c.b16 %v829, %v827
  %v946 = vpack.c.b16 %v830, %v828
  %v947 = vpack.c.b16 %v833, %v831
  %v948 = vpack.c.b16 %v834, %v832
  %v949 = vpack.c.b16 %v837, %v835
  %v950 = vpack.c.b16 %v838, %v836
  %v951 = vpack.c.b16 %v841, %v839
  %v952 = vpack.c.b16 %v842, %v840
  %v953 = vpack.c.b16 %v845, %v843
  %v954 = vpack.c.b16 %v846, %v844
  %v955 = vpack.c.b16 %v849, %v847
  %v956 = vpack.c.b16 %v850, %v848
  %v957 = vpack.c.b16 %v853, %v851
  %v958 = vpack.c.b16 %v854, %v852
  %v959 = vpack.c.b16 %v857, %v855
  %v960 = vpack.c.b16 %v858, %v856
  %v961 = vpack.c.b16 %v861, %v859
  %v962 = vpack.c.b16 %v862, %v860
  %v963 = vpack.c.b16 %v865, %v863
  %v964 = vpack.c.b16 %v866, %v864
  %v965 = vpack.c.b16 %v869, %v867
  %v966 = vpack.c.b16 %v870, %v868
  %v967 = vpack.c.b16 %v873, %v871
  %v968 = vpack.c.b16 %v874, %v872
  %v969 = vpack.c.b16 %v877, %v875
  %v970 = vpack.c.b16 %v878, %v876
  %v971 = vpack.c.b16 %v881, %v879
  %v972 = vpack.c.b16 %v882, %v880
  %v973 = vpack.c.b16 %v885, %v883
  %v974 = vpack.c.b16 %v886, %v884
  %v975 = vpack.c.b16 %v889, %v887
  %v976 = vpack.c.b16 %v890, %v888
  %v977 = vpack.c.b16 %v893, %v891
  %v978 = vpack.c.b16 %v894, %v892
  %v979 = vpack.c.b16 %v897, %v895
  %v980 = vpack.c.b16 %v898, %v896
  %v981 = vpack.c.b16 %v901, %v899
  %v982 = vpack.c.b16 %v902, %v900
  %v983 = vpack.c.b16 %v905, %v903
  %v984 = vpack.c.b16 %v906, %v904
  %v985 = vpack.c.b16 %v909, %v907
  %v986 = vpack.c.b16 %v910, %v908
  %v987 = vpack.c.b16 %v913, %v911
  %v988 = vpack.c.b16 %v914, %v912
  %v989 = vpack.c.b16 %v917, %v915
  %v990 = vpack.c.b16 %v918, %v916
  %v991 = vpack.c.b16 %v921, %v919
  %v992 = vpack.c.b16 %v922, %v920
  %v993 = vpack.c.b16 %v925, %v923
  %v994 = vpack.c.b16 %v926, %v924
  %v995 = vpack.c.b16 %v929, %v927
  %v996 = vpack.c.b16 %v930, %v928
  %v997 = vpack.c.b16 %v933, %v931
  %v998 = vpack.c.b16 %v934, %v932
  %1063 = vmatprep.subr.bf16.mxu0 %v936
  %1064 = vmatpush1.bf16.msra.mxu0 %v935
  %1065 = vmatprep.subr.bf16.mxu0 %v938
  %1066 = vmatpush1.bf16.msra.mxu0 %v937
  %1067 = vmatprep.subr.bf16.mxu0 %v940
  %1068 = vmatpush1.bf16.msra.mxu0 %v939
  %1069 = vmatprep.subr.bf16.mxu0 %v942
  %1070 = vmatpush1.bf16.msra.mxu0 %v941
  %1071 = vmatprep.subr.bf16.mxu0 %v944
  %1072 = vmatpush1.bf16.msra.mxu0 %v943
  %1073 = vmatprep.subr.bf16.mxu0 %v946
  %1074 = vmatpush1.bf16.msra.mxu0 %v945
  %1075 = vmatprep.subr.bf16.mxu0 %v948
  %1076 = vmatpush1.bf16.msra.mxu0 %v947
  %1077 = vmatprep.subr.bf16.mxu0 %v950
  %1078 = vmatpush1.bf16.msra.mxu0 %v949
  %1079 = vmatprep.subr.bf16.mxu0 %v952
  %1080 = vmatpush1.bf16.msra.mxu0 %v951
  %1081 = vmatprep.subr.bf16.mxu0 %v954
  %1082 = vmatpush1.bf16.msra.mxu0 %v953
  %1083 = vmatprep.subr.bf16.mxu0 %v956
  %1084 = vmatpush1.bf16.msra.mxu0 %v955
  %1085 = vmatprep.subr.bf16.mxu0 %v958
  %1086 = vmatpush1.bf16.msra.mxu0 %v957
  %1087 = vmatprep.subr.bf16.mxu0 %v960
  %1088 = vmatpush1.bf16.msra.mxu0 %v959
  %1089 = vmatprep.subr.bf16.mxu0 %v962
  %1090 = vmatpush1.bf16.msra.mxu0 %v961
  %1091 = vmatprep.subr.bf16.mxu0 %v964
  %1092 = vmatpush1.bf16.msra.mxu0 %v963
  %1093 = vmatprep.subr.bf16.mxu0 %v966
  %1094 = vmatpush1.bf16.msra.mxu0 %v965
  %1095 = vmatprep.mubr.bf16.mxu0 %v209
  %1096 = vmatmul.mubr.bf16.gmra.mrb[0].mxu0 %v208
  %v1097 = vpop.f32.mrb[0].mxu0
  %v1098 = vadd.f32 0.0, %v1097
  %v1099 = vpop.f32.mrb[0].mxu0
  %v1100 = vadd.f32 0.0, %v1099
  %v1101 = vpop.f32.mrb[0].mxu0
  %v1102 = vpop.f32.mrb[0].mxu0
  %1103 = vdwg.mxu0
  %1104 = vmatprep.subr.bf16.mxu0 %v968
  %1105 = vmatpush1.bf16.msra.mxu0 %v967
  %1106 = vmatprep.subr.bf16.mxu0 %v970
  %1107 = vmatpush1.bf16.msra.mxu0 %v969
  %1108 = vmatprep.subr.bf16.mxu0 %v972
  %1109 = vmatpush1.bf16.msra.mxu0 %v971
  %1110 = vmatprep.subr.bf16.mxu0 %v974
  %1111 = vmatpush1.bf16.msra.mxu0 %v973
  %1112 = vmatprep.subr.bf16.mxu0 %v976
  %1113 = vmatpush1.bf16.msra.mxu0 %v975
  %1114 = vmatprep.subr.bf16.mxu0 %v978
  %1115 = vmatpush1.bf16.msra.mxu0 %v977
  %1116 = vmatprep.subr.bf16.mxu0 %v980
  %1117 = vmatpush1.bf16.msra.mxu0 %v979
  %1118 = vmatprep.subr.bf16.mxu0 %v982
  %1119 = vmatpush1.bf16.msra.mxu0 %v981
  %1120 = vmatprep.subr.bf16.mxu0 %v984
  %1121 = vmatpush1.bf16.msra.mxu0 %v983
  %1122 = vmatprep.subr.bf16.mxu0 %v986
  %1123 = vmatpush1.bf16.msra.mxu0 %v985
  %1124 = vmatprep.subr.bf16.mxu0 %v988
  %1125 = vmatpush1.bf16.msra.mxu0 %v987
  %1126 = vmatprep.subr.bf16.mxu0 %v990
  %1127 = vmatpush1.bf16.msra.mxu0 %v989
  %1128 = vmatprep.subr.bf16.mxu0 %v992
  %1129 = vmatpush1.bf16.msra.mxu0 %v991
  %1130 = vmatprep.subr.bf16.mxu0 %v994
  %1131 = vmatpush1.bf16.msra.mxu0 %v993
  %1132 = vmatprep.subr.bf16.mxu0 %v996
  %1133 = vmatpush1.bf16.msra.mxu0 %v995
  %1134 = vmatprep.subr.bf16.mxu0 %v998
  %1135 = vmatpush1.bf16.msra.mxu0 %v997
  %1136 = vmatprep.mubr.bf16.mxu0 %v211
  %1137 = vmatmul.mubr.bf16.gmra.mrb[0].mxu0 %v210
  %v1138 = vpop.f32.mrb[0].mxu0
  %v1139 = vadd.f32 %v1098, %v1138
  %v1140 = vpop.f32.mrb[0].mxu0
  %v1141 = vadd.f32 %v1100, %v1140
  %v1142 = vpop.f32.mrb[0].mxu0
  %v1143 = vpop.f32.mrb[0].mxu0
  %1144 = vdwg.mxu0
  %s1145 = scalar_lea.vmem %s3, 1024
  %v1146 = vld [vmem:[%s1145] sm:$0xff]
  %v1147 = vld [vmem:[%s1145 + $0x8] sm:$0xff]
  %v1148 = vld [vmem:[%s1145 + $0x10] sm:$0xff]
  %v1149 = vld [vmem:[%s1145 + $0x18] sm:$0xff]
  %v1150 = vld [vmem:[%s1145 + $0x20] sm:$0xff]
  %v1151 = vld [vmem:[%s1145 + $0x28] sm:$0xff]
  %v1152 = vld [vmem:[%s1145 + $0x30] sm:$0xff]
  %v1153 = vld [vmem:[%s1145 + $0x38] sm:$0xff]
  %v1154 = vld [vmem:[%s1145 + $0x40] sm:$0xff]
  %v1155 = vld [vmem:[%s1145 + $0x48] sm:$0xff]
  %v1156 = vld [vmem:[%s1145 + $0x50] sm:$0xff]
  %v1157 = vld [vmem:[%s1145 + $0x58] sm:$0xff]
  %v1158 = vld [vmem:[%s1145 + $0x60] sm:$0xff]
  %v1159 = vld [vmem:[%s1145 + $0x68] sm:$0xff]
  %v1160 = vld [vmem:[%s1145 + $0x70] sm:$0xff]
  %v1161 = vld [vmem:[%s1145 + $0x78] sm:$0xff]
  %v1162 = vld [vmem:[%s1145 + $0x80] sm:$0xff]
  %v1163 = vld [vmem:[%s1145 + $0x88] sm:$0xff]
  %v1164 = vld [vmem:[%s1145 + $0x90] sm:$0xff]
  %v1165 = vld [vmem:[%s1145 + $0x98] sm:$0xff]
  %v1166 = vld [vmem:[%s1145 + $0xa0] sm:$0xff]
  %v1167 = vld [vmem:[%s1145 + $0xa8] sm:$0xff]
  %v1168 = vld [vmem:[%s1145 + $0xb0] sm:$0xff]
  %v1169 = vld [vmem:[%s1145 + $0xb8] sm:$0xff]
  %v1170 = vld [vmem:[%s1145 + $0xc0] sm:$0xff]
  %v1171 = vld [vmem:[%s1145 + $0xc8] sm:$0xff]
  %v1172 = vld [vmem:[%s1145 + $0xd0] sm:$0xff]
  %v1173 = vld [vmem:[%s1145 + $0xd8] sm:$0xff]
  %v1174 = vld [vmem:[%s1145 + $0xe0] sm:$0xff]
  %v1175 = vld [vmem:[%s1145 + $0xe8] sm:$0xff]
  %v1176 = vld [vmem:[%s1145 + $0xf0] sm:$0xff]
  %v1177 = vld [vmem:[%s1145 + $0xf8] sm:$0xff]
  %v1178 = vld [vmem:[%s1145 + $0x100] sm:$0xff]
  %v1179 = vld [vmem:[%s1145 + $0x108] sm:$0xff]
  %v1180 = vld [vmem:[%s1145 + $0x110] sm:$0xff]
  %v1181 = vld [vmem:[%s1145 + $0x118] sm:$0xff]
  %v1182 = vld [vmem:[%s1145 + $0x120] sm:$0xff]
  %v1183 = vld [vmem:[%s1145 + $0x128] sm:$0xff]
  %v1184 = vld [vmem:[%s1145 + $0x130] sm:$0xff]
  %v1185 = vld [vmem:[%s1145 + $0x138] sm:$0xff]
  %v1186 = vld [vmem:[%s1145 + $0x140] sm:$0xff]
  %v1187 = vld [vmem:[%s1145 + $0x148] sm:$0xff]
  %v1188 = vld [vmem:[%s1145 + $0x150] sm:$0xff]
  %v1189 = vld [vmem:[%s1145 + $0x158] sm:$0xff]
  %v1190 = vld [vmem:[%s1145 + $0x160] sm:$0xff]
  %v1191 = vld [vmem:[%s1145 + $0x168] sm:$0xff]
  %v1192 = vld [vmem:[%s1145 + $0x170] sm:$0xff]
  %v1193 = vld [vmem:[%s1145 + $0x178] sm:$0xff]
  %v1194 = vld [vmem:[%s1145 + $0x180] sm:$0xff]
  %v1195 = vld [vmem:[%s1145 + $0x188] sm:$0xff]
  %v1196 = vld [vmem:[%s1145 + $0x190] sm:$0xff]
  %v1197 = vld [vmem:[%s1145 + $0x198] sm:$0xff]
  %v1198 = vld [vmem:[%s1145 + $0x1a0] sm:$0xff]
  %v1199 = vld [vmem:[%s1145 + $0x1a8] sm:$0xff]
  %v1200 = vld [vmem:[%s1145 + $0x1b0] sm:$0xff]
  %v1201 = vld [vmem:[%s1145 + $0x1b8] sm:$0xff]
  %v1202 = vld [vmem:[%s1145 + $0x1c0] sm:$0xff]
  %v1203 = vld [vmem:[%s1145 + $0x1c8] sm:$0xff]
  %v1204 = vld [vmem:[%s1145 + $0x1d0] sm:$0xff]
  %v1205 = vld [vmem:[%s1145 + $0x1d8] sm:$0xff]
  %v1206 = vld [vmem:[%s1145 + $0x1e0] sm:$0xff]
  %v1207 = vld [vmem:[%s1145 + $0x1e8] sm:$0xff]
  %v1208 = vld [vmem:[%s1145 + $0x1f0] sm:$0xff]
  %v1209 = vld [vmem:[%s1145 + $0x1f8] sm:$0xff]
  %v1274 = vunpack.c.l.b16 %v1146
  %v1275 = vunpack.c.h.b16 %v1146
  %v1276 = vunpack.c.l.b16 %v1147
  %v1277 = vunpack.c.h.b16 %v1147
  %v1278 = vunpack.c.l.b16 %v1148
  %v1279 = vunpack.c.h.b16 %v1148
  %v1280 = vunpack.c.l.b16 %v1149
  %v1281 = vunpack.c.h.b16 %v1149
  %v1282 = vunpack.c.l.b16 %v1150
  %v1283 = vunpack.c.h.b16 %v1150
  %v1284 = vunpack.c.l.b16 %v1151
  %v1285 = vunpack.c.h.b16 %v1151
  %v1286 = vunpack.c.l.b16 %v1152
  %v1287 = vunpack.c.h.b16 %v1152
  %v1288 = vunpack.c.l.b16 %v1153
  %v1289 = vunpack.c.h.b16 %v1153
  %v1290 = vunpack.c.l.b16 %v1154
  %v1291 = vunpack.c.h.b16 %v1154
  %v1292 = vunpack.c.l.b16 %v1155
  %v1293 = vunpack.c.h.b16 %v1155
  %v1294 = vunpack.c.l.b16 %v1156
  %v1295 = vunpack.c.h.b16 %v1156
  %v1296 = vunpack.c.l.b16 %v1157
  %v1297 = vunpack.c.h.b16 %v1157
  %v1298 = vunpack.c.l.b16 %v1158
  %v1299 = vunpack.c.h.b16 %v1158
  %v1300 = vunpack.c.l.b16 %v1159
  %v1301 = vunpack.c.h.b16 %v1159
  %v1302 = vunpack.c.l.b16 %v1160
  %v1303 = vunpack.c.h.b16 %v1160
  %v1304 = vunpack.c.l.b16 %v1161
  %v1305 = vunpack.c.h.b16 %v1161
  %v1306 = vunpack.c.l.b16 %v1162
  %v1307 = vunpack.c.h.b16 %v1162
  %v1308 = vunpack.c.l.b16 %v1163
  %v1309 = vunpack.c.h.b16 %v1163
  %v1310 = vunpack.c.l.b16 %v1164
  %v1311 = vunpack.c.h.b16 %v1164
  %v1312 = vunpack.c.l.b16 %v1165
  %v1313 = vunpack.c.h.b16 %v1165
  %v1314 = vunpack.c.l.b16 %v1166
  %v1315 = vunpack.c.h.b16 %v1166
  %v1316 = vunpack.c.l.b16 %v1167
  %v1317 = vunpack.c.h.b16 %v1167
  %v1318 = vunpack.c.l.b16 %v1168
  %v1319 = vunpack.c.h.b16 %v1168
  %v1320 = vunpack.c.l.b16 %v1169
  %v1321 = vunpack.c.h.b16 %v1169
  %v1322 = vunpack.c.l.b16 %v1170
  %v1323 = vunpack.c.h.b16 %v1170
  %v1324 = vunpack.c.l.b16 %v1171
  %v1325 = vunpack.c.h.b16 %v1171
  %v1326 = vunpack.c.l.b16 %v1172
  %v1327 = vunpack.c.h.b16 %v1172
  %v1328 = vunpack.c.l.b16 %v1173
  %v1329 = vunpack.c.h.b16 %v1173
  %v1330 = vunpack.c.l.b16 %v1174
  %v1331 = vunpack.c.h.b16 %v1174
  %v1332 = vunpack.c.l.b16 %v1175
  %v1333 = vunpack.c.h.b16 %v1175
  %v1334 = vunpack.c.l.b16 %v1176
  %v1335 = vunpack.c.h.b16 %v1176
  %v1336 = vunpack.c.l.b16 %v1177
  %v1337 = vunpack.c.h.b16 %v1177
  %v1338 = vunpack.c.l.b16 %v1178
  %v1339 = vunpack.c.h.b16 %v1178
  %v1340 = vunpack.c.l.b16 %v1179
  %v1341 = vunpack.c.h.b16 %v1179
  %v1342 = vunpack.c.l.b16 %v1180
  %v1343 = vunpack.c.h.b16 %v1180
  %v1344 = vunpack.c.l.b16 %v1181
  %v1345 = vunpack.c.h.b16 %v1181
  %v1346 = vunpack.c.l.b16 %v1182
  %v1347 = vunpack.c.h.b16 %v1182
  %v1348 = vunpack.c.l.b16 %v1183
  %v1349 = vunpack.c.h.b16 %v1183
  %v1350 = vunpack.c.l.b16 %v1184
  %v1351 = vunpack.c.h.b16 %v1184
  %v1352 = vunpack.c.l.b16 %v1185
  %v1353 = vunpack.c.h.b16 %v1185
  %v1354 = vunpack.c.l.b16 %v1186
  %v1355 = vunpack.c.h.b16 %v1186
  %v1356 = vunpack.c.l.b16 %v1187
  %v1357 = vunpack.c.h.b16 %v1187
  %v1358 = vunpack.c.l.b16 %v1188
  %v1359 = vunpack.c.h.b16 %v1188
  %v1360 = vunpack.c.l.b16 %v1189
  %v1361 = vunpack.c.h.b16 %v1189
  %v1362 = vunpack.c.l.b16 %v1190
  %v1363 = vunpack.c.h.b16 %v1190
  %v1364 = vunpack.c.l.b16 %v1191
  %v1365 = vunpack.c.h.b16 %v1191
  %v1366 = vunpack.c.l.b16 %v1192
  %v1367 = vunpack.c.h.b16 %v1192
  %v1368 = vunpack.c.l.b16 %v1193
  %v1369 = vunpack.c.h.b16 %v1193
  %v1370 = vunpack.c.l.b16 %v1194
  %v1371 = vunpack.c.h.b16 %v1194
  %v1372 = vunpack.c.l.b16 %v1195
  %v1373 = vunpack.c.h.b16 %v1195
  %v1374 = vunpack.c.l.b16 %v1196
  %v1375 = vunpack.c.h.b16 %v1196
  %v1376 = vunpack.c.l.b16 %v1197
  %v1377 = vunpack.c.h.b16 %v1197
  %v1378 = vunpack.c.l.b16 %v1198
  %v1379 = vunpack.c.h.b16 %v1198
  %v1380 = vunpack.c.l.b16 %v1199
  %v1381 = vunpack.c.h.b16 %v1199
  %v1382 = vunpack.c.l.b16 %v1200
  %v1383 = vunpack.c.h.b16 %v1200
  %v1384 = vunpack.c.l.b16 %v1201
  %v1385 = vunpack.c.h.b16 %v1201
  %v1386 = vunpack.c.l.b16 %v1202
  %v1387 = vunpack.c.h.b16 %v1202
  %v1388 = vunpack.c.l.b16 %v1203
  %v1389 = vunpack.c.h.b16 %v1203
  %v1390 = vunpack.c.l.b16 %v1204
  %v1391 = vunpack.c.h.b16 %v1204
  %v1392 = vunpack.c.l.b16 %v1205
  %v1393 = vunpack.c.h.b16 %v1205
  %v1394 = vunpack.c.l.b16 %v1206
  %v1395 = vunpack.c.h.b16 %v1206
  %v1396 = vunpack.c.l.b16 %v1207
  %v1397 = vunpack.c.h.b16 %v1207
  %v1398 = vunpack.c.l.b16 %v1208
  %v1399 = vunpack.c.h.b16 %v1208
  %v1400 = vunpack.c.l.b16 %v1209
  %v1401 = vunpack.c.h.b16 %v1209
  %v1402 = vpack.c.b16 %v1276, %v1274
  %v1403 = vpack.c.b16 %v1277, %v1275
  %v1404 = vpack.c.b16 %v1280, %v1278
  %v1405 = vpack.c.b16 %v1281, %v1279
  %v1406 = vpack.c.b16 %v1284, %v1282
  %v1407 = vpack.c.b16 %v1285, %v1283
  %v1408 = vpack.c.b16 %v1288, %v1286
  %v1409 = vpack.c.b16 %v1289, %v1287
  %v1410 = vpack.c.b16 %v1292, %v1290
  %v1411 = vpack.c.b16 %v1293, %v1291
  %v1412 = vpack.c.b16 %v1296, %v1294
  %v1413 = vpack.c.b16 %v1297, %v1295
  %v1414 = vpack.c.b16 %v1300, %v1298
  %v1415 = vpack.c.b16 %v1301, %v1299
  %v1416 = vpack.c.b16 %v1304, %v1302
  %v1417 = vpack.c.b16 %v1305, %v1303
  %v1418 = vpack.c.b16 %v1308, %v1306
  %v1419 = vpack.c.b16 %v1309, %v1307
  %v1420 = vpack.c.b16 %v1312, %v1310
  %v1421 = vpack.c.b16 %v1313, %v1311
  %v1422 = vpack.c.b16 %v1316, %v1314
  %v1423 = vpack.c.b16 %v1317, %v1315
  %v1424 = vpack.c.b16 %v1320, %v1318
  %v1425 = vpack.c.b16 %v1321, %v1319
  %v1426 = vpack.c.b16 %v1324, %v1322
  %v1427 = vpack.c.b16 %v1325, %v1323
  %v1428 = vpack.c.b16 %v1328, %v1326
  %v1429 = vpack.c.b16 %v1329, %v1327
  %v1430 = vpack.c.b16 %v1332, %v1330
  %v1431 = vpack.c.b16 %v1333, %v1331
  %v1432 = vpack.c.b16 %v1336, %v1334
  %v1433 = vpack.c.b16 %v1337, %v1335
  %v1434 = vpack.c.b16 %v1340, %v1338
  %v1435 = vpack.c.b16 %v1341, %v1339
  %v1436 = vpack.c.b16 %v1344, %v1342
  %v1437 = vpack.c.b16 %v1345, %v1343
  %v1438 = vpack.c.b16 %v1348, %v1346
  %v1439 = vpack.c.b16 %v1349, %v1347
  %v1440 = vpack.c.b16 %v1352, %v1350
  %v1441 = vpack.c.b16 %v1353, %v1351
  %v1442 = vpack.c.b16 %v1356, %v1354
  %v1443 = vpack.c.b16 %v1357, %v1355
  %v1444 = vpack.c.b16 %v1360, %v1358
  %v1445 = vpack.c.b16 %v1361, %v1359
  %v1446 = vpack.c.b16 %v1364, %v1362
  %v1447 = vpack.c.b16 %v1365, %v1363
  %v1448 = vpack.c.b16 %v1368, %v1366
  %v1449 = vpack.c.b16 %v1369, %v1367
  %v1450 = vpack.c.b16 %v1372, %v1370
  %v1451 = vpack.c.b16 %v1373, %v1371
  %v1452 = vpack.c.b16 %v1376, %v1374
  %v1453 = vpack.c.b16 %v1377, %v1375
  %v1454 = vpack.c.b16 %v1380, %v1378
  %v1455 = vpack.c.b16 %v1381, %v1379
  %v1456 = vpack.c.b16 %v1384, %v1382
  %v1457 = vpack.c.b16 %v1385, %v1383
  %v1458 = vpack.c.b16 %v1388, %v1386
  %v1459 = vpack.c.b16 %v1389, %v1387
  %v1460 = vpack.c.b16 %v1392, %v1390
  %v1461 = vpack.c.b16 %v1393, %v1391
  %v1462 = vpack.c.b16 %v1396, %v1394
  %v1463 = vpack.c.b16 %v1397, %v1395
  %v1464 = vpack.c.b16 %v1400, %v1398
  %v1465 = vpack.c.b16 %v1401, %v1399
  %1530 = vmatprep.subr.bf16.mxu0 %v1403
  %1531 = vmatpush1.bf16.msra.mxu0 %v1402
  %1532 = vmatprep.subr.bf16.mxu0 %v1405
  %1533 = vmatpush1.bf16.msra.mxu0 %v1404
  %1534 = vmatprep.subr.bf16.mxu0 %v1407
  %1535 = vmatpush1.bf16.msra.mxu0 %v1406
  %1536 = vmatprep.subr.bf16.mxu0 %v1409
  %1537 = vmatpush1.bf16.msra.mxu0 %v1408
  %1538 = vmatprep.subr.bf16.mxu0 %v1411
  %1539 = vmatpush1.bf16.msra.mxu0 %v1410
  %1540 = vmatprep.subr.bf16.mxu0 %v1413
  %1541 = vmatpush1.bf16.msra.mxu0 %v1412
  %1542 = vmatprep.subr.bf16.mxu0 %v1415
  %1543 = vmatpush1.bf16.msra.mxu0 %v1414
  %1544 = vmatprep.subr.bf16.mxu0 %v1417
  %1545 = vmatpush1.bf16.msra.mxu0 %v1416
  %1546 = vmatprep.subr.bf16.mxu0 %v1419
  %1547 = vmatpush1.bf16.msra.mxu0 %v1418
  %1548 = vmatprep.subr.bf16.mxu0 %v1421
  %1549 = vmatpush1.bf16.msra.mxu0 %v1420
  %1550 = vmatprep.subr.bf16.mxu0 %v1423
  %1551 = vmatpush1.bf16.msra.mxu0 %v1422
  %1552 = vmatprep.subr.bf16.mxu0 %v1425
  %1553 = vmatpush1.bf16.msra.mxu0 %v1424
  %1554 = vmatprep.subr.bf16.mxu0 %v1427
  %1555 = vmatpush1.bf16.msra.mxu0 %v1426
  %1556 = vmatprep.subr.bf16.mxu0 %v1429
  %1557 = vmatpush1.bf16.msra.mxu0 %v1428
  %1558 = vmatprep.subr.bf16.mxu0 %v1431
  %1559 = vmatpush1.bf16.msra.mxu0 %v1430
  %1560 = vmatprep.subr.bf16.mxu0 %v1433
  %1561 = vmatpush1.bf16.msra.mxu0 %v1432
  %1562 = vmatprep.mubr.bf16.mxu0 %v209
  %1563 = vmatmul.mubr.bf16.gmra.mrb[0].mxu0 %v208
  %v1564 = vpop.f32.mrb[0].mxu0
  %v1565 = vadd.f32 0.0, %v1564
  %v1566 = vpop.f32.mrb[0].mxu0
  %v1567 = vadd.f32 0.0, %v1566
  %v1568 = vpop.f32.mrb[0].mxu0
  %v1569 = vpop.f32.mrb[0].mxu0
  %1570 = vdwg.mxu0
  %1571 = vmatprep.subr.bf16.mxu0 %v1435
  %1572 = vmatpush1.bf16.msra.mxu0 %v1434
  %1573 = vmatprep.subr.bf16.mxu0 %v1437
  %1574 = vmatpush1.bf16.msra.mxu0 %v1436
  %1575 = vmatprep.subr.bf16.mxu0 %v1439
  %1576 = vmatpush1.bf16.msra.mxu0 %v1438
  %1577 = vmatprep.subr.bf16.mxu0 %v1441
  %1578 = vmatpush1.bf16.msra.mxu0 %v1440
  %1579 = vmatprep.subr.bf16.mxu0 %v1443
  %1580 = vmatpush1.bf16.msra.mxu0 %v1442
  %1581 = vmatprep.subr.bf16.mxu0 %v1445
  %1582 = vmatpush1.bf16.msra.mxu0 %v1444
  %1583 = vmatprep.subr.bf16.mxu0 %v1447
  %1584 = vmatpush1.bf16.msra.mxu0 %v1446
  %1585 = vmatprep.subr.bf16.mxu0 %v1449
  %1586 = vmatpush1.bf16.msra.mxu0 %v1448
  %1587 = vmatprep.subr.bf16.mxu0 %v1451
  %1588 = vmatpush1.bf16.msra.mxu0 %v1450
  %1589 = vmatprep.subr.bf16.mxu0 %v1453
  %1590 = vmatpush1.bf16.msra.mxu0 %v1452
  %1591 = vmatprep.subr.bf16.mxu0 %v1455
  %1592 = vmatpush1.bf16.msra.mxu0 %v1454
  %1593 = vmatprep.subr.bf16.mxu0 %v1457
  %1594 = vmatpush1.bf16.msra.mxu0 %v1456
  %1595 = vmatprep.subr.bf16.mxu0 %v1459
  %1596 = vmatpush1.bf16.msra.mxu0 %v1458
  %1597 = vmatprep.subr.bf16.mxu0 %v1461
  %1598 = vmatpush1.bf16.msra.mxu0 %v1460
  %1599 = vmatprep.subr.bf16.mxu0 %v1463
  %1600 = vmatpush1.bf16.msra.mxu0 %v1462
  %1601 = vmatprep.subr.bf16.mxu0 %v1465
  %1602 = vmatpush1.bf16.msra.mxu0 %v1464
  %1603 = vmatprep.mubr.bf16.mxu0 %v211
  %1604 = vmatmul.mubr.bf16.gmra.mrb[0].mxu0 %v210
  %v1605 = vpop.f32.mrb[0].mxu0
  %v1606 = vadd.f32 %v1565, %v1605
  %v1607 = vpop.f32.mrb[0].mxu0
  %v1608 = vadd.f32 %v1567, %v1607
  %v1609 = vpop.f32.mrb[0].mxu0
  %v1610 = vpop.f32.mrb[0].mxu0
  %1611 = vdwg.mxu0
  %s1612 = scalar_lea.vmem %s3, 1536
  %v1613 = vld [vmem:[%s1612] sm:$0xff]
  %v1614 = vld [vmem:[%s1612 + $0x8] sm:$0xff]
  %v1615 = vld [vmem:[%s1612 + $0x10] sm:$0xff]
  %v1616 = vld [vmem:[%s1612 + $0x18] sm:$0xff]
  %v1617 = vld [vmem:[%s1612 + $0x20] sm:$0xff]
  %v1618 = vld [vmem:[%s1612 + $0x28] sm:$0xff]
  %v1619 = vld [vmem:[%s1612 + $0x30] sm:$0xff]
  %v1620 = vld [vmem:[%s1612 + $0x38] sm:$0xff]
  %v1621 = vld [vmem:[%s1612 + $0x40] sm:$0xff]
  %v1622 = vld [vmem:[%s1612 + $0x48] sm:$0xff]
  %v1623 = vld [vmem:[%s1612 + $0x50] sm:$0xff]
  %v1624 = vld [vmem:[%s1612 + $0x58] sm:$0xff]
  %v1625 = vld [vmem:[%s1612 + $0x60] sm:$0xff]
  %v1626 = vld [vmem:[%s1612 + $0x68] sm:$0xff]
  %v1627 = vld [vmem:[%s1612 + $0x70] sm:$0xff]
  %v1628 = vld [vmem:[%s1612 + $0x78] sm:$0xff]
  %v1629 = vld [vmem:[%s1612 + $0x80] sm:$0xff]
  %v1630 = vld [vmem:[%s1612 + $0x88] sm:$0xff]
  %v1631 = vld [vmem:[%s1612 + $0x90] sm:$0xff]
  %v1632 = vld [vmem:[%s1612 + $0x98] sm:$0xff]
  %v1633 = vld [vmem:[%s1612 + $0xa0] sm:$0xff]
  %v1634 = vld [vmem:[%s1612 + $0xa8] sm:$0xff]
  %v1635 = vld [vmem:[%s1612 + $0xb0] sm:$0xff]
  %v1636 = vld [vmem:[%s1612 + $0xb8] sm:$0xff]
  %v1637 = vld [vmem:[%s1612 + $0xc0] sm:$0xff]
  %v1638 = vld [vmem:[%s1612 + $0xc8] sm:$0xff]
  %v1639 = vld [vmem:[%s1612 + $0xd0] sm:$0xff]
  %v1640 = vld [vmem:[%s1612 + $0xd8] sm:$0xff]
  %v1641 = vld [vmem:[%s1612 + $0xe0] sm:$0xff]
  %v1642 = vld [vmem:[%s1612 + $0xe8] sm:$0xff]
  %v1643 = vld [vmem:[%s1612 + $0xf0] sm:$0xff]
  %v1644 = vld [vmem:[%s1612 + $0xf8] sm:$0xff]
  %v1645 = vld [vmem:[%s1612 + $0x100] sm:$0xff]
  %v1646 = vld [vmem:[%s1612 + $0x108] sm:$0xff]
  %v1647 = vld [vmem:[%s1612 + $0x110] sm:$0xff]
  %v1648 = vld [vmem:[%s1612 + $0x118] sm:$0xff]
  %v1649 = vld [vmem:[%s1612 + $0x120] sm:$0xff]
  %v1650 = vld [vmem:[%s1612 + $0x128] sm:$0xff]
  %v1651 = vld [vmem:[%s1612 + $0x130] sm:$0xff]
  %v1652 = vld [vmem:[%s1612 + $0x138] sm:$0xff]
  %v1653 = vld [vmem:[%s1612 + $0x140] sm:$0xff]
  %v1654 = vld [vmem:[%s1612 + $0x148] sm:$0xff]
  %v1655 = vld [vmem:[%s1612 + $0x150] sm:$0xff]
  %v1656 = vld [vmem:[%s1612 + $0x158] sm:$0xff]
  %v1657 = vld [vmem:[%s1612 + $0x160] sm:$0xff]
  %v1658 = vld [vmem:[%s1612 + $0x168] sm:$0xff]
  %v1659 = vld [vmem:[%s1612 + $0x170] sm:$0xff]
  %v1660 = vld [vmem:[%s1612 + $0x178] sm:$0xff]
  %v1661 = vld [vmem:[%s1612 + $0x180] sm:$0xff]
  %v1662 = vld [vmem:[%s1612 + $0x188] sm:$0xff]
  %v1663 = vld [vmem:[%s1612 + $0x190] sm:$0xff]
  %v1664 = vld [vmem:[%s1612 + $0x198] sm:$0xff]
  %v1665 = vld [vmem:[%s1612 + $0x1a0] sm:$0xff]
  %v1666 = vld [vmem:[%s1612 + $0x1a8] sm:$0xff]
  %v1667 = vld [vmem:[%s1612 + $0x1b0] sm:$0xff]
  %v1668 = vld [vmem:[%s1612 + $0x1b8] sm:$0xff]
  %v1669 = vld [vmem:[%s1612 + $0x1c0] sm:$0xff]
  %v1670 = vld [vmem:[%s1612 + $0x1c8] sm:$0xff]
  %v1671 = vld [vmem:[%s1612 + $0x1d0] sm:$0xff]
  %v1672 = vld [vmem:[%s1612 + $0x1d8] sm:$0xff]
  %v1673 = vld [vmem:[%s1612 + $0x1e0] sm:$0xff]
  %v1674 = vld [vmem:[%s1612 + $0x1e8] sm:$0xff]
  %v1675 = vld [vmem:[%s1612 + $0x1f0] sm:$0xff]
  %v1676 = vld [vmem:[%s1612 + $0x1f8] sm:$0xff]
  %v1741 = vunpack.c.l.b16 %v1613
  %v1742 = vunpack.c.h.b16 %v1613
  %v1743 = vunpack.c.l.b16 %v1614
  %v1744 = vunpack.c.h.b16 %v1614
  %v1745 = vunpack.c.l.b16 %v1615
  %v1746 = vunpack.c.h.b16 %v1615
  %v1747 = vunpack.c.l.b16 %v1616
  %v1748 = vunpack.c.h.b16 %v1616
  %v1749 = vunpack.c.l.b16 %v1617
  %v1750 = vunpack.c.h.b16 %v1617
  %v1751 = vunpack.c.l.b16 %v1618
  %v1752 = vunpack.c.h.b16 %v1618
  %v1753 = vunpack.c.l.b16 %v1619
  %v1754 = vunpack.c.h.b16 %v1619
  %v1755 = vunpack.c.l.b16 %v1620
  %v1756 = vunpack.c.h.b16 %v1620
  %v1757 = vunpack.c.l.b16 %v1621
  %v1758 = vunpack.c.h.b16 %v1621
  %v1759 = vunpack.c.l.b16 %v1622
  %v1760 = vunpack.c.h.b16 %v1622
  %v1761 = vunpack.c.l.b16 %v1623
  %v1762 = vunpack.c.h.b16 %v1623
  %v1763 = vunpack.c.l.b16 %v1624
  %v1764 = vunpack.c.h.b16 %v1624
  %v1765 = vunpack.c.l.b16 %v1625
  %v1766 = vunpack.c.h.b16 %v1625
  %v1767 = vunpack.c.l.b16 %v1626
  %v1768 = vunpack.c.h.b16 %v1626
  %v1769 = vunpack.c.l.b16 %v1627
  %v1770 = vunpack.c.h.b16 %v1627
  %v1771 = vunpack.c.l.b16 %v1628
  %v1772 = vunpack.c.h.b16 %v1628
  %v1773 = vunpack.c.l.b16 %v1629
  %v1774 = vunpack.c.h.b16 %v1629
  %v1775 = vunpack.c.l.b16 %v1630
  %v1776 = vunpack.c.h.b16 %v1630
  %v1777 = vunpack.c.l.b16 %v1631
  %v1778 = vunpack.c.h.b16 %v1631
  %v1779 = vunpack.c.l.b16 %v1632
  %v1780 = vunpack.c.h.b16 %v1632
  %v1781 = vunpack.c.l.b16 %v1633
  %v1782 = vunpack.c.h.b16 %v1633
  %v1783 = vunpack.c.l.b16 %v1634
  %v1784 = vunpack.c.h.b16 %v1634
  %v1785 = vunpack.c.l.b16 %v1635
  %v1786 = vunpack.c.h.b16 %v1635
  %v1787 = vunpack.c.l.b16 %v1636
  %v1788 = vunpack.c.h.b16 %v1636
  %v1789 = vunpack.c.l.b16 %v1637
  %v1790 = vunpack.c.h.b16 %v1637
  %v1791 = vunpack.c.l.b16 %v1638
  %v1792 = vunpack.c.h.b16 %v1638
  %v1793 = vunpack.c.l.b16 %v1639
  %v1794 = vunpack.c.h.b16 %v1639
  %v1795 = vunpack.c.l.b16 %v1640
  %v1796 = vunpack.c.h.b16 %v1640
  %v1797 = vunpack.c.l.b16 %v1641
  %v1798 = vunpack.c.h.b16 %v1641
  %v1799 = vunpack.c.l.b16 %v1642
  %v1800 = vunpack.c.h.b16 %v1642
  %v1801 = vunpack.c.l.b16 %v1643
  %v1802 = vunpack.c.h.b16 %v1643
  %v1803 = vunpack.c.l.b16 %v1644
  %v1804 = vunpack.c.h.b16 %v1644
  %v1805 = vunpack.c.l.b16 %v1645
  %v1806 = vunpack.c.h.b16 %v1645
  %v1807 = vunpack.c.l.b16 %v1646
  %v1808 = vunpack.c.h.b16 %v1646
  %v1809 = vunpack.c.l.b16 %v1647
  %v1810 = vunpack.c.h.b16 %v1647
  %v1811 = vunpack.c.l.b16 %v1648
  %v1812 = vunpack.c.h.b16 %v1648
  %v1813 = vunpack.c.l.b16 %v1649
  %v1814 = vunpack.c.h.b16 %v1649
  %v1815 = vunpack.c.l.b16 %v1650
  %v1816 = vunpack.c.h.b16 %v1650
  %v1817 = vunpack.c.l.b16 %v1651
  %v1818 = vunpack.c.h.b16 %v1651
  %v1819 = vunpack.c.l.b16 %v1652
  %v1820 = vunpack.c.h.b16 %v1652
  %v1821 = vunpack.c.l.b16 %v1653
  %v1822 = vunpack.c.h.b16 %v1653
  %v1823 = vunpack.c.l.b16 %v1654
  %v1824 = vunpack.c.h.b16 %v1654
  %v1825 = vunpack.c.l.b16 %v1655
  %v1826 = vunpack.c.h.b16 %v1655
  %v1827 = vunpack.c.l.b16 %v1656
  %v1828 = vunpack.c.h.b16 %v1656
  %v1829 = vunpack.c.l.b16 %v1657
  %v1830 = vunpack.c.h.b16 %v1657
  %v1831 = vunpack.c.l.b16 %v1658
  %v1832 = vunpack.c.h.b16 %v1658
  %v1833 = vunpack.c.l.b16 %v1659
  %v1834 = vunpack.c.h.b16 %v1659
  %v1835 = vunpack.c.l.b16 %v1660
  %v1836 = vunpack.c.h.b16 %v1660
  %v1837 = vunpack.c.l.b16 %v1661
  %v1838 = vunpack.c.h.b16 %v1661
  %v1839 = vunpack.c.l.b16 %v1662
  %v1840 = vunpack.c.h.b16 %v1662
  %v1841 = vunpack.c.l.b16 %v1663
  %v1842 = vunpack.c.h.b16 %v1663
  %v1843 = vunpack.c.l.b16 %v1664
  %v1844 = vunpack.c.h.b16 %v1664
  %v1845 = vunpack.c.l.b16 %v1665
  %v1846 = vunpack.c.h.b16 %v1665
  %v1847 = vunpack.c.l.b16 %v1666
  %v1848 = vunpack.c.h.b16 %v1666
  %v1849 = vunpack.c.l.b16 %v1667
  %v1850 = vunpack.c.h.b16 %v1667
  %v1851 = vunpack.c.l.b16 %v1668
  %v1852 = vunpack.c.h.b16 %v1668
  %v1853 = vunpack.c.l.b16 %v1669
  %v1854 = vunpack.c.h.b16 %v1669
  %v1855 = vunpack.c.l.b16 %v1670
  %v1856 = vunpack.c.h.b16 %v1670
  %v1857 = vunpack.c.l.b16 %v1671
  %v1858 = vunpack.c.h.b16 %v1671
  %v1859 = vunpack.c.l.b16 %v1672
  %v1860 = vunpack.c.h.b16 %v1672
  %v1861 = vunpack.c.l.b16 %v1673
  %v1862 = vunpack.c.h.b16 %v1673
  %v1863 = vunpack.c.l.b16 %v1674
  %v1864 = vunpack.c.h.b16 %v1674
  %v1865 = vunpack.c.l.b16 %v1675
  %v1866 = vunpack.c.h.b16 %v1675
  %v1867 = vunpack.c.l.b16 %v1676
  %v1868 = vunpack.c.h.b16 %v1676
  %v1869 = vpack.c.b16 %v1743, %v1741
  %v1870 = vpack.c.b16 %v1744, %v1742
  %v1871 = vpack.c.b16 %v1747, %v1745
  %v1872 = vpack.c.b16 %v1748, %v1746
  %v1873 = vpack.c.b16 %v1751, %v1749
  %v1874 = vpack.c.b16 %v1752, %v1750
  %v1875 = vpack.c.b16 %v1755, %v1753
  %v1876 = vpack.c.b16 %v1756, %v1754
  %v1877 = vpack.c.b16 %v1759, %v1757
  %v1878 = vpack.c.b16 %v1760, %v1758
  %v1879 = vpack.c.b16 %v1763, %v1761
  %v1880 = vpack.c.b16 %v1764, %v1762
  %v1881 = vpack.c.b16 %v1767, %v1765
  %v1882 = vpack.c.b16 %v1768, %v1766
  %v1883 = vpack.c.b16 %v1771, %v1769
  %v1884 = vpack.c.b16 %v1772, %v1770
  %v1885 = vpack.c.b16 %v1775, %v1773
  %v1886 = vpack.c.b16 %v1776, %v1774
  %v1887 = vpack.c.b16 %v1779, %v1777
  %v1888 = vpack.c.b16 %v1780, %v1778
  %v1889 = vpack.c.b16 %v1783, %v1781
  %v1890 = vpack.c.b16 %v1784, %v1782
  %v1891 = vpack.c.b16 %v1787, %v1785
  %v1892 = vpack.c.b16 %v1788, %v1786
  %v1893 = vpack.c.b16 %v1791, %v1789
  %v1894 = vpack.c.b16 %v1792, %v1790
  %v1895 = vpack.c.b16 %v1795, %v1793
  %v1896 = vpack.c.b16 %v1796, %v1794
  %v1897 = vpack.c.b16 %v1799, %v1797
  %v1898 = vpack.c.b16 %v1800, %v1798
  %v1899 = vpack.c.b16 %v1803, %v1801
  %v1900 = vpack.c.b16 %v1804, %v1802
  %v1901 = vpack.c.b16 %v1807, %v1805
  %v1902 = vpack.c.b16 %v1808, %v1806
  %v1903 = vpack.c.b16 %v1811, %v1809
  %v1904 = vpack.c.b16 %v1812, %v1810
  %v1905 = vpack.c.b16 %v1815, %v1813
  %v1906 = vpack.c.b16 %v1816, %v1814
  %v1907 = vpack.c.b16 %v1819, %v1817
  %v1908 = vpack.c.b16 %v1820, %v1818
  %v1909 = vpack.c.b16 %v1823, %v1821
  %v1910 = vpack.c.b16 %v1824, %v1822
  %v1911 = vpack.c.b16 %v1827, %v1825
  %v1912 = vpack.c.b16 %v1828, %v1826
  %v1913 = vpack.c.b16 %v1831, %v1829
  %v1914 = vpack.c.b16 %v1832, %v1830
  %v1915 = vpack.c.b16 %v1835, %v1833
  %v1916 = vpack.c.b16 %v1836, %v1834
  %v1917 = vpack.c.b16 %v1839, %v1837
  %v1918 = vpack.c.b16 %v1840, %v1838
  %v1919 = vpack.c.b16 %v1843, %v1841
  %v1920 = vpack.c.b16 %v1844, %v1842
  %v1921 = vpack.c.b16 %v1847, %v1845
  %v1922 = vpack.c.b16 %v1848, %v1846
  %v1923 = vpack.c.b16 %v1851, %v1849
  %v1924 = vpack.c.b16 %v1852, %v1850
  %v1925 = vpack.c.b16 %v1855, %v1853
  %v1926 = vpack.c.b16 %v1856, %v1854
  %v1927 = vpack.c.b16 %v1859, %v1857
  %v1928 = vpack.c.b16 %v1860, %v1858
  %v1929 = vpack.c.b16 %v1863, %v1861
  %v1930 = vpack.c.b16 %v1864, %v1862
  %v1931 = vpack.c.b16 %v1867, %v1865
  %v1932 = vpack.c.b16 %v1868, %v1866
  %1997 = vmatprep.subr.bf16.mxu0 %v1870
  %1998 = vmatpush1.bf16.msra.mxu0 %v1869
  %1999 = vmatprep.subr.bf16.mxu0 %v1872
  %2000 = vmatpush1.bf16.msra.mxu0 %v1871
  %2001 = vmatprep.subr.bf16.mxu0 %v1874
  %2002 = vmatpush1.bf16.msra.mxu0 %v1873
  %2003 = vmatprep.subr.bf16.mxu0 %v1876
  %2004 = vmatpush1.bf16.msra.mxu0 %v1875
  %2005 = vmatprep.subr.bf16.mxu0 %v1878
  %2006 = vmatpush1.bf16.msra.mxu0 %v1877
  %2007 = vmatprep.subr.bf16.mxu0 %v1880
  %2008 = vmatpush1.bf16.msra.mxu0 %v1879
  %2009 = vmatprep.subr.bf16.mxu0 %v1882
  %2010 = vmatpush1.bf16.msra.mxu0 %v1881
  %2011 = vmatprep.subr.bf16.mxu0 %v1884
  %2012 = vmatpush1.bf16.msra.mxu0 %v1883
  %2013 = vmatprep.subr.bf16.mxu0 %v1886
  %2014 = vmatpush1.bf16.msra.mxu0 %v1885
  %2015 = vmatprep.subr.bf16.mxu0 %v1888
  %2016 = vmatpush1.bf16.msra.mxu0 %v1887
  %2017 = vmatprep.subr.bf16.mxu0 %v1890
  %2018 = vmatpush1.bf16.msra.mxu0 %v1889
  %2019 = vmatprep.subr.bf16.mxu0 %v1892
  %2020 = vmatpush1.bf16.msra.mxu0 %v1891
  %2021 = vmatprep.subr.bf16.mxu0 %v1894
  %2022 = vmatpush1.bf16.msra.mxu0 %v1893
  %2023 = vmatprep.subr.bf16.mxu0 %v1896
  %2024 = vmatpush1.bf16.msra.mxu0 %v1895
  %2025 = vmatprep.subr.bf16.mxu0 %v1898
  %2026 = vmatpush1.bf16.msra.mxu0 %v1897
  %2027 = vmatprep.subr.bf16.mxu0 %v1900
  %2028 = vmatpush1.bf16.msra.mxu0 %v1899
  %2029 = vmatprep.mubr.bf16.mxu0 %v209
  %2030 = vmatmul.mubr.bf16.gmra.mrb[0].mxu0 %v208
  %v2031 = vpop.f32.mrb[0].mxu0
  %v2032 = vadd.f32 0.0, %v2031
  %v2033 = vpop.f32.mrb[0].mxu0
  %v2034 = vadd.f32 0.0, %v2033
  %v2035 = vpop.f32.mrb[0].mxu0
  %v2036 = vpop.f32.mrb[0].mxu0
  %2037 = vdwg.mxu0
  %2038 = vmatprep.subr.bf16.mxu0 %v1902
  %2039 = vmatpush1.bf16.msra.mxu0 %v1901
  %2040 = vmatprep.subr.bf16.mxu0 %v1904
  %2041 = vmatpush1.bf16.msra.mxu0 %v1903
  %2042 = vmatprep.subr.bf16.mxu0 %v1906
  %2043 = vmatpush1.bf16.msra.mxu0 %v1905
  %2044 = vmatprep.subr.bf16.mxu0 %v1908
  %2045 = vmatpush1.bf16.msra.mxu0 %v1907
  %2046 = vmatprep.subr.bf16.mxu0 %v1910
  %2047 = vmatpush1.bf16.msra.mxu0 %v1909
  %2048 = vmatprep.subr.bf16.mxu0 %v1912
  %2049 = vmatpush1.bf16.msra.mxu0 %v1911
  %2050 = vmatprep.subr.bf16.mxu0 %v1914
  %2051 = vmatpush1.bf16.msra.mxu0 %v1913
  %2052 = vmatprep.subr.bf16.mxu0 %v1916
  %2053 = vmatpush1.bf16.msra.mxu0 %v1915
  %2054 = vmatprep.subr.bf16.mxu0 %v1918
  %2055 = vmatpush1.bf16.msra.mxu0 %v1917
  %2056 = vmatprep.subr.bf16.mxu0 %v1920
  %2057 = vmatpush1.bf16.msra.mxu0 %v1919
  %2058 = vmatprep.subr.bf16.mxu0 %v1922
  %2059 = vmatpush1.bf16.msra.mxu0 %v1921
  %2060 = vmatprep.subr.bf16.mxu0 %v1924
  %2061 = vmatpush1.bf16.msra.mxu0 %v1923
  %2062 = vmatprep.subr.bf16.mxu0 %v1926
  %2063 = vmatpush1.bf16.msra.mxu0 %v1925
  %2064 = vmatprep.subr.bf16.mxu0 %v1928
  %2065 = vmatpush1.bf16.msra.mxu0 %v1927
  %2066 = vmatprep.subr.bf16.mxu0 %v1930
  %2067 = vmatpush1.bf16.msra.mxu0 %v1929
  %2068 = vmatprep.subr.bf16.mxu0 %v1932
  %2069 = vmatpush1.bf16.msra.mxu0 %v1931
  %2070 = vmatprep.mubr.bf16.mxu0 %v211
  %2071 = vmatmul.mubr.bf16.gmra.mrb[0].mxu0 %v210
  %v2072 = vpop.f32.mrb[0].mxu0
  %v2073 = vadd.f32 %v2032, %v2072
  %v2074 = vpop.f32.mrb[0].mxu0
  %v2075 = vadd.f32 %v2034, %v2074
  %v2076 = vpop.f32.mrb[0].mxu0
  %v2077 = vpop.f32.mrb[0].mxu0
  %2078 = vdwg.mxu0
  %vm2079 = vcmask 1041408
  %v2080 = vsel %vm2079, %v672, 0.0
  %v2081 = vsel %vm2079, %v1139, 0.0
  %v2082 = vadd.f32 %v2080, %v2081
  %v2083 = vsel %vm2079, %v1606, 0.0
  %v2084 = vadd.f32 %v2082, %v2083
  %v2085 = vsel %vm2079, %v2073, 0.0
  %v2086 = vadd.f32 %v2084, %v2085
  %v2087 = vrot.slane %v2086, 4
  %v2088 = vadd.f32 %v2086, %v2087
  %v2089 = vrot.slane %v2088, 2
  %v2090 = vadd.f32 %v2088, %v2089
  %v2091 = vrot.slane %v2090, 1
  %v2092 = vadd.f32 %v2090, %v2091
  %v2093 = vsel %vm2079, %v674, 0.0
  %v2094 = vsel %vm2079, %v1141, 0.0
  %v2095 = vadd.f32 %v2093, %v2094
  %v2096 = vsel %vm2079, %v1608, 0.0
  %v2097 = vadd.f32 %v2095, %v2096
  %v2098 = vsel %vm2079, %v2075, 0.0
  %v2099 = vadd.f32 %v2097, %v2098
  %v2100 = vrot.slane %v2099, 4
  %v2101 = vadd.f32 %v2099, %v2100
  %v2102 = vrot.slane %v2101, 2
  %v2103 = vadd.f32 %v2101, %v2102
  %v2104 = vrot.slane %v2103, 1
  %v2105 = vadd.f32 %v2103, %v2104
  %v2106 = vrcp.pop 8.0
  %v2107 = vmul.f32 %v2092, %v2106
  %v2108 = vmul.f32 %v2105, %v2106
  %v2109 = vsub.f32 %v672, %v2107
  %v2110 = vsub.f32 %v674, %v2108
  %v2111 = vsub.f32 %v1139, %v2107
  %v2112 = vsub.f32 %v1141, %v2108
  %v2113 = vsub.f32 %v1606, %v2107
  %v2114 = vsub.f32 %v1608, %v2108
  %v2115 = vsub.f32 %v2073, %v2107
  %v2116 = vsub.f32 %v2075, %v2108
  %v2117 = vmul.f32 %v2109, %v2109
  %v2118 = vmul.f32 %v2110, %v2110
  %v2119 = vmul.f32 %v2111, %v2111
  %v2120 = vmul.f32 %v2112, %v2112
  %v2121 = vmul.f32 %v2113, %v2113
  %v2122 = vmul.f32 %v2114, %v2114
  %v2123 = vmul.f32 %v2115, %v2115
  %v2124 = vmul.f32 %v2116, %v2116
  %v2125 = vsel %vm2079, %v2117, 0.0
  %v2126 = vsel %vm2079, %v2119, 0.0
  %v2127 = vadd.f32 %v2125, %v2126
  %v2128 = vsel %vm2079, %v2121, 0.0
  %v2129 = vadd.f32 %v2127, %v2128
  %v2130 = vsel %vm2079, %v2123, 0.0
  %v2131 = vadd.f32 %v2129, %v2130
  %v2132 = vrot.slane %v2131, 4
  %v2133 = vadd.f32 %v2131, %v2132
  %v2134 = vrot.slane %v2133, 2
  %v2135 = vadd.f32 %v2133, %v2134
  %v2136 = vrot.slane %v2135, 1
  %v2137 = vadd.f32 %v2135, %v2136
  %v2138 = vsel %vm2079, %v2118, 0.0
  %v2139 = vsel %vm2079, %v2120, 0.0
  %v2140 = vadd.f32 %v2138, %v2139
  %v2141 = vsel %vm2079, %v2122, 0.0
  %v2142 = vadd.f32 %v2140, %v2141
  %v2143 = vsel %vm2079, %v2124, 0.0
  %v2144 = vadd.f32 %v2142, %v2143
  %v2145 = vrot.slane %v2144, 4
  %v2146 = vadd.f32 %v2144, %v2145
  %v2147 = vrot.slane %v2146, 2
  %v2148 = vadd.f32 %v2146, %v2147
  %v2149 = vrot.slane %v2148, 1
  %v2150 = vadd.f32 %v2148, %v2149
  %v2151 = vmul.f32 %v2137, %v2106
  %v2152 = vmul.f32 %v2150, %v2106
  %v2153 = vadd.f32 %v2151, 1e-05
  %v2154 = vadd.f32 %v2152, 1e-05
  %v2155 = vrsqrt.pop %v2153
  %v2156 = vrsqrt.pop %v2154
  %v2157 = vmul.f32 %v2109, %v2155
  %v2158 = vmul.f32 %v2110, %v2156
  %v2159 = vmul.f32 %v2111, %v2155
  %v2160 = vmul.f32 %v2112, %v2156
  %v2161 = vmul.f32 %v2113, %v2155
  %v2162 = vmul.f32 %v2114, %v2156
  %v2163 = vmul.f32 %v2115, %v2155
  %v2164 = vmul.f32 %v2116, %v2156
  %v2165 = vld [vmem:[%s4] sm:$0x3]
  %v2167 = vlaneseq
  %v2168 = vshrl.u32 %v2167, 7
  %v2169 = vsub.s32 0, %v2168
  %v2170 = vrot.slane %v2165, %v2169
  %v2171 = vlaneseq
  %v2172 = vshrl.u32 %v2171, 7
  %v2173 = vsub.s32 1, %v2172
  %v2174 = vrot.slane %v2165, %v2173
  %v2177 = vmul.f32 %v2157, %v2170
  %v2178 = vmul.f32 %v2158, %v2174
  %v2179 = vmul.f32 %v2159, %v2170
  %v2180 = vmul.f32 %v2160, %v2174
  %v2181 = vmul.f32 %v2161, %v2170
  %v2182 = vmul.f32 %v2162, %v2174
  %v2183 = vmul.f32 %v2163, %v2170
  %v2184 = vmul.f32 %v2164, %v2174
  %v2185 = vld [vmem:[%s5] sm:$0x3]
  %v2187 = vlaneseq
  %v2188 = vshrl.u32 %v2187, 7
  %v2189 = vsub.s32 0, %v2188
  %v2190 = vrot.slane %v2185, %v2189
  %v2191 = vlaneseq
  %v2192 = vshrl.u32 %v2191, 7
  %v2193 = vsub.s32 1, %v2192
  %v2194 = vrot.slane %v2185, %v2193
  %v2197 = vadd.f32 %v2177, %v2190
  %v2198 = vadd.f32 %v2178, %v2194
  %v2199 = vadd.f32 %v2179, %v2190
  %v2200 = vadd.f32 %v2180, %v2194
  %v2201 = vadd.f32 %v2181, %v2190
  %v2202 = vadd.f32 %v2182, %v2194
  %v2203 = vadd.f32 %v2183, %v2190
  %v2204 = vadd.f32 %v2184, %v2194
  %v2205 = vmax.f32 %v2197, 0.0
  %v2206 = vmax.f32 %v2198, 0.0
  %v2207 = vmax.f32 %v2199, 0.0
  %v2208 = vmax.f32 %v2200, 0.0
  %v2209 = vmax.f32 %v2201, 0.0
  %v2210 = vmax.f32 %v2202, 0.0
  %v2211 = vmax.f32 %v2203, 0.0
  %v2212 = vmax.f32 %v2204, 0.0
  %v2221 = vcombine.low %v2205, %v2206
  %v2223 = vunpack.c.l.s4 1983009808
  %v2224 = vunpack.c.0.s8 %v2223
  %v2225 = vlaneseq
  %v2226 = vshrl.u32 %v2225, 7
  %v2227 = vsub.s32 %v2224, %v2226
  %v2228 = vrot.slane %v2221, %v2227
  %v2229 = vcombine.low %v2207, %v2208
  %v2231 = vunpack.c.l.s4 1983009808
  %v2232 = vunpack.c.0.s8 %v2231
  %v2233 = vlaneseq
  %v2234 = vshrl.u32 %v2233, 7
  %v2235 = vsub.s32 %v2232, %v2234
  %v2236 = vrot.slane %v2229, %v2235
  %v2237 = vcombine.low %v2209, %v2210
  %v2239 = vunpack.c.l.s4 1983009808
  %v2240 = vunpack.c.0.s8 %v2239
  %v2241 = vlaneseq
  %v2242 = vshrl.u32 %v2241, 7
  %v2243 = vsub.s32 %v2240, %v2242
  %v2244 = vrot.slane %v2237, %v2243
  %v2245 = vcombine.low %v2211, %v2212
  %v2247 = vunpack.c.l.s4 1983009808
  %v2248 = vunpack.c.0.s8 %v2247
  %v2249 = vlaneseq
  %v2250 = vshrl.u32 %v2249, 7
  %v2251 = vsub.s32 %v2248, %v2250
  %v2252 = vrot.slane %v2245, %v2251
  %2257 = vst [vmem:[%s6] sm:$0xf] %v2228
  %2258 = vst [vmem:[%s6 + $0x4] sm:$0xf] %v2236
  %2259 = vst [vmem:[%s6 + $0x8] sm:$0xf] %v2244
  %2260 = vst [vmem:[%s6 + $0xc] sm:$0xf] %v2252
  // Predicated region
  $region26: #{_lambda_.4} parent=0 // pred_check
    _
  $region27: #{_lambda_.4} parent=0 // pred_check_branch
    %2262 = sbr.rel (0) target = $region29
  $region28: #{_lambda_.4} parent=0 // pred_region
    _
  $region29: #{_lambda_.4} parent=0 // pred_fallthru
    _
  // Predicated region
  $region30: #{_lambda_.4} parent=0 // pred_check
    _
  $region31: #{_lambda_.4} parent=0 // pred_check_branch
    %2264 = sbr.rel (0) target = $region33
  $region32: #{_lambda_.4} parent=0 // pred_region
    _
  $region33: #{_lambda_.4} parent=0 // pred_fallthru
    _

// kernel: _lambda_.5
$region0: #{_lambda_.5}
  #allocation0 [shape = 'u32[]', space=smem, size = 0x4, offset = 0x4, fixed_abs, tag = 'smem constant byte address 0x4 - core index']
  #allocation1 [shape = 'u32[144,128]{1,0:T(1,128)}', space=vmem, size = 0x12000, scoped, tag = 'internal scratch']
  %s0 = inlined_call_operand.vmem [shape: bf16[4,8,1024], index: 0, kind: input, shape index: {}]
  %s1 = inlined_call_operand.vmem [shape: bf16[4,1024,128], index: 1, kind: input, shape index: {}]
  %s2 = inlined_call_operand.vmem [shape: f32[1,128], index: 2, kind: input, shape index: {}]
  %s3 = inlined_call_operand.vmem [shape: f32[1,128], index: 3, kind: input, shape index: {}]
  %s4 = inlined_call_operand.vmem [shape: f32[4,8,128], index: 4, kind: output, shape index: {}]
  %s5 = sld [smem:[#allocation0]]
  $region26: #{_lambda_.5} parent=0
    _
  %s7 = ssub.s32 1, %s5
  %s8 = scalar_select 0, %s7, %s5
  // Predicated region
  $region2: #{_lambda_.5} parent=0 // pred_check
    _
  $region3: #{_lambda_.5} parent=0 // pred_check_branch
    %10 = sbr.rel (0) target = $region5
  $region4: #{_lambda_.5} parent=0 // pred_region
    _
  $region5: #{_lambda_.5} parent=0 // pred_fallthru
    _
  // Predicated region
  $region6: #{_lambda_.5} parent=0 // pred_check
    _
  $region7: #{_lambda_.5} parent=0 // pred_check_branch
    %12 = sbr.rel (0) target = $region9
  $region8: #{_lambda_.5} parent=0 // pred_region
    _
  $region9: #{_lambda_.5} parent=0 // pred_fallthru
    _
  // Predicated region
  $region10: #{_lambda_.5} parent=0 // pred_check
    _
  $region11: #{_lambda_.5} parent=0 // pred_check_branch
    %14 = sbr.rel (0) target = $region13
  $region12: #{_lambda_.5} parent=0 // pred_region
    _
  $region13: #{_lambda_.5} parent=0 // pred_fallthru
    _
  // Predicated region
  $region14: #{_lambda_.5} parent=0 // pred_check
    _
  $region15: #{_lambda_.5} parent=0 // pred_check_branch
    %16 = sbr.rel (0) target = $region17
  $region16: #{_lambda_.5} parent=0 // pred_region
    _
  $region17: #{_lambda_.5} parent=0 // pred_fallthru
    _
  %v18 = vld [vmem:[%s0] sm:$0xff]
  %v19 = vld [vmem:[%s0 + $0x8] sm:$0xff]
  %v20 = vld [vmem:[%s0 + $0x10] sm:$0xff]
  %v21 = vld [vmem:[%s0 + $0x18] sm:$0xff]
  %v22 = vld [vmem:[%s1] sm:$0xf]
  %v23 = vld [vmem:[%s1 + $0x4] sm:$0xf]
  %v24 = vld [vmem:[%s1 + $0x8] sm:$0xf]
  %v25 = vld [vmem:[%s1 + $0xc] sm:$0xf]
  %v26 = vld [vmem:[%s1 + $0x10] sm:$0xf]
  %v27 = vld [vmem:[%s1 + $0x14] sm:$0xf]
  %v28 = vld [vmem:[%s1 + $0x18] sm:$0xf]
  %v29 = vld [vmem:[%s1 + $0x1c] sm:$0xf]
  %v30 = vld [vmem:[%s1 + $0x20] sm:$0xf]
  %v31 = vld [vmem:[%s1 + $0x24] sm:$0xf]
  %v32 = vld [vmem:[%s1 + $0x28] sm:$0xf]
  %v33 = vld [vmem:[%s1 + $0x2c] sm:$0xf]
  %v34 = vld [vmem:[%s1 + $0x30] sm:$0xf]
  %v35 = vld [vmem:[%s1 + $0x34] sm:$0xf]
  %v36 = vld [vmem:[%s1 + $0x38] sm:$0xf]
  %v37 = vld [vmem:[%s1 + $0x3c] sm:$0xf]
  %v38 = vld [vmem:[%s1 + $0x40] sm:$0xf]
  %v39 = vld [vmem:[%s1 + $0x44] sm:$0xf]
  %v40 = vld [vmem:[%s1 + $0x48] sm:$0xf]
  %v41 = vld [vmem:[%s1 + $0x4c] sm:$0xf]
  %v42 = vld [vmem:[%s1 + $0x50] sm:$0xf]
  %v43 = vld [vmem:[%s1 + $0x54] sm:$0xf]
  %v44 = vld [vmem:[%s1 + $0x58] sm:$0xf]
  %v45 = vld [vmem:[%s1 + $0x5c] sm:$0xf]
  %v46 = vld [vmem:[%s1 + $0x60] sm:$0xf]
  %v47 = vld [vmem:[%s1 + $0x64] sm:$0xf]
  %v48 = vld [vmem:[%s1 + $0x68] sm:$0xf]
  %v49 = vld [vmem:[%s1 + $0x6c] sm:$0xf]
  %v50 = vld [vmem:[%s1 + $0x70] sm:$0xf]
  %v51 = vld [vmem:[%s1 + $0x74] sm:$0xf]
  %v52 = vld [vmem:[%s1 + $0x78] sm:$0xf]
  %v53 = vld [vmem:[%s1 + $0x7c] sm:$0xf]
  %v54 = vld [vmem:[%s1 + $0x80] sm:$0xf]
  %v55 = vld [vmem:[%s1 + $0x84] sm:$0xf]
  %v56 = vld [vmem:[%s1 + $0x88] sm:$0xf]
  %v57 = vld [vmem:[%s1 + $0x8c] sm:$0xf]
  %v58 = vld [vmem:[%s1 + $0x90] sm:$0xf]
  %v59 = vld [vmem:[%s1 + $0x94] sm:$0xf]
  %v60 = vld [vmem:[%s1 + $0x98] sm:$0xf]
  %v61 = vld [vmem:[%s1 + $0x9c] sm:$0xf]
  %v62 = vld [vmem:[%s1 + $0xa0] sm:$0xf]
  %v63 = vld [vmem:[%s1 + $0xa4] sm:$0xf]
  %v64 = vld [vmem:[%s1 + $0xa8] sm:$0xf]
  %v65 = vld [vmem:[%s1 + $0xac] sm:$0xf]
  %v66 = vld [vmem:[%s1 + $0xb0] sm:$0xf]
  %v67 = vld [vmem:[%s1 + $0xb4] sm:$0xf]
  %v68 = vld [vmem:[%s1 + $0xb8] sm:$0xf]
  %v69 = vld [vmem:[%s1 + $0xbc] sm:$0xf]
  %v70 = vld [vmem:[%s1 + $0xc0] sm:$0xf]
  %v71 = vld [vmem:[%s1 + $0xc4] sm:$0xf]
  %v72 = vld [vmem:[%s1 + $0xc8] sm:$0xf]
  %v73 = vld [vmem:[%s1 + $0xcc] sm:$0xf]
  %v74 = vld [vmem:[%s1 + $0xd0] sm:$0xf]
  %v75 = vld [vmem:[%s1 + $0xd4] sm:$0xf]
  %v76 = vld [vmem:[%s1 + $0xd8] sm:$0xf]
  %v77 = vld [vmem:[%s1 + $0xdc] sm:$0xf]
  %v78 = vld [vmem:[%s1 + $0xe0] sm:$0xf]
  %v79 = vld [vmem:[%s1 + $0xe4] sm:$0xf]
  %v80 = vld [vmem:[%s1 + $0xe8] sm:$0xf]
  %v81 = vld [vmem:[%s1 + $0xec] sm:$0xf]
  %v82 = vld [vmem:[%s1 + $0xf0] sm:$0xf]
  %v83 = vld [vmem:[%s1 + $0xf4] sm:$0xf]
  %v84 = vld [vmem:[%s1 + $0xf8] sm:$0xf]
  %v85 = vld [vmem:[%s1 + $0xfc] sm:$0xf]
  %v86 = vld [vmem:[%s1 + $0x100] sm:$0xf]
  %v87 = vld [vmem:[%s1 + $0x104] sm:$0xf]
  %v88 = vld [vmem:[%s1 + $0x108] sm:$0xf]
  %v89 = vld [vmem:[%s1 + $0x10c] sm:$0xf]
  %v90 = vld [vmem:[%s1 + $0x110] sm:$0xf]
  %v91 = vld [vmem:[%s1 + $0x114] sm:$0xf]
  %v92 = vld [vmem:[%s1 + $0x118] sm:$0xf]
  %v93 = vld [vmem:[%s1 + $0x11c] sm:$0xf]
  %v94 = vld [vmem:[%s1 + $0x120] sm:$0xf]
  %v95 = vld [vmem:[%s1 + $0x124] sm:$0xf]
  %v96 = vld [vmem:[%s1 + $0x128] sm:$0xf]
  %v97 = vld [vmem:[%s1 + $0x12c] sm:$0xf]
  %v98 = vld [vmem:[%s1 + $0x130] sm:$0xf]
  %v99 = vld [vmem:[%s1 + $0x134] sm:$0xf]
  %v100 = vld [vmem:[%s1 + $0x138] sm:$0xf]
  %v101 = vld [vmem:[%s1 + $0x13c] sm:$0xf]
  %v102 = vld [vmem:[%s1 + $0x140] sm:$0xf]
  %v103 = vld [vmem:[%s1 + $0x144] sm:$0xf]
  %v104 = vld [vmem:[%s1 + $0x148] sm:$0xf]
  %v105 = vld [vmem:[%s1 + $0x14c] sm:$0xf]
  %v106 = vld [vmem:[%s1 + $0x150] sm:$0xf]
  %v107 = vld [vmem:[%s1 + $0x154] sm:$0xf]
  %v108 = vld [vmem:[%s1 + $0x158] sm:$0xf]
  %v109 = vld [vmem:[%s1 + $0x15c] sm:$0xf]
  %v110 = vld [vmem:[%s1 + $0x160] sm:$0xf]
  %v111 = vld [vmem:[%s1 + $0x164] sm:$0xf]
  %v112 = vld [vmem:[%s1 + $0x168] sm:$0xf]
  %v113 = vld [vmem:[%s1 + $0x16c] sm:$0xf]
  %v114 = vld [vmem:[%s1 + $0x170] sm:$0xf]
  %v115 = vld [vmem:[%s1 + $0x174] sm:$0xf]
  %v116 = vld [vmem:[%s1 + $0x178] sm:$0xf]
  %v117 = vld [vmem:[%s1 + $0x17c] sm:$0xf]
  %v118 = vld [vmem:[%s1 + $0x180] sm:$0xf]
  %v119 = vld [vmem:[%s1 + $0x184] sm:$0xf]
  %v120 = vld [vmem:[%s1 + $0x188] sm:$0xf]
  %v121 = vld [vmem:[%s1 + $0x18c] sm:$0xf]
  %v122 = vld [vmem:[%s1 + $0x190] sm:$0xf]
  %v123 = vld [vmem:[%s1 + $0x194] sm:$0xf]
  %v124 = vld [vmem:[%s1 + $0x198] sm:$0xf]
  %v125 = vld [vmem:[%s1 + $0x19c] sm:$0xf]
  %v126 = vld [vmem:[%s1 + $0x1a0] sm:$0xf]
  %v127 = vld [vmem:[%s1 + $0x1a4] sm:$0xf]
  %v128 = vld [vmem:[%s1 + $0x1a8] sm:$0xf]
  %v129 = vld [vmem:[%s1 + $0x1ac] sm:$0xf]
  %v130 = vld [vmem:[%s1 + $0x1b0] sm:$0xf]
  %v131 = vld [vmem:[%s1 + $0x1b4] sm:$0xf]
  %v132 = vld [vmem:[%s1 + $0x1b8] sm:$0xf]
  %v133 = vld [vmem:[%s1 + $0x1bc] sm:$0xf]
  %v134 = vld [vmem:[%s1 + $0x1c0] sm:$0xf]
  %v135 = vld [vmem:[%s1 + $0x1c4] sm:$0xf]
  %v136 = vld [vmem:[%s1 + $0x1c8] sm:$0xf]
  %v137 = vld [vmem:[%s1 + $0x1cc] sm:$0xf]
  %v138 = vld [vmem:[%s1 + $0x1d0] sm:$0xf]
  %v139 = vld [vmem:[%s1 + $0x1d4] sm:$0xf]
  %v140 = vld [vmem:[%s1 + $0x1d8] sm:$0xf]
  %v141 = vld [vmem:[%s1 + $0x1dc] sm:$0xf]
  %v142 = vld [vmem:[%s1 + $0x1e0] sm:$0xf]
  %v143 = vld [vmem:[%s1 + $0x1e4] sm:$0xf]
  %v144 = vld [vmem:[%s1 + $0x1e8] sm:$0xf]
  %v145 = vld [vmem:[%s1 + $0x1ec] sm:$0xf]
  %v146 = vld [vmem:[%s1 + $0x1f0] sm:$0xf]
  %v147 = vld [vmem:[%s1 + $0x1f4] sm:$0xf]
  %v148 = vld [vmem:[%s1 + $0x1f8] sm:$0xf]
  %v149 = vld [vmem:[%s1 + $0x1fc] sm:$0xf]
  %v154 = vunpack.c.l.b16 %v18
  %v155 = vunpack.c.h.b16 %v18
  %v156 = vunpack.c.l.b16 %v19
  %v157 = vunpack.c.h.b16 %v19
  %v158 = vunpack.c.l.b16 %v20
  %v159 = vunpack.c.h.b16 %v20
  %v160 = vunpack.c.l.b16 %v21
  %v161 = vunpack.c.h.b16 %v21
  %v162 = vpack.c.b16 %v154, %v154
  %v163 = vpack.c.b16 %v155, %v155
  %v164 = vpack.c.b16 %v156, %v156
  %v165 = vpack.c.b16 %v157, %v157
  %v166 = vpack.c.b16 %v158, %v158
  %v167 = vpack.c.b16 %v159, %v159
  %v168 = vpack.c.b16 %v160, %v160
  %v169 = vpack.c.b16 %v161, %v161
  %v306 = vunpack.c.l.b16 %v22
  %v307 = vunpack.c.l.b16 %v23
  %v308 = vunpack.c.l.b16 %v24
  %v309 = vunpack.c.l.b16 %v25
  %v310 = vunpack.c.l.b16 %v26
  %v311 = vunpack.c.l.b16 %v27
  %v312 = vunpack.c.l.b16 %v28
  %v313 = vunpack.c.l.b16 %v29
  %v314 = vunpack.c.l.b16 %v30
  %v315 = vunpack.c.l.b16 %v31
  %v316 = vunpack.c.l.b16 %v32
  %v317 = vunpack.c.l.b16 %v33
  %v318 = vunpack.c.l.b16 %v34
  %v319 = vunpack.c.l.b16 %v35
  %v320 = vunpack.c.l.b16 %v36
  %v321 = vunpack.c.l.b16 %v37
  %v322 = vunpack.c.l.b16 %v38
  %v323 = vunpack.c.l.b16 %v39
  %v324 = vunpack.c.l.b16 %v40
  %v325 = vunpack.c.l.b16 %v41
  %v326 = vunpack.c.l.b16 %v42
  %v327 = vunpack.c.l.b16 %v43
  %v328 = vunpack.c.l.b16 %v44
  %v329 = vunpack.c.l.b16 %v45
  %v330 = vunpack.c.l.b16 %v46
  %v331 = vunpack.c.l.b16 %v47
  %v332 = vunpack.c.l.b16 %v48
  %v333 = vunpack.c.l.b16 %v49
  %v334 = vunpack.c.l.b16 %v50
  %v335 = vunpack.c.l.b16 %v51
  %v336 = vunpack.c.l.b16 %v52
  %v337 = vunpack.c.l.b16 %v53
  %v338 = vunpack.c.l.b16 %v54
  %v339 = vunpack.c.l.b16 %v55
  %v340 = vunpack.c.l.b16 %v56
  %v341 = vunpack.c.l.b16 %v57
  %v342 = vunpack.c.l.b16 %v58
  %v343 = vunpack.c.l.b16 %v59
  %v344 = vunpack.c.l.b16 %v60
  %v345 = vunpack.c.l.b16 %v61
  %v346 = vunpack.c.l.b16 %v62
  %v347 = vunpack.c.l.b16 %v63
  %v348 = vunpack.c.l.b16 %v64
  %v349 = vunpack.c.l.b16 %v65
  %v350 = vunpack.c.l.b16 %v66
  %v351 = vunpack.c.l.b16 %v67
  %v352 = vunpack.c.l.b16 %v68
  %v353 = vunpack.c.l.b16 %v69
  %v354 = vunpack.c.l.b16 %v70
  %v355 = vunpack.c.l.b16 %v71
  %v356 = vunpack.c.l.b16 %v72
  %v357 = vunpack.c.l.b16 %v73
  %v358 = vunpack.c.l.b16 %v74
  %v359 = vunpack.c.l.b16 %v75
  %v360 = vunpack.c.l.b16 %v76
  %v361 = vunpack.c.l.b16 %v77
  %v362 = vunpack.c.l.b16 %v78
  %v363 = vunpack.c.l.b16 %v79
  %v364 = vunpack.c.l.b16 %v80
  %v365 = vunpack.c.l.b16 %v81
  %v366 = vunpack.c.l.b16 %v82
  %v367 = vunpack.c.l.b16 %v83
  %v368 = vunpack.c.l.b16 %v84
  %v369 = vunpack.c.l.b16 %v85
  %v370 = vunpack.c.l.b16 %v86
  %v371 = vunpack.c.l.b16 %v87
  %v372 = vunpack.c.l.b16 %v88
  %v373 = vunpack.c.l.b16 %v89
  %v374 = vunpack.c.l.b16 %v90
  %v375 = vunpack.c.l.b16 %v91
  %v376 = vunpack.c.l.b16 %v92
  %v377 = vunpack.c.l.b16 %v93
  %v378 = vunpack.c.l.b16 %v94
  %v379 = vunpack.c.l.b16 %v95
  %v380 = vunpack.c.l.b16 %v96
  %v381 = vunpack.c.l.b16 %v97
  %v382 = vunpack.c.l.b16 %v98
  %v383 = vunpack.c.l.b16 %v99
  %v384 = vunpack.c.l.b16 %v100
  %v385 = vunpack.c.l.b16 %v101
  %v386 = vunpack.c.l.b16 %v102
  %v387 = vunpack.c.l.b16 %v103
  %v388 = vunpack.c.l.b16 %v104
  %v389 = vunpack.c.l.b16 %v105
  %v390 = vunpack.c.l.b16 %v106
  %v391 = vunpack.c.l.b16 %v107
  %v392 = vunpack.c.l.b16 %v108
  %v393 = vunpack.c.l.b16 %v109
  %v394 = vunpack.c.l.b16 %v110
  %v395 = vunpack.c.l.b16 %v111
  %v396 = vunpack.c.l.b16 %v112
  %v397 = vunpack.c.l.b16 %v113
  %v398 = vunpack.c.l.b16 %v114
  %v399 = vunpack.c.l.b16 %v115
  %v400 = vunpack.c.l.b16 %v116
  %v401 = vunpack.c.l.b16 %v117
  %v402 = vunpack.c.l.b16 %v118
  %v403 = vunpack.c.l.b16 %v119
  %v404 = vunpack.c.l.b16 %v120
  %v405 = vunpack.c.l.b16 %v121
  %v406 = vunpack.c.l.b16 %v122
  %v407 = vunpack.c.l.b16 %v123
  %v408 = vunpack.c.l.b16 %v124
  %v409 = vunpack.c.l.b16 %v125
  %v410 = vunpack.c.l.b16 %v126
  %v411 = vunpack.c.l.b16 %v127
  %v412 = vunpack.c.l.b16 %v128
  %v413 = vunpack.c.l.b16 %v129
  %v414 = vunpack.c.l.b16 %v130
  %v415 = vunpack.c.l.b16 %v131
  %v416 = vunpack.c.l.b16 %v132
  %v417 = vunpack.c.l.b16 %v133
  %v418 = vunpack.c.l.b16 %v134
  %v419 = vunpack.c.l.b16 %v135
  %v420 = vunpack.c.l.b16 %v136
  %v421 = vunpack.c.l.b16 %v137
  %v422 = vunpack.c.l.b16 %v138
  %v423 = vunpack.c.l.b16 %v139
  %v424 = vunpack.c.l.b16 %v140
  %v425 = vunpack.c.l.b16 %v141
  %v426 = vunpack.c.l.b16 %v142
  %v427 = vunpack.c.l.b16 %v143
  %v428 = vunpack.c.l.b16 %v144
  %v429 = vunpack.c.l.b16 %v145
  %v430 = vunpack.c.l.b16 %v146
  %v431 = vunpack.c.l.b16 %v147
  %v432 = vunpack.c.l.b16 %v148
  %v433 = vunpack.c.l.b16 %v149
  %v434 = vpack.c.b16 %v307, %v306
  %v435 = vpack.c.b16 %v309, %v308
  %v436 = vpack.c.b16 %v311, %v310
  %v437 = vpack.c.b16 %v313, %v312
  %v438 = vpack.c.b16 %v315, %v314
  %v439 = vpack.c.b16 %v317, %v316
  %v440 = vpack.c.b16 %v319, %v318
  %v441 = vpack.c.b16 %v321, %v320
  %v442 = vpack.c.b16 %v323, %v322
  %v443 = vpack.c.b16 %v325, %v324
  %v444 = vpack.c.b16 %v327, %v326
  %v445 = vpack.c.b16 %v329, %v328
  %v446 = vpack.c.b16 %v331, %v330
  %v447 = vpack.c.b16 %v333, %v332
  %v448 = vpack.c.b16 %v335, %v334
  %v449 = vpack.c.b16 %v337, %v336
  %v450 = vpack.c.b16 %v339, %v338
  %v451 = vpack.c.b16 %v341, %v340
  %v452 = vpack.c.b16 %v343, %v342
  %v453 = vpack.c.b16 %v345, %v344
  %v454 = vpack.c.b16 %v347, %v346
  %v455 = vpack.c.b16 %v349, %v348
  %v456 = vpack.c.b16 %v351, %v350
  %v457 = vpack.c.b16 %v353, %v352
  %v458 = vpack.c.b16 %v355, %v354
  %v459 = vpack.c.b16 %v357, %v356
  %v460 = vpack.c.b16 %v359, %v358
  %v461 = vpack.c.b16 %v361, %v360
  %v462 = vpack.c.b16 %v363, %v362
  %v463 = vpack.c.b16 %v365, %v364
  %v464 = vpack.c.b16 %v367, %v366
  %v465 = vpack.c.b16 %v369, %v368
  %v466 = vpack.c.b16 %v371, %v370
  %v467 = vpack.c.b16 %v373, %v372
  %v468 = vpack.c.b16 %v375, %v374
  %v469 = vpack.c.b16 %v377, %v376
  %v470 = vpack.c.b16 %v379, %v378
  %v471 = vpack.c.b16 %v381, %v380
  %v472 = vpack.c.b16 %v383, %v382
  %v473 = vpack.c.b16 %v385, %v384
  %v474 = vpack.c.b16 %v387, %v386
  %v475 = vpack.c.b16 %v389, %v388
  %v476 = vpack.c.b16 %v391, %v390
  %v477 = vpack.c.b16 %v393, %v392
  %v478 = vpack.c.b16 %v395, %v394
  %v479 = vpack.c.b16 %v397, %v396
  %v480 = vpack.c.b16 %v399, %v398
  %v481 = vpack.c.b16 %v401, %v400
  %v482 = vpack.c.b16 %v403, %v402
  %v483 = vpack.c.b16 %v405, %v404
  %v484 = vpack.c.b16 %v407, %v406
  %v485 = vpack.c.b16 %v409, %v408
  %v486 = vpack.c.b16 %v411, %v410
  %v487 = vpack.c.b16 %v413, %v412
  %v488 = vpack.c.b16 %v415, %v414
  %v489 = vpack.c.b16 %v417, %v416
  %v490 = vpack.c.b16 %v419, %v418
  %v491 = vpack.c.b16 %v421, %v420
  %v492 = vpack.c.b16 %v423, %v422
  %v493 = vpack.c.b16 %v425, %v424
  %v494 = vpack.c.b16 %v427, %v426
  %v495 = vpack.c.b16 %v429, %v428
  %v496 = vpack.c.b16 %v431, %v430
  %v497 = vpack.c.b16 %v433, %v432
  %562 = vmatprep.subr.bf16.mxu0 0
  %563 = vmatpush1.bf16.msra.mxu0 %v434
  %564 = vmatprep.subr.bf16.mxu0 0
  %565 = vmatpush1.bf16.msra.mxu0 %v435
  %566 = vmatprep.subr.bf16.mxu0 0
  %567 = vmatpush1.bf16.msra.mxu0 %v436
  %568 = vmatprep.subr.bf16.mxu0 0
  %569 = vmatpush1.bf16.msra.mxu0 %v437
  %570 = vmatprep.subr.bf16.mxu0 0
  %571 = vmatpush1.bf16.msra.mxu0 %v438
  %572 = vmatprep.subr.bf16.mxu0 0
  %573 = vmatpush1.bf16.msra.mxu0 %v439
  %574 = vmatprep.subr.bf16.mxu0 0
  %575 = vmatpush1.bf16.msra.mxu0 %v440
  %576 = vmatprep.subr.bf16.mxu0 0
  %577 = vmatpush1.bf16.msra.mxu0 %v441
  %578 = vmatprep.subr.bf16.mxu0 0
  %579 = vmatpush1.bf16.msra.mxu0 %v442
  %580 = vmatprep.subr.bf16.mxu0 0
  %581 = vmatpush1.bf16.msra.mxu0 %v443
  %582 = vmatprep.subr.bf16.mxu0 0
  %583 = vmatpush1.bf16.msra.mxu0 %v444
  %584 = vmatprep.subr.bf16.mxu0 0
  %585 = vmatpush1.bf16.msra.mxu0 %v445
  %586 = vmatprep.subr.bf16.mxu0 0
  %587 = vmatpush1.bf16.msra.mxu0 %v446
  %588 = vmatprep.subr.bf16.mxu0 0
  %589 = vmatpush1.bf16.msra.mxu0 %v447
  %590 = vmatprep.subr.bf16.mxu0 0
  %591 = vmatpush1.bf16.msra.mxu0 %v448
  %592 = vmatprep.subr.bf16.mxu0 0
  %593 = vmatpush1.bf16.msra.mxu0 %v449
  %594 = vmatprep.mubr.bf16.mxu0 %v163
  %595 = vmatmul.mubr.bf16.gmra.mrb[0].mxu0 %v162
  %v596 = vpop.f32.mrb[0].mxu0
  %v597 = vadd.f32 0.0, %v596
  %v598 = vpop.f32.mrb[0].mxu0
  %v599 = vpop.f32.mrb[0].mxu0
  %v600 = vpop.f32.mrb[0].mxu0
  %601 = vdwg.mxu0
  %602 = vmatprep.subr.bf16.mxu0 0
  %603 = vmatpush1.bf16.msra.mxu0 %v450
  %604 = vmatprep.subr.bf16.mxu0 0
  %605 = vmatpush1.bf16.msra.mxu0 %v451
  %606 = vmatprep.subr.bf16.mxu0 0
  %607 = vmatpush1.bf16.msra.mxu0 %v452
  %608 = vmatprep.subr.bf16.mxu0 0
  %609 = vmatpush1.bf16.msra.mxu0 %v453
  %610 = vmatprep.subr.bf16.mxu0 0
  %611 = vmatpush1.bf16.msra.mxu0 %v454
  %612 = vmatprep.subr.bf16.mxu0 0
  %613 = vmatpush1.bf16.msra.mxu0 %v455
  %614 = vmatprep.subr.bf16.mxu0 0
  %615 = vmatpush1.bf16.msra.mxu0 %v456
  %616 = vmatprep.subr.bf16.mxu0 0
  %617 = vmatpush1.bf16.msra.mxu0 %v457
  %618 = vmatprep.subr.bf16.mxu0 0
  %619 = vmatpush1.bf16.msra.mxu0 %v458
  %620 = vmatprep.subr.bf16.mxu0 0
  %621 = vmatpush1.bf16.msra.mxu0 %v459
  %622 = vmatprep.subr.bf16.mxu0 0
  %623 = vmatpush1.bf16.msra.mxu0 %v460
  %624 = vmatprep.subr.bf16.mxu0 0
  %625 = vmatpush1.bf16.msra.mxu0 %v461
  %626 = vmatprep.subr.bf16.mxu0 0
  %627 = vmatpush1.bf16.msra.mxu0 %v462
  %628 = vmatprep.subr.bf16.mxu0 0
  %629 = vmatpush1.bf16.msra.mxu0 %v463
  %630 = vmatprep.subr.bf16.mxu0 0
  %631 = vmatpush1.bf16.msra.mxu0 %v464
  %632 = vmatprep.subr.bf16.mxu0 0
  %633 = vmatpush1.bf16.msra.mxu0 %v465
  %634 = vmatprep.mubr.bf16.mxu0 %v165
  %635 = vmatmul.mubr.bf16.gmra.mrb[0].mxu0 %v164
  %v636 = vpop.f32.mrb[0].mxu0
  %v637 = vadd.f32 %v597, %v636
  %v638 = vpop.f32.mrb[0].mxu0
  %v639 = vpop.f32.mrb[0].mxu0
  %v640 = vpop.f32.mrb[0].mxu0
  %641 = vdwg.mxu0
  %642 = vmatprep.subr.bf16.mxu0 0
  %643 = vmatpush1.bf16.msra.mxu0 %v466
  %644 = vmatprep.subr.bf16.mxu0 0
  %645 = vmatpush1.bf16.msra.mxu0 %v467
  %646 = vmatprep.subr.bf16.mxu0 0
  %647 = vmatpush1.bf16.msra.mxu0 %v468
  %648 = vmatprep.subr.bf16.mxu0 0
  %649 = vmatpush1.bf16.msra.mxu0 %v469
  %650 = vmatprep.subr.bf16.mxu0 0
  %651 = vmatpush1.bf16.msra.mxu0 %v470
  %652 = vmatprep.subr.bf16.mxu0 0
  %653 = vmatpush1.bf16.msra.mxu0 %v471
  %654 = vmatprep.subr.bf16.mxu0 0
  %655 = vmatpush1.bf16.msra.mxu0 %v472
  %656 = vmatprep.subr.bf16.mxu0 0
  %657 = vmatpush1.bf16.msra.mxu0 %v473
  %658 = vmatprep.subr.bf16.mxu0 0
  %659 = vmatpush1.bf16.msra.mxu0 %v474
  %660 = vmatprep.subr.bf16.mxu0 0
  %661 = vmatpush1.bf16.msra.mxu0 %v475
  %662 = vmatprep.subr.bf16.mxu0 0
  %663 = vmatpush1.bf16.msra.mxu0 %v476
  %664 = vmatprep.subr.bf16.mxu0 0
  %665 = vmatpush1.bf16.msra.mxu0 %v477
  %666 = vmatprep.subr.bf16.mxu0 0
  %667 = vmatpush1.bf16.msra.mxu0 %v478
  %668 = vmatprep.subr.bf16.mxu0 0
  %669 = vmatpush1.bf16.msra.mxu0 %v479
  %670 = vmatprep.subr.bf16.mxu0 0
  %671 = vmatpush1.bf16.msra.mxu0 %v480
  %672 = vmatprep.subr.bf16.mxu0 0
  %673 = vmatpush1.bf16.msra.mxu0 %v481
  %674 = vmatprep.mubr.bf16.mxu0 %v167
  %675 = vmatmul.mubr.bf16.gmra.mrb[0].mxu0 %v166
  %v676 = vpop.f32.mrb[0].mxu0
  %v677 = vadd.f32 %v637, %v676
  %v678 = vpop.f32.mrb[0].mxu0
  %v679 = vpop.f32.mrb[0].mxu0
  %v680 = vpop.f32.mrb[0].mxu0
  %681 = vdwg.mxu0
  %682 = vmatprep.subr.bf16.mxu0 0
  %683 = vmatpush1.bf16.msra.mxu0 %v482
  %684 = vmatprep.subr.bf16.mxu0 0
  %685 = vmatpush1.bf16.msra.mxu0 %v483
  %686 = vmatprep.subr.bf16.mxu0 0
  %687 = vmatpush1.bf16.msra.mxu0 %v484
  %688 = vmatprep.subr.bf16.mxu0 0
  %689 = vmatpush1.bf16.msra.mxu0 %v485
  %690 = vmatprep.subr.bf16.mxu0 0
  %691 = vmatpush1.bf16.msra.mxu0 %v486
  %692 = vmatprep.subr.bf16.mxu0 0
  %693 = vmatpush1.bf16.msra.mxu0 %v487
  %694 = vmatprep.subr.bf16.mxu0 0
  %695 = vmatpush1.bf16.msra.mxu0 %v488
  %696 = vmatprep.subr.bf16.mxu0 0
  %697 = vmatpush1.bf16.msra.mxu0 %v489
  %698 = vmatprep.subr.bf16.mxu0 0
  %699 = vmatpush1.bf16.msra.mxu0 %v490
  %700 = vmatprep.subr.bf16.mxu0 0
  %701 = vmatpush1.bf16.msra.mxu0 %v491
  %702 = vmatprep.subr.bf16.mxu0 0
  %703 = vmatpush1.bf16.msra.mxu0 %v492
  %704 = vmatprep.subr.bf16.mxu0 0
  %705 = vmatpush1.bf16.msra.mxu0 %v493
  %706 = vmatprep.subr.bf16.mxu0 0
  %707 = vmatpush1.bf16.msra.mxu0 %v494
  %708 = vmatprep.subr.bf16.mxu0 0
  %709 = vmatpush1.bf16.msra.mxu0 %v495
  %710 = vmatprep.subr.bf16.mxu0 0
  %711 = vmatpush1.bf16.msra.mxu0 %v496
  %712 = vmatprep.subr.bf16.mxu0 0
  %713 = vmatpush1.bf16.msra.mxu0 %v497
  %714 = vmatprep.mubr.bf16.mxu0 %v169
  %715 = vmatmul.mubr.bf16.gmra.mrb[0].mxu0 %v168
  %v716 = vpop.f32.mrb[0].mxu0
  %v717 = vadd.f32 %v677, %v716
  %v718 = vpop.f32.mrb[0].mxu0
  %v719 = vpop.f32.mrb[0].mxu0
  %v720 = vpop.f32.mrb[0].mxu0
  %721 = vdwg.mxu0
  %s722 = scalar_lea.vmem %s0, 32
  %v723 = vld [vmem:[%s722] sm:$0xff]
  %v724 = vld [vmem:[%s722 + $0x8] sm:$0xff]
  %v725 = vld [vmem:[%s722 + $0x10] sm:$0xff]
  %v726 = vld [vmem:[%s722 + $0x18] sm:$0xff]
  %s727 = scalar_lea.vmem %s1, 512
  %v728 = vld [vmem:[%s727] sm:$0xf]
  %v729 = vld [vmem:[%s727 + $0x4] sm:$0xf]
  %v730 = vld [vmem:[%s727 + $0x8] sm:$0xf]
  %v731 = vld [vmem:[%s727 + $0xc] sm:$0xf]
  %v732 = vld [vmem:[%s727 + $0x10] sm:$0xf]
  %v733 = vld [vmem:[%s727 + $0x14] sm:$0xf]
  %v734 = vld [vmem:[%s727 + $0x18] sm:$0xf]
  %v735 = vld [vmem:[%s727 + $0x1c] sm:$0xf]
  %v736 = vld [vmem:[%s727 + $0x20] sm:$0xf]
  %v737 = vld [vmem:[%s727 + $0x24] sm:$0xf]
  %v738 = vld [vmem:[%s727 + $0x28] sm:$0xf]
  %v739 = vld [vmem:[%s727 + $0x2c] sm:$0xf]
  %v740 = vld [vmem:[%s727 + $0x30] sm:$0xf]
  %v741 = vld [vmem:[%s727 + $0x34] sm:$0xf]
  %v742 = vld [vmem:[%s727 + $0x38] sm:$0xf]
  %v743 = vld [vmem:[%s727 + $0x3c] sm:$0xf]
  %v744 = vld [vmem:[%s727 + $0x40] sm:$0xf]
  %v745 = vld [vmem:[%s727 + $0x44] sm:$0xf]
  %v746 = vld [vmem:[%s727 + $0x48] sm:$0xf]
  %v747 = vld [vmem:[%s727 + $0x4c] sm:$0xf]
  %v748 = vld [vmem:[%s727 + $0x50] sm:$0xf]
  %v749 = vld [vmem:[%s727 + $0x54] sm:$0xf]
  %v750 = vld [vmem:[%s727 + $0x58] sm:$0xf]
  %v751 = vld [vmem:[%s727 + $0x5c] sm:$0xf]
  %v752 = vld [vmem:[%s727 + $0x60] sm:$0xf]
  %v753 = vld [vmem:[%s727 + $0x64] sm:$0xf]
  %v754 = vld [vmem:[%s727 + $0x68] sm:$0xf]
  %v755 = vld [vmem:[%s727 + $0x6c] sm:$0xf]
  %v756 = vld [vmem:[%s727 + $0x70] sm:$0xf]
  %v757 = vld [vmem:[%s727 + $0x74] sm:$0xf]
  %v758 = vld [vmem:[%s727 + $0x78] sm:$0xf]
  %v759 = vld [vmem:[%s727 + $0x7c] sm:$0xf]
  %v760 = vld [vmem:[%s727 + $0x80] sm:$0xf]
  %v761 = vld [vmem:[%s727 + $0x84] sm:$0xf]
  %v762 = vld [vmem:[%s727 + $0x88] sm:$0xf]
  %v763 = vld [vmem:[%s727 + $0x8c] sm:$0xf]
  %v764 = vld [vmem:[%s727 + $0x90] sm:$0xf]
  %v765 = vld [vmem:[%s727 + $0x94] sm:$0xf]
  %v766 = vld [vmem:[%s727 + $0x98] sm:$0xf]
  %v767 = vld [vmem:[%s727 + $0x9c] sm:$0xf]
  %v768 = vld [vmem:[%s727 + $0xa0] sm:$0xf]
  %v769 = vld [vmem:[%s727 + $0xa4] sm:$0xf]
  %v770 = vld [vmem:[%s727 + $0xa8] sm:$0xf]
  %v771 = vld [vmem:[%s727 + $0xac] sm:$0xf]
  %v772 = vld [vmem:[%s727 + $0xb0] sm:$0xf]
  %v773 = vld [vmem:[%s727 + $0xb4] sm:$0xf]
  %v774 = vld [vmem:[%s727 + $0xb8] sm:$0xf]
  %v775 = vld [vmem:[%s727 + $0xbc] sm:$0xf]
  %v776 = vld [vmem:[%s727 + $0xc0] sm:$0xf]
  %v777 = vld [vmem:[%s727 + $0xc4] sm:$0xf]
  %v778 = vld [vmem:[%s727 + $0xc8] sm:$0xf]
  %v779 = vld [vmem:[%s727 + $0xcc] sm:$0xf]
  %v780 = vld [vmem:[%s727 + $0xd0] sm:$0xf]
  %v781 = vld [vmem:[%s727 + $0xd4] sm:$0xf]
  %v782 = vld [vmem:[%s727 + $0xd8] sm:$0xf]
  %v783 = vld [vmem:[%s727 + $0xdc] sm:$0xf]
  %v784 = vld [vmem:[%s727 + $0xe0] sm:$0xf]
  %v785 = vld [vmem:[%s727 + $0xe4] sm:$0xf]
  %v786 = vld [vmem:[%s727 + $0xe8] sm:$0xf]
  %v787 = vld [vmem:[%s727 + $0xec] sm:$0xf]
  %v788 = vld [vmem:[%s727 + $0xf0] sm:$0xf]
  %v789 = vld [vmem:[%s727 + $0xf4] sm:$0xf]
  %v790 = vld [vmem:[%s727 + $0xf8] sm:$0xf]
  %v791 = vld [vmem:[%s727 + $0xfc] sm:$0xf]
  %v792 = vld [vmem:[%s727 + $0x100] sm:$0xf]
  %v793 = vld [vmem:[%s727 + $0x104] sm:$0xf]
  %v794 = vld [vmem:[%s727 + $0x108] sm:$0xf]
  %v795 = vld [vmem:[%s727 + $0x10c] sm:$0xf]
  %v796 = vld [vmem:[%s727 + $0x110] sm:$0xf]
  %v797 = vld [vmem:[%s727 + $0x114] sm:$0xf]
  %v798 = vld [vmem:[%s727 + $0x118] sm:$0xf]
  %v799 = vld [vmem:[%s727 + $0x11c] sm:$0xf]
  %v800 = vld [vmem:[%s727 + $0x120] sm:$0xf]
  %v801 = vld [vmem:[%s727 + $0x124] sm:$0xf]
  %v802 = vld [vmem:[%s727 + $0x128] sm:$0xf]
  %v803 = vld [vmem:[%s727 + $0x12c] sm:$0xf]
  %v804 = vld [vmem:[%s727 + $0x130] sm:$0xf]
  %v805 = vld [vmem:[%s727 + $0x134] sm:$0xf]
  %v806 = vld [vmem:[%s727 + $0x138] sm:$0xf]
  %v807 = vld [vmem:[%s727 + $0x13c] sm:$0xf]
  %v808 = vld [vmem:[%s727 + $0x140] sm:$0xf]
  %v809 = vld [vmem:[%s727 + $0x144] sm:$0xf]
  %v810 = vld [vmem:[%s727 + $0x148] sm:$0xf]
  %v811 = vld [vmem:[%s727 + $0x14c] sm:$0xf]
  %v812 = vld [vmem:[%s727 + $0x150] sm:$0xf]
  %v813 = vld [vmem:[%s727 + $0x154] sm:$0xf]
  %v814 = vld [vmem:[%s727 + $0x158] sm:$0xf]
  %v815 = vld [vmem:[%s727 + $0x15c] sm:$0xf]
  %v816 = vld [vmem:[%s727 + $0x160] sm:$0xf]
  %v817 = vld [vmem:[%s727 + $0x164] sm:$0xf]
  %v818 = vld [vmem:[%s727 + $0x168] sm:$0xf]
  %v819 = vld [vmem:[%s727 + $0x16c] sm:$0xf]
  %v820 = vld [vmem:[%s727 + $0x170] sm:$0xf]
  %v821 = vld [vmem:[%s727 + $0x174] sm:$0xf]
  %v822 = vld [vmem:[%s727 + $0x178] sm:$0xf]
  %v823 = vld [vmem:[%s727 + $0x17c] sm:$0xf]
  %v824 = vld [vmem:[%s727 + $0x180] sm:$0xf]
  %v825 = vld [vmem:[%s727 + $0x184] sm:$0xf]
  %v826 = vld [vmem:[%s727 + $0x188] sm:$0xf]
  %v827 = vld [vmem:[%s727 + $0x18c] sm:$0xf]
  %v828 = vld [vmem:[%s727 + $0x190] sm:$0xf]
  %v829 = vld [vmem:[%s727 + $0x194] sm:$0xf]
  %v830 = vld [vmem:[%s727 + $0x198] sm:$0xf]
  %v831 = vld [vmem:[%s727 + $0x19c] sm:$0xf]
  %v832 = vld [vmem:[%s727 + $0x1a0] sm:$0xf]
  %v833 = vld [vmem:[%s727 + $0x1a4] sm:$0xf]
  %v834 = vld [vmem:[%s727 + $0x1a8] sm:$0xf]
  %v835 = vld [vmem:[%s727 + $0x1ac] sm:$0xf]
  %v836 = vld [vmem:[%s727 + $0x1b0] sm:$0xf]
  %v837 = vld [vmem:[%s727 + $0x1b4] sm:$0xf]
  %v838 = vld [vmem:[%s727 + $0x1b8] sm:$0xf]
  %v839 = vld [vmem:[%s727 + $0x1bc] sm:$0xf]
  %v840 = vld [vmem:[%s727 + $0x1c0] sm:$0xf]
  %v841 = vld [vmem:[%s727 + $0x1c4] sm:$0xf]
  %v842 = vld [vmem:[%s727 + $0x1c8] sm:$0xf]
  %v843 = vld [vmem:[%s727 + $0x1cc] sm:$0xf]
  %v844 = vld [vmem:[%s727 + $0x1d0] sm:$0xf]
  %v845 = vld [vmem:[%s727 + $0x1d4] sm:$0xf]
  %v846 = vld [vmem:[%s727 + $0x1d8] sm:$0xf]
  %v847 = vld [vmem:[%s727 + $0x1dc] sm:$0xf]
  %v848 = vld [vmem:[%s727 + $0x1e0] sm:$0xf]
  %v849 = vld [vmem:[%s727 + $0x1e4] sm:$0xf]
  %v850 = vld [vmem:[%s727 + $0x1e8] sm:$0xf]
  %v851 = vld [vmem:[%s727 + $0x1ec] sm:$0xf]
  %v852 = vld [vmem:[%s727 + $0x1f0] sm:$0xf]
  %v853 = vld [vmem:[%s727 + $0x1f4] sm:$0xf]
  %v854 = vld [vmem:[%s727 + $0x1f8] sm:$0xf]
  %v855 = vld [vmem:[%s727 + $0x1fc] sm:$0xf]
  %v860 = vunpack.c.l.b16 %v723
  %v861 = vunpack.c.h.b16 %v723
  %v862 = vunpack.c.l.b16 %v724
  %v863 = vunpack.c.h.b16 %v724
  %v864 = vunpack.c.l.b16 %v725
  %v865 = vunpack.c.h.b16 %v725
  %v866 = vunpack.c.l.b16 %v726
  %v867 = vunpack.c.h.b16 %v726
  %v868 = vpack.c.b16 %v860, %v860
  %v869 = vpack.c.b16 %v861, %v861
  %v870 = vpack.c.b16 %v862, %v862
  %v871 = vpack.c.b16 %v863, %v863
  %v872 = vpack.c.b16 %v864, %v864
  %v873 = vpack.c.b16 %v865, %v865
  %v874 = vpack.c.b16 %v866, %v866
  %v875 = vpack.c.b16 %v867, %v867
  %v1012 = vunpack.c.l.b16 %v728
  %v1013 = vunpack.c.l.b16 %v729
  %v1014 = vunpack.c.l.b16 %v730
  %v1015 = vunpack.c.l.b16 %v731
  %v1016 = vunpack.c.l.b16 %v732
  %v1017 = vunpack.c.l.b16 %v733
  %v1018 = vunpack.c.l.b16 %v734
  %v1019 = vunpack.c.l.b16 %v735
  %v1020 = vunpack.c.l.b16 %v736
  %v1021 = vunpack.c.l.b16 %v737
  %v1022 = vunpack.c.l.b16 %v738
  %v1023 = vunpack.c.l.b16 %v739
  %v1024 = vunpack.c.l.b16 %v740
  %v1025 = vunpack.c.l.b16 %v741
  %v1026 = vunpack.c.l.b16 %v742
  %v1027 = vunpack.c.l.b16 %v743
  %v1028 = vunpack.c.l.b16 %v744
  %v1029 = vunpack.c.l.b16 %v745
  %v1030 = vunpack.c.l.b16 %v746
  %v1031 = vunpack.c.l.b16 %v747
  %v1032 = vunpack.c.l.b16 %v748
  %v1033 = vunpack.c.l.b16 %v749
  %v1034 = vunpack.c.l.b16 %v750
  %v1035 = vunpack.c.l.b16 %v751
  %v1036 = vunpack.c.l.b16 %v752
  %v1037 = vunpack.c.l.b16 %v753
  %v1038 = vunpack.c.l.b16 %v754
  %v1039 = vunpack.c.l.b16 %v755
  %v1040 = vunpack.c.l.b16 %v756
  %v1041 = vunpack.c.l.b16 %v757
  %v1042 = vunpack.c.l.b16 %v758
  %v1043 = vunpack.c.l.b16 %v759
  %v1044 = vunpack.c.l.b16 %v760
  %v1045 = vunpack.c.l.b16 %v761
  %v1046 = vunpack.c.l.b16 %v762
  %v1047 = vunpack.c.l.b16 %v763
  %v1048 = vunpack.c.l.b16 %v764
  %v1049 = vunpack.c.l.b16 %v765
  %v1050 = vunpack.c.l.b16 %v766
  %v1051 = vunpack.c.l.b16 %v767
  %v1052 = vunpack.c.l.b16 %v768
  %v1053 = vunpack.c.l.b16 %v769
  %v1054 = vunpack.c.l.b16 %v770
  %v1055 = vunpack.c.l.b16 %v771
  %v1056 = vunpack.c.l.b16 %v772
  %v1057 = vunpack.c.l.b16 %v773
  %v1058 = vunpack.c.l.b16 %v774
  %v1059 = vunpack.c.l.b16 %v775
  %v1060 = vunpack.c.l.b16 %v776
  %v1061 = vunpack.c.l.b16 %v777
  %v1062 = vunpack.c.l.b16 %v778
  %v1063 = vunpack.c.l.b16 %v779
  %v1064 = vunpack.c.l.b16 %v780
  %v1065 = vunpack.c.l.b16 %v781
  %v1066 = vunpack.c.l.b16 %v782
  %v1067 = vunpack.c.l.b16 %v783
  %v1068 = vunpack.c.l.b16 %v784
  %v1069 = vunpack.c.l.b16 %v785
  %v1070 = vunpack.c.l.b16 %v786
  %v1071 = vunpack.c.l.b16 %v787
  %v1072 = vunpack.c.l.b16 %v788
  %v1073 = vunpack.c.l.b16 %v789
  %v1074 = vunpack.c.l.b16 %v790
  %v1075 = vunpack.c.l.b16 %v791
  %v1076 = vunpack.c.l.b16 %v792
  %v1077 = vunpack.c.l.b16 %v793
  %v1078 = vunpack.c.l.b16 %v794
  %v1079 = vunpack.c.l.b16 %v795
  %v1080 = vunpack.c.l.b16 %v796
  %v1081 = vunpack.c.l.b16 %v797
  %v1082 = vunpack.c.l.b16 %v798
  %v1083 = vunpack.c.l.b16 %v799
  %v1084 = vunpack.c.l.b16 %v800
  %v1085 = vunpack.c.l.b16 %v801
  %v1086 = vunpack.c.l.b16 %v802
  %v1087 = vunpack.c.l.b16 %v803
  %v1088 = vunpack.c.l.b16 %v804
  %v1089 = vunpack.c.l.b16 %v805
  %v1090 = vunpack.c.l.b16 %v806
  %v1091 = vunpack.c.l.b16 %v807
  %v1092 = vunpack.c.l.b16 %v808
  %v1093 = vunpack.c.l.b16 %v809
  %v1094 = vunpack.c.l.b16 %v810
  %v1095 = vunpack.c.l.b16 %v811
  %v1096 = vunpack.c.l.b16 %v812
  %v1097 = vunpack.c.l.b16 %v813
  %v1098 = vunpack.c.l.b16 %v814
  %v1099 = vunpack.c.l.b16 %v815
  %v1100 = vunpack.c.l.b16 %v816
  %v1101 = vunpack.c.l.b16 %v817
  %v1102 = vunpack.c.l.b16 %v818
  %v1103 = vunpack.c.l.b16 %v819
  %v1104 = vunpack.c.l.b16 %v820
  %v1105 = vunpack.c.l.b16 %v821
  %v1106 = vunpack.c.l.b16 %v822
  %v1107 = vunpack.c.l.b16 %v823
  %v1108 = vunpack.c.l.b16 %v824
  %v1109 = vunpack.c.l.b16 %v825
  %v1110 = vunpack.c.l.b16 %v826
  %v1111 = vunpack.c.l.b16 %v827
  %v1112 = vunpack.c.l.b16 %v828
  %v1113 = vunpack.c.l.b16 %v829
  %v1114 = vunpack.c.l.b16 %v830
  %v1115 = vunpack.c.l.b16 %v831
  %v1116 = vunpack.c.l.b16 %v832
  %v1117 = vunpack.c.l.b16 %v833
  %v1118 = vunpack.c.l.b16 %v834
  %v1119 = vunpack.c.l.b16 %v835
  %v1120 = vunpack.c.l.b16 %v836
  %v1121 = vunpack.c.l.b16 %v837
  %v1122 = vunpack.c.l.b16 %v838
  %v1123 = vunpack.c.l.b16 %v839
  %v1124 = vunpack.c.l.b16 %v840
  %v1125 = vunpack.c.l.b16 %v841
  %v1126 = vunpack.c.l.b16 %v842
  %v1127 = vunpack.c.l.b16 %v843
  %v1128 = vunpack.c.l.b16 %v844
  %v1129 = vunpack.c.l.b16 %v845
  %v1130 = vunpack.c.l.b16 %v846
  %v1131 = vunpack.c.l.b16 %v847
  %v1132 = vunpack.c.l.b16 %v848
  %v1133 = vunpack.c.l.b16 %v849
  %v1134 = vunpack.c.l.b16 %v850
  %v1135 = vunpack.c.l.b16 %v851
  %v1136 = vunpack.c.l.b16 %v852
  %v1137 = vunpack.c.l.b16 %v853
  %v1138 = vunpack.c.l.b16 %v854
  %v1139 = vunpack.c.l.b16 %v855
  %v1140 = vpack.c.b16 %v1013, %v1012
  %v1141 = vpack.c.b16 %v1015, %v1014
  %v1142 = vpack.c.b16 %v1017, %v1016
  %v1143 = vpack.c.b16 %v1019, %v1018
  %v1144 = vpack.c.b16 %v1021, %v1020
  %v1145 = vpack.c.b16 %v1023, %v1022
  %v1146 = vpack.c.b16 %v1025, %v1024
  %v1147 = vpack.c.b16 %v1027, %v1026
  %v1148 = vpack.c.b16 %v1029, %v1028
  %v1149 = vpack.c.b16 %v1031, %v1030
  %v1150 = vpack.c.b16 %v1033, %v1032
  %v1151 = vpack.c.b16 %v1035, %v1034
  %v1152 = vpack.c.b16 %v1037, %v1036
  %v1153 = vpack.c.b16 %v1039, %v1038
  %v1154 = vpack.c.b16 %v1041, %v1040
  %v1155 = vpack.c.b16 %v1043, %v1042
  %v1156 = vpack.c.b16 %v1045, %v1044
  %v1157 = vpack.c.b16 %v1047, %v1046
  %v1158 = vpack.c.b16 %v1049, %v1048
  %v1159 = vpack.c.b16 %v1051, %v1050
  %v1160 = vpack.c.b16 %v1053, %v1052
  %v1161 = vpack.c.b16 %v1055, %v1054
  %v1162 = vpack.c.b16 %v1057, %v1056
  %v1163 = vpack.c.b16 %v1059, %v1058
  %v1164 = vpack.c.b16 %v1061, %v1060
  %v1165 = vpack.c.b16 %v1063, %v1062
  %v1166 = vpack.c.b16 %v1065, %v1064
  %v1167 = vpack.c.b16 %v1067, %v1066
  %v1168 = vpack.c.b16 %v1069, %v1068
  %v1169 = vpack.c.b16 %v1071, %v1070
  %v1170 = vpack.c.b16 %v1073, %v1072
  %v1171 = vpack.c.b16 %v1075, %v1074
  %v1172 = vpack.c.b16 %v1077, %v1076
  %v1173 = vpack.c.b16 %v1079, %v1078
  %v1174 = vpack.c.b16 %v1081, %v1080
  %v1175 = vpack.c.b16 %v1083, %v1082
  %v1176 = vpack.c.b16 %v1085, %v1084
  %v1177 = vpack.c.b16 %v1087, %v1086
  %v1178 = vpack.c.b16 %v1089, %v1088
  %v1179 = vpack.c.b16 %v1091, %v1090
  %v1180 = vpack.c.b16 %v1093, %v1092
  %v1181 = vpack.c.b16 %v1095, %v1094
  %v1182 = vpack.c.b16 %v1097, %v1096
  %v1183 = vpack.c.b16 %v1099, %v1098
  %v1184 = vpack.c.b16 %v1101, %v1100
  %v1185 = vpack.c.b16 %v1103, %v1102
  %v1186 = vpack.c.b16 %v1105, %v1104
  %v1187 = vpack.c.b16 %v1107, %v1106
  %v1188 = vpack.c.b16 %v1109, %v1108
  %v1189 = vpack.c.b16 %v1111, %v1110
  %v1190 = vpack.c.b16 %v1113, %v1112
  %v1191 = vpack.c.b16 %v1115, %v1114
  %v1192 = vpack.c.b16 %v1117, %v1116
  %v1193 = vpack.c.b16 %v1119, %v1118
  %v1194 = vpack.c.b16 %v1121, %v1120
  %v1195 = vpack.c.b16 %v1123, %v1122
  %v1196 = vpack.c.b16 %v1125, %v1124
  %v1197 = vpack.c.b16 %v1127, %v1126
  %v1198 = vpack.c.b16 %v1129, %v1128
  %v1199 = vpack.c.b16 %v1131, %v1130
  %v1200 = vpack.c.b16 %v1133, %v1132
  %v1201 = vpack.c.b16 %v1135, %v1134
  %v1202 = vpack.c.b16 %v1137, %v1136
  %v1203 = vpack.c.b16 %v1139, %v1138
  %1268 = vmatprep.subr.bf16.mxu0 0
  %1269 = vmatpush1.bf16.msra.mxu0 %v1140
  %1270 = vmatprep.subr.bf16.mxu0 0
  %1271 = vmatpush1.bf16.msra.mxu0 %v1141
  %1272 = vmatprep.subr.bf16.mxu0 0
  %1273 = vmatpush1.bf16.msra.mxu0 %v1142
  %1274 = vmatprep.subr.bf16.mxu0 0
  %1275 = vmatpush1.bf16.msra.mxu0 %v1143
  %1276 = vmatprep.subr.bf16.mxu0 0
  %1277 = vmatpush1.bf16.msra.mxu0 %v1144
  %1278 = vmatprep.subr.bf16.mxu0 0
  %1279 = vmatpush1.bf16.msra.mxu0 %v1145
  %1280 = vmatprep.subr.bf16.mxu0 0
  %1281 = vmatpush1.bf16.msra.mxu0 %v1146
  %1282 = vmatprep.subr.bf16.mxu0 0
  %1283 = vmatpush1.bf16.msra.mxu0 %v1147
  %1284 = vmatprep.subr.bf16.mxu0 0
  %1285 = vmatpush1.bf16.msra.mxu0 %v1148
  %1286 = vmatprep.subr.bf16.mxu0 0
  %1287 = vmatpush1.bf16.msra.mxu0 %v1149
  %1288 = vmatprep.subr.bf16.mxu0 0
  %1289 = vmatpush1.bf16.msra.mxu0 %v1150
  %1290 = vmatprep.subr.bf16.mxu0 0
  %1291 = vmatpush1.bf16.msra.mxu0 %v1151
  %1292 = vmatprep.subr.bf16.mxu0 0
  %1293 = vmatpush1.bf16.msra.mxu0 %v1152
  %1294 = vmatprep.subr.bf16.mxu0 0
  %1295 = vmatpush1.bf16.msra.mxu0 %v1153
  %1296 = vmatprep.subr.bf16.mxu0 0
  %1297 = vmatpush1.bf16.msra.mxu0 %v1154
  %1298 = vmatprep.subr.bf16.mxu0 0
  %1299 = vmatpush1.bf16.msra.mxu0 %v1155
  %1300 = vmatprep.mubr.bf16.mxu0 %v869
  %1301 = vmatmul.mubr.bf16.gmra.mrb[0].mxu0 %v868
  %v1302 = vpop.f32.mrb[0].mxu0
  %v1303 = vadd.f32 0.0, %v1302
  %v1304 = vpop.f32.mrb[0].mxu0
  %v1305 = vpop.f32.mrb[0].mxu0
  %v1306 = vpop.f32.mrb[0].mxu0
  %1307 = vdwg.mxu0
  %1308 = vmatprep.subr.bf16.mxu0 0
  %1309 = vmatpush1.bf16.msra.mxu0 %v1156
  %1310 = vmatprep.subr.bf16.mxu0 0
  %1311 = vmatpush1.bf16.msra.mxu0 %v1157
  %1312 = vmatprep.subr.bf16.mxu0 0
  %1313 = vmatpush1.bf16.msra.mxu0 %v1158
  %1314 = vmatprep.subr.bf16.mxu0 0
  %1315 = vmatpush1.bf16.msra.mxu0 %v1159
  %1316 = vmatprep.subr.bf16.mxu0 0
  %1317 = vmatpush1.bf16.msra.mxu0 %v1160
  %1318 = vmatprep.subr.bf16.mxu0 0
  %1319 = vmatpush1.bf16.msra.mxu0 %v1161
  %1320 = vmatprep.subr.bf16.mxu0 0
  %1321 = vmatpush1.bf16.msra.mxu0 %v1162
  %1322 = vmatprep.subr.bf16.mxu0 0
  %1323 = vmatpush1.bf16.msra.mxu0 %v1163
  %1324 = vmatprep.subr.bf16.mxu0 0
  %1325 = vmatpush1.bf16.msra.mxu0 %v1164
  %1326 = vmatprep.subr.bf16.mxu0 0
  %1327 = vmatpush1.bf16.msra.mxu0 %v1165
  %1328 = vmatprep.subr.bf16.mxu0 0
  %1329 = vmatpush1.bf16.msra.mxu0 %v1166
  %1330 = vmatprep.subr.bf16.mxu0 0
  %1331 = vmatpush1.bf16.msra.mxu0 %v1167
  %1332 = vmatprep.subr.bf16.mxu0 0
  %1333 = vmatpush1.bf16.msra.mxu0 %v1168
  %1334 = vmatprep.subr.bf16.mxu0 0
  %1335 = vmatpush1.bf16.msra.mxu0 %v1169
  %1336 = vmatprep.subr.bf16.mxu0 0
  %1337 = vmatpush1.bf16.msra.mxu0 %v1170
  %1338 = vmatprep.subr.bf16.mxu0 0
  %1339 = vmatpush1.bf16.msra.mxu0 %v1171
  %1340 = vmatprep.mubr.bf16.mxu0 %v871
  %1341 = vmatmul.mubr.bf16.gmra.mrb[0].mxu0 %v870
  %v1342 = vpop.f32.mrb[0].mxu0
  %v1343 = vadd.f32 %v1303, %v1342
  %v1344 = vpop.f32.mrb[0].mxu0
  %v1345 = vpop.f32.mrb[0].mxu0
  %v1346 = vpop.f32.mrb[0].mxu0
  %1347 = vdwg.mxu0
  %1348 = vmatprep.subr.bf16.mxu0 0
  %1349 = vmatpush1.bf16.msra.mxu0 %v1172
  %1350 = vmatprep.subr.bf16.mxu0 0
  %1351 = vmatpush1.bf16.msra.mxu0 %v1173
  %1352 = vmatprep.subr.bf16.mxu0 0
  %1353 = vmatpush1.bf16.msra.mxu0 %v1174
  %1354 = vmatprep.subr.bf16.mxu0 0
  %1355 = vmatpush1.bf16.msra.mxu0 %v1175
  %1356 = vmatprep.subr.bf16.mxu0 0
  %1357 = vmatpush1.bf16.msra.mxu0 %v1176
  %1358 = vmatprep.subr.bf16.mxu0 0
  %1359 = vmatpush1.bf16.msra.mxu0 %v1177
  %1360 = vmatprep.subr.bf16.mxu0 0
  %1361 = vmatpush1.bf16.msra.mxu0 %v1178
  %1362 = vmatprep.subr.bf16.mxu0 0
  %1363 = vmatpush1.bf16.msra.mxu0 %v1179
  %1364 = vmatprep.subr.bf16.mxu0 0
  %1365 = vmatpush1.bf16.msra.mxu0 %v1180
  %1366 = vmatprep.subr.bf16.mxu0 0
  %1367 = vmatpush1.bf16.msra.mxu0 %v1181
  %1368 = vmatprep.subr.bf16.mxu0 0
  %1369 = vmatpush1.bf16.msra.mxu0 %v1182
  %1370 = vmatprep.subr.bf16.mxu0 0
  %1371 = vmatpush1.bf16.msra.mxu0 %v1183
  %1372 = vmatprep.subr.bf16.mxu0 0
  %1373 = vmatpush1.bf16.msra.mxu0 %v1184
  %1374 = vmatprep.subr.bf16.mxu0 0
  %1375 = vmatpush1.bf16.msra.mxu0 %v1185
  %1376 = vmatprep.subr.bf16.mxu0 0
  %1377 = vmatpush1.bf16.msra.mxu0 %v1186
  %1378 = vmatprep.subr.bf16.mxu0 0
  %1379 = vmatpush1.bf16.msra.mxu0 %v1187
  %1380 = vmatprep.mubr.bf16.mxu0 %v873
  %1381 = vmatmul.mubr.bf16.gmra.mrb[0].mxu0 %v872
  %v1382 = vpop.f32.mrb[0].mxu0
  %v1383 = vadd.f32 %v1343, %v1382
  %v1384 = vpop.f32.mrb[0].mxu0
  %v1385 = vpop.f32.mrb[0].mxu0
  %v1386 = vpop.f32.mrb[0].mxu0
  %1387 = vdwg.mxu0
  %1388 = vmatprep.subr.bf16.mxu0 0
  %1389 = vmatpush1.bf16.msra.mxu0 %v1188
  %1390 = vmatprep.subr.bf16.mxu0 0
  %1391 = vmatpush1.bf16.msra.mxu0 %v1189
  %1392 = vmatprep.subr.bf16.mxu0 0
  %1393 = vmatpush1.bf16.msra.mxu0 %v1190
  %1394 = vmatprep.subr.bf16.mxu0 0
  %1395 = vmatpush1.bf16.msra.mxu0 %v1191
  %1396 = vmatprep.subr.bf16.mxu0 0
  %1397 = vmatpush1.bf16.msra.mxu0 %v1192
  %1398 = vmatprep.subr.bf16.mxu0 0
  %1399 = vmatpush1.bf16.msra.mxu0 %v1193
  %1400 = vmatprep.subr.bf16.mxu0 0
  %1401 = vmatpush1.bf16.msra.mxu0 %v1194
  %1402 = vmatprep.subr.bf16.mxu0 0
  %1403 = vmatpush1.bf16.msra.mxu0 %v1195
  %1404 = vmatprep.subr.bf16.mxu0 0
  %1405 = vmatpush1.bf16.msra.mxu0 %v1196
  %1406 = vmatprep.subr.bf16.mxu0 0
  %1407 = vmatpush1.bf16.msra.mxu0 %v1197
  %1408 = vmatprep.subr.bf16.mxu0 0
  %1409 = vmatpush1.bf16.msra.mxu0 %v1198
  %1410 = vmatprep.subr.bf16.mxu0 0
  %1411 = vmatpush1.bf16.msra.mxu0 %v1199
  %1412 = vmatprep.subr.bf16.mxu0 0
  %1413 = vmatpush1.bf16.msra.mxu0 %v1200
  %1414 = vmatprep.subr.bf16.mxu0 0
  %1415 = vmatpush1.bf16.msra.mxu0 %v1201
  %1416 = vmatprep.subr.bf16.mxu0 0
  %1417 = vmatpush1.bf16.msra.mxu0 %v1202
  %1418 = vmatprep.subr.bf16.mxu0 0
  %1419 = vmatpush1.bf16.msra.mxu0 %v1203
  %1420 = vmatprep.mubr.bf16.mxu0 %v875
  %1421 = vmatmul.mubr.bf16.gmra.mrb[0].mxu0 %v874
  %v1422 = vpop.f32.mrb[0].mxu0
  %v1423 = vadd.f32 %v1383, %v1422
  %v1424 = vpop.f32.mrb[0].mxu0
  %v1425 = vpop.f32.mrb[0].mxu0
  %v1426 = vpop.f32.mrb[0].mxu0
  %1427 = vdwg.mxu0
  %s1428 = scalar_lea.vmem %s0, 64
  %v1429 = vld [vmem:[%s1428] sm:$0xff]
  %v1430 = vld [vmem:[%s1428 + $0x8] sm:$0xff]
  %v1431 = vld [vmem:[%s1428 + $0x10] sm:$0xff]
  %v1432 = vld [vmem:[%s1428 + $0x18] sm:$0xff]
  %s1433 = scalar_lea.vmem %s1, 1024
  %v1434 = vld [vmem:[%s1433] sm:$0xf]
  %v1435 = vld [vmem:[%s1433 + $0x4] sm:$0xf]
  %v1436 = vld [vmem:[%s1433 + $0x8] sm:$0xf]
  %v1437 = vld [vmem:[%s1433 + $0xc] sm:$0xf]
  %v1438 = vld [vmem:[%s1433 + $0x10] sm:$0xf]
  %v1439 = vld [vmem:[%s1433 + $0x14] sm:$0xf]
  %v1440 = vld [vmem:[%s1433 + $0x18] sm:$0xf]
  %v1441 = vld [vmem:[%s1433 + $0x1c] sm:$0xf]
  %v1442 = vld [vmem:[%s1433 + $0x20] sm:$0xf]
  %v1443 = vld [vmem:[%s1433 + $0x24] sm:$0xf]
  %v1444 = vld [vmem:[%s1433 + $0x28] sm:$0xf]
  %v1445 = vld [vmem:[%s1433 + $0x2c] sm:$0xf]
  %v1446 = vld [vmem:[%s1433 + $0x30] sm:$0xf]
  %v1447 = vld [vmem:[%s1433 + $0x34] sm:$0xf]
  %v1448 = vld [vmem:[%s1433 + $0x38] sm:$0xf]
  %v1449 = vld [vmem:[%s1433 + $0x3c] sm:$0xf]
  %v1450 = vld [vmem:[%s1433 + $0x40] sm:$0xf]
  %v1451 = vld [vmem:[%s1433 + $0x44] sm:$0xf]
  %v1452 = vld [vmem:[%s1433 + $0x48] sm:$0xf]
  %v1453 = vld [vmem:[%s1433 + $0x4c] sm:$0xf]
  %v1454 = vld [vmem:[%s1433 + $0x50] sm:$0xf]
  %v1455 = vld [vmem:[%s1433 + $0x54] sm:$0xf]
  %v1456 = vld [vmem:[%s1433 + $0x58] sm:$0xf]
  %v1457 = vld [vmem:[%s1433 + $0x5c] sm:$0xf]
  %v1458 = vld [vmem:[%s1433 + $0x60] sm:$0xf]
  %v1459 = vld [vmem:[%s1433 + $0x64] sm:$0xf]
  %v1460 = vld [vmem:[%s1433 + $0x68] sm:$0xf]
  %v1461 = vld [vmem:[%s1433 + $0x6c] sm:$0xf]
  %v1462 = vld [vmem:[%s1433 + $0x70] sm:$0xf]
  %v1463 = vld [vmem:[%s1433 + $0x74] sm:$0xf]
  %v1464 = vld [vmem:[%s1433 + $0x78] sm:$0xf]
  %v1465 = vld [vmem:[%s1433 + $0x7c] sm:$0xf]
  %v1466 = vld [vmem:[%s1433 + $0x80] sm:$0xf]
  %v1467 = vld [vmem:[%s1433 + $0x84] sm:$0xf]
  %v1468 = vld [vmem:[%s1433 + $0x88] sm:$0xf]
  %v1469 = vld [vmem:[%s1433 + $0x8c] sm:$0xf]
  %v1470 = vld [vmem:[%s1433 + $0x90] sm:$0xf]
  %v1471 = vld [vmem:[%s1433 + $0x94] sm:$0xf]
  %v1472 = vld [vmem:[%s1433 + $0x98] sm:$0xf]
  %v1473 = vld [vmem:[%s1433 + $0x9c] sm:$0xf]
  %v1474 = vld [vmem:[%s1433 + $0xa0] sm:$0xf]
  %v1475 = vld [vmem:[%s1433 + $0xa4] sm:$0xf]
  %v1476 = vld [vmem:[%s1433 + $0xa8] sm:$0xf]
  %v1477 = vld [vmem:[%s1433 + $0xac] sm:$0xf]
  %v1478 = vld [vmem:[%s1433 + $0xb0] sm:$0xf]
  %v1479 = vld [vmem:[%s1433 + $0xb4] sm:$0xf]
  %v1480 = vld [vmem:[%s1433 + $0xb8] sm:$0xf]
  %v1481 = vld [vmem:[%s1433 + $0xbc] sm:$0xf]
  %v1482 = vld [vmem:[%s1433 + $0xc0] sm:$0xf]
  %v1483 = vld [vmem:[%s1433 + $0xc4] sm:$0xf]
  %v1484 = vld [vmem:[%s1433 + $0xc8] sm:$0xf]
  %v1485 = vld [vmem:[%s1433 + $0xcc] sm:$0xf]
  %v1486 = vld [vmem:[%s1433 + $0xd0] sm:$0xf]
  %v1487 = vld [vmem:[%s1433 + $0xd4] sm:$0xf]
  %v1488 = vld [vmem:[%s1433 + $0xd8] sm:$0xf]
  %v1489 = vld [vmem:[%s1433 + $0xdc] sm:$0xf]
  %v1490 = vld [vmem:[%s1433 + $0xe0] sm:$0xf]
  %v1491 = vld [vmem:[%s1433 + $0xe4] sm:$0xf]
  %v1492 = vld [vmem:[%s1433 + $0xe8] sm:$0xf]
  %v1493 = vld [vmem:[%s1433 + $0xec] sm:$0xf]
  %v1494 = vld [vmem:[%s1433 + $0xf0] sm:$0xf]
  %v1495 = vld [vmem:[%s1433 + $0xf4] sm:$0xf]
  %v1496 = vld [vmem:[%s1433 + $0xf8] sm:$0xf]
  %v1497 = vld [vmem:[%s1433 + $0xfc] sm:$0xf]
  %v1498 = vld [vmem:[%s1433 + $0x100] sm:$0xf]
  %v1499 = vld [vmem:[%s1433 + $0x104] sm:$0xf]
  %v1500 = vld [vmem:[%s1433 + $0x108] sm:$0xf]
  %v1501 = vld [vmem:[%s1433 + $0x10c] sm:$0xf]
  %v1502 = vld [vmem:[%s1433 + $0x110] sm:$0xf]
  %v1503 = vld [vmem:[%s1433 + $0x114] sm:$0xf]
  %v1504 = vld [vmem:[%s1433 + $0x118] sm:$0xf]
  %v1505 = vld [vmem:[%s1433 + $0x11c] sm:$0xf]
  %v1506 = vld [vmem:[%s1433 + $0x120] sm:$0xf]
  %v1507 = vld [vmem:[%s1433 + $0x124] sm:$0xf]
  %v1508 = vld [vmem:[%s1433 + $0x128] sm:$0xf]
  %v1509 = vld [vmem:[%s1433 + $0x12c] sm:$0xf]
  %v1510 = vld [vmem:[%s1433 + $0x130] sm:$0xf]
  %v1511 = vld [vmem:[%s1433 + $0x134] sm:$0xf]
  %v1512 = vld [vmem:[%s1433 + $0x138] sm:$0xf]
  %v1513 = vld [vmem:[%s1433 + $0x13c] sm:$0xf]
  %v1514 = vld [vmem:[%s1433 + $0x140] sm:$0xf]
  %v1515 = vld [vmem:[%s1433 + $0x144] sm:$0xf]
  %v1516 = vld [vmem:[%s1433 + $0x148] sm:$0xf]
  %v1517 = vld [vmem:[%s1433 + $0x14c] sm:$0xf]
  %v1518 = vld [vmem:[%s1433 + $0x150] sm:$0xf]
  %v1519 = vld [vmem:[%s1433 + $0x154] sm:$0xf]
  %v1520 = vld [vmem:[%s1433 + $0x158] sm:$0xf]
  %v1521 = vld [vmem:[%s1433 + $0x15c] sm:$0xf]
  %v1522 = vld [vmem:[%s1433 + $0x160] sm:$0xf]
  %v1523 = vld [vmem:[%s1433 + $0x164] sm:$0xf]
  %v1524 = vld [vmem:[%s1433 + $0x168] sm:$0xf]
  %v1525 = vld [vmem:[%s1433 + $0x16c] sm:$0xf]
  %v1526 = vld [vmem:[%s1433 + $0x170] sm:$0xf]
  %v1527 = vld [vmem:[%s1433 + $0x174] sm:$0xf]
  %v1528 = vld [vmem:[%s1433 + $0x178] sm:$0xf]
  %v1529 = vld [vmem:[%s1433 + $0x17c] sm:$0xf]
  %v1530 = vld [vmem:[%s1433 + $0x180] sm:$0xf]
  %v1531 = vld [vmem:[%s1433 + $0x184] sm:$0xf]
  %v1532 = vld [vmem:[%s1433 + $0x188] sm:$0xf]
  %v1533 = vld [vmem:[%s1433 + $0x18c] sm:$0xf]
  %v1534 = vld [vmem:[%s1433 + $0x190] sm:$0xf]
  %v1535 = vld [vmem:[%s1433 + $0x194] sm:$0xf]
  %v1536 = vld [vmem:[%s1433 + $0x198] sm:$0xf]
  %v1537 = vld [vmem:[%s1433 + $0x19c] sm:$0xf]
  %v1538 = vld [vmem:[%s1433 + $0x1a0] sm:$0xf]
  %v1539 = vld [vmem:[%s1433 + $0x1a4] sm:$0xf]
  %v1540 = vld [vmem:[%s1433 + $0x1a8] sm:$0xf]
  %v1541 = vld [vmem:[%s1433 + $0x1ac] sm:$0xf]
  %v1542 = vld [vmem:[%s1433 + $0x1b0] sm:$0xf]
  %v1543 = vld [vmem:[%s1433 + $0x1b4] sm:$0xf]
  %v1544 = vld [vmem:[%s1433 + $0x1b8] sm:$0xf]
  %v1545 = vld [vmem:[%s1433 + $0x1bc] sm:$0xf]
  %v1546 = vld [vmem:[%s1433 + $0x1c0] sm:$0xf]
  %v1547 = vld [vmem:[%s1433 + $0x1c4] sm:$0xf]
  %v1548 = vld [vmem:[%s1433 + $0x1c8] sm:$0xf]
  %v1549 = vld [vmem:[%s1433 + $0x1cc] sm:$0xf]
  %v1550 = vld [vmem:[%s1433 + $0x1d0] sm:$0xf]
  %v1551 = vld [vmem:[%s1433 + $0x1d4] sm:$0xf]
  %v1552 = vld [vmem:[%s1433 + $0x1d8] sm:$0xf]
  %v1553 = vld [vmem:[%s1433 + $0x1dc] sm:$0xf]
  %v1554 = vld [vmem:[%s1433 + $0x1e0] sm:$0xf]
  %v1555 = vld [vmem:[%s1433 + $0x1e4] sm:$0xf]
  %v1556 = vld [vmem:[%s1433 + $0x1e8] sm:$0xf]
  %v1557 = vld [vmem:[%s1433 + $0x1ec] sm:$0xf]
  %v1558 = vld [vmem:[%s1433 + $0x1f0] sm:$0xf]
  %v1559 = vld [vmem:[%s1433 + $0x1f4] sm:$0xf]
  %v1560 = vld [vmem:[%s1433 + $0x1f8] sm:$0xf]
  %v1561 = vld [vmem:[%s1433 + $0x1fc] sm:$0xf]
  %v1566 = vunpack.c.l.b16 %v1429
  %v1567 = vunpack.c.h.b16 %v1429
  %v1568 = vunpack.c.l.b16 %v1430
  %v1569 = vunpack.c.h.b16 %v1430
  %v1570 = vunpack.c.l.b16 %v1431
  %v1571 = vunpack.c.h.b16 %v1431
  %v1572 = vunpack.c.l.b16 %v1432
  %v1573 = vunpack.c.h.b16 %v1432
  %v1574 = vpack.c.b16 %v1566, %v1566
  %v1575 = vpack.c.b16 %v1567, %v1567
  %v1576 = vpack.c.b16 %v1568, %v1568
  %v1577 = vpack.c.b16 %v1569, %v1569
  %v1578 = vpack.c.b16 %v1570, %v1570
  %v1579 = vpack.c.b16 %v1571, %v1571
  %v1580 = vpack.c.b16 %v1572, %v1572
  %v1581 = vpack.c.b16 %v1573, %v1573
  %v1718 = vunpack.c.l.b16 %v1434
  %v1719 = vunpack.c.l.b16 %v1435
  %v1720 = vunpack.c.l.b16 %v1436
  %v1721 = vunpack.c.l.b16 %v1437
  %v1722 = vunpack.c.l.b16 %v1438
  %v1723 = vunpack.c.l.b16 %v1439
  %v1724 = vunpack.c.l.b16 %v1440
  %v1725 = vunpack.c.l.b16 %v1441
  %v1726 = vunpack.c.l.b16 %v1442
  %v1727 = vunpack.c.l.b16 %v1443
  %v1728 = vunpack.c.l.b16 %v1444
  %v1729 = vunpack.c.l.b16 %v1445
  %v1730 = vunpack.c.l.b16 %v1446
  %v1731 = vunpack.c.l.b16 %v1447
  %v1732 = vunpack.c.l.b16 %v1448
  %v1733 = vunpack.c.l.b16 %v1449
  %v1734 = vunpack.c.l.b16 %v1450
  %v1735 = vunpack.c.l.b16 %v1451
  %v1736 = vunpack.c.l.b16 %v1452
  %v1737 = vunpack.c.l.b16 %v1453
  %v1738 = vunpack.c.l.b16 %v1454
  %v1739 = vunpack.c.l.b16 %v1455
  %v1740 = vunpack.c.l.b16 %v1456
  %v1741 = vunpack.c.l.b16 %v1457
  %v1742 = vunpack.c.l.b16 %v1458
  %v1743 = vunpack.c.l.b16 %v1459
  %v1744 = vunpack.c.l.b16 %v1460
  %v1745 = vunpack.c.l.b16 %v1461
  %v1746 = vunpack.c.l.b16 %v1462
  %v1747 = vunpack.c.l.b16 %v1463
  %v1748 = vunpack.c.l.b16 %v1464
  %v1749 = vunpack.c.l.b16 %v1465
  %v1750 = vunpack.c.l.b16 %v1466
  %v1751 = vunpack.c.l.b16 %v1467
  %v1752 = vunpack.c.l.b16 %v1468
  %v1753 = vunpack.c.l.b16 %v1469
  %v1754 = vunpack.c.l.b16 %v1470
  %v1755 = vunpack.c.l.b16 %v1471
  %v1756 = vunpack.c.l.b16 %v1472
  %v1757 = vunpack.c.l.b16 %v1473
  %v1758 = vunpack.c.l.b16 %v1474
  %v1759 = vunpack.c.l.b16 %v1475
  %v1760 = vunpack.c.l.b16 %v1476
  %v1761 = vunpack.c.l.b16 %v1477
  %v1762 = vunpack.c.l.b16 %v1478
  %v1763 = vunpack.c.l.b16 %v1479
  %v1764 = vunpack.c.l.b16 %v1480
  %v1765 = vunpack.c.l.b16 %v1481
  %v1766 = vunpack.c.l.b16 %v1482
  %v1767 = vunpack.c.l.b16 %v1483
  %v1768 = vunpack.c.l.b16 %v1484
  %v1769 = vunpack.c.l.b16 %v1485
  %v1770 = vunpack.c.l.b16 %v1486
  %v1771 = vunpack.c.l.b16 %v1487
  %v1772 = vunpack.c.l.b16 %v1488
  %v1773 = vunpack.c.l.b16 %v1489
  %v1774 = vunpack.c.l.b16 %v1490
  %v1775 = vunpack.c.l.b16 %v1491
  %v1776 = vunpack.c.l.b16 %v1492
  %v1777 = vunpack.c.l.b16 %v1493
  %v1778 = vunpack.c.l.b16 %v1494
  %v1779 = vunpack.c.l.b16 %v1495
  %v1780 = vunpack.c.l.b16 %v1496
  %v1781 = vunpack.c.l.b16 %v1497
  %v1782 = vunpack.c.l.b16 %v1498
  %v1783 = vunpack.c.l.b16 %v1499
  %v1784 = vunpack.c.l.b16 %v1500
  %v1785 = vunpack.c.l.b16 %v1501
  %v1786 = vunpack.c.l.b16 %v1502
  %v1787 = vunpack.c.l.b16 %v1503
  %v1788 = vunpack.c.l.b16 %v1504
  %v1789 = vunpack.c.l.b16 %v1505
  %v1790 = vunpack.c.l.b16 %v1506
  %v1791 = vunpack.c.l.b16 %v1507
  %v1792 = vunpack.c.l.b16 %v1508
  %v1793 = vunpack.c.l.b16 %v1509
  %v1794 = vunpack.c.l.b16 %v1510
  %v1795 = vunpack.c.l.b16 %v1511
  %v1796 = vunpack.c.l.b16 %v1512
  %v1797 = vunpack.c.l.b16 %v1513
  %v1798 = vunpack.c.l.b16 %v1514
  %v1799 = vunpack.c.l.b16 %v1515
  %v1800 = vunpack.c.l.b16 %v1516
  %v1801 = vunpack.c.l.b16 %v1517
  %v1802 = vunpack.c.l.b16 %v1518
  %v1803 = vunpack.c.l.b16 %v1519
  %v1804 = vunpack.c.l.b16 %v1520
  %v1805 = vunpack.c.l.b16 %v1521
  %v1806 = vunpack.c.l.b16 %v1522
  %v1807 = vunpack.c.l.b16 %v1523
  %v1808 = vunpack.c.l.b16 %v1524
  %v1809 = vunpack.c.l.b16 %v1525
  %v1810 = vunpack.c.l.b16 %v1526
  %v1811 = vunpack.c.l.b16 %v1527
  %v1812 = vunpack.c.l.b16 %v1528
  %v1813 = vunpack.c.l.b16 %v1529
  %v1814 = vunpack.c.l.b16 %v1530
  %v1815 = vunpack.c.l.b16 %v1531
  %v1816 = vunpack.c.l.b16 %v1532
  %v1817 = vunpack.c.l.b16 %v1533
  %v1818 = vunpack.c.l.b16 %v1534
  %v1819 = vunpack.c.l.b16 %v1535
  %v1820 = vunpack.c.l.b16 %v1536
  %v1821 = vunpack.c.l.b16 %v1537
  %v1822 = vunpack.c.l.b16 %v1538
  %v1823 = vunpack.c.l.b16 %v1539
  %v1824 = vunpack.c.l.b16 %v1540
  %v1825 = vunpack.c.l.b16 %v1541
  %v1826 = vunpack.c.l.b16 %v1542
  %v1827 = vunpack.c.l.b16 %v1543
  %v1828 = vunpack.c.l.b16 %v1544
  %v1829 = vunpack.c.l.b16 %v1545
  %v1830 = vunpack.c.l.b16 %v1546
  %v1831 = vunpack.c.l.b16 %v1547
  %v1832 = vunpack.c.l.b16 %v1548
  %v1833 = vunpack.c.l.b16 %v1549
  %v1834 = vunpack.c.l.b16 %v1550
  %v1835 = vunpack.c.l.b16 %v1551
  %v1836 = vunpack.c.l.b16 %v1552
  %v1837 = vunpack.c.l.b16 %v1553
  %v1838 = vunpack.c.l.b16 %v1554
  %v1839 = vunpack.c.l.b16 %v1555
  %v1840 = vunpack.c.l.b16 %v1556
  %v1841 = vunpack.c.l.b16 %v1557
  %v1842 = vunpack.c.l.b16 %v1558
  %v1843 = vunpack.c.l.b16 %v1559
  %v1844 = vunpack.c.l.b16 %v1560
  %v1845 = vunpack.c.l.b16 %v1561
  %v1846 = vpack.c.b16 %v1719, %v1718
  %v1847 = vpack.c.b16 %v1721, %v1720
  %v1848 = vpack.c.b16 %v1723, %v1722
  %v1849 = vpack.c.b16 %v1725, %v1724
  %v1850 = vpack.c.b16 %v1727, %v1726
  %v1851 = vpack.c.b16 %v1729, %v1728
  %v1852 = vpack.c.b16 %v1731, %v1730
  %v1853 = vpack.c.b16 %v1733, %v1732
  %v1854 = vpack.c.b16 %v1735, %v1734
  %v1855 = vpack.c.b16 %v1737, %v1736
  %v1856 = vpack.c.b16 %v1739, %v1738
  %v1857 = vpack.c.b16 %v1741, %v1740
  %v1858 = vpack.c.b16 %v1743, %v1742
  %v1859 = vpack.c.b16 %v1745, %v1744
  %v1860 = vpack.c.b16 %v1747, %v1746
  %v1861 = vpack.c.b16 %v1749, %v1748
  %v1862 = vpack.c.b16 %v1751, %v1750
  %v1863 = vpack.c.b16 %v1753, %v1752
  %v1864 = vpack.c.b16 %v1755, %v1754
  %v1865 = vpack.c.b16 %v1757, %v1756
  %v1866 = vpack.c.b16 %v1759, %v1758
  %v1867 = vpack.c.b16 %v1761, %v1760
  %v1868 = vpack.c.b16 %v1763, %v1762
  %v1869 = vpack.c.b16 %v1765, %v1764
  %v1870 = vpack.c.b16 %v1767, %v1766
  %v1871 = vpack.c.b16 %v1769, %v1768
  %v1872 = vpack.c.b16 %v1771, %v1770
  %v1873 = vpack.c.b16 %v1773, %v1772
  %v1874 = vpack.c.b16 %v1775, %v1774
  %v1875 = vpack.c.b16 %v1777, %v1776
  %v1876 = vpack.c.b16 %v1779, %v1778
  %v1877 = vpack.c.b16 %v1781, %v1780
  %v1878 = vpack.c.b16 %v1783, %v1782
  %v1879 = vpack.c.b16 %v1785, %v1784
  %v1880 = vpack.c.b16 %v1787, %v1786
  %v1881 = vpack.c.b16 %v1789, %v1788
  %v1882 = vpack.c.b16 %v1791, %v1790
  %v1883 = vpack.c.b16 %v1793, %v1792
  %v1884 = vpack.c.b16 %v1795, %v1794
  %v1885 = vpack.c.b16 %v1797, %v1796
  %v1886 = vpack.c.b16 %v1799, %v1798
  %v1887 = vpack.c.b16 %v1801, %v1800
  %v1888 = vpack.c.b16 %v1803, %v1802
  %v1889 = vpack.c.b16 %v1805, %v1804
  %v1890 = vpack.c.b16 %v1807, %v1806
  %v1891 = vpack.c.b16 %v1809, %v1808
  %v1892 = vpack.c.b16 %v1811, %v1810
  %v1893 = vpack.c.b16 %v1813, %v1812
  %v1894 = vpack.c.b16 %v1815, %v1814
  %v1895 = vpack.c.b16 %v1817, %v1816
  %v1896 = vpack.c.b16 %v1819, %v1818
  %v1897 = vpack.c.b16 %v1821, %v1820
  %v1898 = vpack.c.b16 %v1823, %v1822
  %v1899 = vpack.c.b16 %v1825, %v1824
  %v1900 = vpack.c.b16 %v1827, %v1826
  %v1901 = vpack.c.b16 %v1829, %v1828
  %v1902 = vpack.c.b16 %v1831, %v1830
  %v1903 = vpack.c.b16 %v1833, %v1832
  %v1904 = vpack.c.b16 %v1835, %v1834
  %v1905 = vpack.c.b16 %v1837, %v1836
  %v1906 = vpack.c.b16 %v1839, %v1838
  %v1907 = vpack.c.b16 %v1841, %v1840
  %v1908 = vpack.c.b16 %v1843, %v1842
  %v1909 = vpack.c.b16 %v1845, %v1844
  %1974 = vmatprep.subr.bf16.mxu0 0
  %1975 = vmatpush1.bf16.msra.mxu0 %v1846
  %1976 = vmatprep.subr.bf16.mxu0 0
  %1977 = vmatpush1.bf16.msra.mxu0 %v1847
  %1978 = vmatprep.subr.bf16.mxu0 0
  %1979 = vmatpush1.bf16.msra.mxu0 %v1848
  %1980 = vmatprep.subr.bf16.mxu0 0
  %1981 = vmatpush1.bf16.msra.mxu0 %v1849
  %1982 = vmatprep.subr.bf16.mxu0 0
  %1983 = vmatpush1.bf16.msra.mxu0 %v1850
  %1984 = vmatprep.subr.bf16.mxu0 0
  %1985 = vmatpush1.bf16.msra.mxu0 %v1851
  %1986 = vmatprep.subr.bf16.mxu0 0
  %1987 = vmatpush1.bf16.msra.mxu0 %v1852
  %1988 = vmatprep.subr.bf16.mxu0 0
  %1989 = vmatpush1.bf16.msra.mxu0 %v1853
  %1990 = vmatprep.subr.bf16.mxu0 0
  %1991 = vmatpush1.bf16.msra.mxu0 %v1854
  %1992 = vmatprep.subr.bf16.mxu0 0
  %1993 = vmatpush1.bf16.msra.mxu0 %v1855
  %1994 = vmatprep.subr.bf16.mxu0 0
  %1995 = vmatpush1.bf16.msra.mxu0 %v1856
  %1996 = vmatprep.subr.bf16.mxu0 0
  %1997 = vmatpush1.bf16.msra.mxu0 %v1857
  %1998 = vmatprep.subr.bf16.mxu0 0
  %1999 = vmatpush1.bf16.msra.mxu0 %v1858
  %2000 = vmatprep.subr.bf16.mxu0 0
  %2001 = vmatpush1.bf16.msra.mxu0 %v1859
  %2002 = vmatprep.subr.bf16.mxu0 0
  %2003 = vmatpush1.bf16.msra.mxu0 %v1860
  %2004 = vmatprep.subr.bf16.mxu0 0
  %2005 = vmatpush1.bf16.msra.mxu0 %v1861
  %2006 = vmatprep.mubr.bf16.mxu0 %v1575
  %2007 = vmatmul.mubr.bf16.gmra.mrb[0].mxu0 %v1574
  %v2008 = vpop.f32.mrb[0].mxu0
  %v2009 = vadd.f32 0.0, %v2008
  %v2010 = vpop.f32.mrb[0].mxu0
  %v2011 = vpop.f32.mrb[0].mxu0
  %v2012 = vpop.f32.mrb[0].mxu0
  %2013 = vdwg.mxu0
  %2014 = vmatprep.subr.bf16.mxu0 0
  %2015 = vmatpush1.bf16.msra.mxu0 %v1862
  %2016 = vmatprep.subr.bf16.mxu0 0
  %2017 = vmatpush1.bf16.msra.mxu0 %v1863
  %2018 = vmatprep.subr.bf16.mxu0 0
  %2019 = vmatpush1.bf16.msra.mxu0 %v1864
  %2020 = vmatprep.subr.bf16.mxu0 0
  %2021 = vmatpush1.bf16.msra.mxu0 %v1865
  %2022 = vmatprep.subr.bf16.mxu0 0
  %2023 = vmatpush1.bf16.msra.mxu0 %v1866
  %2024 = vmatprep.subr.bf16.mxu0 0
  %2025 = vmatpush1.bf16.msra.mxu0 %v1867
  %2026 = vmatprep.subr.bf16.mxu0 0
  %2027 = vmatpush1.bf16.msra.mxu0 %v1868
  %2028 = vmatprep.subr.bf16.mxu0 0
  %2029 = vmatpush1.bf16.msra.mxu0 %v1869
  %2030 = vmatprep.subr.bf16.mxu0 0
  %2031 = vmatpush1.bf16.msra.mxu0 %v1870
  %2032 = vmatprep.subr.bf16.mxu0 0
  %2033 = vmatpush1.bf16.msra.mxu0 %v1871
  %2034 = vmatprep.subr.bf16.mxu0 0
  %2035 = vmatpush1.bf16.msra.mxu0 %v1872
  %2036 = vmatprep.subr.bf16.mxu0 0
  %2037 = vmatpush1.bf16.msra.mxu0 %v1873
  %2038 = vmatprep.subr.bf16.mxu0 0
  %2039 = vmatpush1.bf16.msra.mxu0 %v1874
  %2040 = vmatprep.subr.bf16.mxu0 0
  %2041 = vmatpush1.bf16.msra.mxu0 %v1875
  %2042 = vmatprep.subr.bf16.mxu0 0
  %2043 = vmatpush1.bf16.msra.mxu0 %v1876
  %2044 = vmatprep.subr.bf16.mxu0 0
  %2045 = vmatpush1.bf16.msra.mxu0 %v1877
  %2046 = vmatprep.mubr.bf16.mxu0 %v1577
  %2047 = vmatmul.mubr.bf16.gmra.mrb[0].mxu0 %v1576
  %v2048 = vpop.f32.mrb[0].mxu0
  %v2049 = vadd.f32 %v2009, %v2048
  %v2050 = vpop.f32.mrb[0].mxu0
  %v2051 = vpop.f32.mrb[0].mxu0
  %v2052 = vpop.f32.mrb[0].mxu0
  %2053 = vdwg.mxu0
  %2054 = vmatprep.subr.bf16.mxu0 0
  %2055 = vmatpush1.bf16.msra.mxu0 %v1878
  %2056 = vmatprep.subr.bf16.mxu0 0
  %2057 = vmatpush1.bf16.msra.mxu0 %v1879
  %2058 = vmatprep.subr.bf16.mxu0 0
  %2059 = vmatpush1.bf16.msra.mxu0 %v1880
  %2060 = vmatprep.subr.bf16.mxu0 0
  %2061 = vmatpush1.bf16.msra.mxu0 %v1881
  %2062 = vmatprep.subr.bf16.mxu0 0
  %2063 = vmatpush1.bf16.msra.mxu0 %v1882
  %2064 = vmatprep.subr.bf16.mxu0 0
  %2065 = vmatpush1.bf16.msra.mxu0 %v1883
  %2066 = vmatprep.subr.bf16.mxu0 0
  %2067 = vmatpush1.bf16.msra.mxu0 %v1884
  %2068 = vmatprep.subr.bf16.mxu0 0
  %2069 = vmatpush1.bf16.msra.mxu0 %v1885
  %2070 = vmatprep.subr.bf16.mxu0 0
  %2071 = vmatpush1.bf16.msra.mxu0 %v1886
  %2072 = vmatprep.subr.bf16.mxu0 0
  %2073 = vmatpush1.bf16.msra.mxu0 %v1887
  %2074 = vmatprep.subr.bf16.mxu0 0
  %2075 = vmatpush1.bf16.msra.mxu0 %v1888
  %2076 = vmatprep.subr.bf16.mxu0 0
  %2077 = vmatpush1.bf16.msra.mxu0 %v1889
  %2078 = vmatprep.subr.bf16.mxu0 0
  %2079 = vmatpush1.bf16.msra.mxu0 %v1890
  %2080 = vmatprep.subr.bf16.mxu0 0
  %2081 = vmatpush1.bf16.msra.mxu0 %v1891
  %2082 = vmatprep.subr.bf16.mxu0 0
  %2083 = vmatpush1.bf16.msra.mxu0 %v1892
  %2084 = vmatprep.subr.bf16.mxu0 0
  %2085 = vmatpush1.bf16.msra.mxu0 %v1893
  %2086 = vmatprep.mubr.bf16.mxu0 %v1579
  %2087 = vmatmul.mubr.bf16.gmra.mrb[0].mxu0 %v1578
  %v2088 = vpop.f32.mrb[0].mxu0
  %v2089 = vadd.f32 %v2049, %v2088
  %v2090 = vpop.f32.mrb[0].mxu0
  %v2091 = vpop.f32.mrb[0].mxu0
  %v2092 = vpop.f32.mrb[0].mxu0
  %2093 = vdwg.mxu0
  %2094 = vmatprep.subr.bf16.mxu0 0
  %2095 = vmatpush1.bf16.msra.mxu0 %v1894
  %2096 = vmatprep.subr.bf16.mxu0 0
  %2097 = vmatpush1.bf16.msra.mxu0 %v1895
  %2098 = vmatprep.subr.bf16.mxu0 0
  %2099 = vmatpush1.bf16.msra.mxu0 %v1896
  %2100 = vmatprep.subr.bf16.mxu0 0
  %2101 = vmatpush1.bf16.msra.mxu0 %v1897
  %2102 = vmatprep.subr.bf16.mxu0 0
  %2103 = vmatpush1.bf16.msra.mxu0 %v1898
  %2104 = vmatprep.subr.bf16.mxu0 0
  %2105 = vmatpush1.bf16.msra.mxu0 %v1899
  %2106 = vmatprep.subr.bf16.mxu0 0
  %2107 = vmatpush1.bf16.msra.mxu0 %v1900
  %2108 = vmatprep.subr.bf16.mxu0 0
  %2109 = vmatpush1.bf16.msra.mxu0 %v1901
  %2110 = vmatprep.subr.bf16.mxu0 0
  %2111 = vmatpush1.bf16.msra.mxu0 %v1902
  %2112 = vmatprep.subr.bf16.mxu0 0
  %2113 = vmatpush1.bf16.msra.mxu0 %v1903
  %2114 = vmatprep.subr.bf16.mxu0 0
  %2115 = vmatpush1.bf16.msra.mxu0 %v1904
  %2116 = vmatprep.subr.bf16.mxu0 0
  %2117 = vmatpush1.bf16.msra.mxu0 %v1905
  %2118 = vmatprep.subr.bf16.mxu0 0
  %2119 = vmatpush1.bf16.msra.mxu0 %v1906
  %2120 = vmatprep.subr.bf16.mxu0 0
  %2121 = vmatpush1.bf16.msra.mxu0 %v1907
  %2122 = vmatprep.subr.bf16.mxu0 0
  %2123 = vmatpush1.bf16.msra.mxu0 %v1908
  %2124 = vmatprep.subr.bf16.mxu0 0
  %2125 = vmatpush1.bf16.msra.mxu0 %v1909
  %2126 = vmatprep.mubr.bf16.mxu0 %v1581
  %2127 = vmatmul.mubr.bf16.gmra.mrb[0].mxu0 %v1580
  %v2128 = vpop.f32.mrb[0].mxu0
  %v2129 = vadd.f32 %v2089, %v2128
  %v2130 = vpop.f32.mrb[0].mxu0
  %v2131 = vpop.f32.mrb[0].mxu0
  %v2132 = vpop.f32.mrb[0].mxu0
  %2133 = vdwg.mxu0
  %s2134 = scalar_lea.vmem %s0, 96
  %v2135 = vld [vmem:[%s2134] sm:$0xff]
  %v2136 = vld [vmem:[%s2134 + $0x8] sm:$0xff]
  %v2137 = vld [vmem:[%s2134 + $0x10] sm:$0xff]
  %v2138 = vld [vmem:[%s2134 + $0x18] sm:$0xff]
  %s2139 = scalar_lea.vmem %s1, 1536
  %v2140 = vld [vmem:[%s2139] sm:$0xf]
  %v2141 = vld [vmem:[%s2139 + $0x4] sm:$0xf]
  %v2142 = vld [vmem:[%s2139 + $0x8] sm:$0xf]
  %v2143 = vld [vmem:[%s2139 + $0xc] sm:$0xf]
  %v2144 = vld [vmem:[%s2139 + $0x10] sm:$0xf]
  %v2145 = vld [vmem:[%s2139 + $0x14] sm:$0xf]
  %v2146 = vld [vmem:[%s2139 + $0x18] sm:$0xf]
  %v2147 = vld [vmem:[%s2139 + $0x1c] sm:$0xf]
  %v2148 = vld [vmem:[%s2139 + $0x20] sm:$0xf]
  %v2149 = vld [vmem:[%s2139 + $0x24] sm:$0xf]
  %v2150 = vld [vmem:[%s2139 + $0x28] sm:$0xf]
  %v2151 = vld [vmem:[%s2139 + $0x2c] sm:$0xf]
  %v2152 = vld [vmem:[%s2139 + $0x30] sm:$0xf]
  %v2153 = vld [vmem:[%s2139 + $0x34] sm:$0xf]
  %v2154 = vld [vmem:[%s2139 + $0x38] sm:$0xf]
  %v2155 = vld [vmem:[%s2139 + $0x3c] sm:$0xf]
  %v2156 = vld [vmem:[%s2139 + $0x40] sm:$0xf]
  %v2157 = vld [vmem:[%s2139 + $0x44] sm:$0xf]
  %v2158 = vld [vmem:[%s2139 + $0x48] sm:$0xf]
  %v2159 = vld [vmem:[%s2139 + $0x4c] sm:$0xf]
  %v2160 = vld [vmem:[%s2139 + $0x50] sm:$0xf]
  %v2161 = vld [vmem:[%s2139 + $0x54] sm:$0xf]
  %v2162 = vld [vmem:[%s2139 + $0x58] sm:$0xf]
  %v2163 = vld [vmem:[%s2139 + $0x5c] sm:$0xf]
  %v2164 = vld [vmem:[%s2139 + $0x60] sm:$0xf]
  %v2165 = vld [vmem:[%s2139 + $0x64] sm:$0xf]
  %v2166 = vld [vmem:[%s2139 + $0x68] sm:$0xf]
  %v2167 = vld [vmem:[%s2139 + $0x6c] sm:$0xf]
  %v2168 = vld [vmem:[%s2139 + $0x70] sm:$0xf]
  %v2169 = vld [vmem:[%s2139 + $0x74] sm:$0xf]
  %v2170 = vld [vmem:[%s2139 + $0x78] sm:$0xf]
  %v2171 = vld [vmem:[%s2139 + $0x7c] sm:$0xf]
  %v2172 = vld [vmem:[%s2139 + $0x80] sm:$0xf]
  %v2173 = vld [vmem:[%s2139 + $0x84] sm:$0xf]
  %v2174 = vld [vmem:[%s2139 + $0x88] sm:$0xf]
  %v2175 = vld [vmem:[%s2139 + $0x8c] sm:$0xf]
  %v2176 = vld [vmem:[%s2139 + $0x90] sm:$0xf]
  %v2177 = vld [vmem:[%s2139 + $0x94] sm:$0xf]
  %v2178 = vld [vmem:[%s2139 + $0x98] sm:$0xf]
  %v2179 = vld [vmem:[%s2139 + $0x9c] sm:$0xf]
  %v2180 = vld [vmem:[%s2139 + $0xa0] sm:$0xf]
  %v2181 = vld [vmem:[%s2139 + $0xa4] sm:$0xf]
  %v2182 = vld [vmem:[%s2139 + $0xa8] sm:$0xf]
  %v2183 = vld [vmem:[%s2139 + $0xac] sm:$0xf]
  %v2184 = vld [vmem:[%s2139 + $0xb0] sm:$0xf]
  %v2185 = vld [vmem:[%s2139 + $0xb4] sm:$0xf]
  %v2186 = vld [vmem:[%s2139 + $0xb8] sm:$0xf]
  %v2187 = vld [vmem:[%s2139 + $0xbc] sm:$0xf]
  %v2188 = vld [vmem:[%s2139 + $0xc0] sm:$0xf]
  %v2189 = vld [vmem:[%s2139 + $0xc4] sm:$0xf]
  %v2190 = vld [vmem:[%s2139 + $0xc8] sm:$0xf]
  %v2191 = vld [vmem:[%s2139 + $0xcc] sm:$0xf]
  %v2192 = vld [vmem:[%s2139 + $0xd0] sm:$0xf]
  %v2193 = vld [vmem:[%s2139 + $0xd4] sm:$0xf]
  %v2194 = vld [vmem:[%s2139 + $0xd8] sm:$0xf]
  %v2195 = vld [vmem:[%s2139 + $0xdc] sm:$0xf]
  %v2196 = vld [vmem:[%s2139 + $0xe0] sm:$0xf]
  %v2197 = vld [vmem:[%s2139 + $0xe4] sm:$0xf]
  %v2198 = vld [vmem:[%s2139 + $0xe8] sm:$0xf]
  %v2199 = vld [vmem:[%s2139 + $0xec] sm:$0xf]
  %v2200 = vld [vmem:[%s2139 + $0xf0] sm:$0xf]
  %v2201 = vld [vmem:[%s2139 + $0xf4] sm:$0xf]
  %v2202 = vld [vmem:[%s2139 + $0xf8] sm:$0xf]
  %v2203 = vld [vmem:[%s2139 + $0xfc] sm:$0xf]
  %v2204 = vld [vmem:[%s2139 + $0x100] sm:$0xf]
  %v2205 = vld [vmem:[%s2139 + $0x104] sm:$0xf]
  %v2206 = vld [vmem:[%s2139 + $0x108] sm:$0xf]
  %v2207 = vld [vmem:[%s2139 + $0x10c] sm:$0xf]
  %v2208 = vld [vmem:[%s2139 + $0x110] sm:$0xf]
  %v2209 = vld [vmem:[%s2139 + $0x114] sm:$0xf]
  %v2210 = vld [vmem:[%s2139 + $0x118] sm:$0xf]
  %v2211 = vld [vmem:[%s2139 + $0x11c] sm:$0xf]
  %v2212 = vld [vmem:[%s2139 + $0x120] sm:$0xf]
  %v2213 = vld [vmem:[%s2139 + $0x124] sm:$0xf]
  %v2214 = vld [vmem:[%s2139 + $0x128] sm:$0xf]
  %v2215 = vld [vmem:[%s2139 + $0x12c] sm:$0xf]
  %v2216 = vld [vmem:[%s2139 + $0x130] sm:$0xf]
  %v2217 = vld [vmem:[%s2139 + $0x134] sm:$0xf]
  %v2218 = vld [vmem:[%s2139 + $0x138] sm:$0xf]
  %v2219 = vld [vmem:[%s2139 + $0x13c] sm:$0xf]
  %v2220 = vld [vmem:[%s2139 + $0x140] sm:$0xf]
  %v2221 = vld [vmem:[%s2139 + $0x144] sm:$0xf]
  %v2222 = vld [vmem:[%s2139 + $0x148] sm:$0xf]
  %v2223 = vld [vmem:[%s2139 + $0x14c] sm:$0xf]
  %v2224 = vld [vmem:[%s2139 + $0x150] sm:$0xf]
  %v2225 = vld [vmem:[%s2139 + $0x154] sm:$0xf]
  %v2226 = vld [vmem:[%s2139 + $0x158] sm:$0xf]
  %v2227 = vld [vmem:[%s2139 + $0x15c] sm:$0xf]
  %v2228 = vld [vmem:[%s2139 + $0x160] sm:$0xf]
  %v2229 = vld [vmem:[%s2139 + $0x164] sm:$0xf]
  %v2230 = vld [vmem:[%s2139 + $0x168] sm:$0xf]
  %v2231 = vld [vmem:[%s2139 + $0x16c] sm:$0xf]
  %v2232 = vld [vmem:[%s2139 + $0x170] sm:$0xf]
  %v2233 = vld [vmem:[%s2139 + $0x174] sm:$0xf]
  %v2234 = vld [vmem:[%s2139 + $0x178] sm:$0xf]
  %v2235 = vld [vmem:[%s2139 + $0x17c] sm:$0xf]
  %v2236 = vld [vmem:[%s2139 + $0x180] sm:$0xf]
  %v2237 = vld [vmem:[%s2139 + $0x184] sm:$0xf]
  %v2238 = vld [vmem:[%s2139 + $0x188] sm:$0xf]
  %v2239 = vld [vmem:[%s2139 + $0x18c] sm:$0xf]
  %v2240 = vld [vmem:[%s2139 + $0x190] sm:$0xf]
  %v2241 = vld [vmem:[%s2139 + $0x194] sm:$0xf]
  %v2242 = vld [vmem:[%s2139 + $0x198] sm:$0xf]
  %v2243 = vld [vmem:[%s2139 + $0x19c] sm:$0xf]
  %v2244 = vld [vmem:[%s2139 + $0x1a0] sm:$0xf]
  %v2245 = vld [vmem:[%s2139 + $0x1a4] sm:$0xf]
  %v2246 = vld [vmem:[%s2139 + $0x1a8] sm:$0xf]
  %v2247 = vld [vmem:[%s2139 + $0x1ac] sm:$0xf]
  %v2248 = vld [vmem:[%s2139 + $0x1b0] sm:$0xf]
  %v2249 = vld [vmem:[%s2139 + $0x1b4] sm:$0xf]
  %v2250 = vld [vmem:[%s2139 + $0x1b8] sm:$0xf]
  %v2251 = vld [vmem:[%s2139 + $0x1bc] sm:$0xf]
  %v2252 = vld [vmem:[%s2139 + $0x1c0] sm:$0xf]
  %v2253 = vld [vmem:[%s2139 + $0x1c4] sm:$0xf]
  %v2254 = vld [vmem:[%s2139 + $0x1c8] sm:$0xf]
  %v2255 = vld [vmem:[%s2139 + $0x1cc] sm:$0xf]
  %v2256 = vld [vmem:[%s2139 + $0x1d0] sm:$0xf]
  %v2257 = vld [vmem:[%s2139 + $0x1d4] sm:$0xf]
  %v2258 = vld [vmem:[%s2139 + $0x1d8] sm:$0xf]
  %v2259 = vld [vmem:[%s2139 + $0x1dc] sm:$0xf]
  %v2260 = vld [vmem:[%s2139 + $0x1e0] sm:$0xf]
  %v2261 = vld [vmem:[%s2139 + $0x1e4] sm:$0xf]
  %v2262 = vld [vmem:[%s2139 + $0x1e8] sm:$0xf]
  %v2263 = vld [vmem:[%s2139 + $0x1ec] sm:$0xf]
  %v2264 = vld [vmem:[%s2139 + $0x1f0] sm:$0xf]
  %v2265 = vld [vmem:[%s2139 + $0x1f4] sm:$0xf]
  %v2266 = vld [vmem:[%s2139 + $0x1f8] sm:$0xf]
  %v2267 = vld [vmem:[%s2139 + $0x1fc] sm:$0xf]
  %v2272 = vunpack.c.l.b16 %v2135
  %v2273 = vunpack.c.h.b16 %v2135
  %v2274 = vunpack.c.l.b16 %v2136
  %v2275 = vunpack.c.h.b16 %v2136
  %v2276 = vunpack.c.l.b16 %v2137
  %v2277 = vunpack.c.h.b16 %v2137
  %v2278 = vunpack.c.l.b16 %v2138
  %v2279 = vunpack.c.h.b16 %v2138
  %v2280 = vpack.c.b16 %v2272, %v2272
  %v2281 = vpack.c.b16 %v2273, %v2273
  %v2282 = vpack.c.b16 %v2274, %v2274
  %v2283 = vpack.c.b16 %v2275, %v2275
  %v2284 = vpack.c.b16 %v2276, %v2276
  %v2285 = vpack.c.b16 %v2277, %v2277
  %v2286 = vpack.c.b16 %v2278, %v2278
  %v2287 = vpack.c.b16 %v2279, %v2279
  %v2424 = vunpack.c.l.b16 %v2140
  %v2425 = vunpack.c.l.b16 %v2141
  %v2426 = vunpack.c.l.b16 %v2142
  %v2427 = vunpack.c.l.b16 %v2143
  %v2428 = vunpack.c.l.b16 %v2144
  %v2429 = vunpack.c.l.b16 %v2145
  %v2430 = vunpack.c.l.b16 %v2146
  %v2431 = vunpack.c.l.b16 %v2147
  %v2432 = vunpack.c.l.b16 %v2148
  %v2433 = vunpack.c.l.b16 %v2149
  %v2434 = vunpack.c.l.b16 %v2150
  %v2435 = vunpack.c.l.b16 %v2151
  %v2436 = vunpack.c.l.b16 %v2152
  %v2437 = vunpack.c.l.b16 %v2153
  %v2438 = vunpack.c.l.b16 %v2154
  %v2439 = vunpack.c.l.b16 %v2155
  %v2440 = vunpack.c.l.b16 %v2156
  %v2441 = vunpack.c.l.b16 %v2157
  %v2442 = vunpack.c.l.b16 %v2158
  %v2443 = vunpack.c.l.b16 %v2159
  %v2444 = vunpack.c.l.b16 %v2160
  %v2445 = vunpack.c.l.b16 %v2161
  %v2446 = vunpack.c.l.b16 %v2162
  %v2447 = vunpack.c.l.b16 %v2163
  %v2448 = vunpack.c.l.b16 %v2164
  %v2449 = vunpack.c.l.b16 %v2165
  %v2450 = vunpack.c.l.b16 %v2166
  %v2451 = vunpack.c.l.b16 %v2167
  %v2452 = vunpack.c.l.b16 %v2168
  %v2453 = vunpack.c.l.b16 %v2169
  %v2454 = vunpack.c.l.b16 %v2170
  %v2455 = vunpack.c.l.b16 %v2171
  %v2456 = vunpack.c.l.b16 %v2172
  %v2457 = vunpack.c.l.b16 %v2173
  %v2458 = vunpack.c.l.b16 %v2174
  %v2459 = vunpack.c.l.b16 %v2175
  %v2460 = vunpack.c.l.b16 %v2176
  %v2461 = vunpack.c.l.b16 %v2177
  %v2462 = vunpack.c.l.b16 %v2178
  %v2463 = vunpack.c.l.b16 %v2179
  %v2464 = vunpack.c.l.b16 %v2180
  %v2465 = vunpack.c.l.b16 %v2181
  %v2466 = vunpack.c.l.b16 %v2182
  %v2467 = vunpack.c.l.b16 %v2183
  %v2468 = vunpack.c.l.b16 %v2184
  %v2469 = vunpack.c.l.b16 %v2185
  %v2470 = vunpack.c.l.b16 %v2186
  %v2471 = vunpack.c.l.b16 %v2187
  %v2472 = vunpack.c.l.b16 %v2188
  %v2473 = vunpack.c.l.b16 %v2189
  %v2474 = vunpack.c.l.b16 %v2190
  %v2475 = vunpack.c.l.b16 %v2191
  %v2476 = vunpack.c.l.b16 %v2192
  %v2477 = vunpack.c.l.b16 %v2193
  %v2478 = vunpack.c.l.b16 %v2194
  %v2479 = vunpack.c.l.b16 %v2195
  %v2480 = vunpack.c.l.b16 %v2196
  %v2481 = vunpack.c.l.b16 %v2197
  %v2482 = vunpack.c.l.b16 %v2198
  %v2483 = vunpack.c.l.b16 %v2199
  %v2484 = vunpack.c.l.b16 %v2200
  %v2485 = vunpack.c.l.b16 %v2201
  %v2486 = vunpack.c.l.b16 %v2202
  %v2487 = vunpack.c.l.b16 %v2203
  %v2488 = vunpack.c.l.b16 %v2204
  %v2489 = vunpack.c.l.b16 %v2205
  %v2490 = vunpack.c.l.b16 %v2206
  %v2491 = vunpack.c.l.b16 %v2207
  %v2492 = vunpack.c.l.b16 %v2208
  %v2493 = vunpack.c.l.b16 %v2209
  %v2494 = vunpack.c.l.b16 %v2210
  %v2495 = vunpack.c.l.b16 %v2211
  %v2496 = vunpack.c.l.b16 %v2212
  %v2497 = vunpack.c.l.b16 %v2213
  %v2498 = vunpack.c.l.b16 %v2214
  %v2499 = vunpack.c.l.b16 %v2215
  %v2500 = vunpack.c.l.b16 %v2216
  %v2501 = vunpack.c.l.b16 %v2217
  %v2502 = vunpack.c.l.b16 %v2218
  %v2503 = vunpack.c.l.b16 %v2219
  %v2504 = vunpack.c.l.b16 %v2220
  %v2505 = vunpack.c.l.b16 %v2221
  %v2506 = vunpack.c.l.b16 %v2222
  %v2507 = vunpack.c.l.b16 %v2223
  %v2508 = vunpack.c.l.b16 %v2224
  %v2509 = vunpack.c.l.b16 %v2225
  %v2510 = vunpack.c.l.b16 %v2226
  %v2511 = vunpack.c.l.b16 %v2227
  %v2512 = vunpack.c.l.b16 %v2228
  %v2513 = vunpack.c.l.b16 %v2229
  %v2514 = vunpack.c.l.b16 %v2230
  %v2515 = vunpack.c.l.b16 %v2231
  %v2516 = vunpack.c.l.b16 %v2232
  %v2517 = vunpack.c.l.b16 %v2233
  %v2518 = vunpack.c.l.b16 %v2234
  %v2519 = vunpack.c.l.b16 %v2235
  %v2520 = vunpack.c.l.b16 %v2236
  %v2521 = vunpack.c.l.b16 %v2237
  %v2522 = vunpack.c.l.b16 %v2238
  %v2523 = vunpack.c.l.b16 %v2239
  %v2524 = vunpack.c.l.b16 %v2240
  %v2525 = vunpack.c.l.b16 %v2241
  %v2526 = vunpack.c.l.b16 %v2242
  %v2527 = vunpack.c.l.b16 %v2243
  %v2528 = vunpack.c.l.b16 %v2244
  %v2529 = vunpack.c.l.b16 %v2245
  %v2530 = vunpack.c.l.b16 %v2246
  %v2531 = vunpack.c.l.b16 %v2247
  %v2532 = vunpack.c.l.b16 %v2248
  %v2533 = vunpack.c.l.b16 %v2249
  %v2534 = vunpack.c.l.b16 %v2250
  %v2535 = vunpack.c.l.b16 %v2251
  %v2536 = vunpack.c.l.b16 %v2252
  %v2537 = vunpack.c.l.b16 %v2253
  %v2538 = vunpack.c.l.b16 %v2254
  %v2539 = vunpack.c.l.b16 %v2255
  %v2540 = vunpack.c.l.b16 %v2256
  %v2541 = vunpack.c.l.b16 %v2257
  %v2542 = vunpack.c.l.b16 %v2258
  %v2543 = vunpack.c.l.b16 %v2259
  %v2544 = vunpack.c.l.b16 %v2260
  %v2545 = vunpack.c.l.b16 %v2261
  %v2546 = vunpack.c.l.b16 %v2262
  %v2547 = vunpack.c.l.b16 %v2263
  %v2548 = vunpack.c.l.b16 %v2264
  %v2549 = vunpack.c.l.b16 %v2265
  %v2550 = vunpack.c.l.b16 %v2266
  %v2551 = vunpack.c.l.b16 %v2267
  %v2552 = vpack.c.b16 %v2425, %v2424
  %v2553 = vpack.c.b16 %v2427, %v2426
  %v2554 = vpack.c.b16 %v2429, %v2428
  %v2555 = vpack.c.b16 %v2431, %v2430
  %v2556 = vpack.c.b16 %v2433, %v2432
  %v2557 = vpack.c.b16 %v2435, %v2434
  %v2558 = vpack.c.b16 %v2437, %v2436
  %v2559 = vpack.c.b16 %v2439, %v2438
  %v2560 = vpack.c.b16 %v2441, %v2440
  %v2561 = vpack.c.b16 %v2443, %v2442
  %v2562 = vpack.c.b16 %v2445, %v2444
  %v2563 = vpack.c.b16 %v2447, %v2446
  %v2564 = vpack.c.b16 %v2449, %v2448
  %v2565 = vpack.c.b16 %v2451, %v2450
  %v2566 = vpack.c.b16 %v2453, %v2452
  %v2567 = vpack.c.b16 %v2455, %v2454
  %v2568 = vpack.c.b16 %v2457, %v2456
  %v2569 = vpack.c.b16 %v2459, %v2458
  %v2570 = vpack.c.b16 %v2461, %v2460
  %v2571 = vpack.c.b16 %v2463, %v2462
  %v2572 = vpack.c.b16 %v2465, %v2464
  %v2573 = vpack.c.b16 %v2467, %v2466
  %v2574 = vpack.c.b16 %v2469, %v2468
  %v2575 = vpack.c.b16 %v2471, %v2470
  %v2576 = vpack.c.b16 %v2473, %v2472
  %v2577 = vpack.c.b16 %v2475, %v2474
  %v2578 = vpack.c.b16 %v2477, %v2476
  %v2579 = vpack.c.b16 %v2479, %v2478
  %v2580 = vpack.c.b16 %v2481, %v2480
  %v2581 = vpack.c.b16 %v2483, %v2482
  %v2582 = vpack.c.b16 %v2485, %v2484
  %v2583 = vpack.c.b16 %v2487, %v2486
  %v2584 = vpack.c.b16 %v2489, %v2488
  %v2585 = vpack.c.b16 %v2491, %v2490
  %v2586 = vpack.c.b16 %v2493, %v2492
  %v2587 = vpack.c.b16 %v2495, %v2494
  %v2588 = vpack.c.b16 %v2497, %v2496
  %v2589 = vpack.c.b16 %v2499, %v2498
  %v2590 = vpack.c.b16 %v2501, %v2500
  %v2591 = vpack.c.b16 %v2503, %v2502
  %v2592 = vpack.c.b16 %v2505, %v2504
  %v2593 = vpack.c.b16 %v2507, %v2506
  %v2594 = vpack.c.b16 %v2509, %v2508
  %v2595 = vpack.c.b16 %v2511, %v2510
  %v2596 = vpack.c.b16 %v2513, %v2512
  %v2597 = vpack.c.b16 %v2515, %v2514
  %v2598 = vpack.c.b16 %v2517, %v2516
  %v2599 = vpack.c.b16 %v2519, %v2518
  %v2600 = vpack.c.b16 %v2521, %v2520
  %v2601 = vpack.c.b16 %v2523, %v2522
  %v2602 = vpack.c.b16 %v2525, %v2524
  %v2603 = vpack.c.b16 %v2527, %v2526
  %v2604 = vpack.c.b16 %v2529, %v2528
  %v2605 = vpack.c.b16 %v2531, %v2530
  %v2606 = vpack.c.b16 %v2533, %v2532
  %v2607 = vpack.c.b16 %v2535, %v2534
  %v2608 = vpack.c.b16 %v2537, %v2536
  %v2609 = vpack.c.b16 %v2539, %v2538
  %v2610 = vpack.c.b16 %v2541, %v2540
  %v2611 = vpack.c.b16 %v2543, %v2542
  %v2612 = vpack.c.b16 %v2545, %v2544
  %v2613 = vpack.c.b16 %v2547, %v2546
  %v2614 = vpack.c.b16 %v2549, %v2548
  %v2615 = vpack.c.b16 %v2551, %v2550
  %2680 = vmatprep.subr.bf16.mxu0 0
  %2681 = vmatpush1.bf16.msra.mxu0 %v2552
  %2682 = vmatprep.subr.bf16.mxu0 0
  %2683 = vmatpush1.bf16.msra.mxu0 %v2553
  %2684 = vmatprep.subr.bf16.mxu0 0
  %2685 = vmatpush1.bf16.msra.mxu0 %v2554
  %2686 = vmatprep.subr.bf16.mxu0 0
  %2687 = vmatpush1.bf16.msra.mxu0 %v2555
  %2688 = vmatprep.subr.bf16.mxu0 0
  %2689 = vmatpush1.bf16.msra.mxu0 %v2556
  %2690 = vmatprep.subr.bf16.mxu0 0
  %2691 = vmatpush1.bf16.msra.mxu0 %v2557
  %2692 = vmatprep.subr.bf16.mxu0 0
  %2693 = vmatpush1.bf16.msra.mxu0 %v2558
  %2694 = vmatprep.subr.bf16.mxu0 0
  %2695 = vmatpush1.bf16.msra.mxu0 %v2559
  %2696 = vmatprep.subr.bf16.mxu0 0
  %2697 = vmatpush1.bf16.msra.mxu0 %v2560
  %2698 = vmatprep.subr.bf16.mxu0 0
  %2699 = vmatpush1.bf16.msra.mxu0 %v2561
  %2700 = vmatprep.subr.bf16.mxu0 0
  %2701 = vmatpush1.bf16.msra.mxu0 %v2562
  %2702 = vmatprep.subr.bf16.mxu0 0
  %2703 = vmatpush1.bf16.msra.mxu0 %v2563
  %2704 = vmatprep.subr.bf16.mxu0 0
  %2705 = vmatpush1.bf16.msra.mxu0 %v2564
  %2706 = vmatprep.subr.bf16.mxu0 0
  %2707 = vmatpush1.bf16.msra.mxu0 %v2565
  %2708 = vmatprep.subr.bf16.mxu0 0
  %2709 = vmatpush1.bf16.msra.mxu0 %v2566
  %2710 = vmatprep.subr.bf16.mxu0 0
  %2711 = vmatpush1.bf16.msra.mxu0 %v2567
  %2712 = vmatprep.mubr.bf16.mxu0 %v2281
  %2713 = vmatmul.mubr.bf16.gmra.mrb[0].mxu0 %v2280
  %v2714 = vpop.f32.mrb[0].mxu0
  %v2715 = vadd.f32 0.0, %v2714
  %v2716 = vpop.f32.mrb[0].mxu0
  %v2717 = vpop.f32.mrb[0].mxu0
  %v2718 = vpop.f32.mrb[0].mxu0
  %2719 = vdwg.mxu0
  %2720 = vmatprep.subr.bf16.mxu0 0
  %2721 = vmatpush1.bf16.msra.mxu0 %v2568
  %2722 = vmatprep.subr.bf16.mxu0 0
  %2723 = vmatpush1.bf16.msra.mxu0 %v2569
  %2724 = vmatprep.subr.bf16.mxu0 0
  %2725 = vmatpush1.bf16.msra.mxu0 %v2570
  %2726 = vmatprep.subr.bf16.mxu0 0
  %2727 = vmatpush1.bf16.msra.mxu0 %v2571
  %2728 = vmatprep.subr.bf16.mxu0 0
  %2729 = vmatpush1.bf16.msra.mxu0 %v2572
  %2730 = vmatprep.subr.bf16.mxu0 0
  %2731 = vmatpush1.bf16.msra.mxu0 %v2573
  %2732 = vmatprep.subr.bf16.mxu0 0
  %2733 = vmatpush1.bf16.msra.mxu0 %v2574
  %2734 = vmatprep.subr.bf16.mxu0 0
  %2735 = vmatpush1.bf16.msra.mxu0 %v2575
  %2736 = vmatprep.subr.bf16.mxu0 0
  %2737 = vmatpush1.bf16.msra.mxu0 %v2576
  %2738 = vmatprep.subr.bf16.mxu0 0
  %2739 = vmatpush1.bf16.msra.mxu0 %v2577
  %2740 = vmatprep.subr.bf16.mxu0 0
  %2741 = vmatpush1.bf16.msra.mxu0 %v2578
  %2742 = vmatprep.subr.bf16.mxu0 0
  %2743 = vmatpush1.bf16.msra.mxu0 %v2579
  %2744 = vmatprep.subr.bf16.mxu0 0
  %2745 = vmatpush1.bf16.msra.mxu0 %v2580
  %2746 = vmatprep.subr.bf16.mxu0 0
  %2747 = vmatpush1.bf16.msra.mxu0 %v2581
  %2748 = vmatprep.subr.bf16.mxu0 0
  %2749 = vmatpush1.bf16.msra.mxu0 %v2582
  %2750 = vmatprep.subr.bf16.mxu0 0
  %2751 = vmatpush1.bf16.msra.mxu0 %v2583
  %2752 = vmatprep.mubr.bf16.mxu0 %v2283
  %2753 = vmatmul.mubr.bf16.gmra.mrb[0].mxu0 %v2282
  %v2754 = vpop.f32.mrb[0].mxu0
  %v2755 = vadd.f32 %v2715, %v2754
  %v2756 = vpop.f32.mrb[0].mxu0
  %v2757 = vpop.f32.mrb[0].mxu0
  %v2758 = vpop.f32.mrb[0].mxu0
  %2759 = vdwg.mxu0
  %2760 = vmatprep.subr.bf16.mxu0 0
  %2761 = vmatpush1.bf16.msra.mxu0 %v2584
  %2762 = vmatprep.subr.bf16.mxu0 0
  %2763 = vmatpush1.bf16.msra.mxu0 %v2585
  %2764 = vmatprep.subr.bf16.mxu0 0
  %2765 = vmatpush1.bf16.msra.mxu0 %v2586
  %2766 = vmatprep.subr.bf16.mxu0 0
  %2767 = vmatpush1.bf16.msra.mxu0 %v2587
  %2768 = vmatprep.subr.bf16.mxu0 0
  %2769 = vmatpush1.bf16.msra.mxu0 %v2588
  %2770 = vmatprep.subr.bf16.mxu0 0
  %2771 = vmatpush1.bf16.msra.mxu0 %v2589
  %2772 = vmatprep.subr.bf16.mxu0 0
  %2773 = vmatpush1.bf16.msra.mxu0 %v2590
  %2774 = vmatprep.subr.bf16.mxu0 0
  %2775 = vmatpush1.bf16.msra.mxu0 %v2591
  %2776 = vmatprep.subr.bf16.mxu0 0
  %2777 = vmatpush1.bf16.msra.mxu0 %v2592
  %2778 = vmatprep.subr.bf16.mxu0 0
  %2779 = vmatpush1.bf16.msra.mxu0 %v2593
  %2780 = vmatprep.subr.bf16.mxu0 0
  %2781 = vmatpush1.bf16.msra.mxu0 %v2594
  %2782 = vmatprep.subr.bf16.mxu0 0
  %2783 = vmatpush1.bf16.msra.mxu0 %v2595
  %2784 = vmatprep.subr.bf16.mxu0 0
  %2785 = vmatpush1.bf16.msra.mxu0 %v2596
  %2786 = vmatprep.subr.bf16.mxu0 0
  %2787 = vmatpush1.bf16.msra.mxu0 %v2597
  %2788 = vmatprep.subr.bf16.mxu0 0
  %2789 = vmatpush1.bf16.msra.mxu0 %v2598
  %2790 = vmatprep.subr.bf16.mxu0 0
  %2791 = vmatpush1.bf16.msra.mxu0 %v2599
  %2792 = vmatprep.mubr.bf16.mxu0 %v2285
  %2793 = vmatmul.mubr.bf16.gmra.mrb[0].mxu0 %v2284
  %v2794 = vpop.f32.mrb[0].mxu0
  %v2795 = vadd.f32 %v2755, %v2794
  %v2796 = vpop.f32.mrb[0].mxu0
  %v2797 = vpop.f32.mrb[0].mxu0
  %v2798 = vpop.f32.mrb[0].mxu0
  %2799 = vdwg.mxu0
  %2800 = vmatprep.subr.bf16.mxu0 0
  %2801 = vmatpush1.bf16.msra.mxu0 %v2600
  %2802 = vmatprep.subr.bf16.mxu0 0
  %2803 = vmatpush1.bf16.msra.mxu0 %v2601
  %2804 = vmatprep.subr.bf16.mxu0 0
  %2805 = vmatpush1.bf16.msra.mxu0 %v2602
  %2806 = vmatprep.subr.bf16.mxu0 0
  %2807 = vmatpush1.bf16.msra.mxu0 %v2603
  %2808 = vmatprep.subr.bf16.mxu0 0
  %2809 = vmatpush1.bf16.msra.mxu0 %v2604
  %2810 = vmatprep.subr.bf16.mxu0 0
  %2811 = vmatpush1.bf16.msra.mxu0 %v2605
  %2812 = vmatprep.subr.bf16.mxu0 0
  %2813 = vmatpush1.bf16.msra.mxu0 %v2606
  %2814 = vmatprep.subr.bf16.mxu0 0
  %2815 = vmatpush1.bf16.msra.mxu0 %v2607
  %2816 = vmatprep.subr.bf16.mxu0 0
  %2817 = vmatpush1.bf16.msra.mxu0 %v2608
  %2818 = vmatprep.subr.bf16.mxu0 0
  %2819 = vmatpush1.bf16.msra.mxu0 %v2609
  %2820 = vmatprep.subr.bf16.mxu0 0
  %2821 = vmatpush1.bf16.msra.mxu0 %v2610
  %2822 = vmatprep.subr.bf16.mxu0 0
  %2823 = vmatpush1.bf16.msra.mxu0 %v2611
  %2824 = vmatprep.subr.bf16.mxu0 0
  %2825 = vmatpush1.bf16.msra.mxu0 %v2612
  %2826 = vmatprep.subr.bf16.mxu0 0
  %2827 = vmatpush1.bf16.msra.mxu0 %v2613
  %2828 = vmatprep.subr.bf16.mxu0 0
  %2829 = vmatpush1.bf16.msra.mxu0 %v2614
  %2830 = vmatprep.subr.bf16.mxu0 0
  %2831 = vmatpush1.bf16.msra.mxu0 %v2615
  %2832 = vmatprep.mubr.bf16.mxu0 %v2287
  %2833 = vmatmul.mubr.bf16.gmra.mrb[0].mxu0 %v2286
  %v2834 = vpop.f32.mrb[0].mxu0
  %v2835 = vadd.f32 %v2795, %v2834
  %v2836 = vpop.f32.mrb[0].mxu0
  %v2837 = vpop.f32.mrb[0].mxu0
  %v2838 = vpop.f32.mrb[0].mxu0
  %2839 = vdwg.mxu0
  %v2840 = vadd.f32 %v717, %v1423
  %v2841 = vadd.f32 %v2840, %v2129
  %v2842 = vadd.f32 %v2841, %v2835
  %v2843 = vrot.slane %v2842, 4
  %v2844 = vadd.f32 %v2842, %v2843
  %v2845 = vrot.slane %v2844, 2
  %v2846 = vadd.f32 %v2844, %v2845
  %v2847 = vrot.slane %v2846, 1
  %v2848 = vadd.f32 %v2846, %v2847
  %v2849 = vrcp.pop 32.0
  %v2850 = vmul.f32 %v2848, %v2849
  %v2851 = vsub.f32 %v717, %v2850
  %v2852 = vsub.f32 %v1423, %v2850
  %v2853 = vsub.f32 %v2129, %v2850
  %v2854 = vsub.f32 %v2835, %v2850
  %v2855 = vmul.f32 %v2851, %v2851
  %v2856 = vmul.f32 %v2852, %v2852
  %v2857 = vmul.f32 %v2853, %v2853
  %v2858 = vmul.f32 %v2854, %v2854
  %v2859 = vadd.f32 %v2855, %v2856
  %v2860 = vadd.f32 %v2859, %v2857
  %v2861 = vadd.f32 %v2860, %v2858
  %v2862 = vrot.slane %v2861, 4
  %v2863 = vadd.f32 %v2861, %v2862
  %v2864 = vrot.slane %v2863, 2
  %v2865 = vadd.f32 %v2863, %v2864
  %v2866 = vrot.slane %v2865, 1
  %v2867 = vadd.f32 %v2865, %v2866
  %v2868 = vmul.f32 %v2867, %v2849
  %v2869 = vadd.f32 %v2868, 1e-05
  %v2870 = vrsqrt.pop %v2869
  %v2871 = vmul.f32 %v2851, %v2870
  %v2872 = vmul.f32 %v2852, %v2870
  %v2873 = vmul.f32 %v2853, %v2870
  %v2874 = vmul.f32 %v2854, %v2870
  %v2875 = vld [vmem:[%s2] sm:$0x1]
  %v2877 = vlaneseq
  %v2878 = vshrl.u32 %v2877, 7
  %v2879 = vsub.s32 0, %v2878
  %v2880 = vrot.slane %v2875, %v2879
  %v2882 = vmul.f32 %v2871, %v2880
  %v2883 = vmul.f32 %v2872, %v2880
  %v2884 = vmul.f32 %v2873, %v2880
  %v2885 = vmul.f32 %v2874, %v2880
  %v2886 = vld [vmem:[%s3] sm:$0x1]
  %v2888 = vlaneseq
  %v2889 = vshrl.u32 %v2888, 7
  %v2890 = vsub.s32 0, %v2889
  %v2891 = vrot.slane %v2886, %v2890
  %v2893 = vadd.f32 %v2882, %v2891
  %v2894 = vadd.f32 %v2883, %v2891
  %v2895 = vadd.f32 %v2884, %v2891
  %v2896 = vadd.f32 %v2885, %v2891
  %v2897 = vmax.f32 %v2893, 0.0
  %v2898 = vmax.f32 %v2894, 0.0
  %v2899 = vmax.f32 %v2895, 0.0
  %v2900 = vmax.f32 %v2896, 0.0
  %2901 = vst [vmem:[%s4] sm:$0xff] %v2897
  %2902 = vst [vmem:[%s4 + $0x8] sm:$0xff] %v2898
  %2903 = vst [vmem:[%s4 + $0x10] sm:$0xff] %v2899
  %2904 = vst [vmem:[%s4 + $0x18] sm:$0xff] %v2900
  // Predicated region
  $region18: #{_lambda_.5} parent=0 // pred_check
    _
  $region19: #{_lambda_.5} parent=0 // pred_check_branch
    %2906 = sbr.rel (0) target = $region21
  $region20: #{_lambda_.5} parent=0 // pred_region
    _
  $region21: #{_lambda_.5} parent=0 // pred_fallthru
    _
  // Predicated region
  $region22: #{_lambda_.5} parent=0 // pred_check
    _
  $region23: #{_lambda_.5} parent=0 // pred_check_branch
    %2908 = sbr.rel (0) target = $region25
  $region24: #{_lambda_.5} parent=0 // pred_region
    _
  $region25: #{_lambda_.5} parent=0 // pred_fallthru
    _

// kernel: _lambda_.6
$region0: #{_lambda_.6}
  #allocation0 [shape = 'u32[]', space=smem, size = 0x4, offset = 0x4, fixed_abs, tag = 'smem constant byte address 0x4 - core index']
  #allocation1 [shape = 'u32[144,128]{1,0:T(1,128)}', space=vmem, size = 0x12000, scoped, tag = 'internal scratch']
  %s0 = inlined_call_operand.vmem [shape: bf16[4,32,512], index: 0, kind: input, shape index: {}]
  %s1 = inlined_call_operand.vmem [shape: bf16[4,512,64], index: 1, kind: input, shape index: {}]
  %s2 = inlined_call_operand.vmem [shape: f32[1,64], index: 2, kind: input, shape index: {}]
  %s3 = inlined_call_operand.vmem [shape: f32[1,64], index: 3, kind: input, shape index: {}]
  %s4 = inlined_call_operand.vmem [shape: f32[4,32,64], index: 4, kind: output, shape index: {}]
  %s5 = sld [smem:[#allocation0]]
  $region26: #{_lambda_.6} parent=0
    _
  %s7 = ssub.s32 1, %s5
  %s8 = scalar_select 0, %s7, %s5
  // Predicated region
  $region2: #{_lambda_.6} parent=0 // pred_check
    _
  $region3: #{_lambda_.6} parent=0 // pred_check_branch
    %10 = sbr.rel (0) target = $region5
  $region4: #{_lambda_.6} parent=0 // pred_region
    _
  $region5: #{_lambda_.6} parent=0 // pred_fallthru
    _
  // Predicated region
  $region6: #{_lambda_.6} parent=0 // pred_check
    _
  $region7: #{_lambda_.6} parent=0 // pred_check_branch
    %12 = sbr.rel (0) target = $region9
  $region8: #{_lambda_.6} parent=0 // pred_region
    _
  $region9: #{_lambda_.6} parent=0 // pred_fallthru
    _
  // Predicated region
  $region10: #{_lambda_.6} parent=0 // pred_check
    _
  $region11: #{_lambda_.6} parent=0 // pred_check_branch
    %14 = sbr.rel (0) target = $region13
  $region12: #{_lambda_.6} parent=0 // pred_region
    _
  $region13: #{_lambda_.6} parent=0 // pred_fallthru
    _
  // Predicated region
  $region14: #{_lambda_.6} parent=0 // pred_check
    _
  $region15: #{_lambda_.6} parent=0 // pred_check_branch
    %16 = sbr.rel (0) target = $region17
  $region16: #{_lambda_.6} parent=0 // pred_region
    _
  $region17: #{_lambda_.6} parent=0 // pred_fallthru
    _
  %v18 = vld [vmem:[%s0] sm:$0xff]
  %v19 = vld [vmem:[%s0 + $0x8] sm:$0xff]
  %v20 = vld [vmem:[%s0 + $0x10] sm:$0xff]
  %v21 = vld [vmem:[%s0 + $0x18] sm:$0xff]
  %v22 = vld [vmem:[%s0 + $0x20] sm:$0xff]
  %v23 = vld [vmem:[%s0 + $0x28] sm:$0xff]
  %v24 = vld [vmem:[%s0 + $0x30] sm:$0xff]
  %v25 = vld [vmem:[%s0 + $0x38] sm:$0xff]
  %v26 = vld [vmem:[%s1] sm:$0xf]
  %v27 = vld [vmem:[%s1 + $0x4] sm:$0xf]
  %v28 = vld [vmem:[%s1 + $0x8] sm:$0xf]
  %v29 = vld [vmem:[%s1 + $0xc] sm:$0xf]
  %v30 = vld [vmem:[%s1 + $0x10] sm:$0xf]
  %v31 = vld [vmem:[%s1 + $0x14] sm:$0xf]
  %v32 = vld [vmem:[%s1 + $0x18] sm:$0xf]
  %v33 = vld [vmem:[%s1 + $0x1c] sm:$0xf]
  %v34 = vld [vmem:[%s1 + $0x20] sm:$0xf]
  %v35 = vld [vmem:[%s1 + $0x24] sm:$0xf]
  %v36 = vld [vmem:[%s1 + $0x28] sm:$0xf]
  %v37 = vld [vmem:[%s1 + $0x2c] sm:$0xf]
  %v38 = vld [vmem:[%s1 + $0x30] sm:$0xf]
  %v39 = vld [vmem:[%s1 + $0x34] sm:$0xf]
  %v40 = vld [vmem:[%s1 + $0x38] sm:$0xf]
  %v41 = vld [vmem:[%s1 + $0x3c] sm:$0xf]
  %v42 = vld [vmem:[%s1 + $0x40] sm:$0xf]
  %v43 = vld [vmem:[%s1 + $0x44] sm:$0xf]
  %v44 = vld [vmem:[%s1 + $0x48] sm:$0xf]
  %v45 = vld [vmem:[%s1 + $0x4c] sm:$0xf]
  %v46 = vld [vmem:[%s1 + $0x50] sm:$0xf]
  %v47 = vld [vmem:[%s1 + $0x54] sm:$0xf]
  %v48 = vld [vmem:[%s1 + $0x58] sm:$0xf]
  %v49 = vld [vmem:[%s1 + $0x5c] sm:$0xf]
  %v50 = vld [vmem:[%s1 + $0x60] sm:$0xf]
  %v51 = vld [vmem:[%s1 + $0x64] sm:$0xf]
  %v52 = vld [vmem:[%s1 + $0x68] sm:$0xf]
  %v53 = vld [vmem:[%s1 + $0x6c] sm:$0xf]
  %v54 = vld [vmem:[%s1 + $0x70] sm:$0xf]
  %v55 = vld [vmem:[%s1 + $0x74] sm:$0xf]
  %v56 = vld [vmem:[%s1 + $0x78] sm:$0xf]
  %v57 = vld [vmem:[%s1 + $0x7c] sm:$0xf]
  %v58 = vld [vmem:[%s1 + $0x80] sm:$0xf]
  %v59 = vld [vmem:[%s1 + $0x84] sm:$0xf]
  %v60 = vld [vmem:[%s1 + $0x88] sm:$0xf]
  %v61 = vld [vmem:[%s1 + $0x8c] sm:$0xf]
  %v62 = vld [vmem:[%s1 + $0x90] sm:$0xf]
  %v63 = vld [vmem:[%s1 + $0x94] sm:$0xf]
  %v64 = vld [vmem:[%s1 + $0x98] sm:$0xf]
  %v65 = vld [vmem:[%s1 + $0x9c] sm:$0xf]
  %v66 = vld [vmem:[%s1 + $0xa0] sm:$0xf]
  %v67 = vld [vmem:[%s1 + $0xa4] sm:$0xf]
  %v68 = vld [vmem:[%s1 + $0xa8] sm:$0xf]
  %v69 = vld [vmem:[%s1 + $0xac] sm:$0xf]
  %v70 = vld [vmem:[%s1 + $0xb0] sm:$0xf]
  %v71 = vld [vmem:[%s1 + $0xb4] sm:$0xf]
  %v72 = vld [vmem:[%s1 + $0xb8] sm:$0xf]
  %v73 = vld [vmem:[%s1 + $0xbc] sm:$0xf]
  %v74 = vld [vmem:[%s1 + $0xc0] sm:$0xf]
  %v75 = vld [vmem:[%s1 + $0xc4] sm:$0xf]
  %v76 = vld [vmem:[%s1 + $0xc8] sm:$0xf]
  %v77 = vld [vmem:[%s1 + $0xcc] sm:$0xf]
  %v78 = vld [vmem:[%s1 + $0xd0] sm:$0xf]
  %v79 = vld [vmem:[%s1 + $0xd4] sm:$0xf]
  %v80 = vld [vmem:[%s1 + $0xd8] sm:$0xf]
  %v81 = vld [vmem:[%s1 + $0xdc] sm:$0xf]
  %v82 = vld [vmem:[%s1 + $0xe0] sm:$0xf]
  %v83 = vld [vmem:[%s1 + $0xe4] sm:$0xf]
  %v84 = vld [vmem:[%s1 + $0xe8] sm:$0xf]
  %v85 = vld [vmem:[%s1 + $0xec] sm:$0xf]
  %v86 = vld [vmem:[%s1 + $0xf0] sm:$0xf]
  %v87 = vld [vmem:[%s1 + $0xf4] sm:$0xf]
  %v88 = vld [vmem:[%s1 + $0xf8] sm:$0xf]
  %v89 = vld [vmem:[%s1 + $0xfc] sm:$0xf]
  %v98 = vunpack.c.l.b16 %v18
  %v99 = vunpack.c.h.b16 %v18
  %v100 = vunpack.c.l.b16 %v19
  %v101 = vunpack.c.h.b16 %v19
  %v102 = vunpack.c.l.b16 %v20
  %v103 = vunpack.c.h.b16 %v20
  %v104 = vunpack.c.l.b16 %v21
  %v105 = vunpack.c.h.b16 %v21
  %v106 = vunpack.c.l.b16 %v22
  %v107 = vunpack.c.h.b16 %v22
  %v108 = vunpack.c.l.b16 %v23
  %v109 = vunpack.c.h.b16 %v23
  %v110 = vunpack.c.l.b16 %v24
  %v111 = vunpack.c.h.b16 %v24
  %v112 = vunpack.c.l.b16 %v25
  %v113 = vunpack.c.h.b16 %v25
  %v114 = vpack.c.b16 %v102, %v98
  %v115 = vpack.c.b16 %v103, %v99
  %v116 = vpack.c.b16 %v104, %v100
  %v117 = vpack.c.b16 %v105, %v101
  %v118 = vpack.c.b16 %v110, %v106
  %v119 = vpack.c.b16 %v111, %v107
  %v120 = vpack.c.b16 %v112, %v108
  %v121 = vpack.c.b16 %v113, %v109
  %v194 = vunpack.c.l.b16 %v26
  %v195 = vunpack.c.l.b16 %v27
  %v196 = vunpack.c.l.b16 %v28
  %v197 = vunpack.c.l.b16 %v29
  %v198 = vunpack.c.l.b16 %v30
  %v199 = vunpack.c.l.b16 %v31
  %v200 = vunpack.c.l.b16 %v32
  %v201 = vunpack.c.l.b16 %v33
  %v202 = vunpack.c.l.b16 %v34
  %v203 = vunpack.c.l.b16 %v35
  %v204 = vunpack.c.l.b16 %v36
  %v205 = vunpack.c.l.b16 %v37
  %v206 = vunpack.c.l.b16 %v38
  %v207 = vunpack.c.l.b16 %v39
  %v208 = vunpack.c.l.b16 %v40
  %v209 = vunpack.c.l.b16 %v41
  %v210 = vunpack.c.l.b16 %v42
  %v211 = vunpack.c.l.b16 %v43
  %v212 = vunpack.c.l.b16 %v44
  %v213 = vunpack.c.l.b16 %v45
  %v214 = vunpack.c.l.b16 %v46
  %v215 = vunpack.c.l.b16 %v47
  %v216 = vunpack.c.l.b16 %v48
  %v217 = vunpack.c.l.b16 %v49
  %v218 = vunpack.c.l.b16 %v50
  %v219 = vunpack.c.l.b16 %v51
  %v220 = vunpack.c.l.b16 %v52
  %v221 = vunpack.c.l.b16 %v53
  %v222 = vunpack.c.l.b16 %v54
  %v223 = vunpack.c.l.b16 %v55
  %v224 = vunpack.c.l.b16 %v56
  %v225 = vunpack.c.l.b16 %v57
  %v226 = vunpack.c.l.b16 %v58
  %v227 = vunpack.c.l.b16 %v59
  %v228 = vunpack.c.l.b16 %v60
  %v229 = vunpack.c.l.b16 %v61
  %v230 = vunpack.c.l.b16 %v62
  %v231 = vunpack.c.l.b16 %v63
  %v232 = vunpack.c.l.b16 %v64
  %v233 = vunpack.c.l.b16 %v65
  %v234 = vunpack.c.l.b16 %v66
  %v235 = vunpack.c.l.b16 %v67
  %v236 = vunpack.c.l.b16 %v68
  %v237 = vunpack.c.l.b16 %v69
  %v238 = vunpack.c.l.b16 %v70
  %v239 = vunpack.c.l.b16 %v71
  %v240 = vunpack.c.l.b16 %v72
  %v241 = vunpack.c.l.b16 %v73
  %v242 = vunpack.c.l.b16 %v74
  %v243 = vunpack.c.l.b16 %v75
  %v244 = vunpack.c.l.b16 %v76
  %v245 = vunpack.c.l.b16 %v77
  %v246 = vunpack.c.l.b16 %v78
  %v247 = vunpack.c.l.b16 %v79
  %v248 = vunpack.c.l.b16 %v80
  %v249 = vunpack.c.l.b16 %v81
  %v250 = vunpack.c.l.b16 %v82
  %v251 = vunpack.c.l.b16 %v83
  %v252 = vunpack.c.l.b16 %v84
  %v253 = vunpack.c.l.b16 %v85
  %v254 = vunpack.c.l.b16 %v86
  %v255 = vunpack.c.l.b16 %v87
  %v256 = vunpack.c.l.b16 %v88
  %v257 = vunpack.c.l.b16 %v89
  %v258 = vpack.c.b16 %v195, %v194
  %v259 = vpack.c.b16 %v197, %v196
  %v260 = vpack.c.b16 %v199, %v198
  %v261 = vpack.c.b16 %v201, %v200
  %v262 = vpack.c.b16 %v203, %v202
  %v263 = vpack.c.b16 %v205, %v204
  %v264 = vpack.c.b16 %v207, %v206
  %v265 = vpack.c.b16 %v209, %v208
  %v266 = vpack.c.b16 %v211, %v210
  %v267 = vpack.c.b16 %v213, %v212
  %v268 = vpack.c.b16 %v215, %v214
  %v269 = vpack.c.b16 %v217, %v216
  %v270 = vpack.c.b16 %v219, %v218
  %v271 = vpack.c.b16 %v221, %v220
  %v272 = vpack.c.b16 %v223, %v222
  %v273 = vpack.c.b16 %v225, %v224
  %v274 = vpack.c.b16 %v227, %v226
  %v275 = vpack.c.b16 %v229, %v228
  %v276 = vpack.c.b16 %v231, %v230
  %v277 = vpack.c.b16 %v233, %v232
  %v278 = vpack.c.b16 %v235, %v234
  %v279 = vpack.c.b16 %v237, %v236
  %v280 = vpack.c.b16 %v239, %v238
  %v281 = vpack.c.b16 %v241, %v240
  %v282 = vpack.c.b16 %v243, %v242
  %v283 = vpack.c.b16 %v245, %v244
  %v284 = vpack.c.b16 %v247, %v246
  %v285 = vpack.c.b16 %v249, %v248
  %v286 = vpack.c.b16 %v251, %v250
  %v287 = vpack.c.b16 %v253, %v252
  %v288 = vpack.c.b16 %v255, %v254
  %v289 = vpack.c.b16 %v257, %v256
  %322 = vmatprep.subr.bf16.mxu0 0
  %323 = vmatpush1.bf16.msra.mxu0 %v258
  %324 = vmatprep.subr.bf16.mxu0 0
  %325 = vmatpush1.bf16.msra.mxu0 %v259
  %326 = vmatprep.subr.bf16.mxu0 0
  %327 = vmatpush1.bf16.msra.mxu0 %v260
  %328 = vmatprep.subr.bf16.mxu0 0
  %329 = vmatpush1.bf16.msra.mxu0 %v261
  %330 = vmatprep.subr.bf16.mxu0 0
  %331 = vmatpush1.bf16.msra.mxu0 %v262
  %332 = vmatprep.subr.bf16.mxu0 0
  %333 = vmatpush1.bf16.msra.mxu0 %v263
  %334 = vmatprep.subr.bf16.mxu0 0
  %335 = vmatpush1.bf16.msra.mxu0 %v264
  %336 = vmatprep.subr.bf16.mxu0 0
  %337 = vmatpush1.bf16.msra.mxu0 %v265
  %338 = vmatprep.subr.bf16.mxu0 0
  %339 = vmatpush1.bf16.msra.mxu0 %v266
  %340 = vmatprep.subr.bf16.mxu0 0
  %341 = vmatpush1.bf16.msra.mxu0 %v267
  %342 = vmatprep.subr.bf16.mxu0 0
  %343 = vmatpush1.bf16.msra.mxu0 %v268
  %344 = vmatprep.subr.bf16.mxu0 0
  %345 = vmatpush1.bf16.msra.mxu0 %v269
  %346 = vmatprep.subr.bf16.mxu0 0
  %347 = vmatpush1.bf16.msra.mxu0 %v270
  %348 = vmatprep.subr.bf16.mxu0 0
  %349 = vmatpush1.bf16.msra.mxu0 %v271
  %350 = vmatprep.subr.bf16.mxu0 0
  %351 = vmatpush1.bf16.msra.mxu0 %v272
  %352 = vmatprep.subr.bf16.mxu0 0
  %353 = vmatpush1.bf16.msra.mxu0 %v273
  %354 = vmatprep.mubr.bf16.mxu0 %v115
  %355 = vmatmul.mubr.bf16.gmra.mrb[0].mxu0 %v114
  %v356 = vpop.f32.mrb[0].mxu0
  %v357 = vadd.f32 0.0, %v356
  %v358 = vpop.f32.mrb[0].mxu0
  %v359 = vpop.f32.mrb[0].mxu0
  %v360 = vadd.f32 0.0, %v359
  %v361 = vpop.f32.mrb[0].mxu0
  %362 = vmatprep.mubr.bf16.mxu0 %v119
  %363 = vmatmul.mubr.bf16.gmra.mrb[0].mxu0 %v118
  %v364 = vpop.f32.mrb[0].mxu0
  %v365 = vadd.f32 0.0, %v364
  %v366 = vpop.f32.mrb[0].mxu0
  %v367 = vpop.f32.mrb[0].mxu0
  %v368 = vadd.f32 0.0, %v367
  %v369 = vpop.f32.mrb[0].mxu0
  %370 = vdwg.mxu0
  %371 = vmatprep.subr.bf16.mxu0 0
  %372 = vmatpush1.bf16.msra.mxu0 %v274
  %373 = vmatprep.subr.bf16.mxu0 0
  %374 = vmatpush1.bf16.msra.mxu0 %v275
  %375 = vmatprep.subr.bf16.mxu0 0
  %376 = vmatpush1.bf16.msra.mxu0 %v276
  %377 = vmatprep.subr.bf16.mxu0 0
  %378 = vmatpush1.bf16.msra.mxu0 %v277
  %379 = vmatprep.subr.bf16.mxu0 0
  %380 = vmatpush1.bf16.msra.mxu0 %v278
  %381 = vmatprep.subr.bf16.mxu0 0
  %382 = vmatpush1.bf16.msra.mxu0 %v279
  %383 = vmatprep.subr.bf16.mxu0 0
  %384 = vmatpush1.bf16.msra.mxu0 %v280
  %385 = vmatprep.subr.bf16.mxu0 0
  %386 = vmatpush1.bf16.msra.mxu0 %v281
  %387 = vmatprep.subr.bf16.mxu0 0
  %388 = vmatpush1.bf16.msra.mxu0 %v282
  %389 = vmatprep.subr.bf16.mxu0 0
  %390 = vmatpush1.bf16.msra.mxu0 %v283
  %391 = vmatprep.subr.bf16.mxu0 0
  %392 = vmatpush1.bf16.msra.mxu0 %v284
  %393 = vmatprep.subr.bf16.mxu0 0
  %394 = vmatpush1.bf16.msra.mxu0 %v285
  %395 = vmatprep.subr.bf16.mxu0 0
  %396 = vmatpush1.bf16.msra.mxu0 %v286
  %397 = vmatprep.subr.bf16.mxu0 0
  %398 = vmatpush1.bf16.msra.mxu0 %v287
  %399 = vmatprep.subr.bf16.mxu0 0
  %400 = vmatpush1.bf16.msra.mxu0 %v288
  %401 = vmatprep.subr.bf16.mxu0 0
  %402 = vmatpush1.bf16.msra.mxu0 %v289
  %403 = vmatprep.mubr.bf16.mxu0 %v117
  %404 = vmatmul.mubr.bf16.gmra.mrb[0].mxu0 %v116
  %v405 = vpop.f32.mrb[0].mxu0
  %v406 = vadd.f32 %v357, %v405
  %v407 = vpop.f32.mrb[0].mxu0
  %v408 = vpop.f32.mrb[0].mxu0
  %v409 = vadd.f32 %v360, %v408
  %v410 = vpop.f32.mrb[0].mxu0
  %411 = vmatprep.mubr.bf16.mxu0 %v121
  %412 = vmatmul.mubr.bf16.gmra.mrb[0].mxu0 %v120
  %v413 = vpop.f32.mrb[0].mxu0
  %v414 = vadd.f32 %v365, %v413
  %v415 = vpop.f32.mrb[0].mxu0
  %v416 = vpop.f32.mrb[0].mxu0
  %v417 = vadd.f32 %v368, %v416
  %v418 = vpop.f32.mrb[0].mxu0
  %419 = vdwg.mxu0
  %s420 = scalar_lea.vmem %s0, 64
  %v421 = vld [vmem:[%s420] sm:$0xff]
  %v422 = vld [vmem:[%s420 + $0x8] sm:$0xff]
  %v423 = vld [vmem:[%s420 + $0x10] sm:$0xff]
  %v424 = vld [vmem:[%s420 + $0x18] sm:$0xff]
  %v425 = vld [vmem:[%s420 + $0x20] sm:$0xff]
  %v426 = vld [vmem:[%s420 + $0x28] sm:$0xff]
  %v427 = vld [vmem:[%s420 + $0x30] sm:$0xff]
  %v428 = vld [vmem:[%s420 + $0x38] sm:$0xff]
  %s429 = scalar_lea.vmem %s1, 256
  %v430 = vld [vmem:[%s429] sm:$0xf]
  %v431 = vld [vmem:[%s429 + $0x4] sm:$0xf]
  %v432 = vld [vmem:[%s429 + $0x8] sm:$0xf]
  %v433 = vld [vmem:[%s429 + $0xc] sm:$0xf]
  %v434 = vld [vmem:[%s429 + $0x10] sm:$0xf]
  %v435 = vld [vmem:[%s429 + $0x14] sm:$0xf]
  %v436 = vld [vmem:[%s429 + $0x18] sm:$0xf]
  %v437 = vld [vmem:[%s429 + $0x1c] sm:$0xf]
  %v438 = vld [vmem:[%s429 + $0x20] sm:$0xf]
  %v439 = vld [vmem:[%s429 + $0x24] sm:$0xf]
  %v440 = vld [vmem:[%s429 + $0x28] sm:$0xf]
  %v441 = vld [vmem:[%s429 + $0x2c] sm:$0xf]
  %v442 = vld [vmem:[%s429 + $0x30] sm:$0xf]
  %v443 = vld [vmem:[%s429 + $0x34] sm:$0xf]
  %v444 = vld [vmem:[%s429 + $0x38] sm:$0xf]
  %v445 = vld [vmem:[%s429 + $0x3c] sm:$0xf]
  %v446 = vld [vmem:[%s429 + $0x40] sm:$0xf]
  %v447 = vld [vmem:[%s429 + $0x44] sm:$0xf]
  %v448 = vld [vmem:[%s429 + $0x48] sm:$0xf]
  %v449 = vld [vmem:[%s429 + $0x4c] sm:$0xf]
  %v450 = vld [vmem:[%s429 + $0x50] sm:$0xf]
  %v451 = vld [vmem:[%s429 + $0x54] sm:$0xf]
  %v452 = vld [vmem:[%s429 + $0x58] sm:$0xf]
  %v453 = vld [vmem:[%s429 + $0x5c] sm:$0xf]
  %v454 = vld [vmem:[%s429 + $0x60] sm:$0xf]
  %v455 = vld [vmem:[%s429 + $0x64] sm:$0xf]
  %v456 = vld [vmem:[%s429 + $0x68] sm:$0xf]
  %v457 = vld [vmem:[%s429 + $0x6c] sm:$0xf]
  %v458 = vld [vmem:[%s429 + $0x70] sm:$0xf]
  %v459 = vld [vmem:[%s429 + $0x74] sm:$0xf]
  %v460 = vld [vmem:[%s429 + $0x78] sm:$0xf]
  %v461 = vld [vmem:[%s429 + $0x7c] sm:$0xf]
  %v462 = vld [vmem:[%s429 + $0x80] sm:$0xf]
  %v463 = vld [vmem:[%s429 + $0x84] sm:$0xf]
  %v464 = vld [vmem:[%s429 + $0x88] sm:$0xf]
  %v465 = vld [vmem:[%s429 + $0x8c] sm:$0xf]
  %v466 = vld [vmem:[%s429 + $0x90] sm:$0xf]
  %v467 = vld [vmem:[%s429 + $0x94] sm:$0xf]
  %v468 = vld [vmem:[%s429 + $0x98] sm:$0xf]
  %v469 = vld [vmem:[%s429 + $0x9c] sm:$0xf]
  %v470 = vld [vmem:[%s429 + $0xa0] sm:$0xf]
  %v471 = vld [vmem:[%s429 + $0xa4] sm:$0xf]
  %v472 = vld [vmem:[%s429 + $0xa8] sm:$0xf]
  %v473 = vld [vmem:[%s429 + $0xac] sm:$0xf]
  %v474 = vld [vmem:[%s429 + $0xb0] sm:$0xf]
  %v475 = vld [vmem:[%s429 + $0xb4] sm:$0xf]
  %v476 = vld [vmem:[%s429 + $0xb8] sm:$0xf]
  %v477 = vld [vmem:[%s429 + $0xbc] sm:$0xf]
  %v478 = vld [vmem:[%s429 + $0xc0] sm:$0xf]
  %v479 = vld [vmem:[%s429 + $0xc4] sm:$0xf]
  %v480 = vld [vmem:[%s429 + $0xc8] sm:$0xf]
  %v481 = vld [vmem:[%s429 + $0xcc] sm:$0xf]
  %v482 = vld [vmem:[%s429 + $0xd0] sm:$0xf]
  %v483 = vld [vmem:[%s429 + $0xd4] sm:$0xf]
  %v484 = vld [vmem:[%s429 + $0xd8] sm:$0xf]
  %v485 = vld [vmem:[%s429 + $0xdc] sm:$0xf]
  %v486 = vld [vmem:[%s429 + $0xe0] sm:$0xf]
  %v487 = vld [vmem:[%s429 + $0xe4] sm:$0xf]
  %v488 = vld [vmem:[%s429 + $0xe8] sm:$0xf]
  %v489 = vld [vmem:[%s429 + $0xec] sm:$0xf]
  %v490 = vld [vmem:[%s429 + $0xf0] sm:$0xf]
  %v491 = vld [vmem:[%s429 + $0xf4] sm:$0xf]
  %v492 = vld [vmem:[%s429 + $0xf8] sm:$0xf]
  %v493 = vld [vmem:[%s429 + $0xfc] sm:$0xf]
  %v502 = vunpack.c.l.b16 %v421
  %v503 = vunpack.c.h.b16 %v421
  %v504 = vunpack.c.l.b16 %v422
  %v505 = vunpack.c.h.b16 %v422
  %v506 = vunpack.c.l.b16 %v423
  %v507 = vunpack.c.h.b16 %v423
  %v508 = vunpack.c.l.b16 %v424
  %v509 = vunpack.c.h.b16 %v424
  %v510 = vunpack.c.l.b16 %v425
  %v511 = vunpack.c.h.b16 %v425
  %v512 = vunpack.c.l.b16 %v426
  %v513 = vunpack.c.h.b16 %v426
  %v514 = vunpack.c.l.b16 %v427
  %v515 = vunpack.c.h.b16 %v427
  %v516 = vunpack.c.l.b16 %v428
  %v517 = vunpack.c.h.b16 %v428
  %v518 = vpack.c.b16 %v506, %v502
  %v519 = vpack.c.b16 %v507, %v503
  %v520 = vpack.c.b16 %v508, %v504
  %v521 = vpack.c.b16 %v509, %v505
  %v522 = vpack.c.b16 %v514, %v510
  %v523 = vpack.c.b16 %v515, %v511
  %v524 = vpack.c.b16 %v516, %v512
  %v525 = vpack.c.b16 %v517, %v513
  %v598 = vunpack.c.l.b16 %v430
  %v599 = vunpack.c.l.b16 %v431
  %v600 = vunpack.c.l.b16 %v432
  %v601 = vunpack.c.l.b16 %v433
  %v602 = vunpack.c.l.b16 %v434
  %v603 = vunpack.c.l.b16 %v435
  %v604 = vunpack.c.l.b16 %v436
  %v605 = vunpack.c.l.b16 %v437
  %v606 = vunpack.c.l.b16 %v438
  %v607 = vunpack.c.l.b16 %v439
  %v608 = vunpack.c.l.b16 %v440
  %v609 = vunpack.c.l.b16 %v441
  %v610 = vunpack.c.l.b16 %v442
  %v611 = vunpack.c.l.b16 %v443
  %v612 = vunpack.c.l.b16 %v444
  %v613 = vunpack.c.l.b16 %v445
  %v614 = vunpack.c.l.b16 %v446
  %v615 = vunpack.c.l.b16 %v447
  %v616 = vunpack.c.l.b16 %v448
  %v617 = vunpack.c.l.b16 %v449
  %v618 = vunpack.c.l.b16 %v450
  %v619 = vunpack.c.l.b16 %v451
  %v620 = vunpack.c.l.b16 %v452
  %v621 = vunpack.c.l.b16 %v453
  %v622 = vunpack.c.l.b16 %v454
  %v623 = vunpack.c.l.b16 %v455
  %v624 = vunpack.c.l.b16 %v456
  %v625 = vunpack.c.l.b16 %v457
  %v626 = vunpack.c.l.b16 %v458
  %v627 = vunpack.c.l.b16 %v459
  %v628 = vunpack.c.l.b16 %v460
  %v629 = vunpack.c.l.b16 %v461
  %v630 = vunpack.c.l.b16 %v462
  %v631 = vunpack.c.l.b16 %v463
  %v632 = vunpack.c.l.b16 %v464
  %v633 = vunpack.c.l.b16 %v465
  %v634 = vunpack.c.l.b16 %v466
  %v635 = vunpack.c.l.b16 %v467
  %v636 = vunpack.c.l.b16 %v468
  %v637 = vunpack.c.l.b16 %v469
  %v638 = vunpack.c.l.b16 %v470
  %v639 = vunpack.c.l.b16 %v471
  %v640 = vunpack.c.l.b16 %v472
  %v641 = vunpack.c.l.b16 %v473
  %v642 = vunpack.c.l.b16 %v474
  %v643 = vunpack.c.l.b16 %v475
  %v644 = vunpack.c.l.b16 %v476
  %v645 = vunpack.c.l.b16 %v477
  %v646 = vunpack.c.l.b16 %v478
  %v647 = vunpack.c.l.b16 %v479
  %v648 = vunpack.c.l.b16 %v480
  %v649 = vunpack.c.l.b16 %v481
  %v650 = vunpack.c.l.b16 %v482
  %v651 = vunpack.c.l.b16 %v483
  %v652 = vunpack.c.l.b16 %v484
  %v653 = vunpack.c.l.b16 %v485
  %v654 = vunpack.c.l.b16 %v486
  %v655 = vunpack.c.l.b16 %v487
  %v656 = vunpack.c.l.b16 %v488
  %v657 = vunpack.c.l.b16 %v489
  %v658 = vunpack.c.l.b16 %v490
  %v659 = vunpack.c.l.b16 %v491
  %v660 = vunpack.c.l.b16 %v492
  %v661 = vunpack.c.l.b16 %v493
  %v662 = vpack.c.b16 %v599, %v598
  %v663 = vpack.c.b16 %v601, %v600
  %v664 = vpack.c.b16 %v603, %v602
  %v665 = vpack.c.b16 %v605, %v604
  %v666 = vpack.c.b16 %v607, %v606
  %v667 = vpack.c.b16 %v609, %v608
  %v668 = vpack.c.b16 %v611, %v610
  %v669 = vpack.c.b16 %v613, %v612
  %v670 = vpack.c.b16 %v615, %v614
  %v671 = vpack.c.b16 %v617, %v616
  %v672 = vpack.c.b16 %v619, %v618
  %v673 = vpack.c.b16 %v621, %v620
  %v674 = vpack.c.b16 %v623, %v622
  %v675 = vpack.c.b16 %v625, %v624
  %v676 = vpack.c.b16 %v627, %v626
  %v677 = vpack.c.b16 %v629, %v628
  %v678 = vpack.c.b16 %v631, %v630
  %v679 = vpack.c.b16 %v633, %v632
  %v680 = vpack.c.b16 %v635, %v634
  %v681 = vpack.c.b16 %v637, %v636
  %v682 = vpack.c.b16 %v639, %v638
  %v683 = vpack.c.b16 %v641, %v640
  %v684 = vpack.c.b16 %v643, %v642
  %v685 = vpack.c.b16 %v645, %v644
  %v686 = vpack.c.b16 %v647, %v646
  %v687 = vpack.c.b16 %v649, %v648
  %v688 = vpack.c.b16 %v651, %v650
  %v689 = vpack.c.b16 %v653, %v652
  %v690 = vpack.c.b16 %v655, %v654
  %v691 = vpack.c.b16 %v657, %v656
  %v692 = vpack.c.b16 %v659, %v658
  %v693 = vpack.c.b16 %v661, %v660
  %726 = vmatprep.subr.bf16.mxu0 0
  %727 = vmatpush1.bf16.msra.mxu0 %v662
  %728 = vmatprep.subr.bf16.mxu0 0
  %729 = vmatpush1.bf16.msra.mxu0 %v663
  %730 = vmatprep.subr.bf16.mxu0 0
  %731 = vmatpush1.bf16.msra.mxu0 %v664
  %732 = vmatprep.subr.bf16.mxu0 0
  %733 = vmatpush1.bf16.msra.mxu0 %v665
  %734 = vmatprep.subr.bf16.mxu0 0
  %735 = vmatpush1.bf16.msra.mxu0 %v666
  %736 = vmatprep.subr.bf16.mxu0 0
  %737 = vmatpush1.bf16.msra.mxu0 %v667
  %738 = vmatprep.subr.bf16.mxu0 0
  %739 = vmatpush1.bf16.msra.mxu0 %v668
  %740 = vmatprep.subr.bf16.mxu0 0
  %741 = vmatpush1.bf16.msra.mxu0 %v669
  %742 = vmatprep.subr.bf16.mxu0 0
  %743 = vmatpush1.bf16.msra.mxu0 %v670
  %744 = vmatprep.subr.bf16.mxu0 0
  %745 = vmatpush1.bf16.msra.mxu0 %v671
  %746 = vmatprep.subr.bf16.mxu0 0
  %747 = vmatpush1.bf16.msra.mxu0 %v672
  %748 = vmatprep.subr.bf16.mxu0 0
  %749 = vmatpush1.bf16.msra.mxu0 %v673
  %750 = vmatprep.subr.bf16.mxu0 0
  %751 = vmatpush1.bf16.msra.mxu0 %v674
  %752 = vmatprep.subr.bf16.mxu0 0
  %753 = vmatpush1.bf16.msra.mxu0 %v675
  %754 = vmatprep.subr.bf16.mxu0 0
  %755 = vmatpush1.bf16.msra.mxu0 %v676
  %756 = vmatprep.subr.bf16.mxu0 0
  %757 = vmatpush1.bf16.msra.mxu0 %v677
  %758 = vmatprep.mubr.bf16.mxu0 %v519
  %759 = vmatmul.mubr.bf16.gmra.mrb[0].mxu0 %v518
  %v760 = vpop.f32.mrb[0].mxu0
  %v761 = vadd.f32 0.0, %v760
  %v762 = vpop.f32.mrb[0].mxu0
  %v763 = vpop.f32.mrb[0].mxu0
  %v764 = vadd.f32 0.0, %v763
  %v765 = vpop.f32.mrb[0].mxu0
  %766 = vmatprep.mubr.bf16.mxu0 %v523
  %767 = vmatmul.mubr.bf16.gmra.mrb[0].mxu0 %v522
  %v768 = vpop.f32.mrb[0].mxu0
  %v769 = vadd.f32 0.0, %v768
  %v770 = vpop.f32.mrb[0].mxu0
  %v771 = vpop.f32.mrb[0].mxu0
  %v772 = vadd.f32 0.0, %v771
  %v773 = vpop.f32.mrb[0].mxu0
  %774 = vdwg.mxu0
  %775 = vmatprep.subr.bf16.mxu0 0
  %776 = vmatpush1.bf16.msra.mxu0 %v678
  %777 = vmatprep.subr.bf16.mxu0 0
  %778 = vmatpush1.bf16.msra.mxu0 %v679
  %779 = vmatprep.subr.bf16.mxu0 0
  %780 = vmatpush1.bf16.msra.mxu0 %v680
  %781 = vmatprep.subr.bf16.mxu0 0
  %782 = vmatpush1.bf16.msra.mxu0 %v681
  %783 = vmatprep.subr.bf16.mxu0 0
  %784 = vmatpush1.bf16.msra.mxu0 %v682
  %785 = vmatprep.subr.bf16.mxu0 0
  %786 = vmatpush1.bf16.msra.mxu0 %v683
  %787 = vmatprep.subr.bf16.mxu0 0
  %788 = vmatpush1.bf16.msra.mxu0 %v684
  %789 = vmatprep.subr.bf16.mxu0 0
  %790 = vmatpush1.bf16.msra.mxu0 %v685
  %791 = vmatprep.subr.bf16.mxu0 0
  %792 = vmatpush1.bf16.msra.mxu0 %v686
  %793 = vmatprep.subr.bf16.mxu0 0
  %794 = vmatpush1.bf16.msra.mxu0 %v687
  %795 = vmatprep.subr.bf16.mxu0 0
  %796 = vmatpush1.bf16.msra.mxu0 %v688
  %797 = vmatprep.subr.bf16.mxu0 0
  %798 = vmatpush1.bf16.msra.mxu0 %v689
  %799 = vmatprep.subr.bf16.mxu0 0
  %800 = vmatpush1.bf16.msra.mxu0 %v690
  %801 = vmatprep.subr.bf16.mxu0 0
  %802 = vmatpush1.bf16.msra.mxu0 %v691
  %803 = vmatprep.subr.bf16.mxu0 0
  %804 = vmatpush1.bf16.msra.mxu0 %v692
  %805 = vmatprep.subr.bf16.mxu0 0
  %806 = vmatpush1.bf16.msra.mxu0 %v693
  %807 = vmatprep.mubr.bf16.mxu0 %v521
  %808 = vmatmul.mubr.bf16.gmra.mrb[0].mxu0 %v520
  %v809 = vpop.f32.mrb[0].mxu0
  %v810 = vadd.f32 %v761, %v809
  %v811 = vpop.f32.mrb[0].mxu0
  %v812 = vpop.f32.mrb[0].mxu0
  %v813 = vadd.f32 %v764, %v812
  %v814 = vpop.f32.mrb[0].mxu0
  %815 = vmatprep.mubr.bf16.mxu0 %v525
  %816 = vmatmul.mubr.bf16.gmra.mrb[0].mxu0 %v524
  %v817 = vpop.f32.mrb[0].mxu0
  %v818 = vadd.f32 %v769, %v817
  %v819 = vpop.f32.mrb[0].mxu0
  %v820 = vpop.f32.mrb[0].mxu0
  %v821 = vadd.f32 %v772, %v820
  %v822 = vpop.f32.mrb[0].mxu0
  %823 = vdwg.mxu0
  %s824 = scalar_lea.vmem %s0, 128
  %v825 = vld [vmem:[%s824] sm:$0xff]
  %v826 = vld [vmem:[%s824 + $0x8] sm:$0xff]
  %v827 = vld [vmem:[%s824 + $0x10] sm:$0xff]
  %v828 = vld [vmem:[%s824 + $0x18] sm:$0xff]
  %v829 = vld [vmem:[%s824 + $0x20] sm:$0xff]
  %v830 = vld [vmem:[%s824 + $0x28] sm:$0xff]
  %v831 = vld [vmem:[%s824 + $0x30] sm:$0xff]
  %v832 = vld [vmem:[%s824 + $0x38] sm:$0xff]
  %s833 = scalar_lea.vmem %s1, 512
  %v834 = vld [vmem:[%s833] sm:$0xf]
  %v835 = vld [vmem:[%s833 + $0x4] sm:$0xf]
  %v836 = vld [vmem:[%s833 + $0x8] sm:$0xf]
  %v837 = vld [vmem:[%s833 + $0xc] sm:$0xf]
  %v838 = vld [vmem:[%s833 + $0x10] sm:$0xf]
  %v839 = vld [vmem:[%s833 + $0x14] sm:$0xf]
  %v840 = vld [vmem:[%s833 + $0x18] sm:$0xf]
  %v841 = vld [vmem:[%s833 + $0x1c] sm:$0xf]
  %v842 = vld [vmem:[%s833 + $0x20] sm:$0xf]
  %v843 = vld [vmem:[%s833 + $0x24] sm:$0xf]
  %v844 = vld [vmem:[%s833 + $0x28] sm:$0xf]
  %v845 = vld [vmem:[%s833 + $0x2c] sm:$0xf]
  %v846 = vld [vmem:[%s833 + $0x30] sm:$0xf]
  %v847 = vld [vmem:[%s833 + $0x34] sm:$0xf]
  %v848 = vld [vmem:[%s833 + $0x38] sm:$0xf]
  %v849 = vld [vmem:[%s833 + $0x3c] sm:$0xf]
  %v850 = vld [vmem:[%s833 + $0x40] sm:$0xf]
  %v851 = vld [vmem:[%s833 + $0x44] sm:$0xf]
  %v852 = vld [vmem:[%s833 + $0x48] sm:$0xf]
  %v853 = vld [vmem:[%s833 + $0x4c] sm:$0xf]
  %v854 = vld [vmem:[%s833 + $0x50] sm:$0xf]
  %v855 = vld [vmem:[%s833 + $0x54] sm:$0xf]
  %v856 = vld [vmem:[%s833 + $0x58] sm:$0xf]
  %v857 = vld [vmem:[%s833 + $0x5c] sm:$0xf]
  %v858 = vld [vmem:[%s833 + $0x60] sm:$0xf]
  %v859 = vld [vmem:[%s833 + $0x64] sm:$0xf]
  %v860 = vld [vmem:[%s833 + $0x68] sm:$0xf]
  %v861 = vld [vmem:[%s833 + $0x6c] sm:$0xf]
  %v862 = vld [vmem:[%s833 + $0x70] sm:$0xf]
  %v863 = vld [vmem:[%s833 + $0x74] sm:$0xf]
  %v864 = vld [vmem:[%s833 + $0x78] sm:$0xf]
  %v865 = vld [vmem:[%s833 + $0x7c] sm:$0xf]
  %v866 = vld [vmem:[%s833 + $0x80] sm:$0xf]
  %v867 = vld [vmem:[%s833 + $0x84] sm:$0xf]
  %v868 = vld [vmem:[%s833 + $0x88] sm:$0xf]
  %v869 = vld [vmem:[%s833 + $0x8c] sm:$0xf]
  %v870 = vld [vmem:[%s833 + $0x90] sm:$0xf]
  %v871 = vld [vmem:[%s833 + $0x94] sm:$0xf]
  %v872 = vld [vmem:[%s833 + $0x98] sm:$0xf]
  %v873 = vld [vmem:[%s833 + $0x9c] sm:$0xf]
  %v874 = vld [vmem:[%s833 + $0xa0] sm:$0xf]
  %v875 = vld [vmem:[%s833 + $0xa4] sm:$0xf]
  %v876 = vld [vmem:[%s833 + $0xa8] sm:$0xf]
  %v877 = vld [vmem:[%s833 + $0xac] sm:$0xf]
  %v878 = vld [vmem:[%s833 + $0xb0] sm:$0xf]
  %v879 = vld [vmem:[%s833 + $0xb4] sm:$0xf]
  %v880 = vld [vmem:[%s833 + $0xb8] sm:$0xf]
  %v881 = vld [vmem:[%s833 + $0xbc] sm:$0xf]
  %v882 = vld [vmem:[%s833 + $0xc0] sm:$0xf]
  %v883 = vld [vmem:[%s833 + $0xc4] sm:$0xf]
  %v884 = vld [vmem:[%s833 + $0xc8] sm:$0xf]
  %v885 = vld [vmem:[%s833 + $0xcc] sm:$0xf]
  %v886 = vld [vmem:[%s833 + $0xd0] sm:$0xf]
  %v887 = vld [vmem:[%s833 + $0xd4] sm:$0xf]
  %v888 = vld [vmem:[%s833 + $0xd8] sm:$0xf]
  %v889 = vld [vmem:[%s833 + $0xdc] sm:$0xf]
  %v890 = vld [vmem:[%s833 + $0xe0] sm:$0xf]
  %v891 = vld [vmem:[%s833 + $0xe4] sm:$0xf]
  %v892 = vld [vmem:[%s833 + $0xe8] sm:$0xf]
  %v893 = vld [vmem:[%s833 + $0xec] sm:$0xf]
  %v894 = vld [vmem:[%s833 + $0xf0] sm:$0xf]
  %v895 = vld [vmem:[%s833 + $0xf4] sm:$0xf]
  %v896 = vld [vmem:[%s833 + $0xf8] sm:$0xf]
  %v897 = vld [vmem:[%s833 + $0xfc] sm:$0xf]
  %v906 = vunpack.c.l.b16 %v825
  %v907 = vunpack.c.h.b16 %v825
  %v908 = vunpack.c.l.b16 %v826
  %v909 = vunpack.c.h.b16 %v826
  %v910 = vunpack.c.l.b16 %v827
  %v911 = vunpack.c.h.b16 %v827
  %v912 = vunpack.c.l.b16 %v828
  %v913 = vunpack.c.h.b16 %v828
  %v914 = vunpack.c.l.b16 %v829
  %v915 = vunpack.c.h.b16 %v829
  %v916 = vunpack.c.l.b16 %v830
  %v917 = vunpack.c.h.b16 %v830
  %v918 = vunpack.c.l.b16 %v831
  %v919 = vunpack.c.h.b16 %v831
  %v920 = vunpack.c.l.b16 %v832
  %v921 = vunpack.c.h.b16 %v832
  %v922 = vpack.c.b16 %v910, %v906
  %v923 = vpack.c.b16 %v911, %v907
  %v924 = vpack.c.b16 %v912, %v908
  %v925 = vpack.c.b16 %v913, %v909
  %v926 = vpack.c.b16 %v918, %v914
  %v927 = vpack.c.b16 %v919, %v915
  %v928 = vpack.c.b16 %v920, %v916
  %v929 = vpack.c.b16 %v921, %v917
  %v1002 = vunpack.c.l.b16 %v834
  %v1003 = vunpack.c.l.b16 %v835
  %v1004 = vunpack.c.l.b16 %v836
  %v1005 = vunpack.c.l.b16 %v837
  %v1006 = vunpack.c.l.b16 %v838
  %v1007 = vunpack.c.l.b16 %v839
  %v1008 = vunpack.c.l.b16 %v840
  %v1009 = vunpack.c.l.b16 %v841
  %v1010 = vunpack.c.l.b16 %v842
  %v1011 = vunpack.c.l.b16 %v843
  %v1012 = vunpack.c.l.b16 %v844
  %v1013 = vunpack.c.l.b16 %v845
  %v1014 = vunpack.c.l.b16 %v846
  %v1015 = vunpack.c.l.b16 %v847
  %v1016 = vunpack.c.l.b16 %v848
  %v1017 = vunpack.c.l.b16 %v849
  %v1018 = vunpack.c.l.b16 %v850
  %v1019 = vunpack.c.l.b16 %v851
  %v1020 = vunpack.c.l.b16 %v852
  %v1021 = vunpack.c.l.b16 %v853
  %v1022 = vunpack.c.l.b16 %v854
  %v1023 = vunpack.c.l.b16 %v855
  %v1024 = vunpack.c.l.b16 %v856
  %v1025 = vunpack.c.l.b16 %v857
  %v1026 = vunpack.c.l.b16 %v858
  %v1027 = vunpack.c.l.b16 %v859
  %v1028 = vunpack.c.l.b16 %v860
  %v1029 = vunpack.c.l.b16 %v861
  %v1030 = vunpack.c.l.b16 %v862
  %v1031 = vunpack.c.l.b16 %v863
  %v1032 = vunpack.c.l.b16 %v864
  %v1033 = vunpack.c.l.b16 %v865
  %v1034 = vunpack.c.l.b16 %v866
  %v1035 = vunpack.c.l.b16 %v867
  %v1036 = vunpack.c.l.b16 %v868
  %v1037 = vunpack.c.l.b16 %v869
  %v1038 = vunpack.c.l.b16 %v870
  %v1039 = vunpack.c.l.b16 %v871
  %v1040 = vunpack.c.l.b16 %v872
  %v1041 = vunpack.c.l.b16 %v873
  %v1042 = vunpack.c.l.b16 %v874
  %v1043 = vunpack.c.l.b16 %v875
  %v1044 = vunpack.c.l.b16 %v876
  %v1045 = vunpack.c.l.b16 %v877
  %v1046 = vunpack.c.l.b16 %v878
  %v1047 = vunpack.c.l.b16 %v879
  %v1048 = vunpack.c.l.b16 %v880
  %v1049 = vunpack.c.l.b16 %v881
  %v1050 = vunpack.c.l.b16 %v882
  %v1051 = vunpack.c.l.b16 %v883
  %v1052 = vunpack.c.l.b16 %v884
  %v1053 = vunpack.c.l.b16 %v885
  %v1054 = vunpack.c.l.b16 %v886
  %v1055 = vunpack.c.l.b16 %v887
  %v1056 = vunpack.c.l.b16 %v888
  %v1057 = vunpack.c.l.b16 %v889
  %v1058 = vunpack.c.l.b16 %v890
  %v1059 = vunpack.c.l.b16 %v891
  %v1060 = vunpack.c.l.b16 %v892
  %v1061 = vunpack.c.l.b16 %v893
  %v1062 = vunpack.c.l.b16 %v894
  %v1063 = vunpack.c.l.b16 %v895
  %v1064 = vunpack.c.l.b16 %v896
  %v1065 = vunpack.c.l.b16 %v897
  %v1066 = vpack.c.b16 %v1003, %v1002
  %v1067 = vpack.c.b16 %v1005, %v1004
  %v1068 = vpack.c.b16 %v1007, %v1006
  %v1069 = vpack.c.b16 %v1009, %v1008
  %v1070 = vpack.c.b16 %v1011, %v1010
  %v1071 = vpack.c.b16 %v1013, %v1012
  %v1072 = vpack.c.b16 %v1015, %v1014
  %v1073 = vpack.c.b16 %v1017, %v1016
  %v1074 = vpack.c.b16 %v1019, %v1018
  %v1075 = vpack.c.b16 %v1021, %v1020
  %v1076 = vpack.c.b16 %v1023, %v1022
  %v1077 = vpack.c.b16 %v1025, %v1024
  %v1078 = vpack.c.b16 %v1027, %v1026
  %v1079 = vpack.c.b16 %v1029, %v1028
  %v1080 = vpack.c.b16 %v1031, %v1030
  %v1081 = vpack.c.b16 %v1033, %v1032
  %v1082 = vpack.c.b16 %v1035, %v1034
  %v1083 = vpack.c.b16 %v1037, %v1036
  %v1084 = vpack.c.b16 %v1039, %v1038
  %v1085 = vpack.c.b16 %v1041, %v1040
  %v1086 = vpack.c.b16 %v1043, %v1042
  %v1087 = vpack.c.b16 %v1045, %v1044
  %v1088 = vpack.c.b16 %v1047, %v1046
  %v1089 = vpack.c.b16 %v1049, %v1048
  %v1090 = vpack.c.b16 %v1051, %v1050
  %v1091 = vpack.c.b16 %v1053, %v1052
  %v1092 = vpack.c.b16 %v1055, %v1054
  %v1093 = vpack.c.b16 %v1057, %v1056
  %v1094 = vpack.c.b16 %v1059, %v1058
  %v1095 = vpack.c.b16 %v1061, %v1060
  %v1096 = vpack.c.b16 %v1063, %v1062
  %v1097 = vpack.c.b16 %v1065, %v1064
  %1130 = vmatprep.subr.bf16.mxu0 0
  %1131 = vmatpush1.bf16.msra.mxu0 %v1066
  %1132 = vmatprep.subr.bf16.mxu0 0
  %1133 = vmatpush1.bf16.msra.mxu0 %v1067
  %1134 = vmatprep.subr.bf16.mxu0 0
  %1135 = vmatpush1.bf16.msra.mxu0 %v1068
  %1136 = vmatprep.subr.bf16.mxu0 0
  %1137 = vmatpush1.bf16.msra.mxu0 %v1069
  %1138 = vmatprep.subr.bf16.mxu0 0
  %1139 = vmatpush1.bf16.msra.mxu0 %v1070
  %1140 = vmatprep.subr.bf16.mxu0 0
  %1141 = vmatpush1.bf16.msra.mxu0 %v1071
  %1142 = vmatprep.subr.bf16.mxu0 0
  %1143 = vmatpush1.bf16.msra.mxu0 %v1072
  %1144 = vmatprep.subr.bf16.mxu0 0
  %1145 = vmatpush1.bf16.msra.mxu0 %v1073
  %1146 = vmatprep.subr.bf16.mxu0 0
  %1147 = vmatpush1.bf16.msra.mxu0 %v1074
  %1148 = vmatprep.subr.bf16.mxu0 0
  %1149 = vmatpush1.bf16.msra.mxu0 %v1075
  %1150 = vmatprep.subr.bf16.mxu0 0
  %1151 = vmatpush1.bf16.msra.mxu0 %v1076
  %1152 = vmatprep.subr.bf16.mxu0 0
  %1153 = vmatpush1.bf16.msra.mxu0 %v1077
  %1154 = vmatprep.subr.bf16.mxu0 0
  %1155 = vmatpush1.bf16.msra.mxu0 %v1078
  %1156 = vmatprep.subr.bf16.mxu0 0
  %1157 = vmatpush1.bf16.msra.mxu0 %v1079
  %1158 = vmatprep.subr.bf16.mxu0 0
  %1159 = vmatpush1.bf16.msra.mxu0 %v1080
  %1160 = vmatprep.subr.bf16.mxu0 0
  %1161 = vmatpush1.bf16.msra.mxu0 %v1081
  %1162 = vmatprep.mubr.bf16.mxu0 %v923
  %1163 = vmatmul.mubr.bf16.gmra.mrb[0].mxu0 %v922
  %v1164 = vpop.f32.mrb[0].mxu0
  %v1165 = vadd.f32 0.0, %v1164
  %v1166 = vpop.f32.mrb[0].mxu0
  %v1167 = vpop.f32.mrb[0].mxu0
  %v1168 = vadd.f32 0.0, %v1167
  %v1169 = vpop.f32.mrb[0].mxu0
  %1170 = vmatprep.mubr.bf16.mxu0 %v927
  %1171 = vmatmul.mubr.bf16.gmra.mrb[0].mxu0 %v926
  %v1172 = vpop.f32.mrb[0].mxu0
  %v1173 = vadd.f32 0.0, %v1172
  %v1174 = vpop.f32.mrb[0].mxu0
  %v1175 = vpop.f32.mrb[0].mxu0
  %v1176 = vadd.f32 0.0, %v1175
  %v1177 = vpop.f32.mrb[0].mxu0
  %1178 = vdwg.mxu0
  %1179 = vmatprep.subr.bf16.mxu0 0
  %1180 = vmatpush1.bf16.msra.mxu0 %v1082
  %1181 = vmatprep.subr.bf16.mxu0 0
  %1182 = vmatpush1.bf16.msra.mxu0 %v1083
  %1183 = vmatprep.subr.bf16.mxu0 0
  %1184 = vmatpush1.bf16.msra.mxu0 %v1084
  %1185 = vmatprep.subr.bf16.mxu0 0
  %1186 = vmatpush1.bf16.msra.mxu0 %v1085
  %1187 = vmatprep.subr.bf16.mxu0 0
  %1188 = vmatpush1.bf16.msra.mxu0 %v1086
  %1189 = vmatprep.subr.bf16.mxu0 0
  %1190 = vmatpush1.bf16.msra.mxu0 %v1087
  %1191 = vmatprep.subr.bf16.mxu0 0
  %1192 = vmatpush1.bf16.msra.mxu0 %v1088
  %1193 = vmatprep.subr.bf16.mxu0 0
  %1194 = vmatpush1.bf16.msra.mxu0 %v1089
  %1195 = vmatprep.subr.bf16.mxu0 0
  %1196 = vmatpush1.bf16.msra.mxu0 %v1090
  %1197 = vmatprep.subr.bf16.mxu0 0
  %1198 = vmatpush1.bf16.msra.mxu0 %v1091
  %1199 = vmatprep.subr.bf16.mxu0 0
  %1200 = vmatpush1.bf16.msra.mxu0 %v1092
  %1201 = vmatprep.subr.bf16.mxu0 0
  %1202 = vmatpush1.bf16.msra.mxu0 %v1093
  %1203 = vmatprep.subr.bf16.mxu0 0
  %1204 = vmatpush1.bf16.msra.mxu0 %v1094
  %1205 = vmatprep.subr.bf16.mxu0 0
  %1206 = vmatpush1.bf16.msra.mxu0 %v1095
  %1207 = vmatprep.subr.bf16.mxu0 0
  %1208 = vmatpush1.bf16.msra.mxu0 %v1096
  %1209 = vmatprep.subr.bf16.mxu0 0
  %1210 = vmatpush1.bf16.msra.mxu0 %v1097
  %1211 = vmatprep.mubr.bf16.mxu0 %v925
  %1212 = vmatmul.mubr.bf16.gmra.mrb[0].mxu0 %v924
  %v1213 = vpop.f32.mrb[0].mxu0
  %v1214 = vadd.f32 %v1165, %v1213
  %v1215 = vpop.f32.mrb[0].mxu0
  %v1216 = vpop.f32.mrb[0].mxu0
  %v1217 = vadd.f32 %v1168, %v1216
  %v1218 = vpop.f32.mrb[0].mxu0
  %1219 = vmatprep.mubr.bf16.mxu0 %v929
  %1220 = vmatmul.mubr.bf16.gmra.mrb[0].mxu0 %v928
  %v1221 = vpop.f32.mrb[0].mxu0
  %v1222 = vadd.f32 %v1173, %v1221
  %v1223 = vpop.f32.mrb[0].mxu0
  %v1224 = vpop.f32.mrb[0].mxu0
  %v1225 = vadd.f32 %v1176, %v1224
  %v1226 = vpop.f32.mrb[0].mxu0
  %1227 = vdwg.mxu0
  %s1228 = scalar_lea.vmem %s0, 192
  %v1229 = vld [vmem:[%s1228] sm:$0xff]
  %v1230 = vld [vmem:[%s1228 + $0x8] sm:$0xff]
  %v1231 = vld [vmem:[%s1228 + $0x10] sm:$0xff]
  %v1232 = vld [vmem:[%s1228 + $0x18] sm:$0xff]
  %v1233 = vld [vmem:[%s1228 + $0x20] sm:$0xff]
  %v1234 = vld [vmem:[%s1228 + $0x28] sm:$0xff]
  %v1235 = vld [vmem:[%s1228 + $0x30] sm:$0xff]
  %v1236 = vld [vmem:[%s1228 + $0x38] sm:$0xff]
  %s1237 = scalar_lea.vmem %s1, 768
  %v1238 = vld [vmem:[%s1237] sm:$0xf]
  %v1239 = vld [vmem:[%s1237 + $0x4] sm:$0xf]
  %v1240 = vld [vmem:[%s1237 + $0x8] sm:$0xf]
  %v1241 = vld [vmem:[%s1237 + $0xc] sm:$0xf]
  %v1242 = vld [vmem:[%s1237 + $0x10] sm:$0xf]
  %v1243 = vld [vmem:[%s1237 + $0x14] sm:$0xf]
  %v1244 = vld [vmem:[%s1237 + $0x18] sm:$0xf]
  %v1245 = vld [vmem:[%s1237 + $0x1c] sm:$0xf]
  %v1246 = vld [vmem:[%s1237 + $0x20] sm:$0xf]
  %v1247 = vld [vmem:[%s1237 + $0x24] sm:$0xf]
  %v1248 = vld [vmem:[%s1237 + $0x28] sm:$0xf]
  %v1249 = vld [vmem:[%s1237 + $0x2c] sm:$0xf]
  %v1250 = vld [vmem:[%s1237 + $0x30] sm:$0xf]
  %v1251 = vld [vmem:[%s1237 + $0x34] sm:$0xf]
  %v1252 = vld [vmem:[%s1237 + $0x38] sm:$0xf]
  %v1253 = vld [vmem:[%s1237 + $0x3c] sm:$0xf]
  %v1254 = vld [vmem:[%s1237 + $0x40] sm:$0xf]
  %v1255 = vld [vmem:[%s1237 + $0x44] sm:$0xf]
  %v1256 = vld [vmem:[%s1237 + $0x48] sm:$0xf]
  %v1257 = vld [vmem:[%s1237 + $0x4c] sm:$0xf]
  %v1258 = vld [vmem:[%s1237 + $0x50] sm:$0xf]
  %v1259 = vld [vmem:[%s1237 + $0x54] sm:$0xf]
  %v1260 = vld [vmem:[%s1237 + $0x58] sm:$0xf]
  %v1261 = vld [vmem:[%s1237 + $0x5c] sm:$0xf]
  %v1262 = vld [vmem:[%s1237 + $0x60] sm:$0xf]
  %v1263 = vld [vmem:[%s1237 + $0x64] sm:$0xf]
  %v1264 = vld [vmem:[%s1237 + $0x68] sm:$0xf]
  %v1265 = vld [vmem:[%s1237 + $0x6c] sm:$0xf]
  %v1266 = vld [vmem:[%s1237 + $0x70] sm:$0xf]
  %v1267 = vld [vmem:[%s1237 + $0x74] sm:$0xf]
  %v1268 = vld [vmem:[%s1237 + $0x78] sm:$0xf]
  %v1269 = vld [vmem:[%s1237 + $0x7c] sm:$0xf]
  %v1270 = vld [vmem:[%s1237 + $0x80] sm:$0xf]
  %v1271 = vld [vmem:[%s1237 + $0x84] sm:$0xf]
  %v1272 = vld [vmem:[%s1237 + $0x88] sm:$0xf]
  %v1273 = vld [vmem:[%s1237 + $0x8c] sm:$0xf]
  %v1274 = vld [vmem:[%s1237 + $0x90] sm:$0xf]
  %v1275 = vld [vmem:[%s1237 + $0x94] sm:$0xf]
  %v1276 = vld [vmem:[%s1237 + $0x98] sm:$0xf]
  %v1277 = vld [vmem:[%s1237 + $0x9c] sm:$0xf]
  %v1278 = vld [vmem:[%s1237 + $0xa0] sm:$0xf]
  %v1279 = vld [vmem:[%s1237 + $0xa4] sm:$0xf]
  %v1280 = vld [vmem:[%s1237 + $0xa8] sm:$0xf]
  %v1281 = vld [vmem:[%s1237 + $0xac] sm:$0xf]
  %v1282 = vld [vmem:[%s1237 + $0xb0] sm:$0xf]
  %v1283 = vld [vmem:[%s1237 + $0xb4] sm:$0xf]
  %v1284 = vld [vmem:[%s1237 + $0xb8] sm:$0xf]
  %v1285 = vld [vmem:[%s1237 + $0xbc] sm:$0xf]
  %v1286 = vld [vmem:[%s1237 + $0xc0] sm:$0xf]
  %v1287 = vld [vmem:[%s1237 + $0xc4] sm:$0xf]
  %v1288 = vld [vmem:[%s1237 + $0xc8] sm:$0xf]
  %v1289 = vld [vmem:[%s1237 + $0xcc] sm:$0xf]
  %v1290 = vld [vmem:[%s1237 + $0xd0] sm:$0xf]
  %v1291 = vld [vmem:[%s1237 + $0xd4] sm:$0xf]
  %v1292 = vld [vmem:[%s1237 + $0xd8] sm:$0xf]
  %v1293 = vld [vmem:[%s1237 + $0xdc] sm:$0xf]
  %v1294 = vld [vmem:[%s1237 + $0xe0] sm:$0xf]
  %v1295 = vld [vmem:[%s1237 + $0xe4] sm:$0xf]
  %v1296 = vld [vmem:[%s1237 + $0xe8] sm:$0xf]
  %v1297 = vld [vmem:[%s1237 + $0xec] sm:$0xf]
  %v1298 = vld [vmem:[%s1237 + $0xf0] sm:$0xf]
  %v1299 = vld [vmem:[%s1237 + $0xf4] sm:$0xf]
  %v1300 = vld [vmem:[%s1237 + $0xf8] sm:$0xf]
  %v1301 = vld [vmem:[%s1237 + $0xfc] sm:$0xf]
  %v1310 = vunpack.c.l.b16 %v1229
  %v1311 = vunpack.c.h.b16 %v1229
  %v1312 = vunpack.c.l.b16 %v1230
  %v1313 = vunpack.c.h.b16 %v1230
  %v1314 = vunpack.c.l.b16 %v1231
  %v1315 = vunpack.c.h.b16 %v1231
  %v1316 = vunpack.c.l.b16 %v1232
  %v1317 = vunpack.c.h.b16 %v1232
  %v1318 = vunpack.c.l.b16 %v1233
  %v1319 = vunpack.c.h.b16 %v1233
  %v1320 = vunpack.c.l.b16 %v1234
  %v1321 = vunpack.c.h.b16 %v1234
  %v1322 = vunpack.c.l.b16 %v1235
  %v1323 = vunpack.c.h.b16 %v1235
  %v1324 = vunpack.c.l.b16 %v1236
  %v1325 = vunpack.c.h.b16 %v1236
  %v1326 = vpack.c.b16 %v1314, %v1310
  %v1327 = vpack.c.b16 %v1315, %v1311
  %v1328 = vpack.c.b16 %v1316, %v1312
  %v1329 = vpack.c.b16 %v1317, %v1313
  %v1330 = vpack.c.b16 %v1322, %v1318
  %v1331 = vpack.c.b16 %v1323, %v1319
  %v1332 = vpack.c.b16 %v1324, %v1320
  %v1333 = vpack.c.b16 %v1325, %v1321
  %v1406 = vunpack.c.l.b16 %v1238
  %v1407 = vunpack.c.l.b16 %v1239
  %v1408 = vunpack.c.l.b16 %v1240
  %v1409 = vunpack.c.l.b16 %v1241
  %v1410 = vunpack.c.l.b16 %v1242
  %v1411 = vunpack.c.l.b16 %v1243
  %v1412 = vunpack.c.l.b16 %v1244
  %v1413 = vunpack.c.l.b16 %v1245
  %v1414 = vunpack.c.l.b16 %v1246
  %v1415 = vunpack.c.l.b16 %v1247
  %v1416 = vunpack.c.l.b16 %v1248
  %v1417 = vunpack.c.l.b16 %v1249
  %v1418 = vunpack.c.l.b16 %v1250
  %v1419 = vunpack.c.l.b16 %v1251
  %v1420 = vunpack.c.l.b16 %v1252
  %v1421 = vunpack.c.l.b16 %v1253
  %v1422 = vunpack.c.l.b16 %v1254
  %v1423 = vunpack.c.l.b16 %v1255
  %v1424 = vunpack.c.l.b16 %v1256
  %v1425 = vunpack.c.l.b16 %v1257
  %v1426 = vunpack.c.l.b16 %v1258
  %v1427 = vunpack.c.l.b16 %v1259
  %v1428 = vunpack.c.l.b16 %v1260
  %v1429 = vunpack.c.l.b16 %v1261
  %v1430 = vunpack.c.l.b16 %v1262
  %v1431 = vunpack.c.l.b16 %v1263
  %v1432 = vunpack.c.l.b16 %v1264
  %v1433 = vunpack.c.l.b16 %v1265
  %v1434 = vunpack.c.l.b16 %v1266
  %v1435 = vunpack.c.l.b16 %v1267
  %v1436 = vunpack.c.l.b16 %v1268
  %v1437 = vunpack.c.l.b16 %v1269
  %v1438 = vunpack.c.l.b16 %v1270
  %v1439 = vunpack.c.l.b16 %v1271
  %v1440 = vunpack.c.l.b16 %v1272
  %v1441 = vunpack.c.l.b16 %v1273
  %v1442 = vunpack.c.l.b16 %v1274
  %v1443 = vunpack.c.l.b16 %v1275
  %v1444 = vunpack.c.l.b16 %v1276
  %v1445 = vunpack.c.l.b16 %v1277
  %v1446 = vunpack.c.l.b16 %v1278
  %v1447 = vunpack.c.l.b16 %v1279
  %v1448 = vunpack.c.l.b16 %v1280
  %v1449 = vunpack.c.l.b16 %v1281
  %v1450 = vunpack.c.l.b16 %v1282
  %v1451 = vunpack.c.l.b16 %v1283
  %v1452 = vunpack.c.l.b16 %v1284
  %v1453 = vunpack.c.l.b16 %v1285
  %v1454 = vunpack.c.l.b16 %v1286
  %v1455 = vunpack.c.l.b16 %v1287
  %v1456 = vunpack.c.l.b16 %v1288
  %v1457 = vunpack.c.l.b16 %v1289
  %v1458 = vunpack.c.l.b16 %v1290
  %v1459 = vunpack.c.l.b16 %v1291
  %v1460 = vunpack.c.l.b16 %v1292
  %v1461 = vunpack.c.l.b16 %v1293
  %v1462 = vunpack.c.l.b16 %v1294
  %v1463 = vunpack.c.l.b16 %v1295
  %v1464 = vunpack.c.l.b16 %v1296
  %v1465 = vunpack.c.l.b16 %v1297
  %v1466 = vunpack.c.l.b16 %v1298
  %v1467 = vunpack.c.l.b16 %v1299
  %v1468 = vunpack.c.l.b16 %v1300
  %v1469 = vunpack.c.l.b16 %v1301
  %v1470 = vpack.c.b16 %v1407, %v1406
  %v1471 = vpack.c.b16 %v1409, %v1408
  %v1472 = vpack.c.b16 %v1411, %v1410
  %v1473 = vpack.c.b16 %v1413, %v1412
  %v1474 = vpack.c.b16 %v1415, %v1414
  %v1475 = vpack.c.b16 %v1417, %v1416
  %v1476 = vpack.c.b16 %v1419, %v1418
  %v1477 = vpack.c.b16 %v1421, %v1420
  %v1478 = vpack.c.b16 %v1423, %v1422
  %v1479 = vpack.c.b16 %v1425, %v1424
  %v1480 = vpack.c.b16 %v1427, %v1426
  %v1481 = vpack.c.b16 %v1429, %v1428
  %v1482 = vpack.c.b16 %v1431, %v1430
  %v1483 = vpack.c.b16 %v1433, %v1432
  %v1484 = vpack.c.b16 %v1435, %v1434
  %v1485 = vpack.c.b16 %v1437, %v1436
  %v1486 = vpack.c.b16 %v1439, %v1438
  %v1487 = vpack.c.b16 %v1441, %v1440
  %v1488 = vpack.c.b16 %v1443, %v1442
  %v1489 = vpack.c.b16 %v1445, %v1444
  %v1490 = vpack.c.b16 %v1447, %v1446
  %v1491 = vpack.c.b16 %v1449, %v1448
  %v1492 = vpack.c.b16 %v1451, %v1450
  %v1493 = vpack.c.b16 %v1453, %v1452
  %v1494 = vpack.c.b16 %v1455, %v1454
  %v1495 = vpack.c.b16 %v1457, %v1456
  %v1496 = vpack.c.b16 %v1459, %v1458
  %v1497 = vpack.c.b16 %v1461, %v1460
  %v1498 = vpack.c.b16 %v1463, %v1462
  %v1499 = vpack.c.b16 %v1465, %v1464
  %v1500 = vpack.c.b16 %v1467, %v1466
  %v1501 = vpack.c.b16 %v1469, %v1468
  %1534 = vmatprep.subr.bf16.mxu0 0
  %1535 = vmatpush1.bf16.msra.mxu0 %v1470
  %1536 = vmatprep.subr.bf16.mxu0 0
  %1537 = vmatpush1.bf16.msra.mxu0 %v1471
  %1538 = vmatprep.subr.bf16.mxu0 0
  %1539 = vmatpush1.bf16.msra.mxu0 %v1472
  %1540 = vmatprep.subr.bf16.mxu0 0
  %1541 = vmatpush1.bf16.msra.mxu0 %v1473
  %1542 = vmatprep.subr.bf16.mxu0 0
  %1543 = vmatpush1.bf16.msra.mxu0 %v1474
  %1544 = vmatprep.subr.bf16.mxu0 0
  %1545 = vmatpush1.bf16.msra.mxu0 %v1475
  %1546 = vmatprep.subr.bf16.mxu0 0
  %1547 = vmatpush1.bf16.msra.mxu0 %v1476
  %1548 = vmatprep.subr.bf16.mxu0 0
  %1549 = vmatpush1.bf16.msra.mxu0 %v1477
  %1550 = vmatprep.subr.bf16.mxu0 0
  %1551 = vmatpush1.bf16.msra.mxu0 %v1478
  %1552 = vmatprep.subr.bf16.mxu0 0
  %1553 = vmatpush1.bf16.msra.mxu0 %v1479
  %1554 = vmatprep.subr.bf16.mxu0 0
  %1555 = vmatpush1.bf16.msra.mxu0 %v1480
  %1556 = vmatprep.subr.bf16.mxu0 0
  %1557 = vmatpush1.bf16.msra.mxu0 %v1481
  %1558 = vmatprep.subr.bf16.mxu0 0
  %1559 = vmatpush1.bf16.msra.mxu0 %v1482
  %1560 = vmatprep.subr.bf16.mxu0 0
  %1561 = vmatpush1.bf16.msra.mxu0 %v1483
  %1562 = vmatprep.subr.bf16.mxu0 0
  %1563 = vmatpush1.bf16.msra.mxu0 %v1484
  %1564 = vmatprep.subr.bf16.mxu0 0
  %1565 = vmatpush1.bf16.msra.mxu0 %v1485
  %1566 = vmatprep.mubr.bf16.mxu0 %v1327
  %1567 = vmatmul.mubr.bf16.gmra.mrb[0].mxu0 %v1326
  %v1568 = vpop.f32.mrb[0].mxu0
  %v1569 = vadd.f32 0.0, %v1568
  %v1570 = vpop.f32.mrb[0].mxu0
  %v1571 = vpop.f32.mrb[0].mxu0
  %v1572 = vadd.f32 0.0, %v1571
  %v1573 = vpop.f32.mrb[0].mxu0
  %1574 = vmatprep.mubr.bf16.mxu0 %v1331
  %1575 = vmatmul.mubr.bf16.gmra.mrb[0].mxu0 %v1330
  %v1576 = vpop.f32.mrb[0].mxu0
  %v1577 = vadd.f32 0.0, %v1576
  %v1578 = vpop.f32.mrb[0].mxu0
  %v1579 = vpop.f32.mrb[0].mxu0
  %v1580 = vadd.f32 0.0, %v1579
  %v1581 = vpop.f32.mrb[0].mxu0
  %1582 = vdwg.mxu0
  %1583 = vmatprep.subr.bf16.mxu0 0
  %1584 = vmatpush1.bf16.msra.mxu0 %v1486
  %1585 = vmatprep.subr.bf16.mxu0 0
  %1586 = vmatpush1.bf16.msra.mxu0 %v1487
  %1587 = vmatprep.subr.bf16.mxu0 0
  %1588 = vmatpush1.bf16.msra.mxu0 %v1488
  %1589 = vmatprep.subr.bf16.mxu0 0
  %1590 = vmatpush1.bf16.msra.mxu0 %v1489
  %1591 = vmatprep.subr.bf16.mxu0 0
  %1592 = vmatpush1.bf16.msra.mxu0 %v1490
  %1593 = vmatprep.subr.bf16.mxu0 0
  %1594 = vmatpush1.bf16.msra.mxu0 %v1491
  %1595 = vmatprep.subr.bf16.mxu0 0
  %1596 = vmatpush1.bf16.msra.mxu0 %v1492
  %1597 = vmatprep.subr.bf16.mxu0 0
  %1598 = vmatpush1.bf16.msra.mxu0 %v1493
  %1599 = vmatprep.subr.bf16.mxu0 0
  %1600 = vmatpush1.bf16.msra.mxu0 %v1494
  %1601 = vmatprep.subr.bf16.mxu0 0
  %1602 = vmatpush1.bf16.msra.mxu0 %v1495
  %1603 = vmatprep.subr.bf16.mxu0 0
  %1604 = vmatpush1.bf16.msra.mxu0 %v1496
  %1605 = vmatprep.subr.bf16.mxu0 0
  %1606 = vmatpush1.bf16.msra.mxu0 %v1497
  %1607 = vmatprep.subr.bf16.mxu0 0
  %1608 = vmatpush1.bf16.msra.mxu0 %v1498
  %1609 = vmatprep.subr.bf16.mxu0 0
  %1610 = vmatpush1.bf16.msra.mxu0 %v1499
  %1611 = vmatprep.subr.bf16.mxu0 0
  %1612 = vmatpush1.bf16.msra.mxu0 %v1500
  %1613 = vmatprep.subr.bf16.mxu0 0
  %1614 = vmatpush1.bf16.msra.mxu0 %v1501
  %1615 = vmatprep.mubr.bf16.mxu0 %v1329
  %1616 = vmatmul.mubr.bf16.gmra.mrb[0].mxu0 %v1328
  %v1617 = vpop.f32.mrb[0].mxu0
  %v1618 = vadd.f32 %v1569, %v1617
  %v1619 = vpop.f32.mrb[0].mxu0
  %v1620 = vpop.f32.mrb[0].mxu0
  %v1621 = vadd.f32 %v1572, %v1620
  %v1622 = vpop.f32.mrb[0].mxu0
  %1623 = vmatprep.mubr.bf16.mxu0 %v1333
  %1624 = vmatmul.mubr.bf16.gmra.mrb[0].mxu0 %v1332
  %v1625 = vpop.f32.mrb[0].mxu0
  %v1626 = vadd.f32 %v1577, %v1625
  %v1627 = vpop.f32.mrb[0].mxu0
  %v1628 = vpop.f32.mrb[0].mxu0
  %v1629 = vadd.f32 %v1580, %v1628
  %v1630 = vpop.f32.mrb[0].mxu0
  %1631 = vdwg.mxu0
  %vm1632 = vcmask 523264
  %v1633 = vsel %vm1632, %v406, 0.0
  %v1634 = vsel %vm1632, %v409, 0.0
  %v1635 = vadd.f32 %v1633, %v1634
  %v1636 = vsel %vm1632, %v414, 0.0
  %v1637 = vadd.f32 %v1635, %v1636
  %v1638 = vsel %vm1632, %v417, 0.0
  %v1639 = vadd.f32 %v1637, %v1638
  %v1640 = vsel %vm1632, %v810, 0.0
  %v1641 = vadd.f32 %v1639, %v1640
  %v1642 = vsel %vm1632, %v813, 0.0
  %v1643 = vadd.f32 %v1641, %v1642
  %v1644 = vsel %vm1632, %v818, 0.0
  %v1645 = vadd.f32 %v1643, %v1644
  %v1646 = vsel %vm1632, %v821, 0.0
  %v1647 = vadd.f32 %v1645, %v1646
  %v1648 = vsel %vm1632, %v1214, 0.0
  %v1649 = vadd.f32 %v1647, %v1648
  %v1650 = vsel %vm1632, %v1217, 0.0
  %v1651 = vadd.f32 %v1649, %v1650
  %v1652 = vsel %vm1632, %v1222, 0.0
  %v1653 = vadd.f32 %v1651, %v1652
  %v1654 = vsel %vm1632, %v1225, 0.0
  %v1655 = vadd.f32 %v1653, %v1654
  %v1656 = vsel %vm1632, %v1618, 0.0
  %v1657 = vadd.f32 %v1655, %v1656
  %v1658 = vsel %vm1632, %v1621, 0.0
  %v1659 = vadd.f32 %v1657, %v1658
  %v1660 = vsel %vm1632, %v1626, 0.0
  %v1661 = vadd.f32 %v1659, %v1660
  %v1662 = vsel %vm1632, %v1629, 0.0
  %v1663 = vadd.f32 %v1661, %v1662
  %v1664 = vrot.slane %v1663, 4
  %v1665 = vadd.f32 %v1663, %v1664
  %v1666 = vrot.slane %v1665, 2
  %v1667 = vadd.f32 %v1665, %v1666
  %v1668 = vrot.slane %v1667, 1
  %v1669 = vadd.f32 %v1667, %v1668
  %v1670 = vrcp.pop 128.0
  %v1671 = vmul.f32 %v1669, %v1670
  %v1672 = vsub.f32 %v406, %v1671
  %v1673 = vsub.f32 %v409, %v1671
  %v1674 = vsub.f32 %v414, %v1671
  %v1675 = vsub.f32 %v417, %v1671
  %v1676 = vsub.f32 %v810, %v1671
  %v1677 = vsub.f32 %v813, %v1671
  %v1678 = vsub.f32 %v818, %v1671
  %v1679 = vsub.f32 %v821, %v1671
  %v1680 = vsub.f32 %v1214, %v1671
  %v1681 = vsub.f32 %v1217, %v1671
  %v1682 = vsub.f32 %v1222, %v1671
  %v1683 = vsub.f32 %v1225, %v1671
  %v1684 = vsub.f32 %v1618, %v1671
  %v1685 = vsub.f32 %v1621, %v1671
  %v1686 = vsub.f32 %v1626, %v1671
  %v1687 = vsub.f32 %v1629, %v1671
  %v1688 = vmul.f32 %v1672, %v1672
  %v1689 = vmul.f32 %v1673, %v1673
  %v1690 = vmul.f32 %v1674, %v1674
  %v1691 = vmul.f32 %v1675, %v1675
  %v1692 = vmul.f32 %v1676, %v1676
  %v1693 = vmul.f32 %v1677, %v1677
  %v1694 = vmul.f32 %v1678, %v1678
  %v1695 = vmul.f32 %v1679, %v1679
  %v1696 = vmul.f32 %v1680, %v1680
  %v1697 = vmul.f32 %v1681, %v1681
  %v1698 = vmul.f32 %v1682, %v1682
  %v1699 = vmul.f32 %v1683, %v1683
  %v1700 = vmul.f32 %v1684, %v1684
  %v1701 = vmul.f32 %v1685, %v1685
  %v1702 = vmul.f32 %v1686, %v1686
  %v1703 = vmul.f32 %v1687, %v1687
  %v1704 = vsel %vm1632, %v1688, 0.0
  %v1705 = vsel %vm1632, %v1689, 0.0
  %v1706 = vadd.f32 %v1704, %v1705
  %v1707 = vsel %vm1632, %v1690, 0.0
  %v1708 = vadd.f32 %v1706, %v1707
  %v1709 = vsel %vm1632, %v1691, 0.0
  %v1710 = vadd.f32 %v1708, %v1709
  %v1711 = vsel %vm1632, %v1692, 0.0
  %v1712 = vadd.f32 %v1710, %v1711
  %v1713 = vsel %vm1632, %v1693, 0.0
  %v1714 = vadd.f32 %v1712, %v1713
  %v1715 = vsel %vm1632, %v1694, 0.0
  %v1716 = vadd.f32 %v1714, %v1715
  %v1717 = vsel %vm1632, %v1695, 0.0
  %v1718 = vadd.f32 %v1716, %v1717
  %v1719 = vsel %vm1632, %v1696, 0.0
  %v1720 = vadd.f32 %v1718, %v1719
  %v1721 = vsel %vm1632, %v1697, 0.0
  %v1722 = vadd.f32 %v1720, %v1721
  %v1723 = vsel %vm1632, %v1698, 0.0
  %v1724 = vadd.f32 %v1722, %v1723
  %v1725 = vsel %vm1632, %v1699, 0.0
  %v1726 = vadd.f32 %v1724, %v1725
  %v1727 = vsel %vm1632, %v1700, 0.0
  %v1728 = vadd.f32 %v1726, %v1727
  %v1729 = vsel %vm1632, %v1701, 0.0
  %v1730 = vadd.f32 %v1728, %v1729
  %v1731 = vsel %vm1632, %v1702, 0.0
  %v1732 = vadd.f32 %v1730, %v1731
  %v1733 = vsel %vm1632, %v1703, 0.0
  %v1734 = vadd.f32 %v1732, %v1733
  %v1735 = vrot.slane %v1734, 4
  %v1736 = vadd.f32 %v1734, %v1735
  %v1737 = vrot.slane %v1736, 2
  %v1738 = vadd.f32 %v1736, %v1737
  %v1739 = vrot.slane %v1738, 1
  %v1740 = vadd.f32 %v1738, %v1739
  %v1741 = vmul.f32 %v1740, %v1670
  %v1742 = vadd.f32 %v1741, 1e-05
  %v1743 = vrsqrt.pop %v1742
  %v1744 = vmul.f32 %v1672, %v1743
  %v1745 = vmul.f32 %v1673, %v1743
  %v1746 = vmul.f32 %v1674, %v1743
  %v1747 = vmul.f32 %v1675, %v1743
  %v1748 = vmul.f32 %v1676, %v1743
  %v1749 = vmul.f32 %v1677, %v1743
  %v1750 = vmul.f32 %v1678, %v1743
  %v1751 = vmul.f32 %v1679, %v1743
  %v1752 = vmul.f32 %v1680, %v1743
  %v1753 = vmul.f32 %v1681, %v1743
  %v1754 = vmul.f32 %v1682, %v1743
  %v1755 = vmul.f32 %v1683, %v1743
  %v1756 = vmul.f32 %v1684, %v1743
  %v1757 = vmul.f32 %v1685, %v1743
  %v1758 = vmul.f32 %v1686, %v1743
  %v1759 = vmul.f32 %v1687, %v1743
  %v1760 = vld [vmem:[%s2] sm:$0x1]
  %v1762 = vlaneseq
  %v1763 = vshrl.u32 %v1762, 7
  %v1764 = vsub.s32 0, %v1763
  %v1765 = vrot.slane %v1760, %v1764
  %v1767 = vmul.f32 %v1744, %v1765
  %v1768 = vmul.f32 %v1745, %v1765
  %v1769 = vmul.f32 %v1746, %v1765
  %v1770 = vmul.f32 %v1747, %v1765
  %v1771 = vmul.f32 %v1748, %v1765
  %v1772 = vmul.f32 %v1749, %v1765
  %v1773 = vmul.f32 %v1750, %v1765
  %v1774 = vmul.f32 %v1751, %v1765
  %v1775 = vmul.f32 %v1752, %v1765
  %v1776 = vmul.f32 %v1753, %v1765
  %v1777 = vmul.f32 %v1754, %v1765
  %v1778 = vmul.f32 %v1755, %v1765
  %v1779 = vmul.f32 %v1756, %v1765
  %v1780 = vmul.f32 %v1757, %v1765
  %v1781 = vmul.f32 %v1758, %v1765
  %v1782 = vmul.f32 %v1759, %v1765
  %v1783 = vld [vmem:[%s3] sm:$0x1]
  %v1785 = vlaneseq
  %v1786 = vshrl.u32 %v1785, 7
  %v1787 = vsub.s32 0, %v1786
  %v1788 = vrot.slane %v1783, %v1787
  %v1790 = vadd.f32 %v1767, %v1788
  %v1791 = vadd.f32 %v1768, %v1788
  %v1792 = vadd.f32 %v1769, %v1788
  %v1793 = vadd.f32 %v1770, %v1788
  %v1794 = vadd.f32 %v1771, %v1788
  %v1795 = vadd.f32 %v1772, %v1788
  %v1796 = vadd.f32 %v1773, %v1788
  %v1797 = vadd.f32 %v1774, %v1788
  %v1798 = vadd.f32 %v1775, %v1788
  %v1799 = vadd.f32 %v1776, %v1788
  %v1800 = vadd.f32 %v1777, %v1788
  %v1801 = vadd.f32 %v1778, %v1788
  %v1802 = vadd.f32 %v1779, %v1788
  %v1803 = vadd.f32 %v1780, %v1788
  %v1804 = vadd.f32 %v1781, %v1788
  %v1805 = vadd.f32 %v1782, %v1788
  %v1806 = vmax.f32 %v1790, 0.0
  %v1807 = vmax.f32 %v1791, 0.0
  %v1808 = vmax.f32 %v1792, 0.0
  %v1809 = vmax.f32 %v1793, 0.0
  %v1810 = vmax.f32 %v1794, 0.0
  %v1811 = vmax.f32 %v1795, 0.0
  %v1812 = vmax.f32 %v1796, 0.0
  %v1813 = vmax.f32 %v1797, 0.0
  %v1814 = vmax.f32 %v1798, 0.0
  %v1815 = vmax.f32 %v1799, 0.0
  %v1816 = vmax.f32 %v1800, 0.0
  %v1817 = vmax.f32 %v1801, 0.0
  %v1818 = vmax.f32 %v1802, 0.0
  %v1819 = vmax.f32 %v1803, 0.0
  %v1820 = vmax.f32 %v1804, 0.0
  %v1821 = vmax.f32 %v1805, 0.0
  %1822 = vst.msk [vmem:[%s4] sm:$0xff] %vm1632, %v1806
  %1823 = vst.msk [vmem:[%s4 + $0x8] sm:$0xff] %vm1632, %v1807
  %1824 = vst.msk [vmem:[%s4 + $0x10] sm:$0xff] %vm1632, %v1808
  %1825 = vst.msk [vmem:[%s4 + $0x18] sm:$0xff] %vm1632, %v1809
  %1826 = vst.msk [vmem:[%s4 + $0x20] sm:$0xff] %vm1632, %v1810
  %1827 = vst.msk [vmem:[%s4 + $0x28] sm:$0xff] %vm1632, %v1811
  %1828 = vst.msk [vmem:[%s4 + $0x30] sm:$0xff] %vm1632, %v1812
  %1829 = vst.msk [vmem:[%s4 + $0x38] sm:$0xff] %vm1632, %v1813
  %1830 = vst.msk [vmem:[%s4 + $0x40] sm:$0xff] %vm1632, %v1814
  %1831 = vst.msk [vmem:[%s4 + $0x48] sm:$0xff] %vm1632, %v1815
  %1832 = vst.msk [vmem:[%s4 + $0x50] sm:$0xff] %vm1632, %v1816
  %1833 = vst.msk [vmem:[%s4 + $0x58] sm:$0xff] %vm1632, %v1817
  %1834 = vst.msk [vmem:[%s4 + $0x60] sm:$0xff] %vm1632, %v1818
  %1835 = vst.msk [vmem:[%s4 + $0x68] sm:$0xff] %vm1632, %v1819
  %1836 = vst.msk [vmem:[%s4 + $0x70] sm:$0xff] %vm1632, %v1820
  %1837 = vst.msk [vmem:[%s4 + $0x78] sm:$0xff] %vm1632, %v1821
  // Predicated region
  $region18: #{_lambda_.6} parent=0 // pred_check
    _
  $region19: #{_lambda_.6} parent=0 // pred_check_branch
    %1839 = sbr.rel (0) target = $region21
  $region20: #{_lambda_.6} parent=0 // pred_region
    _
  $region21: #{_lambda_.6} parent=0 // pred_fallthru
    _
  // Predicated region
  $region22: #{_lambda_.6} parent=0 // pred_check
    _
  $region23: #{_lambda_.6} parent=0 // pred_check_branch
    %1841 = sbr.rel (0) target = $region25
  $region24: #{_lambda_.6} parent=0 // pred_region
    _
  $region25: #{_lambda_.6} parent=0 // pred_fallthru
    _

// kernel: _lambda_.7
$region0: #{_lambda_.7}
  #allocation0 [shape = 'u32[]', space=smem, size = 0x4, offset = 0x4, fixed_abs, tag = 'smem constant byte address 0x4 - core index']
  #allocation1 [shape = 'u32[144,128]{1,0:T(1,128)}', space=vmem, size = 0x12000, scoped, tag = 'internal scratch']
  %s0 = inlined_call_operand.vmem [shape: bf16[4,256,128], index: 0, kind: input, shape index: {}]
  %s1 = inlined_call_operand.vmem [shape: bf16[4,3,256], index: 1, kind: input, shape index: {}]
  %s2 = inlined_call_operand.vmem [shape: f32[3,1], index: 2, kind: input, shape index: {}]
  %s3 = inlined_call_operand.vmem [shape: f32[3,1], index: 3, kind: input, shape index: {}]
  %s4 = inlined_call_operand.vmem [shape: f32[4,3,128], index: 4, kind: output, shape index: {}]
  %s5 = sld [smem:[#allocation0]]
  $region26: #{_lambda_.7} parent=0
    _
  %s7 = ssub.s32 1, %s5
  %s8 = scalar_select 0, %s7, %s5
  // Predicated region
  $region2: #{_lambda_.7} parent=0 // pred_check
    _
  $region3: #{_lambda_.7} parent=0 // pred_check_branch
    %10 = sbr.rel (0) target = $region5
  $region4: #{_lambda_.7} parent=0 // pred_region
    _
  $region5: #{_lambda_.7} parent=0 // pred_fallthru
    _
  // Predicated region
  $region6: #{_lambda_.7} parent=0 // pred_check
    _
  $region7: #{_lambda_.7} parent=0 // pred_check_branch
    %12 = sbr.rel (0) target = $region9
  $region8: #{_lambda_.7} parent=0 // pred_region
    _
  $region9: #{_lambda_.7} parent=0 // pred_fallthru
    _
  // Predicated region
  $region10: #{_lambda_.7} parent=0 // pred_check
    _
  $region11: #{_lambda_.7} parent=0 // pred_check_branch
    %14 = sbr.rel (0) target = $region13
  $region12: #{_lambda_.7} parent=0 // pred_region
    _
  $region13: #{_lambda_.7} parent=0 // pred_fallthru
    _
  // Predicated region
  $region14: #{_lambda_.7} parent=0 // pred_check
    _
  $region15: #{_lambda_.7} parent=0 // pred_check_branch
    %16 = sbr.rel (0) target = $region17
  $region16: #{_lambda_.7} parent=0 // pred_region
    _
  $region17: #{_lambda_.7} parent=0 // pred_fallthru
    _
  %v18 = vld [vmem:[%s1] sm:$0xf]
  %v19 = vld [vmem:[%s0] sm:$0xf]
  %v20 = vld [vmem:[%s0 + $0x4] sm:$0xf]
  %v21 = vld [vmem:[%s0 + $0x8] sm:$0xf]
  %v22 = vld [vmem:[%s0 + $0xc] sm:$0xf]
  %v23 = vld [vmem:[%s0 + $0x10] sm:$0xf]
  %v24 = vld [vmem:[%s0 + $0x14] sm:$0xf]
  %v25 = vld [vmem:[%s0 + $0x18] sm:$0xf]
  %v26 = vld [vmem:[%s0 + $0x1c] sm:$0xf]
  %v27 = vld [vmem:[%s0 + $0x20] sm:$0xf]
  %v28 = vld [vmem:[%s0 + $0x24] sm:$0xf]
  %v29 = vld [vmem:[%s0 + $0x28] sm:$0xf]
  %v30 = vld [vmem:[%s0 + $0x2c] sm:$0xf]
  %v31 = vld [vmem:[%s0 + $0x30] sm:$0xf]
  %v32 = vld [vmem:[%s0 + $0x34] sm:$0xf]
  %v33 = vld [vmem:[%s0 + $0x38] sm:$0xf]
  %v34 = vld [vmem:[%s0 + $0x3c] sm:$0xf]
  %v35 = vld [vmem:[%s0 + $0x40] sm:$0xf]
  %v36 = vld [vmem:[%s0 + $0x44] sm:$0xf]
  %v37 = vld [vmem:[%s0 + $0x48] sm:$0xf]
  %v38 = vld [vmem:[%s0 + $0x4c] sm:$0xf]
  %v39 = vld [vmem:[%s0 + $0x50] sm:$0xf]
  %v40 = vld [vmem:[%s0 + $0x54] sm:$0xf]
  %v41 = vld [vmem:[%s0 + $0x58] sm:$0xf]
  %v42 = vld [vmem:[%s0 + $0x5c] sm:$0xf]
  %v43 = vld [vmem:[%s0 + $0x60] sm:$0xf]
  %v44 = vld [vmem:[%s0 + $0x64] sm:$0xf]
  %v45 = vld [vmem:[%s0 + $0x68] sm:$0xf]
  %v46 = vld [vmem:[%s0 + $0x6c] sm:$0xf]
  %v47 = vld [vmem:[%s0 + $0x70] sm:$0xf]
  %v48 = vld [vmem:[%s0 + $0x74] sm:$0xf]
  %v49 = vld [vmem:[%s0 + $0x78] sm:$0xf]
  %v50 = vld [vmem:[%s0 + $0x7c] sm:$0xf]
  %v53 = vunpack.c.l.s4 1983009808
  %v54 = vunpack.c.0.s8 %v53
  %v55 = vlaneseq
  %v56 = vshrl.u32 %v55, 7
  %v57 = vsub.s32 %v54, %v56
  %v58 = vrot.slane %v18, %v57
  %v59 = vcombine.high %v58, %v58
  %v94 = vunpack.c.l.b16 %v19
  %v95 = vunpack.c.l.b16 %v20
  %v96 = vunpack.c.l.b16 %v21
  %v97 = vunpack.c.l.b16 %v22
  %v98 = vunpack.c.l.b16 %v23
  %v99 = vunpack.c.l.b16 %v24
  %v100 = vunpack.c.l.b16 %v25
  %v101 = vunpack.c.l.b16 %v26
  %v102 = vunpack.c.l.b16 %v27
  %v103 = vunpack.c.l.b16 %v28
  %v104 = vunpack.c.l.b16 %v29
  %v105 = vunpack.c.l.b16 %v30
  %v106 = vunpack.c.l.b16 %v31
  %v107 = vunpack.c.l.b16 %v32
  %v108 = vunpack.c.l.b16 %v33
  %v109 = vunpack.c.l.b16 %v34
  %v110 = vunpack.c.l.b16 %v35
  %v111 = vunpack.c.l.b16 %v36
  %v112 = vunpack.c.l.b16 %v37
  %v113 = vunpack.c.l.b16 %v38
  %v114 = vunpack.c.l.b16 %v39
  %v115 = vunpack.c.l.b16 %v40
  %v116 = vunpack.c.l.b16 %v41
  %v117 = vunpack.c.l.b16 %v42
  %v118 = vunpack.c.l.b16 %v43
  %v119 = vunpack.c.l.b16 %v44
  %v120 = vunpack.c.l.b16 %v45
  %v121 = vunpack.c.l.b16 %v46
  %v122 = vunpack.c.l.b16 %v47
  %v123 = vunpack.c.l.b16 %v48
  %v124 = vunpack.c.l.b16 %v49
  %v125 = vunpack.c.l.b16 %v50
  %v126 = vpack.c.b16 %v95, %v94
  %v127 = vpack.c.b16 %v97, %v96
  %v128 = vpack.c.b16 %v99, %v98
  %v129 = vpack.c.b16 %v101, %v100
  %v130 = vpack.c.b16 %v103, %v102
  %v131 = vpack.c.b16 %v105, %v104
  %v132 = vpack.c.b16 %v107, %v106
  %v133 = vpack.c.b16 %v109, %v108
  %v134 = vpack.c.b16 %v111, %v110
  %v135 = vpack.c.b16 %v113, %v112
  %v136 = vpack.c.b16 %v115, %v114
  %v137 = vpack.c.b16 %v117, %v116
  %v138 = vpack.c.b16 %v119, %v118
  %v139 = vpack.c.b16 %v121, %v120
  %v140 = vpack.c.b16 %v123, %v122
  %v141 = vpack.c.b16 %v125, %v124
  %158 = vmatprep.subr.bf16.mxu0 0
  %159 = vmatpush1.bf16.msra.mxu0 %v126
  %160 = vmatprep.subr.bf16.mxu0 0
  %161 = vmatpush1.bf16.msra.mxu0 %v127
  %162 = vmatprep.subr.bf16.mxu0 0
  %163 = vmatpush1.bf16.msra.mxu0 %v128
  %164 = vmatprep.subr.bf16.mxu0 0
  %165 = vmatpush1.bf16.msra.mxu0 %v129
  %166 = vmatprep.subr.bf16.mxu0 0
  %167 = vmatpush1.bf16.msra.mxu0 %v130
  %168 = vmatprep.subr.bf16.mxu0 0
  %169 = vmatpush1.bf16.msra.mxu0 %v131
  %170 = vmatprep.subr.bf16.mxu0 0
  %171 = vmatpush1.bf16.msra.mxu0 %v132
  %172 = vmatprep.subr.bf16.mxu0 0
  %173 = vmatpush1.bf16.msra.mxu0 %v133
  %174 = vmatprep.subr.bf16.mxu0 0
  %175 = vmatpush1.bf16.msra.mxu0 %v134
  %176 = vmatprep.subr.bf16.mxu0 0
  %177 = vmatpush1.bf16.msra.mxu0 %v135
  %178 = vmatprep.subr.bf16.mxu0 0
  %179 = vmatpush1.bf16.msra.mxu0 %v136
  %180 = vmatprep.subr.bf16.mxu0 0
  %181 = vmatpush1.bf16.msra.mxu0 %v137
  %182 = vmatprep.subr.bf16.mxu0 0
  %183 = vmatpush1.bf16.msra.mxu0 %v138
  %184 = vmatprep.subr.bf16.mxu0 0
  %185 = vmatpush1.bf16.msra.mxu0 %v139
  %186 = vmatprep.subr.bf16.mxu0 0
  %187 = vmatpush1.bf16.msra.mxu0 %v140
  %188 = vmatprep.subr.bf16.mxu0 0
  %189 = vmatpush1.bf16.msra.mxu0 %v141
  %190 = vmatprep.mubr.bf16.mxu0 %v59
  %191 = vmatmul.mubr.bf16.gmra.mrb[0].mxu0 %v58
  %v192 = vpop.f32.mrb[0].mxu0
  %v193 = vadd.f32 0.0, %v192
  %v194 = vpop.f32.mrb[0].mxu0
  %v195 = vpop.f32.mrb[0].mxu0
  %v196 = vpop.f32.mrb[0].mxu0
  %197 = vdwg.mxu0
  %s198 = scalar_lea.vmem %s1, 4
  %v199 = vld [vmem:[%s198] sm:$0xf]
  %s200 = scalar_lea.vmem %s0, 128
  %v201 = vld [vmem:[%s200] sm:$0xf]
  %v202 = vld [vmem:[%s200 + $0x4] sm:$0xf]
  %v203 = vld [vmem:[%s200 + $0x8] sm:$0xf]
  %v204 = vld [vmem:[%s200 + $0xc] sm:$0xf]
  %v205 = vld [vmem:[%s200 + $0x10] sm:$0xf]
  %v206 = vld [vmem:[%s200 + $0x14] sm:$0xf]
  %v207 = vld [vmem:[%s200 + $0x18] sm:$0xf]
  %v208 = vld [vmem:[%s200 + $0x1c] sm:$0xf]
  %v209 = vld [vmem:[%s200 + $0x20] sm:$0xf]
  %v210 = vld [vmem:[%s200 + $0x24] sm:$0xf]
  %v211 = vld [vmem:[%s200 + $0x28] sm:$0xf]
  %v212 = vld [vmem:[%s200 + $0x2c] sm:$0xf]
  %v213 = vld [vmem:[%s200 + $0x30] sm:$0xf]
  %v214 = vld [vmem:[%s200 + $0x34] sm:$0xf]
  %v215 = vld [vmem:[%s200 + $0x38] sm:$0xf]
  %v216 = vld [vmem:[%s200 + $0x3c] sm:$0xf]
  %v217 = vld [vmem:[%s200 + $0x40] sm:$0xf]
  %v218 = vld [vmem:[%s200 + $0x44] sm:$0xf]
  %v219 = vld [vmem:[%s200 + $0x48] sm:$0xf]
  %v220 = vld [vmem:[%s200 + $0x4c] sm:$0xf]
  %v221 = vld [vmem:[%s200 + $0x50] sm:$0xf]
  %v222 = vld [vmem:[%s200 + $0x54] sm:$0xf]
  %v223 = vld [vmem:[%s200 + $0x58] sm:$0xf]
  %v224 = vld [vmem:[%s200 + $0x5c] sm:$0xf]
  %v225 = vld [vmem:[%s200 + $0x60] sm:$0xf]
  %v226 = vld [vmem:[%s200 + $0x64] sm:$0xf]
  %v227 = vld [vmem:[%s200 + $0x68] sm:$0xf]
  %v228 = vld [vmem:[%s200 + $0x6c] sm:$0xf]
  %v229 = vld [vmem:[%s200 + $0x70] sm:$0xf]
  %v230 = vld [vmem:[%s200 + $0x74] sm:$0xf]
  %v231 = vld [vmem:[%s200 + $0x78] sm:$0xf]
  %v232 = vld [vmem:[%s200 + $0x7c] sm:$0xf]
  %v235 = vunpack.c.l.s4 1983009808
  %v236 = vunpack.c.0.s8 %v235
  %v237 = vlaneseq
  %v238 = vshrl.u32 %v237, 7
  %v239 = vsub.s32 %v236, %v238
  %v240 = vrot.slane %v199, %v239
  %v241 = vcombine.high %v240, %v240
  %v276 = vunpack.c.l.b16 %v201
  %v277 = vunpack.c.l.b16 %v202
  %v278 = vunpack.c.l.b16 %v203
  %v279 = vunpack.c.l.b16 %v204
  %v280 = vunpack.c.l.b16 %v205
  %v281 = vunpack.c.l.b16 %v206
  %v282 = vunpack.c.l.b16 %v207
  %v283 = vunpack.c.l.b16 %v208
  %v284 = vunpack.c.l.b16 %v209
  %v285 = vunpack.c.l.b16 %v210
  %v286 = vunpack.c.l.b16 %v211
  %v287 = vunpack.c.l.b16 %v212
  %v288 = vunpack.c.l.b16 %v213
  %v289 = vunpack.c.l.b16 %v214
  %v290 = vunpack.c.l.b16 %v215
  %v291 = vunpack.c.l.b16 %v216
  %v292 = vunpack.c.l.b16 %v217
  %v293 = vunpack.c.l.b16 %v218
  %v294 = vunpack.c.l.b16 %v219
  %v295 = vunpack.c.l.b16 %v220
  %v296 = vunpack.c.l.b16 %v221
  %v297 = vunpack.c.l.b16 %v222
  %v298 = vunpack.c.l.b16 %v223
  %v299 = vunpack.c.l.b16 %v224
  %v300 = vunpack.c.l.b16 %v225
  %v301 = vunpack.c.l.b16 %v226
  %v302 = vunpack.c.l.b16 %v227
  %v303 = vunpack.c.l.b16 %v228
  %v304 = vunpack.c.l.b16 %v229
  %v305 = vunpack.c.l.b16 %v230
  %v306 = vunpack.c.l.b16 %v231
  %v307 = vunpack.c.l.b16 %v232
  %v308 = vpack.c.b16 %v277, %v276
  %v309 = vpack.c.b16 %v279, %v278
  %v310 = vpack.c.b16 %v281, %v280
  %v311 = vpack.c.b16 %v283, %v282
  %v312 = vpack.c.b16 %v285, %v284
  %v313 = vpack.c.b16 %v287, %v286
  %v314 = vpack.c.b16 %v289, %v288
  %v315 = vpack.c.b16 %v291, %v290
  %v316 = vpack.c.b16 %v293, %v292
  %v317 = vpack.c.b16 %v295, %v294
  %v318 = vpack.c.b16 %v297, %v296
  %v319 = vpack.c.b16 %v299, %v298
  %v320 = vpack.c.b16 %v301, %v300
  %v321 = vpack.c.b16 %v303, %v302
  %v322 = vpack.c.b16 %v305, %v304
  %v323 = vpack.c.b16 %v307, %v306
  %340 = vmatprep.subr.bf16.mxu0 0
  %341 = vmatpush1.bf16.msra.mxu0 %v308
  %342 = vmatprep.subr.bf16.mxu0 0
  %343 = vmatpush1.bf16.msra.mxu0 %v309
  %344 = vmatprep.subr.bf16.mxu0 0
  %345 = vmatpush1.bf16.msra.mxu0 %v310
  %346 = vmatprep.subr.bf16.mxu0 0
  %347 = vmatpush1.bf16.msra.mxu0 %v311
  %348 = vmatprep.subr.bf16.mxu0 0
  %349 = vmatpush1.bf16.msra.mxu0 %v312
  %350 = vmatprep.subr.bf16.mxu0 0
  %351 = vmatpush1.bf16.msra.mxu0 %v313
  %352 = vmatprep.subr.bf16.mxu0 0
  %353 = vmatpush1.bf16.msra.mxu0 %v314
  %354 = vmatprep.subr.bf16.mxu0 0
  %355 = vmatpush1.bf16.msra.mxu0 %v315
  %356 = vmatprep.subr.bf16.mxu0 0
  %357 = vmatpush1.bf16.msra.mxu0 %v316
  %358 = vmatprep.subr.bf16.mxu0 0
  %359 = vmatpush1.bf16.msra.mxu0 %v317
  %360 = vmatprep.subr.bf16.mxu0 0
  %361 = vmatpush1.bf16.msra.mxu0 %v318
  %362 = vmatprep.subr.bf16.mxu0 0
  %363 = vmatpush1.bf16.msra.mxu0 %v319
  %364 = vmatprep.subr.bf16.mxu0 0
  %365 = vmatpush1.bf16.msra.mxu0 %v320
  %366 = vmatprep.subr.bf16.mxu0 0
  %367 = vmatpush1.bf16.msra.mxu0 %v321
  %368 = vmatprep.subr.bf16.mxu0 0
  %369 = vmatpush1.bf16.msra.mxu0 %v322
  %370 = vmatprep.subr.bf16.mxu0 0
  %371 = vmatpush1.bf16.msra.mxu0 %v323
  %372 = vmatprep.mubr.bf16.mxu0 %v241
  %373 = vmatmul.mubr.bf16.gmra.mrb[0].mxu0 %v240
  %v374 = vpop.f32.mrb[0].mxu0
  %v375 = vadd.f32 0.0, %v374
  %v376 = vpop.f32.mrb[0].mxu0
  %v377 = vpop.f32.mrb[0].mxu0
  %v378 = vpop.f32.mrb[0].mxu0
  %379 = vdwg.mxu0
  %s380 = scalar_lea.vmem %s1, 8
  %v381 = vld [vmem:[%s380] sm:$0xf]
  %s382 = scalar_lea.vmem %s0, 256
  %v383 = vld [vmem:[%s382] sm:$0xf]
  %v384 = vld [vmem:[%s382 + $0x4] sm:$0xf]
  %v385 = vld [vmem:[%s382 + $0x8] sm:$0xf]
  %v386 = vld [vmem:[%s382 + $0xc] sm:$0xf]
  %v387 = vld [vmem:[%s382 + $0x10] sm:$0xf]
  %v388 = vld [vmem:[%s382 + $0x14] sm:$0xf]
  %v389 = vld [vmem:[%s382 + $0x18] sm:$0xf]
  %v390 = vld [vmem:[%s382 + $0x1c] sm:$0xf]
  %v391 = vld [vmem:[%s382 + $0x20] sm:$0xf]
  %v392 = vld [vmem:[%s382 + $0x24] sm:$0xf]
  %v393 = vld [vmem:[%s382 + $0x28] sm:$0xf]
  %v394 = vld [vmem:[%s382 + $0x2c] sm:$0xf]
  %v395 = vld [vmem:[%s382 + $0x30] sm:$0xf]
  %v396 = vld [vmem:[%s382 + $0x34] sm:$0xf]
  %v397 = vld [vmem:[%s382 + $0x38] sm:$0xf]
  %v398 = vld [vmem:[%s382 + $0x3c] sm:$0xf]
  %v399 = vld [vmem:[%s382 + $0x40] sm:$0xf]
  %v400 = vld [vmem:[%s382 + $0x44] sm:$0xf]
  %v401 = vld [vmem:[%s382 + $0x48] sm:$0xf]
  %v402 = vld [vmem:[%s382 + $0x4c] sm:$0xf]
  %v403 = vld [vmem:[%s382 + $0x50] sm:$0xf]
  %v404 = vld [vmem:[%s382 + $0x54] sm:$0xf]
  %v405 = vld [vmem:[%s382 + $0x58] sm:$0xf]
  %v406 = vld [vmem:[%s382 + $0x5c] sm:$0xf]
  %v407 = vld [vmem:[%s382 + $0x60] sm:$0xf]
  %v408 = vld [vmem:[%s382 + $0x64] sm:$0xf]
  %v409 = vld [vmem:[%s382 + $0x68] sm:$0xf]
  %v410 = vld [vmem:[%s382 + $0x6c] sm:$0xf]
  %v411 = vld [vmem:[%s382 + $0x70] sm:$0xf]
  %v412 = vld [vmem:[%s382 + $0x74] sm:$0xf]
  %v413 = vld [vmem:[%s382 + $0x78] sm:$0xf]
  %v414 = vld [vmem:[%s382 + $0x7c] sm:$0xf]
  %v417 = vunpack.c.l.s4 1983009808
  %v418 = vunpack.c.0.s8 %v417
  %v419 = vlaneseq
  %v420 = vshrl.u32 %v419, 7
  %v421 = vsub.s32 %v418, %v420
  %v422 = vrot.slane %v381, %v421
  %v423 = vcombine.high %v422, %v422
  %v458 = vunpack.c.l.b16 %v383
  %v459 = vunpack.c.l.b16 %v384
  %v460 = vunpack.c.l.b16 %v385
  %v461 = vunpack.c.l.b16 %v386
  %v462 = vunpack.c.l.b16 %v387
  %v463 = vunpack.c.l.b16 %v388
  %v464 = vunpack.c.l.b16 %v389
  %v465 = vunpack.c.l.b16 %v390
  %v466 = vunpack.c.l.b16 %v391
  %v467 = vunpack.c.l.b16 %v392
  %v468 = vunpack.c.l.b16 %v393
  %v469 = vunpack.c.l.b16 %v394
  %v470 = vunpack.c.l.b16 %v395
  %v471 = vunpack.c.l.b16 %v396
  %v472 = vunpack.c.l.b16 %v397
  %v473 = vunpack.c.l.b16 %v398
  %v474 = vunpack.c.l.b16 %v399
  %v475 = vunpack.c.l.b16 %v400
  %v476 = vunpack.c.l.b16 %v401
  %v477 = vunpack.c.l.b16 %v402
  %v478 = vunpack.c.l.b16 %v403
  %v479 = vunpack.c.l.b16 %v404
  %v480 = vunpack.c.l.b16 %v405
  %v481 = vunpack.c.l.b16 %v406
  %v482 = vunpack.c.l.b16 %v407
  %v483 = vunpack.c.l.b16 %v408
  %v484 = vunpack.c.l.b16 %v409
  %v485 = vunpack.c.l.b16 %v410
  %v486 = vunpack.c.l.b16 %v411
  %v487 = vunpack.c.l.b16 %v412
  %v488 = vunpack.c.l.b16 %v413
  %v489 = vunpack.c.l.b16 %v414
  %v490 = vpack.c.b16 %v459, %v458
  %v491 = vpack.c.b16 %v461, %v460
  %v492 = vpack.c.b16 %v463, %v462
  %v493 = vpack.c.b16 %v465, %v464
  %v494 = vpack.c.b16 %v467, %v466
  %v495 = vpack.c.b16 %v469, %v468
  %v496 = vpack.c.b16 %v471, %v470
  %v497 = vpack.c.b16 %v473, %v472
  %v498 = vpack.c.b16 %v475, %v474
  %v499 = vpack.c.b16 %v477, %v476
  %v500 = vpack.c.b16 %v479, %v478
  %v501 = vpack.c.b16 %v481, %v480
  %v502 = vpack.c.b16 %v483, %v482
  %v503 = vpack.c.b16 %v485, %v484
  %v504 = vpack.c.b16 %v487, %v486
  %v505 = vpack.c.b16 %v489, %v488
  %522 = vmatprep.subr.bf16.mxu0 0
  %523 = vmatpush1.bf16.msra.mxu0 %v490
  %524 = vmatprep.subr.bf16.mxu0 0
  %525 = vmatpush1.bf16.msra.mxu0 %v491
  %526 = vmatprep.subr.bf16.mxu0 0
  %527 = vmatpush1.bf16.msra.mxu0 %v492
  %528 = vmatprep.subr.bf16.mxu0 0
  %529 = vmatpush1.bf16.msra.mxu0 %v493
  %530 = vmatprep.subr.bf16.mxu0 0
  %531 = vmatpush1.bf16.msra.mxu0 %v494
  %532 = vmatprep.subr.bf16.mxu0 0
  %533 = vmatpush1.bf16.msra.mxu0 %v495
  %534 = vmatprep.subr.bf16.mxu0 0
  %535 = vmatpush1.bf16.msra.mxu0 %v496
  %536 = vmatprep.subr.bf16.mxu0 0
  %537 = vmatpush1.bf16.msra.mxu0 %v497
  %538 = vmatprep.subr.bf16.mxu0 0
  %539 = vmatpush1.bf16.msra.mxu0 %v498
  %540 = vmatprep.subr.bf16.mxu0 0
  %541 = vmatpush1.bf16.msra.mxu0 %v499
  %542 = vmatprep.subr.bf16.mxu0 0
  %543 = vmatpush1.bf16.msra.mxu0 %v500
  %544 = vmatprep.subr.bf16.mxu0 0
  %545 = vmatpush1.bf16.msra.mxu0 %v501
  %546 = vmatprep.subr.bf16.mxu0 0
  %547 = vmatpush1.bf16.msra.mxu0 %v502
  %548 = vmatprep.subr.bf16.mxu0 0
  %549 = vmatpush1.bf16.msra.mxu0 %v503
  %550 = vmatprep.subr.bf16.mxu0 0
  %551 = vmatpush1.bf16.msra.mxu0 %v504
  %552 = vmatprep.subr.bf16.mxu0 0
  %553 = vmatpush1.bf16.msra.mxu0 %v505
  %554 = vmatprep.mubr.bf16.mxu0 %v423
  %555 = vmatmul.mubr.bf16.gmra.mrb[0].mxu0 %v422
  %v556 = vpop.f32.mrb[0].mxu0
  %v557 = vadd.f32 0.0, %v556
  %v558 = vpop.f32.mrb[0].mxu0
  %v559 = vpop.f32.mrb[0].mxu0
  %v560 = vpop.f32.mrb[0].mxu0
  %561 = vdwg.mxu0
  %s562 = scalar_lea.vmem %s1, 12
  %v563 = vld [vmem:[%s562] sm:$0xf]
  %s564 = scalar_lea.vmem %s0, 384
  %v565 = vld [vmem:[%s564] sm:$0xf]
  %v566 = vld [vmem:[%s564 + $0x4] sm:$0xf]
  %v567 = vld [vmem:[%s564 + $0x8] sm:$0xf]
  %v568 = vld [vmem:[%s564 + $0xc] sm:$0xf]
  %v569 = vld [vmem:[%s564 + $0x10] sm:$0xf]
  %v570 = vld [vmem:[%s564 + $0x14] sm:$0xf]
  %v571 = vld [vmem:[%s564 + $0x18] sm:$0xf]
  %v572 = vld [vmem:[%s564 + $0x1c] sm:$0xf]
  %v573 = vld [vmem:[%s564 + $0x20] sm:$0xf]
  %v574 = vld [vmem:[%s564 + $0x24] sm:$0xf]
  %v575 = vld [vmem:[%s564 + $0x28] sm:$0xf]
  %v576 = vld [vmem:[%s564 + $0x2c] sm:$0xf]
  %v577 = vld [vmem:[%s564 + $0x30] sm:$0xf]
  %v578 = vld [vmem:[%s564 + $0x34] sm:$0xf]
  %v579 = vld [vmem:[%s564 + $0x38] sm:$0xf]
  %v580 = vld [vmem:[%s564 + $0x3c] sm:$0xf]
  %v581 = vld [vmem:[%s564 + $0x40] sm:$0xf]
  %v582 = vld [vmem:[%s564 + $0x44] sm:$0xf]
  %v583 = vld [vmem:[%s564 + $0x48] sm:$0xf]
  %v584 = vld [vmem:[%s564 + $0x4c] sm:$0xf]
  %v585 = vld [vmem:[%s564 + $0x50] sm:$0xf]
  %v586 = vld [vmem:[%s564 + $0x54] sm:$0xf]
  %v587 = vld [vmem:[%s564 + $0x58] sm:$0xf]
  %v588 = vld [vmem:[%s564 + $0x5c] sm:$0xf]
  %v589 = vld [vmem:[%s564 + $0x60] sm:$0xf]
  %v590 = vld [vmem:[%s564 + $0x64] sm:$0xf]
  %v591 = vld [vmem:[%s564 + $0x68] sm:$0xf]
  %v592 = vld [vmem:[%s564 + $0x6c] sm:$0xf]
  %v593 = vld [vmem:[%s564 + $0x70] sm:$0xf]
  %v594 = vld [vmem:[%s564 + $0x74] sm:$0xf]
  %v595 = vld [vmem:[%s564 + $0x78] sm:$0xf]
  %v596 = vld [vmem:[%s564 + $0x7c] sm:$0xf]
  %v599 = vunpack.c.l.s4 1983009808
  %v600 = vunpack.c.0.s8 %v599
  %v601 = vlaneseq
  %v602 = vshrl.u32 %v601, 7
  %v603 = vsub.s32 %v600, %v602
  %v604 = vrot.slane %v563, %v603
  %v605 = vcombine.high %v604, %v604
  %v640 = vunpack.c.l.b16 %v565
  %v641 = vunpack.c.l.b16 %v566
  %v642 = vunpack.c.l.b16 %v567
  %v643 = vunpack.c.l.b16 %v568
  %v644 = vunpack.c.l.b16 %v569
  %v645 = vunpack.c.l.b16 %v570
  %v646 = vunpack.c.l.b16 %v571
  %v647 = vunpack.c.l.b16 %v572
  %v648 = vunpack.c.l.b16 %v573
  %v649 = vunpack.c.l.b16 %v574
  %v650 = vunpack.c.l.b16 %v575
  %v651 = vunpack.c.l.b16 %v576
  %v652 = vunpack.c.l.b16 %v577
  %v653 = vunpack.c.l.b16 %v578
  %v654 = vunpack.c.l.b16 %v579
  %v655 = vunpack.c.l.b16 %v580
  %v656 = vunpack.c.l.b16 %v581
  %v657 = vunpack.c.l.b16 %v582
  %v658 = vunpack.c.l.b16 %v583
  %v659 = vunpack.c.l.b16 %v584
  %v660 = vunpack.c.l.b16 %v585
  %v661 = vunpack.c.l.b16 %v586
  %v662 = vunpack.c.l.b16 %v587
  %v663 = vunpack.c.l.b16 %v588
  %v664 = vunpack.c.l.b16 %v589
  %v665 = vunpack.c.l.b16 %v590
  %v666 = vunpack.c.l.b16 %v591
  %v667 = vunpack.c.l.b16 %v592
  %v668 = vunpack.c.l.b16 %v593
  %v669 = vunpack.c.l.b16 %v594
  %v670 = vunpack.c.l.b16 %v595
  %v671 = vunpack.c.l.b16 %v596
  %v672 = vpack.c.b16 %v641, %v640
  %v673 = vpack.c.b16 %v643, %v642
  %v674 = vpack.c.b16 %v645, %v644
  %v675 = vpack.c.b16 %v647, %v646
  %v676 = vpack.c.b16 %v649, %v648
  %v677 = vpack.c.b16 %v651, %v650
  %v678 = vpack.c.b16 %v653, %v652
  %v679 = vpack.c.b16 %v655, %v654
  %v680 = vpack.c.b16 %v657, %v656
  %v681 = vpack.c.b16 %v659, %v658
  %v682 = vpack.c.b16 %v661, %v660
  %v683 = vpack.c.b16 %v663, %v662
  %v684 = vpack.c.b16 %v665, %v664
  %v685 = vpack.c.b16 %v667, %v666
  %v686 = vpack.c.b16 %v669, %v668
  %v687 = vpack.c.b16 %v671, %v670
  %704 = vmatprep.subr.bf16.mxu0 0
  %705 = vmatpush1.bf16.msra.mxu0 %v672
  %706 = vmatprep.subr.bf16.mxu0 0
  %707 = vmatpush1.bf16.msra.mxu0 %v673
  %708 = vmatprep.subr.bf16.mxu0 0
  %709 = vmatpush1.bf16.msra.mxu0 %v674
  %710 = vmatprep.subr.bf16.mxu0 0
  %711 = vmatpush1.bf16.msra.mxu0 %v675
  %712 = vmatprep.subr.bf16.mxu0 0
  %713 = vmatpush1.bf16.msra.mxu0 %v676
  %714 = vmatprep.subr.bf16.mxu0 0
  %715 = vmatpush1.bf16.msra.mxu0 %v677
  %716 = vmatprep.subr.bf16.mxu0 0
  %717 = vmatpush1.bf16.msra.mxu0 %v678
  %718 = vmatprep.subr.bf16.mxu0 0
  %719 = vmatpush1.bf16.msra.mxu0 %v679
  %720 = vmatprep.subr.bf16.mxu0 0
  %721 = vmatpush1.bf16.msra.mxu0 %v680
  %722 = vmatprep.subr.bf16.mxu0 0
  %723 = vmatpush1.bf16.msra.mxu0 %v681
  %724 = vmatprep.subr.bf16.mxu0 0
  %725 = vmatpush1.bf16.msra.mxu0 %v682
  %726 = vmatprep.subr.bf16.mxu0 0
  %727 = vmatpush1.bf16.msra.mxu0 %v683
  %728 = vmatprep.subr.bf16.mxu0 0
  %729 = vmatpush1.bf16.msra.mxu0 %v684
  %730 = vmatprep.subr.bf16.mxu0 0
  %731 = vmatpush1.bf16.msra.mxu0 %v685
  %732 = vmatprep.subr.bf16.mxu0 0
  %733 = vmatpush1.bf16.msra.mxu0 %v686
  %734 = vmatprep.subr.bf16.mxu0 0
  %735 = vmatpush1.bf16.msra.mxu0 %v687
  %736 = vmatprep.mubr.bf16.mxu0 %v605
  %737 = vmatmul.mubr.bf16.gmra.mrb[0].mxu0 %v604
  %v738 = vpop.f32.mrb[0].mxu0
  %v739 = vadd.f32 0.0, %v738
  %v740 = vpop.f32.mrb[0].mxu0
  %v741 = vpop.f32.mrb[0].mxu0
  %v742 = vpop.f32.mrb[0].mxu0
  %743 = vdwg.mxu0
  %vm744 = vcmask 1042432
  %v745 = vsel %vm744, %v193, 0.0
  %v746 = vsel %vm744, %v375, 0.0
  %v747 = vadd.f32 %v745, %v746
  %v748 = vsel %vm744, %v557, 0.0
  %v749 = vadd.f32 %v747, %v748
  %v750 = vsel %vm744, %v739, 0.0
  %v751 = vadd.f32 %v749, %v750
  %752 = vadd.xlane.f32.xlu0 %v751
  %v753 = vpop.xlane.xlu0 %752
  %v754 = vrcp.pop 512.0
  %v755 = vmul.f32 %v753, %v754
  %v756 = vsub.f32 %v193, %v755
  %v757 = vsub.f32 %v375, %v755
  %v758 = vsub.f32 %v557, %v755
  %v759 = vsub.f32 %v739, %v755
  %v760 = vmul.f32 %v756, %v756
  %v761 = vmul.f32 %v757, %v757
  %v762 = vmul.f32 %v758, %v758
  %v763 = vmul.f32 %v759, %v759
  %v764 = vsel %vm744, %v760, 0.0
  %v765 = vsel %vm744, %v761, 0.0
  %v766 = vadd.f32 %v764, %v765
  %v767 = vsel %vm744, %v762, 0.0
  %v768 = vadd.f32 %v766, %v767
  %v769 = vsel %vm744, %v763, 0.0
  %v770 = vadd.f32 %v768, %v769
  %771 = vadd.xlane.f32.xlu0 %v770
  %v772 = vpop.xlane.xlu0 %771
  %v773 = vmul.f32 %v772, %v754
  %v774 = vadd.f32 %v773, 1e-05
  %v775 = vrsqrt.pop %v774
  %v776 = vmul.f32 %v756, %v775
  %v777 = vmul.f32 %v757, %v775
  %v778 = vmul.f32 %v758, %v775
  %v779 = vmul.f32 %v759, %v775
  %v780 = vld [vmem:[%s2] sm:$0x7]
  %782 = vset.pattern.permute.xlu0 0
  %783 = vperm.xlu0 %782, %v780
  %v784 = vpop.permute.xlu0 %783
  %v786 = vmul.f32 %v776, %v784
  %v787 = vmul.f32 %v777, %v784
  %v788 = vmul.f32 %v778, %v784
  %v789 = vmul.f32 %v779, %v784
  %v790 = vld [vmem:[%s3] sm:$0x7]
  %792 = vset.pattern.permute.xlu0 0
  %793 = vperm.xlu0 %792, %v790
  %v794 = vpop.permute.xlu0 %793
  %v796 = vadd.f32 %v786, %v794
  %v797 = vadd.f32 %v787, %v794
  %v798 = vadd.f32 %v788, %v794
  %v799 = vadd.f32 %v789, %v794
  %v800 = vtanh.pop %v796
  %v801 = vtanh.pop %v797
  %v802 = vtanh.pop %v798
  %v803 = vtanh.pop %v799
  %804 = vst [vmem:[%s4] sm:$0x7] %v800
  %805 = vst [vmem:[%s4 + $0x4] sm:$0x7] %v801
  %806 = vst [vmem:[%s4 + $0x8] sm:$0x7] %v802
  %807 = vst [vmem:[%s4 + $0xc] sm:$0x7] %v803
  // Predicated region
  $region18: #{_lambda_.7} parent=0 // pred_check
    _
  $region19: #{_lambda_.7} parent=0 // pred_check_branch
    %809 = sbr.rel (0) target = $region21
  $region20: #{_lambda_.7} parent=0 // pred_region
    _
  $region21: #{_lambda_.7} parent=0 // pred_fallthru
    _
  // Predicated region
  $region22: #{_lambda_.7} parent=0 // pred_check
    _
  $region23: #{_lambda_.7} parent=0 // pred_check_branch
    %811 = sbr.rel (0) target = $region25
  $region24: #{_lambda_.7} parent=0 // pred_region
    _
  $region25: #{_lambda_.7} parent=0 // pred_fallthru
    _

</llo_original>
